<compile_context>
chip_gen: v5e
topology: v5e:2x2
jax: 0.10.0
libtpu: 0.0.40
codegen_flags: <defaults>
</compile_context>

<pallas_src>
import math
import functools

import jax
import jax.numpy as jnp
from jax.experimental import pallas as pl
from jax.experimental.pallas import tpu as pltpu

LN_EPS = 1e-5
GELU_C = math.tanh(math.sqrt(2.0 / math.pi))   # reference quirk: tanh of the constant only


# ---------------------------------------------------------------------------
# shared math helpers (used inside kernels and in the pure-JAX reference)
# ---------------------------------------------------------------------------
def _layernorm(x, w, b):
    mu = jnp.mean(x, axis=-1, keepdims=True)
    var = jnp.mean((x - mu) ** 2, axis=-1, keepdims=True)
    return (x - mu) * jax.lax.rsqrt(var + LN_EPS) * w + b


def _new_gelu(x):
    return 0.5 * x * (1.0 + GELU_C * (x + 0.044715 * x * x * x))


# ---------------------------------------------------------------------------
# Pallas kernels
# ---------------------------------------------------------------------------
def gpt_blocks_kernel(x_ref, ln1w_ref, ln1b_ref, wqkv_ref, bqkv_ref,
                      wproj_ref, bproj_ref, ln2w_ref, ln2b_ref,
                      wfc_ref, bfc_ref, wfp_ref, bfp_ref,
                      o_ref, *, num_heads):
    """All transformer layers for one batch element.  grid = (B, L).

    o_ref's block index depends only on b, so it is VMEM-resident across the layer
    axis and doubles as the activation accumulator (P3 pattern); per-layer weights
    (leading L axis) are pipelined/prefetched by their BlockSpecs.
    """
    l = pl.program_id(1)

    @pl.when(l == 0)
    def _():
        o_ref[0] = x_ref[0]

    x = o_ref[0]                               # (T, C)
    T, C = x.shape
    H = num_heads
    hs = C // H
    scale = C ** (-0.5)                        # reference quirk: full n_embed, not head_size

    # ---- self-attention on ln1(x): fused QKV projection + fused output projection ----
    xn = _layernorm(x, ln1w_ref[0], ln1b_ref[0])
    qkv = jnp.dot(xn, wqkv_ref[0], preferred_element_type=jnp.float32) + bqkv_ref[0]

    # additive causal mask, built once per step and fused into the score add
    row = jax.lax.broadcasted_iota(jnp.int32, (T, T), 0)
    col = jax.lax.broadcasted_iota(jnp.int32, (T, T), 1)
    neg_mask = jnp.where(row >= col, 0.0, -1e30).astype(jnp.float32)

    # TODO(synk): for large T, tile the KV axis with a flash-style online softmax;
    # here T == block_size == 128 fits in a single lane-dense tile.
    outs = []
    for h in range(H):                         # small static loop; slices are 128-lane aligned
        qh = qkv[:, h * hs:(h + 1) * hs]
        kh = qkv[:, C + h * hs: C + (h + 1) * hs]
        vh = qkv[:, 2 * C + h * hs: 2 * C + (h + 1) * hs]
        s = jnp.dot(qh, kh.T, preferred_element_type=jnp.float32) * scale
        s = s + neg_mask
        s = s - jnp.max(s, axis=-1, keepdims=True)
        p = jnp.exp(s)
        # exact normalization keeps the fp32 check tight; approx=True would move it to EUP
        p = p * pl.reciprocal(jnp.sum(p, axis=-1, keepdims=True))
        outs.append(jnp.dot(p, vh, preferred_element_type=jnp.float32))
    attn = jnp.dot(jnp.concatenate(outs, axis=-1), wproj_ref[0],
                   preferred_element_type=jnp.float32) + bproj_ref[0]

    # ---- residual / ln2 / MLP (matches the quirky reference block exactly) ----
    x1 = x + attn
    x2 = _layernorm(x1, ln2w_ref[0], ln2b_ref[0])
    hdn = _new_gelu(jnp.dot(x2, wfc_ref[0], preferred_element_type=jnp.float32) + bfc_ref[0])
    ff = jnp.dot(hdn, wfp_ref[0], preferred_element_type=jnp.float32) + bfp_ref[0]
    o_ref[0] = x2 + ff                         # intentional: x2 + MLP(x2), per reference


def lm_head_kernel(x_ref, lnw_ref, lnb_ref, wlm_ref, blm_ref, o_ref):
    """Final layernorm + one vocab tile of the LM head.  grid = (B, V // TN)."""
    xn = _layernorm(x_ref[0], lnw_ref[...], lnb_ref[...])
    o_ref[0] = jnp.dot(xn, wlm_ref[...], preferred_element_type=jnp.float32) + blm_ref[...]


# ---------------------------------------------------------------------------
# pallas_call wrappers
# ---------------------------------------------------------------------------
_LAYER_W = ('ln1_w', 'ln1_b', 'wqkv', 'bqkv', 'wproj', 'bproj',
            'ln2_w', 'ln2_b', 'wfc', 'bfc', 'wfp', 'bfp')


def run_blocks(x, layers, num_heads):
    B, T, C = x.shape
    L = layers['wqkv'].shape[0]

    def _wspec(arr):
        return pl.BlockSpec((1,) + arr.shape[1:], lambda b, l: (l, 0, 0))

    in_specs = [pl.BlockSpec((1, T, C), lambda b, l: (b, 0, 0))]
    in_specs += [_wspec(layers[k]) for k in _LAYER_W]
    args = [x] + [layers[k] for k in _LAYER_W]

    return pl.pallas_call(
        functools.partial(gpt_blocks_kernel, num_heads=num_heads),
        out_shape=jax.ShapeDtypeStruct((B, T, C), jnp.float32),
        grid=(B, L),
        in_specs=in_specs,
        out_specs=pl.BlockSpec((1, T, C), lambda b, l: (b, 0, 0)),
        input_output_aliases={0: 0},           # x in / x out share the HBM buffer
        compiler_params=pltpu.CompilerParams(
            dimension_semantics=("parallel", "arbitrary")),
    )(*args)


def run_lm_head(x, params, tile_n=256):
    B, T, C = x.shape
    V = params['wlm'].shape[1]
    tile_n = min(tile_n, V)
    assert V % tile_n == 0 and tile_n % 128 == 0
    in_specs = [
        pl.BlockSpec((1, T, C), lambda b, j: (b, 0, 0)),
        pl.BlockSpec((1, C), lambda b, j: (0, 0)),
        pl.BlockSpec((1, C), lambda b, j: (0, 0)),
        pl.BlockSpec((C, tile_n), lambda b, j: (0, j)),
        pl.BlockSpec((1, tile_n), lambda b, j: (0, j)),
    ]
    return pl.pallas_call(
        lm_head_kernel,
        out_shape=jax.ShapeDtypeStruct((B, T, V), jnp.float32),
        grid=(B, V // tile_n),
        in_specs=in_specs,
        out_specs=pl.BlockSpec((1, T, tile_n), lambda b, j: (b, 0, j)),
        compiler_params=pltpu.CompilerParams(
            dimension_semantics=("parallel", "parallel")),
    )(x, params['ln_w'], params['ln_b'], params['wlm'], params['blm'])


def gpt_forward(params, idx, num_heads):
    T = idx.shape[1]
    # embedding gather + sinusoidal positional table are plain-JAX glue (dropout = identity)
    x = params['emb'][idx] + params['P'][:, :T, :]
    x = run_blocks(x, params['layers'], num_heads)
    return run_lm_head(x, params)
    # TODO(synk): cross-entropy loss path (targets != None) and multinomial sampling in
    # generate() stay in plain JAX; bf16 weight casting for big C is a follow-up.


# ---------------------------------------------------------------------------
# pure-JAX reference (for correctness check)
# ---------------------------------------------------------------------------
def gpt_forward_ref(params, idx, num_heads):
    B, T = idx.shape
    x = params['emb'][idx] + params['P'][:, :T, :]
    C = x.shape[-1]
    H = num_heads
    hs = C // H
    scale = C ** (-0.5)
    mask = jnp.tril(jnp.ones((T, T)))
    L = params['layers']['wqkv'].shape[0]
    for l in range(L):
        lp = {k: params['layers'][k][l] for k in params['layers']}
        xn = _layernorm(x, lp['ln1_w'], lp['ln1_b'])
        qkv = xn @ lp['wqkv'] + lp['bqkv']
        outs = []
        for h in range(H):
            qh = qkv[..., h * hs:(h + 1) * hs]
            kh = qkv[..., C + h * hs: C + (h + 1) * hs]
            vh = qkv[..., 2 * C + h * hs: 2 * C + (h + 1) * hs]
            s = jnp.einsum('btd,bsd->bts', qh, kh) * scale
            s = jnp.where(mask == 0, -jnp.inf, s)
            p = jax.nn.softmax(s, axis=-1)
            outs.append(jnp.einsum('bts,bsd->btd', p, vh))
        attn = jnp.concatenate(outs, axis=-1) @ lp['wproj'] + lp['bproj']
        x1 = x + attn
        x2 = _layernorm(x1, lp['ln2_w'], lp['ln2_b'])
        hdn = _new_gelu(x2 @ lp['wfc'] + lp['bfc'])
        x = x2 + (hdn @ lp['wfp'] + lp['bfp'])
    xn = _layernorm(x, params['ln_w'], params['ln_b'])
    return xn @ params['wlm'] + params['blm']


# ---------------------------------------------------------------------------
# deterministic parameter initialization (synthetic; shapes from __init__)
# ---------------------------------------------------------------------------
def positional_table(n_embed, max_len):
    pos = jnp.arange(max_len, dtype=jnp.float32)[:, None]
    div = jnp.power(10000.0, jnp.arange(0, n_embed, 2, dtype=jnp.float32) / n_embed)
    X = pos / div
    P = jnp.zeros((1, max_len, n_embed), jnp.float32)
    P = P.at[:, :, 0::2].set(jnp.sin(X))
    P = P.at[:, :, 1::2].set(jnp.cos(X))
    return P


def init_params(key, vocab_size, n_embed, block_size, num_heads, num_layers):
    C = n_embed

    def nrm(k, shape, scale=0.1):
        return (scale * jax.random.normal(k, shape)).astype(jnp.float32)

    keys = jax.random.split(key, 2 + num_layers)
    params = {
        'emb': nrm(keys[0], (vocab_size, C), 1.0),
        'P': positional_table(C, block_size),
        'ln_w': jnp.ones((1, C), jnp.float32),
        'ln_b': jnp.zeros((1, C), jnp.float32),
        'wlm': nrm(keys[1], (C, vocab_size)),
        'blm': jnp.zeros((1, vocab_size), jnp.float32),
    }
    Ls = {k: [] for k in _LAYER_W}
    for l in range(num_layers):
        lk = jax.random.split(keys[2 + l], 5)
        Ls['ln1_w'].append(jnp.ones((1, C), jnp.float32))
        Ls['ln1_b'].append(jnp.zeros((1, C), jnp.float32))
        # fused qkv layout: columns [q_head0..q_headH | k_head0.. | v_head0..]
        Ls['wqkv'].append(nrm(lk[0], (C, 3 * C)))
        Ls['bqkv'].append(nrm(lk[1], (1, 3 * C)))
        Ls['wproj'].append(nrm(lk[2], (C, C)))
        Ls['bproj'].append(jnp.zeros((1, C), jnp.float32))
        Ls['ln2_w'].append(jnp.ones((1, C), jnp.float32))
        Ls['ln2_b'].append(jnp.zeros((1, C), jnp.float32))
        Ls['wfc'].append(nrm(lk[3], (C, 4 * C)))
        Ls['bfc'].append(jnp.zeros((1, 4 * C), jnp.float32))
        Ls['wfp'].append(nrm(lk[4], (4 * C, C)))
        Ls['bfp'].append(jnp.zeros((1, C), jnp.float32))
    params['layers'] = {k: jnp.stack(v) for k, v in Ls.items()}
    return params


# ---------------------------------------------------------------------------
if __name__ == "__main__":
    # small, but lane-dense: n_embed and vocab tile are multiples of 128, head_size = 128
    vocab_size = 512
    n_embed = 256
    block_size = 128
    num_heads = 2
    num_layers = 2
    B, T = 2, 128           # T <= block_size

    key = jax.random.PRNGKey(0)
    pkey, ikey = jax.random.split(key)
    params = init_params(pkey, vocab_size, n_embed, block_size, num_heads, num_layers)
    idx = jax.random.randint(ikey, (B, T), 0, vocab_size, dtype=jnp.int32)

    fwd = jax.jit(functools.partial(gpt_forward, num_heads=num_heads))
    logits = jax.block_until_ready(fwd(params, idx))

    ref = gpt_forward_ref(params, idx, num_heads)
    assert logits.shape == (B, T, vocab_size)
    err = jnp.max(jnp.abs(logits - ref))
    assert jnp.allclose(logits, ref, atol=5e-3, rtol=5e-3), f"max abs err {err}"
    print("KERNEL_OK")
</pallas_src>

<mosaic_0001>
module attributes {stable_mosaic.version = 11 : i64} {
  func.func @lm_head_kernel(%arg0: i32, %arg1: i32, %arg2: memref<1x128x256xf32, #tpu.memory_space<vmem>>, %arg3: memref<1x256xf32, #tpu.memory_space<vmem>>, %arg4: memref<1x256xf32, #tpu.memory_space<vmem>>, %arg5: memref<256x256xf32, #tpu.memory_space<vmem>>, %arg6: memref<1x256xf32, #tpu.memory_space<vmem>>, %arg7: memref<1x128x256xf32, #tpu.memory_space<vmem>>) attributes {dimension_semantics = [#tpu.dimension_semantics<parallel>, #tpu.dimension_semantics<parallel>], iteration_bounds = array<i64: 2, 2>, scalar_prefetch = 0 : i64, scratch_operands = 0 : i64, tpu.core_type = #tpu.core_type<tc>, window_params = [{transform_indices = @transform_0, window_bounds = array<i64: 1, 128, 256>}, {pipeline_mode = #tpu.pipeline_mode<synchronous>, transform_indices = @transform_1, window_bounds = array<i64: 1, 256>}, {pipeline_mode = #tpu.pipeline_mode<synchronous>, transform_indices = @transform_2, window_bounds = array<i64: 1, 256>}, {transform_indices = @transform_3, window_bounds = array<i64: 256, 256>}, {transform_indices = @transform_4, window_bounds = array<i64: 1, 256>}, {transform_indices = @transform_5, window_bounds = array<i64: 1, 128, 256>}]} {
    %c0 = arith.constant 0 : index
    %c0_0 = arith.constant 0 : index
    %c0_1 = arith.constant 0 : index
    %0 = vector.load %arg2[%c0, %c0_0, %c0_1] : memref<1x128x256xf32, #tpu.memory_space<vmem>>, vector<1x128x256xf32>
    %1 = vector.shape_cast %0 : vector<1x128x256xf32> to vector<128x256xf32>
    %c0_2 = arith.constant 0 : index
    %c0_3 = arith.constant 0 : index
    %2 = vector.load %arg3[%c0_2, %c0_3] : memref<1x256xf32, #tpu.memory_space<vmem>>, vector<1x256xf32>
    %c0_4 = arith.constant 0 : index
    %c0_5 = arith.constant 0 : index
    %3 = vector.load %arg4[%c0_4, %c0_5] : memref<1x256xf32, #tpu.memory_space<vmem>>, vector<1x256xf32>
    %cst = arith.constant dense<0.000000e+00> : vector<128xf32>
    %4 = vector.multi_reduction <add>, %1, %cst [1] : vector<128x256xf32> to vector<128xf32>
    %5 = vector.shape_cast %4 : vector<128xf32> to vector<128x1xf32>
    %cst_6 = arith.constant 2.560000e+02 : f32
    %6 = vector.broadcast %cst_6 : f32 to vector<128x1xf32>
    %7 = arith.divf %5, %6 : vector<128x1xf32>
    %8 = vector.broadcast %7 : vector<128x1xf32> to vector<128x256xf32>
    %9 = arith.subf %1, %8 : vector<128x256xf32>
    %10 = arith.mulf %9, %9 : vector<128x256xf32>
    %cst_7 = arith.constant dense<0.000000e+00> : vector<128xf32>
    %11 = vector.multi_reduction <add>, %10, %cst_7 [1] : vector<128x256xf32> to vector<128xf32>
    %12 = vector.shape_cast %11 : vector<128xf32> to vector<128x1xf32>
    %cst_8 = arith.constant 2.560000e+02 : f32
    %13 = vector.broadcast %cst_8 : f32 to vector<128x1xf32>
    %14 = arith.divf %12, %13 : vector<128x1xf32>
    %15 = vector.broadcast %7 : vector<128x1xf32> to vector<128x256xf32>
    %16 = arith.subf %1, %15 : vector<128x256xf32>
    %cst_9 = arith.constant 9.99999974E-6 : f32
    %17 = vector.broadcast %cst_9 : f32 to vector<128x1xf32>
    %18 = arith.addf %14, %17 : vector<128x1xf32>
    %19 = math.rsqrt %18 : vector<128x1xf32>
    %20 = vector.broadcast %19 : vector<128x1xf32> to vector<128x256xf32>
    %21 = arith.mulf %16, %20 : vector<128x256xf32>
    %22 = vector.broadcast %2 : vector<1x256xf32> to vector<128x256xf32>
    %23 = arith.mulf %21, %22 : vector<128x256xf32>
    %24 = vector.broadcast %3 : vector<1x256xf32> to vector<128x256xf32>
    %25 = arith.addf %23, %24 : vector<128x256xf32>
    %c0_10 = arith.constant 0 : index
    %c0_11 = arith.constant 0 : index
    %26 = vector.load %arg5[%c0_10, %c0_11] : memref<256x256xf32, #tpu.memory_space<vmem>>, vector<256x256xf32>
    %cst_12 = arith.constant dense<0.000000e+00> : vector<128x256xf32>
    %27 = tpu.matmul %25, %26, %cst_12 {dimension_numbers = #tpu.dot_dimension_numbers<[1], [0], [0], [1], [0, 0, 1, 1], [], []>} : vector<128x256xf32>, vector<256x256xf32>, vector<128x256xf32> -> vector<128x256xf32>
    %c0_13 = arith.constant 0 : index
    %c0_14 = arith.constant 0 : index
    %28 = vector.load %arg6[%c0_13, %c0_14] : memref<1x256xf32, #tpu.memory_space<vmem>>, vector<1x256xf32>
    %29 = vector.broadcast %28 : vector<1x256xf32> to vector<128x256xf32>
    %30 = arith.addf %27, %29 : vector<128x256xf32>
    %c0_15 = arith.constant 0 : index
    %c0_16 = arith.constant 0 : index
    %c0_17 = arith.constant 0 : index
    %31 = vector.load %arg7[%c0_15, %c0_16, %c0_17] : memref<1x128x256xf32, #tpu.memory_space<vmem>>, vector<1x128x256xf32>
    %32 = vector.shape_cast %31 : vector<1x128x256xf32> to vector<128x256xf32>
    %33 = vector.shape_cast %30 : vector<128x256xf32> to vector<1x128x256xf32>
    tpu.vector_store %arg7[%c0_15, %c0_16, %c0_17], %33 {strides = array<i32>} : memref<1x128x256xf32, #tpu.memory_space<vmem>>, vector<1x128x256xf32>,
    return
  }
  func.func @transform_0(%arg0: i32, %arg1: i32) -> (i32, i32, i32) {
    %c0_i32 = arith.constant 0 : i32
    %c0_i32_0 = arith.constant 0 : i32
    %c0_i32_1 = arith.constant 0 : i32
    return %arg0, %c0_i32, %c0_i32_0 : i32, i32, i32
  }
  func.func @transform_1(%arg0: i32, %arg1: i32) -> (i32, i32) {
    %c0_i32 = arith.constant 0 : i32
    %c0_i32_0 = arith.constant 0 : i32
    %c0_i32_1 = arith.constant 0 : i32
    return %c0_i32, %c0_i32_0 : i32, i32
  }
  func.func @transform_2(%arg0: i32, %arg1: i32) -> (i32, i32) {
    %c0_i32 = arith.constant 0 : i32
    %c0_i32_0 = arith.constant 0 : i32
    %c0_i32_1 = arith.constant 0 : i32
    return %c0_i32, %c0_i32_0 : i32, i32
  }
  func.func @transform_3(%arg0: i32, %arg1: i32) -> (i32, i32) {
    %c0_i32 = arith.constant 0 : i32
    %c0_i32_0 = arith.constant 0 : i32
    return %c0_i32, %arg1 : i32, i32
  }
  func.func @transform_4(%arg0: i32, %arg1: i32) -> (i32, i32) {
    %c0_i32 = arith.constant 0 : i32
    %c0_i32_0 = arith.constant 0 : i32
    return %c0_i32, %arg1 : i32, i32
  }
  func.func @transform_5(%arg0: i32, %arg1: i32) -> (i32, i32, i32) {
    %c0_i32 = arith.constant 0 : i32
    %c0_i32_0 = arith.constant 0 : i32
    return %arg0, %c0_i32, %arg1 : i32, i32, i32
  }
}

module attributes {stable_mosaic.version = 11 : i64} {
  func.func @gpt_blocks_kernel(%arg0: i32, %arg1: i32, %arg2: memref<1x128x256xf32, #tpu.memory_space<vmem>>, %arg3: memref<1x1x256xf32, #tpu.memory_space<vmem>>, %arg4: memref<1x1x256xf32, #tpu.memory_space<vmem>>, %arg5: memref<1x256x768xf32, #tpu.memory_space<vmem>>, %arg6: memref<1x1x768xf32, #tpu.memory_space<vmem>>, %arg7: memref<1x256x256xf32, #tpu.memory_space<vmem>>, %arg8: memref<1x1x256xf32, #tpu.memory_space<vmem>>, %arg9: memref<1x1x256xf32, #tpu.memory_space<vmem>>, %arg10: memref<1x1x256xf32, #tpu.memory_space<vmem>>, %arg11: memref<1x256x1024xf32, #tpu.memory_space<vmem>>, %arg12: memref<1x1x1024xf32, #tpu.memory_space<vmem>>, %arg13: memref<1x1024x256xf32, #tpu.memory_space<vmem>>, %arg14: memref<1x1x256xf32, #tpu.memory_space<vmem>>, %arg15: memref<1x128x256xf32, #tpu.memory_space<vmem>>) attributes {dimension_semantics = [#tpu.dimension_semantics<parallel>, #tpu.dimension_semantics<arbitrary>], iteration_bounds = array<i64: 2, 2>, scalar_prefetch = 0 : i64, scratch_operands = 0 : i64, tpu.core_type = #tpu.core_type<tc>, window_params = [{transform_indices = @transform_0, window_bounds = array<i64: 1, 128, 256>}, {transform_indices = @transform_1, window_bounds = array<i64: 1, 1, 256>}, {transform_indices = @transform_2, window_bounds = array<i64: 1, 1, 256>}, {transform_indices = @transform_3, window_bounds = array<i64: 1, 256, 768>}, {transform_indices = @transform_4, window_bounds = array<i64: 1, 1, 768>}, {transform_indices = @transform_5, window_bounds = array<i64: 1, 256, 256>}, {transform_indices = @transform_6, window_bounds = array<i64: 1, 1, 256>}, {transform_indices = @transform_7, window_bounds = array<i64: 1, 1, 256>}, {transform_indices = @transform_8, window_bounds = array<i64: 1, 1, 256>}, {transform_indices = @transform_9, window_bounds = array<i64: 1, 256, 1024>}, {transform_indices = @transform_10, window_bounds = array<i64: 1, 1, 1024>}, {transform_indices = @transform_11, window_bounds = array<i64: 1, 1024, 256>}, {transform_indices = @transform_12, window_bounds = array<i64: 1, 1, 256>}, {transform_indices = @transform_13, window_bounds = array<i64: 1, 128, 256>}]} {
    %c0_i32 = arith.constant 0 : i32
    %0 = arith.cmpi eq, %arg1, %c0_i32 : i32
    %1 = arith.extui %0 : i1 to i32
    %c0_i32_0 = arith.constant 0 : i32
    %2 = arith.cmpi ne, %1, %c0_i32_0 : i32
    scf.if %2 {
      %c0_71 = arith.constant 0 : index
      %c0_72 = arith.constant 0 : index
      %c0_73 = arith.constant 0 : index
      %147 = vector.load %arg2[%c0_71, %c0_72, %c0_73] : memref<1x128x256xf32, #tpu.memory_space<vmem>>, vector<1x128x256xf32>
      %148 = vector.shape_cast %147 : vector<1x128x256xf32> to vector<128x256xf32>
      %c0_74 = arith.constant 0 : index
      %c0_75 = arith.constant 0 : index
      %c0_76 = arith.constant 0 : index
      %149 = vector.load %arg15[%c0_74, %c0_75, %c0_76] : memref<1x128x256xf32, #tpu.memory_space<vmem>>, vector<1x128x256xf32>
      %150 = vector.shape_cast %149 : vector<1x128x256xf32> to vector<128x256xf32>
      %151 = vector.shape_cast %148 : vector<128x256xf32> to vector<1x128x256xf32>
      tpu.vector_store %arg15[%c0_74, %c0_75, %c0_76], %151 {strides = array<i32>} : memref<1x128x256xf32, #tpu.memory_space<vmem>>, vector<1x128x256xf32>,
    } else {
    }
    %c0 = arith.constant 0 : index
    %c0_1 = arith.constant 0 : index
    %c0_2 = arith.constant 0 : index
    %3 = vector.load %arg15[%c0, %c0_1, %c0_2] : memref<1x128x256xf32, #tpu.memory_space<vmem>>, vector<1x128x256xf32>
    %4 = vector.shape_cast %3 : vector<1x128x256xf32> to vector<128x256xf32>
    %c0_3 = arith.constant 0 : index
    %c0_4 = arith.constant 0 : index
    %c0_5 = arith.constant 0 : index
    %5 = vector.load %arg3[%c0_3, %c0_4, %c0_5] : memref<1x1x256xf32, #tpu.memory_space<vmem>>, vector<1x1x256xf32>
    %6 = vector.shape_cast %5 : vector<1x1x256xf32> to vector<1x256xf32>
    %c0_6 = arith.constant 0 : index
    %c0_7 = arith.constant 0 : index
    %c0_8 = arith.constant 0 : index
    %7 = vector.load %arg4[%c0_6, %c0_7, %c0_8] : memref<1x1x256xf32, #tpu.memory_space<vmem>>, vector<1x1x256xf32>
    %8 = vector.shape_cast %7 : vector<1x1x256xf32> to vector<1x256xf32>
    %cst = arith.constant dense<0.000000e+00> : vector<128xf32>
    %9 = vector.multi_reduction <add>, %4, %cst [1] : vector<128x256xf32> to vector<128xf32>
    %10 = vector.shape_cast %9 : vector<128xf32> to vector<128x1xf32>
    %cst_9 = arith.constant 2.560000e+02 : f32
    %11 = vector.broadcast %cst_9 : f32 to vector<128x1xf32>
    %12 = arith.divf %10, %11 : vector<128x1xf32>
    %13 = vector.broadcast %12 : vector<128x1xf32> to vector<128x256xf32>
    %14 = arith.subf %4, %13 : vector<128x256xf32>
    %15 = arith.mulf %14, %14 : vector<128x256xf32>
    %cst_10 = arith.constant dense<0.000000e+00> : vector<128xf32>
    %16 = vector.multi_reduction <add>, %15, %cst_10 [1] : vector<128x256xf32> to vector<128xf32>
    %17 = vector.shape_cast %16 : vector<128xf32> to vector<128x1xf32>
    %cst_11 = arith.constant 2.560000e+02 : f32
    %18 = vector.broadcast %cst_11 : f32 to vector<128x1xf32>
    %19 = arith.divf %17, %18 : vector<128x1xf32>
    %20 = vector.broadcast %12 : vector<128x1xf32> to vector<128x256xf32>
    %21 = arith.subf %4, %20 : vector<128x256xf32>
    %cst_12 = arith.constant 9.99999974E-6 : f32
    %22 = vector.broadcast %cst_12 : f32 to vector<128x1xf32>
    %23 = arith.addf %19, %22 : vector<128x1xf32>
    %24 = math.rsqrt %23 : vector<128x1xf32>
    %25 = vector.broadcast %24 : vector<128x1xf32> to vector<128x256xf32>
    %26 = arith.mulf %21, %25 : vector<128x256xf32>
    %27 = vector.broadcast %6 : vector<1x256xf32> to vector<128x256xf32>
    %28 = arith.mulf %26, %27 : vector<128x256xf32>
    %29 = vector.broadcast %8 : vector<1x256xf32> to vector<128x256xf32>
    %30 = arith.addf %28, %29 : vector<128x256xf32>
    %c0_13 = arith.constant 0 : index
    %c0_14 = arith.constant 0 : index
    %c0_15 = arith.constant 0 : index
    %31 = vector.load %arg5[%c0_13, %c0_14, %c0_15] : memref<1x256x768xf32, #tpu.memory_space<vmem>>, vector<1x256x768xf32>
    %32 = vector.shape_cast %31 : vector<1x256x768xf32> to vector<256x768xf32>
    %cst_16 = arith.constant dense<0.000000e+00> : vector<128x768xf32>
    %33 = tpu.matmul %30, %32, %cst_16 {dimension_numbers = #tpu.dot_dimension_numbers<[1], [0], [0], [1], [0, 0, 1, 1], [], []>} : vector<128x256xf32>, vector<256x768xf32>, vector<128x768xf32> -> vector<128x768xf32>
    %c0_17 = arith.constant 0 : index
    %c0_18 = arith.constant 0 : index
    %c0_19 = arith.constant 0 : index
    %34 = vector.load %arg6[%c0_17, %c0_18, %c0_19] : memref<1x1x768xf32, #tpu.memory_space<vmem>>, vector<1x1x768xf32>
    %35 = vector.shape_cast %34 : vector<1x1x768xf32> to vector<1x768xf32>
    %36 = vector.broadcast %35 : vector<1x768xf32> to vector<128x768xf32>
    %37 = arith.addf %33, %36 : vector<128x768xf32>
    %38 = tpu.iota {dimensions = array<i32: 0>} : vector<128x128xi32>
    %39 = tpu.iota {dimensions = array<i32: 1>} : vector<128x128xi32>
    %40 = arith.cmpi sge, %38, %39 : vector<128x128xi32>
    %cst_20 = arith.constant 0.000000e+00 : f32
    %cst_21 = arith.constant -1.000000e+30 : f32
    %41 = vector.broadcast %cst_20 : f32 to vector<128x128xf32>
    %42 = vector.broadcast %cst_21 : f32 to vector<128x128xf32>
    %43 = arith.select %40, %41, %42 : vector<128x128xi1>, vector<128x128xf32>
    %44 = vector.extract_strided_slice %37 {offsets = [0, 0], sizes = [128, 128], strides = [1, 1]} : vector<128x768xf32> to vector<128x128xf32>
    %45 = vector.extract_strided_slice %37 {offsets = [0, 256], sizes = [128, 128], strides = [1, 1]} : vector<128x768xf32> to vector<128x128xf32>
    %46 = vector.extract_strided_slice %37 {offsets = [0, 512], sizes = [128, 128], strides = [1, 1]} : vector<128x768xf32> to vector<128x128xf32>
    %47 = tpu.transpose %45, [1, 0] : vector<128x128xf32> -> vector<128x128xf32>
    %cst_22 = arith.constant dense<0.000000e+00> : vector<128x128xf32>
    %48 = tpu.matmul %44, %47, %cst_22 {dimension_numbers = #tpu.dot_dimension_numbers<[1], [0], [0], [1], [0, 0, 1, 1], [], []>} : vector<128x128xf32>, vector<128x128xf32>, vector<128x128xf32> -> vector<128x128xf32>
    %cst_23 = arith.constant 6.250000e-02 : f32
    %49 = vector.broadcast %cst_23 : f32 to vector<128x128xf32>
    %50 = arith.mulf %48, %49 : vector<128x128xf32>
    %51 = arith.addf %50, %43 : vector<128x128xf32>
    %cst_24 = arith.constant dense<0xFF800000> : vector<128xf32>
    %52 = vector.multi_reduction <maximumf>, %51, %cst_24 [1] : vector<128x128xf32> to vector<128xf32>
    %53 = vector.shape_cast %52 : vector<128xf32> to vector<128x1xf32>
    %54 = vector.broadcast %53 : vector<128x1xf32> to vector<128x128xf32>
    %55 = arith.subf %51, %54 : vector<128x128xf32>
    %56 = math.exp %55 : vector<128x128xf32>
    %cst_25 = arith.constant dense<0.000000e+00> : vector<128xf32>
    %57 = vector.multi_reduction <add>, %56, %cst_25 [1] : vector<128x128xf32> to vector<128xf32>
    %58 = vector.shape_cast %57 : vector<128xf32> to vector<128x1xf32>
    %59 = tpu.reciprocal %58 : vector<128x1xf32> -> vector<128x1xf32>
    %60 = vector.broadcast %59 : vector<128x1xf32> to vector<128x128xf32>
    %61 = arith.mulf %56, %60 : vector<128x128xf32>
    %cst_26 = arith.constant dense<0.000000e+00> : vector<128x128xf32>
    %62 = tpu.matmul %61, %46, %cst_26 {dimension_numbers = #tpu.dot_dimension_numbers<[1], [0], [0], [1], [0, 0, 1, 1], [], []>} : vector<128x128xf32>, vector<128x128xf32>, vector<128x128xf32> -> vector<128x128xf32>
    %63 = vector.extract_strided_slice %37 {offsets = [0, 128], sizes = [128, 128], strides = [1, 1]} : vector<128x768xf32> to vector<128x128xf32>
    %64 = vector.extract_strided_slice %37 {offsets = [0, 384], sizes = [128, 128], strides = [1, 1]} : vector<128x768xf32> to vector<128x128xf32>
    %65 = vector.extract_strided_slice %37 {offsets = [0, 640], sizes = [128, 128], strides = [1, 1]} : vector<128x768xf32> to vector<128x128xf32>
    %66 = tpu.transpose %64, [1, 0] : vector<128x128xf32> -> vector<128x128xf32>
    %cst_27 = arith.constant dense<0.000000e+00> : vector<128x128xf32>
    %67 = tpu.matmul %63, %66, %cst_27 {dimension_numbers = #tpu.dot_dimension_numbers<[1], [0], [0], [1], [0, 0, 1, 1], [], []>} : vector<128x128xf32>, vector<128x128xf32>, vector<128x128xf32> -> vector<128x128xf32>
    %cst_28 = arith.constant 6.250000e-02 : f32
    %68 = vector.broadcast %cst_28 : f32 to vector<128x128xf32>
    %69 = arith.mulf %67, %68 : vector<128x128xf32>
    %70 = arith.addf %69, %43 : vector<128x128xf32>
    %cst_29 = arith.constant dense<0xFF800000> : vector<128xf32>
    %71 = vector.multi_reduction <maximumf>, %70, %cst_29 [1] : vector<128x128xf32> to vector<128xf32>
    %72 = vector.shape_cast %71 : vector<128xf32> to vector<128x1xf32>
    %73 = vector.broadcast %72 : vector<128x1xf32> to vector<128x128xf32>
    %74 = arith.subf %70, %73 : vector<128x128xf32>
    %75 = math.exp %74 : vector<128x128xf32>
    %cst_30 = arith.constant dense<0.000000e+00> : vector<128xf32>
    %76 = vector.multi_reduction <add>, %75, %cst_30 [1] : vector<128x128xf32> to vector<128xf32>
    %77 = vector.shape_cast %76 : vector<128xf32> to vector<128x1xf32>
    %78 = tpu.reciprocal %77 : vector<128x1xf32> -> vector<128x1xf32>
    %79 = vector.broadcast %78 : vector<128x1xf32> to vector<128x128xf32>
    %80 = arith.mulf %75, %79 : vector<128x128xf32>
    %cst_31 = arith.constant dense<0.000000e+00> : vector<128x128xf32>
    %81 = tpu.matmul %80, %65, %cst_31 {dimension_numbers = #tpu.dot_dimension_numbers<[1], [0], [0], [1], [0, 0, 1, 1], [], []>} : vector<128x128xf32>, vector<128x128xf32>, vector<128x128xf32> -> vector<128x128xf32>
    %82 = tpu.concatenate %62, %81 in 1 : vector<128x128xf32>, vector<128x128xf32> -> vector<128x256xf32>
    %c0_32 = arith.constant 0 : index
    %c0_33 = arith.constant 0 : index
    %c0_34 = arith.constant 0 : index
    %83 = vector.load %arg7[%c0_32, %c0_33, %c0_34] : memref<1x256x256xf32, #tpu.memory_space<vmem>>, vector<1x256x256xf32>
    %84 = vector.shape_cast %83 : vector<1x256x256xf32> to vector<256x256xf32>
    %cst_35 = arith.constant dense<0.000000e+00> : vector<128x256xf32>
    %85 = tpu.matmul %82, %84, %cst_35 {dimension_numbers = #tpu.dot_dimension_numbers<[1], [0], [0], [1], [0, 0, 1, 1], [], []>} : vector<128x256xf32>, vector<256x256xf32>, vector<128x256xf32> -> vector<128x256xf32>
    %c0_36 = arith.constant 0 : index
    %c0_37 = arith.constant 0 : index
    %c0_38 = arith.constant 0 : index
    %86 = vector.load %arg8[%c0_36, %c0_37, %c0_38] : memref<1x1x256xf32, #tpu.memory_space<vmem>>, vector<1x1x256xf32>
    %87 = vector.shape_cast %86 : vector<1x1x256xf32> to vector<1x256xf32>
    %88 = vector.broadcast %87 : vector<1x256xf32> to vector<128x256xf32>
    %89 = arith.addf %85, %88 : vector<128x256xf32>
    %90 = arith.addf %4, %89 : vector<128x256xf32>
    %c0_39 = arith.constant 0 : index
    %c0_40 = arith.constant 0 : index
    %c0_41 = arith.constant 0 : index
    %91 = vector.load %arg9[%c0_39, %c0_40, %c0_41] : memref<1x1x256xf32, #tpu.memory_space<vmem>>, vector<1x1x256xf32>
    %92 = vector.shape_cast %91 : vector<1x1x256xf32> to vector<1x256xf32>
    %c0_42 = arith.constant 0 : index
    %c0_43 = arith.constant 0 : index
    %c0_44 = arith.constant 0 : index
    %93 = vector.load %arg10[%c0_42, %c0_43, %c0_44] : memref<1x1x256xf32, #tpu.memory_space<vmem>>, vector<1x1x256xf32>
    %94 = vector.shape_cast %93 : vector<1x1x256xf32> to vector<1x256xf32>
    %cst_45 = arith.constant dense<0.000000e+00> : vector<128xf32>
    %95 = vector.multi_reduction <add>, %90, %cst_45 [1] : vector<128x256xf32> to vector<128xf32>
    %96 = vector.shape_cast %95 : vector<128xf32> to vector<128x1xf32>
    %cst_46 = arith.constant 2.560000e+02 : f32
    %97 = vector.broadcast %cst_46 : f32 to vector<128x1xf32>
    %98 = arith.divf %96, %97 : vector<128x1xf32>
    %99 = vector.broadcast %98 : vector<128x1xf32> to vector<128x256xf32>
    %100 = arith.subf %90, %99 : vector<128x256xf32>
    %101 = arith.mulf %100, %100 : vector<128x256xf32>
    %cst_47 = arith.constant dense<0.000000e+00> : vector<128xf32>
    %102 = vector.multi_reduction <add>, %101, %cst_47 [1] : vector<128x256xf32> to vector<128xf32>
    %103 = vector.shape_cast %102 : vector<128xf32> to vector<128x1xf32>
    %cst_48 = arith.constant 2.560000e+02 : f32
    %104 = vector.broadcast %cst_48 : f32 to vector<128x1xf32>
    %105 = arith.divf %103, %104 : vector<128x1xf32>
    %106 = vector.broadcast %98 : vector<128x1xf32> to vector<128x256xf32>
    %107 = arith.subf %90, %106 : vector<128x256xf32>
    %cst_49 = arith.constant 9.99999974E-6 : f32
    %108 = vector.broadcast %cst_49 : f32 to vector<128x1xf32>
    %109 = arith.addf %105, %108 : vector<128x1xf32>
    %110 = math.rsqrt %109 : vector<128x1xf32>
    %111 = vector.broadcast %110 : vector<128x1xf32> to vector<128x256xf32>
    %112 = arith.mulf %107, %111 : vector<128x256xf32>
    %113 = vector.broadcast %92 : vector<1x256xf32> to vector<128x256xf32>
    %114 = arith.mulf %112, %113 : vector<128x256xf32>
    %115 = vector.broadcast %94 : vector<1x256xf32> to vector<128x256xf32>
    %116 = arith.addf %114, %115 : vector<128x256xf32>
    %c0_50 = arith.constant 0 : index
    %c0_51 = arith.constant 0 : index
    %c0_52 = arith.constant 0 : index
    %117 = vector.load %arg11[%c0_50, %c0_51, %c0_52] : memref<1x256x1024xf32, #tpu.memory_space<vmem>>, vector<1x256x1024xf32>
    %118 = vector.shape_cast %117 : vector<1x256x1024xf32> to vector<256x1024xf32>
    %cst_53 = arith.constant dense<0.000000e+00> : vector<128x1024xf32>
    %119 = tpu.matmul %116, %118, %cst_53 {dimension_numbers = #tpu.dot_dimension_numbers<[1], [0], [0], [1], [0, 0, 1, 1], [], []>} : vector<128x256xf32>, vector<256x1024xf32>, vector<128x1024xf32> -> vector<128x1024xf32>
    %c0_54 = arith.constant 0 : index
    %c0_55 = arith.constant 0 : index
    %c0_56 = arith.constant 0 : index
    %120 = vector.load %arg12[%c0_54, %c0_55, %c0_56] : memref<1x1x1024xf32, #tpu.memory_space<vmem>>, vector<1x1x1024xf32>
    %121 = vector.shape_cast %120 : vector<1x1x1024xf32> to vector<1x1024xf32>
    %122 = vector.broadcast %121 : vector<1x1024xf32> to vector<128x1024xf32>
    %123 = arith.addf %119, %122 : vector<128x1024xf32>
    %cst_57 = arith.constant 5.000000e-01 : f32
    %124 = vector.broadcast %cst_57 : f32 to vector<128x1024xf32>
    %125 = arith.mulf %124, %123 : vector<128x1024xf32>
    %cst_58 = arith.constant 4.471500e-02 : f32
    %126 = vector.broadcast %cst_58 : f32 to vector<128x1024xf32>
    %127 = arith.mulf %126, %123 : vector<128x1024xf32>
    %128 = arith.mulf %127, %123 : vector<128x1024xf32>
    %129 = arith.mulf %128, %123 : vector<128x1024xf32>
    %130 = arith.addf %123, %129 : vector<128x1024xf32>
    %cst_59 = arith.constant 0.662852466 : f32
    %131 = vector.broadcast %cst_59 : f32 to vector<128x1024xf32>
    %132 = arith.mulf %131, %130 : vector<128x1024xf32>
    %cst_60 = arith.constant 1.000000e+00 : f32
    %133 = vector.broadcast %cst_60 : f32 to vector<128x1024xf32>
    %134 = arith.addf %133, %132 : vector<128x1024xf32>
    %135 = arith.mulf %125, %134 : vector<128x1024xf32>
    %c0_61 = arith.constant 0 : index
    %c0_62 = arith.constant 0 : index
    %c0_63 = arith.constant 0 : index
    %136 = vector.load %arg13[%c0_61, %c0_62, %c0_63] : memref<1x1024x256xf32, #tpu.memory_space<vmem>>, vector<1x1024x256xf32>
    %137 = vector.shape_cast %136 : vector<1x1024x256xf32> to vector<1024x256xf32>
    %cst_64 = arith.constant dense<0.000000e+00> : vector<128x256xf32>
    %138 = tpu.matmul %135, %137, %cst_64 {dimension_numbers = #tpu.dot_dimension_numbers<[1], [0], [0], [1], [0, 0, 1, 1], [], []>} : vector<128x1024xf32>, vector<1024x256xf32>, vector<128x256xf32> -> vector<128x256xf32>
    %c0_65 = arith.constant 0 : index
    %c0_66 = arith.constant 0 : index
    %c0_67 = arith.constant 0 : index
    %139 = vector.load %arg14[%c0_65, %c0_66, %c0_67] : memref<1x1x256xf32, #tpu.memory_space<vmem>>, vector<1x1x256xf32>
    %140 = vector.shape_cast %139 : vector<1x1x256xf32> to vector<1x256xf32>
    %141 = vector.broadcast %140 : vector<1x256xf32> to vector<128x256xf32>
    %142 = arith.addf %138, %141 : vector<128x256xf32>
    %143 = arith.addf %116, %142 : vector<128x256xf32>
    %c0_68 = arith.constant 0 : index
    %c0_69 = arith.constant 0 : index
    %c0_70 = arith.constant 0 : index
    %144 = vector.load %arg15[%c0_68, %c0_69, %c0_70] : memref<1x128x256xf32, #tpu.memory_space<vmem>>, vector<1x128x256xf32>
    %145 = vector.shape_cast %144 : vector<1x128x256xf32> to vector<128x256xf32>
    %146 = vector.shape_cast %143 : vector<128x256xf32> to vector<1x128x256xf32>
    tpu.vector_store %arg15[%c0_68, %c0_69, %c0_70], %146 {strides = array<i32>} : memref<1x128x256xf32, #tpu.memory_space<vmem>>, vector<1x128x256xf32>,
    return
  }
  func.func @transform_0(%arg0: i32, %arg1: i32) -> (i32, i32, i32) {
    %c0_i32 = arith.constant 0 : i32
    %c0_i32_0 = arith.constant 0 : i32
    %c0_i32_1 = arith.constant 0 : i32
    return %arg0, %c0_i32, %c0_i32_0 : i32, i32, i32
  }
  func.func @transform_1(%arg0: i32, %arg1: i32) -> (i32, i32, i32) {
    %c0_i32 = arith.constant 0 : i32
    %c0_i32_0 = arith.constant 0 : i32
    %c0_i32_1 = arith.constant 0 : i32
    return %arg1, %c0_i32, %c0_i32_0 : i32, i32, i32
  }
  func.func @transform_2(%arg0: i32, %arg1: i32) -> (i32, i32, i32) {
    %c0_i32 = arith.constant 0 : i32
    %c0_i32_0 = arith.constant 0 : i32
    %c0_i32_1 = arith.constant 0 : i32
    return %arg1, %c0_i32, %c0_i32_0 : i32, i32, i32
  }
  func.func @transform_3(%arg0: i32, %arg1: i32) -> (i32, i32, i32) {
    %c0_i32 = arith.constant 0 : i32
    %c0_i32_0 = arith.constant 0 : i32
    %c0_i32_1 = arith.constant 0 : i32
    return %arg1, %c0_i32, %c0_i32_0 : i32, i32, i32
  }
  func.func @transform_4(%arg0: i32, %arg1: i32) -> (i32, i32, i32) {
    %c0_i32 = arith.constant 0 : i32
    %c0_i32_0 = arith.constant 0 : i32
    %c0_i32_1 = arith.constant 0 : i32
    return %arg1, %c0_i32, %c0_i32_0 : i32, i32, i32
  }
  func.func @transform_5(%arg0: i32, %arg1: i32) -> (i32, i32, i32) {
    %c0_i32 = arith.constant 0 : i32
    %c0_i32_0 = arith.constant 0 : i32
    %c0_i32_1 = arith.constant 0 : i32
    return %arg1, %c0_i32, %c0_i32_0 : i32, i32, i32
  }
  func.func @transform_6(%arg0: i32, %arg1: i32) -> (i32, i32, i32) {
    %c0_i32 = arith.constant 0 : i32
    %c0_i32_0 = arith.constant 0 : i32
    %c0_i32_1 = arith.constant 0 : i32
    return %arg1, %c0_i32, %c0_i32_0 : i32, i32, i32
  }
  func.func @transform_7(%arg0: i32, %arg1: i32) -> (i32, i32, i32) {
    %c0_i32 = arith.constant 0 : i32
    %c0_i32_0 = arith.constant 0 : i32
    %c0_i32_1 = arith.constant 0 : i32
    return %arg1, %c0_i32, %c0_i32_0 : i32, i32, i32
  }
  func.func @transform_8(%arg0: i32, %arg1: i32) -> (i32, i32, i32) {
    %c0_i32 = arith.constant 0 : i32
    %c0_i32_0 = arith.constant 0 : i32
    %c0_i32_1 = arith.constant 0 : i32
    return %arg1, %c0_i32, %c0_i32_0 : i32, i32, i32
  }
  func.func @transform_9(%arg0: i32, %arg1: i32) -> (i32, i32, i32) {
    %c0_i32 = arith.constant 0 : i32
    %c0_i32_0 = arith.constant 0 : i32
    %c0_i32_1 = arith.constant 0 : i32
    return %arg1, %c0_i32, %c0_i32_0 : i32, i32, i32
  }
  func.func @transform_10(%arg0: i32, %arg1: i32) -> (i32, i32, i32) {
    %c0_i32 = arith.constant 0 : i32
    %c0_i32_0 = arith.constant 0 : i32
    %c0_i32_1 = arith.constant 0 : i32
    return %arg1, %c0_i32, %c0_i32_0 : i32, i32, i32
  }
  func.func @transform_11(%arg0: i32, %arg1: i32) -> (i32, i32, i32) {
    %c0_i32 = arith.constant 0 : i32
    %c0_i32_0 = arith.constant 0 : i32
    %c0_i32_1 = arith.constant 0 : i32
    return %arg1, %c0_i32, %c0_i32_0 : i32, i32, i32
  }
  func.func @transform_12(%arg0: i32, %arg1: i32) -> (i32, i32, i32) {
    %c0_i32 = arith.constant 0 : i32
    %c0_i32_0 = arith.constant 0 : i32
    %c0_i32_1 = arith.constant 0 : i32
    return %arg1, %c0_i32, %c0_i32_0 : i32, i32, i32
  }
  func.func @transform_13(%arg0: i32, %arg1: i32) -> (i32, i32, i32) {
    %c0_i32 = arith.constant 0 : i32
    %c0_i32_0 = arith.constant 0 : i32
    %c0_i32_1 = arith.constant 0 : i32
    return %arg0, %c0_i32, %c0_i32_0 : i32, i32, i32
  }
}

</mosaic_0001>

<llo_original>
// kernel: gpt_forward.3
$region0: #{gpt_forward.3}
  #allocation0 [shape = 'u32[]', space=smem, size = 0x4, offset = 0x4, fixed_abs, tag = 'smem constant byte address 0x4 - core index']
  #allocation1 [shape = 'u32[72,128]{1,0:T(1,128)}', space=vmem, size = 0x9000, scoped, tag = 'internal scratch']
  %s0 = inlined_call_operand.vmem [shape: f32[2,128,256], index: 0, kind: input, shape index: {}]
  %s1 = inlined_call_operand.vmem [shape: f32[1,256], index: 1, kind: input, shape index: {}]
  %s2 = inlined_call_operand.vmem [shape: f32[1,256], index: 2, kind: input, shape index: {}]
  %s3 = inlined_call_operand.hbm [shape: f32[256,512], index: 3, kind: input, shape index: {}]
  %s4 = inlined_call_operand.vmem [shape: f32[1,512], index: 4, kind: input, shape index: {}]
  %s5 = inlined_call_operand.hbm [shape: f32[2,128,512], index: 5, kind: output, shape index: {}]
  %s6 = sld [smem:[#allocation0]]
  $region57: #{gpt_forward.3} parent=0
    _
  %s8 = ssub.s32 1, %s6
  %s9 = scalar_select 0, %s8, %s6
  $region1: #{gpt_forward.3} parent=0
    #allocation2 [shape = 'u8[524288]{0}', space=vmem, size = 0x80000, scoped, tag = 'input window, operand 3']
    #allocation3 [shape = 's32[2]{0}', space=sflag, size = 0x8, scoped, tag = 'scoped memory for gpt_forward.3']
    #allocation4 [shape = 's32[2]{0}', space=sflag, size = 0x8, scoped, tag = 'scoped memory for gpt_forward.3']
    #allocation5 [shape = 'u8[262144]{0}', space=vmem, size = 0x40000, scoped, tag = 'output window, operand 0']
    %10 = vsyncpa [#allocation3], 0
    %s11 = scalar_lea.sflag [#allocation3], 1
    %12 = vsyncpa %s11, 0
    %13 = vsyncpa [#allocation4], 0
    %s14 = scalar_lea.sflag [#allocation4], 1
    %15 = vsyncpa %s14, 0
    loop: start=0, step=1, limit=6
    $region2: #{gpt_forward.3} parent=1 // loop_pre_header
      _
    $region3: #{gpt_forward.3} parent=1 // loop_header
      %s17 = sphi 0, %s21
      %p18 = scmp.ge.s32.totalorder %s17, 6
      %s24 = sphi 0, %s36
      %s25 = sphi 0, %s32
      %s26 = sphi 0, %s24
      %s27 = sphi 0, %s25
      %s28 = sphi 0, %s26
      %s29 = sphi 0, %s27
      %s39 = sphi 0, %s41
      %s42 = sphi 0, %s39
      %s43 = sphi 0, %s42
      %s59 = sphi 0, %s43
      %s63 = sphi 0, %s63
      %s65 = sphi 0, %s63
      %s66 = sphi 0, %s65
      %s80 = sphi 0, %s66
      %s84 = sphi 0, %s84
      %s86 = sphi 0, %s84
      %s87 = sphi 0, %s86
      %s101 = sphi 0, %s87
      %s107 = sphi 0, %s109
      %s110 = sphi 0, %s107
      %s111 = sphi 0, %s110
      %s127 = sphi 0, %s111
      %s133 = sphi 0, %s135
      %s136 = sphi 0, %s133
      %s137 = sphi 0, %s136
      %s153 = sphi 0, %s137
      %s161 = sphi 0, %s163
      %s164 = sphi 0, %s161
      %s165 = sphi 0, %s164
      %s181 = sphi 0, %s165
    $region4: #{gpt_forward.3} parent=1 // loop_header_branch
      %20 = sbr.rel (%p18) target = $region8
    $region5: #{gpt_forward.3} parent=1 // loop_body
      %s22 = ssub.s32 %s17, 1
      %s23 = ssub.s32 %s17, 2
      %s30 = sadd.s32 1, %s25
      %p31 = scmp.ge.s32.totalorder %s30, 2
      %s32 = scalar_select %p31, 0, %s30
      %s33 = sadd.s32 1, %s24
      %s34 = scalar_select %p31, %s33, %s24
      %p35 = scmp.ge.s32.totalorder %s34, 2
      %s36 = scalar_select %p35, 0, %s34
      %s37 = ssub.s32 %s24, %s36
      %p38 = scmp.eq.s32.totalorder %s37, 0
      %s40 = sadd.s32 %s39, 1
      %s41 = scalar_select %p38, %s39, %s40
      %p44 = pneg %p38
      %p45 = scmp.eq.s32.totalorder %s17, 3
      %p46 = por %p44, %p45
      %p47 = scmp.ne.s32.totalorder %s39, %s42
      %p48 = scmp.eq.s32.totalorder %s17, 0
      %p49 = por %p47, %p48
      %p50 = scmp.ne.s32.totalorder %s39, %s42
      %p51 = scmp.eq.s32.totalorder %s22, 3
      %p52 = por %p50, %p51
      %p53 = scmp.ne.s32.totalorder %s42, %s43
      %p54 = scmp.eq.s32.totalorder %s22, 0
      %p55 = por %p53, %p54
      %p56 = scmp.ne.s32.totalorder %s42, %s43
      %p57 = scmp.eq.s32.totalorder %s23, 3
      %p58 = por %p56, %p57
      %p60 = scmp.ne.s32.totalorder %s43, %s59
      %p61 = scmp.eq.s32.totalorder %s23, 0
      %p62 = por %p60, %p61
      %s64 = sadd.s32 %s63, 1
      %p67 = scmp.eq.s32.totalorder %s17, 3
      %p68 = scmp.ne.s32.totalorder %s63, %s65
      %p69 = scmp.eq.s32.totalorder %s17, 0
      %p70 = por %p68, %p69
      %p71 = scmp.ne.s32.totalorder %s63, %s65
      %p72 = scmp.eq.s32.totalorder %s22, 3
      %p73 = por %p71, %p72
      %p74 = scmp.ne.s32.totalorder %s65, %s66
      %p75 = scmp.eq.s32.totalorder %s22, 0
      %p76 = por %p74, %p75
      %p77 = scmp.ne.s32.totalorder %s65, %s66
      %p78 = scmp.eq.s32.totalorder %s23, 3
      %p79 = por %p77, %p78
      %p81 = scmp.ne.s32.totalorder %s66, %s80
      %p82 = scmp.eq.s32.totalorder %s23, 0
      %p83 = por %p81, %p82
      %s85 = sadd.s32 %s84, 1
      %p88 = scmp.eq.s32.totalorder %s17, 3
      %p89 = scmp.ne.s32.totalorder %s84, %s86
      %p90 = scmp.eq.s32.totalorder %s17, 0
      %p91 = por %p89, %p90
      %p92 = scmp.ne.s32.totalorder %s84, %s86
      %p93 = scmp.eq.s32.totalorder %s22, 3
      %p94 = por %p92, %p93
      %p95 = scmp.ne.s32.totalorder %s86, %s87
      %p96 = scmp.eq.s32.totalorder %s22, 0
      %p97 = por %p95, %p96
      %p98 = scmp.ne.s32.totalorder %s86, %s87
      %p99 = scmp.eq.s32.totalorder %s23, 3
      %p100 = por %p98, %p99
      %p102 = scmp.ne.s32.totalorder %s87, %s101
      %p103 = scmp.eq.s32.totalorder %s23, 0
      %p104 = por %p102, %p103
      %s105 = ssub.s32 %s25, %s32
      %p106 = scmp.eq.s32.totalorder %s105, 0
      %s108 = sadd.s32 %s107, 1
      %s109 = scalar_select %p106, %s107, %s108
      %p112 = pneg %p106
      %p113 = scmp.eq.s32.totalorder %s17, 3
      %p114 = por %p112, %p113
      %p115 = scmp.ne.s32.totalorder %s107, %s110
      %p116 = scmp.eq.s32.totalorder %s17, 0
      %p117 = por %p115, %p116
      %p118 = scmp.ne.s32.totalorder %s107, %s110
      %p119 = scmp.eq.s32.totalorder %s22, 3
      %p120 = por %p118, %p119
      %p121 = scmp.ne.s32.totalorder %s110, %s111
      %p122 = scmp.eq.s32.totalorder %s22, 0
      %p123 = por %p121, %p122
      %p124 = scmp.ne.s32.totalorder %s110, %s111
      %p125 = scmp.eq.s32.totalorder %s23, 3
      %p126 = por %p124, %p125
      %p128 = scmp.ne.s32.totalorder %s111, %s127
      %p129 = scmp.eq.s32.totalorder %s23, 0
      %p130 = por %p128, %p129
      %s131 = ssub.s32 %s25, %s32
      %p132 = scmp.eq.s32.totalorder %s131, 0
      %s134 = sadd.s32 %s133, 1
      %s135 = scalar_select %p132, %s133, %s134
      %p138 = pneg %p132
      %p139 = scmp.eq.s32.totalorder %s17, 3
      %p140 = por %p138, %p139
      %p141 = scmp.ne.s32.totalorder %s133, %s136
      %p142 = scmp.eq.s32.totalorder %s17, 0
      %p143 = por %p141, %p142
      %p144 = scmp.ne.s32.totalorder %s133, %s136
      %p145 = scmp.eq.s32.totalorder %s22, 3
      %p146 = por %p144, %p145
      %p147 = scmp.ne.s32.totalorder %s136, %s137
      %p148 = scmp.eq.s32.totalorder %s22, 0
      %p149 = por %p147, %p148
      %p150 = scmp.ne.s32.totalorder %s136, %s137
      %p151 = scmp.eq.s32.totalorder %s23, 3
      %p152 = por %p150, %p151
      %p154 = scmp.ne.s32.totalorder %s137, %s153
      %p155 = scmp.eq.s32.totalorder %s23, 0
      %p156 = por %p154, %p155
      %s157 = ssub.s32 %s24, %s36
      %s158 = ssub.s32 %s25, %s32
      %s159 = sor.u32 %s157, %s158
      %p160 = scmp.eq.s32.totalorder %s159, 0
      %s162 = sadd.s32 %s161, 1
      %s163 = scalar_select %p160, %s161, %s162
      %p166 = pneg %p160
      %p167 = scmp.eq.s32.totalorder %s17, 3
      %p168 = por %p166, %p167
      %p169 = scmp.ne.s32.totalorder %s161, %s164
      %p170 = scmp.eq.s32.totalorder %s17, 0
      %p171 = por %p169, %p170
      %p172 = scmp.ne.s32.totalorder %s161, %s164
      %p173 = scmp.eq.s32.totalorder %s22, 3
      %p174 = por %p172, %p173
      %p175 = scmp.ne.s32.totalorder %s164, %s165
      %p176 = scmp.eq.s32.totalorder %s22, 0
      %p177 = por %p175, %p176
      %p178 = scmp.ne.s32.totalorder %s164, %s165
      %p179 = scmp.eq.s32.totalorder %s23, 3
      %p180 = por %p178, %p179
      %p182 = scmp.ne.s32.totalorder %s165, %s181
      %p183 = scmp.eq.s32.totalorder %s23, 0
      %p184 = por %p182, %p183
      %p185 = scmp.le.s32.totalorder 1, %s17
      %p186 = scmp.lt.s32.totalorder %s17, 5
      %p187 = pnand %p185, %p186
      %p188 = pneg %p187
      // Predicated region
      $region9: #{gpt_forward.3} parent=5 // pred_check
        _
      $region10: #{gpt_forward.3} parent=5 // pred_check_branch
        %190 = sbr.rel (%p187) target = $region12
      $region11: #{gpt_forward.3} parent=5 // pred_region
        %s191 = ssub.s32 %s17, 1
        // Predicated region
        $region13: #{gpt_forward.3} parent=11 // pred_check
          %p192 = pneg %p76
        $region14: #{gpt_forward.3} parent=11 // pred_check_branch
          %194 = sbr.rel (%p192) target = $region16
        $region15: #{gpt_forward.3} parent=11 // pred_region
          _
        $region16: #{gpt_forward.3} parent=11 // pred_fallthru
          _
        // Predicated region
        $region17: #{gpt_forward.3} parent=11 // pred_check
          %p195 = pneg %p97
        $region18: #{gpt_forward.3} parent=11 // pred_check_branch
          %197 = sbr.rel (%p195) target = $region20
        $region19: #{gpt_forward.3} parent=11 // pred_region
          _
        $region20: #{gpt_forward.3} parent=11 // pred_fallthru
          _
      $region12: #{gpt_forward.3} parent=5 // pred_fallthru
        _
      %p198 = scmp.lt.s32.totalorder %s17, 4
      // Predicated region
      $region21: #{gpt_forward.3} parent=5 // pred_check
        %p199 = pneg %p198
      $region22: #{gpt_forward.3} parent=5 // pred_check_branch
        %201 = sbr.rel (%p199) target = $region24
      $region23: #{gpt_forward.3} parent=5 // pred_region
        // Predicated region
        $region25: #{gpt_forward.3} parent=23 // pred_check
          %p202 = pneg %p49
        $region26: #{gpt_forward.3} parent=23 // pred_check_branch
          %204 = sbr.rel (%p202) target = $region28
        $region27: #{gpt_forward.3} parent=23 // pred_region
          %p205 = scmp.lt.s32.totalorder %s24, 1
          %s206 = scalar_select %p205, %s24, 1
          %s207 = smul.addr %s206, 32
          %s208 = smul.addr %s207, 8
          %s209 = scalar_lea.vmem %s0, %s208
        $region28: #{gpt_forward.3} parent=23 // pred_fallthru
          _
        // Predicated region
        $region29: #{gpt_forward.3} parent=23 // pred_check
          %p210 = pneg %p117
        $region30: #{gpt_forward.3} parent=23 // pred_check_branch
          %212 = sbr.rel (%p210) target = $region32
        $region31: #{gpt_forward.3} parent=23 // pred_region
          %s213 = sand.u32 %s107, 1
          %s214 = scalar_lea.sflag [#allocation3], %s213
          %s215 = sand.u32 %s107, 1
          %s216 = smul.addr %s215, 512
          %s217 = scalar_lea.vmem [#allocation2], %s216
          %s218 = smul.u32 2, %s25
          %220 = vsyncadd %s214, 0
          %s221 = smul.addr %s218, 8
          %s222 = scalar_lea.hbm %s3, %s221
          %s223 = sshll.u32 %s222, 4
          %s224 = int_to_ptr.hbm [resolvable:$true] %s223
          %s225 = sshll.u32 %s217, 4
          %s226 = int_to_ptr.vmem [resolvable:$true] %s225
          %231 = dma.hbm_to_vmem [thread:$0]  %s224, 8192, %s226, %s214, 512, 256, 16
        $region32: #{gpt_forward.3} parent=23 // pred_fallthru
          _
        // Predicated region
        $region33: #{gpt_forward.3} parent=23 // pred_check
          %p232 = pneg %p143
        $region34: #{gpt_forward.3} parent=23 // pred_check_branch
          %234 = sbr.rel (%p232) target = $region36
        $region35: #{gpt_forward.3} parent=23 // pred_region
          %s235 = smul.u32 2, %s25
          %p236 = scmp.lt.s32.totalorder %s235, 3
          %s237 = scalar_select %p236, %s235, 3
          %s238 = scalar_lea.vmem %s4, %s237
          %s239 = smul.u32 2, %s25
        $region36: #{gpt_forward.3} parent=23 // pred_fallthru
          _
      $region24: #{gpt_forward.3} parent=5 // pred_fallthru
        _
      %p240 = scmp.le.s32.totalorder 1, %s17
      %p241 = scmp.lt.s32.totalorder %s17, 5
      %p242 = pnand %p240, %p241
      %p243 = pneg %p242
      // Predicated region
      $region37: #{gpt_forward.3} parent=5 // pred_check
        _
      $region38: #{gpt_forward.3} parent=5 // pred_check_branch
        %245 = sbr.rel (%p242) target = $region40
      $region39: #{gpt_forward.3} parent=5 // pred_region
        %s246 = ssub.s32 %s17, 1
        %s247 = sand.u32 %s110, 1
        %s248 = scalar_lea.sflag [#allocation3], %s247
        %s249 = sand.u32 %s110, 1
        %s250 = smul.addr %s249, 512
        %s251 = scalar_lea.vmem [#allocation2], %s250
        // Predicated region
        $region41: #{gpt_forward.3} parent=39 // pred_check
          %p252 = pneg %p123
        $region42: #{gpt_forward.3} parent=39 // pred_check_branch
          %254 = sbr.rel (%p252) target = $region44
        $region43: #{gpt_forward.3} parent=39 // pred_region
          %256 = dma.done %s248, 8192
        $region44: #{gpt_forward.3} parent=39 // pred_fallthru
          _
        %p257 = scmp.lt.s32.totalorder %s26, 1
        %s258 = scalar_select %p257, %s26, 1
        %s259 = smul.addr %s258, 32
        %s260 = smul.addr %s259, 8
        %s261 = scalar_lea.vmem %s0, %s260
        %p262 = pneg %p55
        %p263 = pneg %p52
        %p264 = pneg %p76
        %p265 = pneg %p73
        %p266 = pneg %p97
        %p267 = pneg %p94
        %s268 = sand.u32 %s110, 1
        %s269 = scalar_lea.sflag [#allocation3], %s268
        %s270 = sand.u32 %s110, 1
        %s271 = smul.addr %s270, 512
        %s272 = scalar_lea.vmem [#allocation2], %s271
        %p273 = pneg %p123
        %p274 = pneg %p120
        %s275 = smul.u32 2, %s27
        %p276 = scmp.lt.s32.totalorder %s275, 3
        %s277 = scalar_select %p276, %s275, 3
        %s278 = scalar_lea.vmem %s4, %s277
        %p279 = pneg %p149
        %p280 = pneg %p146
        %p281 = pneg %p177
        %p282 = pneg %p174
        %s283 = sand.u32 %s164, 1
        %s284 = scalar_lea.sflag [#allocation4], %s283
        %s285 = sand.u32 %s164, 1
        %s286 = smul.addr %s285, 256
        %s287 = scalar_lea.vmem [#allocation5], %s286
        %p288 = scmp.lt.s32.totalorder %s26, 1
        %s289 = scalar_select %p288, %s26, 1
        %s290 = smul.addr %s289, 32
        %s291 = smul.addr %s290, 8
        %s292 = scalar_lea.vmem %s0, %s291
        %s293 = smul.u32 2, %s27
        %s294 = smul.u32 2, %s27
        %p295 = scmp.lt.s32.totalorder %s294, 3
        %s296 = scalar_select %p295, %s294, 3
        %s297 = scalar_lea.vmem %s4, %s296
        %s298 = smul.u32 2, %s27
        %s299 = smul.u32 2, %s27
        %v300 = vld [vmem:[%s292] sm:$0xff]
        %v301 = vld [vmem:[%s292 + $0x8] sm:$0xff]
        %v302 = vld [vmem:[%s292 + $0x10] sm:$0xff]
        %v303 = vld [vmem:[%s292 + $0x18] sm:$0xff]
        %v304 = vld [vmem:[%s292 + $0x20] sm:$0xff]
        %v305 = vld [vmem:[%s292 + $0x28] sm:$0xff]
        %v306 = vld [vmem:[%s292 + $0x30] sm:$0xff]
        %v307 = vld [vmem:[%s292 + $0x38] sm:$0xff]
        %v308 = vld [vmem:[%s292 + $0x40] sm:$0xff]
        %v309 = vld [vmem:[%s292 + $0x48] sm:$0xff]
        %v310 = vld [vmem:[%s292 + $0x50] sm:$0xff]
        %v311 = vld [vmem:[%s292 + $0x58] sm:$0xff]
        %v312 = vld [vmem:[%s292 + $0x60] sm:$0xff]
        %v313 = vld [vmem:[%s292 + $0x68] sm:$0xff]
        %v314 = vld [vmem:[%s292 + $0x70] sm:$0xff]
        %v315 = vld [vmem:[%s292 + $0x78] sm:$0xff]
        %v316 = vld [vmem:[%s292 + $0x80] sm:$0xff]
        %v317 = vld [vmem:[%s292 + $0x88] sm:$0xff]
        %v318 = vld [vmem:[%s292 + $0x90] sm:$0xff]
        %v319 = vld [vmem:[%s292 + $0x98] sm:$0xff]
        %v320 = vld [vmem:[%s292 + $0xa0] sm:$0xff]
        %v321 = vld [vmem:[%s292 + $0xa8] sm:$0xff]
        %v322 = vld [vmem:[%s292 + $0xb0] sm:$0xff]
        %v323 = vld [vmem:[%s292 + $0xb8] sm:$0xff]
        %v324 = vld [vmem:[%s292 + $0xc0] sm:$0xff]
        %v325 = vld [vmem:[%s292 + $0xc8] sm:$0xff]
        %v326 = vld [vmem:[%s292 + $0xd0] sm:$0xff]
        %v327 = vld [vmem:[%s292 + $0xd8] sm:$0xff]
        %v328 = vld [vmem:[%s292 + $0xe0] sm:$0xff]
        %v329 = vld [vmem:[%s292 + $0xe8] sm:$0xff]
        %v330 = vld [vmem:[%s292 + $0xf0] sm:$0xff]
        %v331 = vld [vmem:[%s292 + $0xf8] sm:$0xff]
        %v332 = vld [vmem:[%s1] sm:$0x3]
        %v333 = vld [vmem:[%s2] sm:$0x3]
        %v334 = vadd.f32 %v300, %v301
        %335 = vadd.xlane.f32.xlu0 %v334
        %v336 = vpop.xlane.xlu0 %335
        %v337 = vadd.f32 %v302, %v303
        %338 = vadd.xlane.f32.xlu0 %v337
        %v339 = vpop.xlane.xlu0 %338
        %v340 = vadd.f32 %v304, %v305
        %341 = vadd.xlane.f32.xlu0 %v340
        %v342 = vpop.xlane.xlu0 %341
        %v343 = vadd.f32 %v306, %v307
        %344 = vadd.xlane.f32.xlu0 %v343
        %v345 = vpop.xlane.xlu0 %344
        %v346 = vadd.f32 %v308, %v309
        %347 = vadd.xlane.f32.xlu0 %v346
        %v348 = vpop.xlane.xlu0 %347
        %v349 = vadd.f32 %v310, %v311
        %350 = vadd.xlane.f32.xlu0 %v349
        %v351 = vpop.xlane.xlu0 %350
        %v352 = vadd.f32 %v312, %v313
        %353 = vadd.xlane.f32.xlu0 %v352
        %v354 = vpop.xlane.xlu0 %353
        %v355 = vadd.f32 %v314, %v315
        %356 = vadd.xlane.f32.xlu0 %v355
        %v357 = vpop.xlane.xlu0 %356
        %v358 = vadd.f32 %v316, %v317
        %359 = vadd.xlane.f32.xlu0 %v358
        %v360 = vpop.xlane.xlu0 %359
        %v361 = vadd.f32 %v318, %v319
        %362 = vadd.xlane.f32.xlu0 %v361
        %v363 = vpop.xlane.xlu0 %362
        %v364 = vadd.f32 %v320, %v321
        %365 = vadd.xlane.f32.xlu0 %v364
        %v366 = vpop.xlane.xlu0 %365
        %v367 = vadd.f32 %v322, %v323
        %368 = vadd.xlane.f32.xlu0 %v367
        %v369 = vpop.xlane.xlu0 %368
        %v370 = vadd.f32 %v324, %v325
        %371 = vadd.xlane.f32.xlu0 %v370
        %v372 = vpop.xlane.xlu0 %371
        %v373 = vadd.f32 %v326, %v327
        %374 = vadd.xlane.f32.xlu0 %v373
        %v375 = vpop.xlane.xlu0 %374
        %v376 = vadd.f32 %v328, %v329
        %377 = vadd.xlane.f32.xlu0 %v376
        %v378 = vpop.xlane.xlu0 %377
        %v379 = vadd.f32 %v330, %v331
        %380 = vadd.xlane.f32.xlu0 %v379
        %v381 = vpop.xlane.xlu0 %380
        %v382 = vrcp.pop 256.0
        %v383 = vmul.f32 256.0, %v382
        %v384 = vsub.f32 1.0, %v383
        %v385 = vmul.f32 %v382, %v384
        %v386 = vadd.f32 %v382, %v385
        %vm387 = vweird.f32 %v382
        %v388 = vsel %vm387, %v382, %v386
        %v389 = vmul.f32 %v336, %v388
        %v390 = vmul.f32 %v339, %v388
        %v391 = vmul.f32 %v342, %v388
        %v392 = vmul.f32 %v345, %v388
        %v393 = vmul.f32 %v348, %v388
        %v394 = vmul.f32 %v351, %v388
        %v395 = vmul.f32 %v354, %v388
        %v396 = vmul.f32 %v357, %v388
        %v397 = vmul.f32 %v360, %v388
        %v398 = vmul.f32 %v363, %v388
        %v399 = vmul.f32 %v366, %v388
        %v400 = vmul.f32 %v369, %v388
        %v401 = vmul.f32 %v372, %v388
        %v402 = vmul.f32 %v375, %v388
        %v403 = vmul.f32 %v378, %v388
        %v404 = vmul.f32 %v381, %v388
        %v405 = vsub.f32 %v300, %v389
        %v406 = vsub.f32 %v301, %v389
        %v407 = vsub.f32 %v302, %v390
        %v408 = vsub.f32 %v303, %v390
        %v409 = vsub.f32 %v304, %v391
        %v410 = vsub.f32 %v305, %v391
        %v411 = vsub.f32 %v306, %v392
        %v412 = vsub.f32 %v307, %v392
        %v413 = vsub.f32 %v308, %v393
        %v414 = vsub.f32 %v309, %v393
        %v415 = vsub.f32 %v310, %v394
        %v416 = vsub.f32 %v311, %v394
        %v417 = vsub.f32 %v312, %v395
        %v418 = vsub.f32 %v313, %v395
        %v419 = vsub.f32 %v314, %v396
        %v420 = vsub.f32 %v315, %v396
        %v421 = vsub.f32 %v316, %v397
        %v422 = vsub.f32 %v317, %v397
        %v423 = vsub.f32 %v318, %v398
        %v424 = vsub.f32 %v319, %v398
        %v425 = vsub.f32 %v320, %v399
        %v426 = vsub.f32 %v321, %v399
        %v427 = vsub.f32 %v322, %v400
        %v428 = vsub.f32 %v323, %v400
        %v429 = vsub.f32 %v324, %v401
        %v430 = vsub.f32 %v325, %v401
        %v431 = vsub.f32 %v326, %v402
        %v432 = vsub.f32 %v327, %v402
        %v433 = vsub.f32 %v328, %v403
        %v434 = vsub.f32 %v329, %v403
        %v435 = vsub.f32 %v330, %v404
        %v436 = vsub.f32 %v331, %v404
        %v437 = vmul.f32 %v405, %v405
        %v438 = vmul.f32 %v406, %v406
        %v439 = vmul.f32 %v407, %v407
        %v440 = vmul.f32 %v408, %v408
        %v441 = vmul.f32 %v409, %v409
        %v442 = vmul.f32 %v410, %v410
        %v443 = vmul.f32 %v411, %v411
        %v444 = vmul.f32 %v412, %v412
        %v445 = vmul.f32 %v413, %v413
        %v446 = vmul.f32 %v414, %v414
        %v447 = vmul.f32 %v415, %v415
        %v448 = vmul.f32 %v416, %v416
        %v449 = vmul.f32 %v417, %v417
        %v450 = vmul.f32 %v418, %v418
        %v451 = vmul.f32 %v419, %v419
        %v452 = vmul.f32 %v420, %v420
        %v453 = vmul.f32 %v421, %v421
        %v454 = vmul.f32 %v422, %v422
        %v455 = vmul.f32 %v423, %v423
        %v456 = vmul.f32 %v424, %v424
        %v457 = vmul.f32 %v425, %v425
        %v458 = vmul.f32 %v426, %v426
        %v459 = vmul.f32 %v427, %v427
        %v460 = vmul.f32 %v428, %v428
        %v461 = vmul.f32 %v429, %v429
        %v462 = vmul.f32 %v430, %v430
        %v463 = vmul.f32 %v431, %v431
        %v464 = vmul.f32 %v432, %v432
        %v465 = vmul.f32 %v433, %v433
        %v466 = vmul.f32 %v434, %v434
        %v467 = vmul.f32 %v435, %v435
        %v468 = vmul.f32 %v436, %v436
        %v469 = vadd.f32 %v437, %v438
        %470 = vadd.xlane.f32.xlu0 %v469
        %v471 = vpop.xlane.xlu0 %470
        %v472 = vadd.f32 %v439, %v440
        %473 = vadd.xlane.f32.xlu0 %v472
        %v474 = vpop.xlane.xlu0 %473
        %v475 = vadd.f32 %v441, %v442
        %476 = vadd.xlane.f32.xlu0 %v475
        %v477 = vpop.xlane.xlu0 %476
        %v478 = vadd.f32 %v443, %v444
        %479 = vadd.xlane.f32.xlu0 %v478
        %v480 = vpop.xlane.xlu0 %479
        %v481 = vadd.f32 %v445, %v446
        %482 = vadd.xlane.f32.xlu0 %v481
        %v483 = vpop.xlane.xlu0 %482
        %v484 = vadd.f32 %v447, %v448
        %485 = vadd.xlane.f32.xlu0 %v484
        %v486 = vpop.xlane.xlu0 %485
        %v487 = vadd.f32 %v449, %v450
        %488 = vadd.xlane.f32.xlu0 %v487
        %v489 = vpop.xlane.xlu0 %488
        %v490 = vadd.f32 %v451, %v452
        %491 = vadd.xlane.f32.xlu0 %v490
        %v492 = vpop.xlane.xlu0 %491
        %v493 = vadd.f32 %v453, %v454
        %494 = vadd.xlane.f32.xlu0 %v493
        %v495 = vpop.xlane.xlu0 %494
        %v496 = vadd.f32 %v455, %v456
        %497 = vadd.xlane.f32.xlu0 %v496
        %v498 = vpop.xlane.xlu0 %497
        %v499 = vadd.f32 %v457, %v458
        %500 = vadd.xlane.f32.xlu0 %v499
        %v501 = vpop.xlane.xlu0 %500
        %v502 = vadd.f32 %v459, %v460
        %503 = vadd.xlane.f32.xlu0 %v502
        %v504 = vpop.xlane.xlu0 %503
        %v505 = vadd.f32 %v461, %v462
        %506 = vadd.xlane.f32.xlu0 %v505
        %v507 = vpop.xlane.xlu0 %506
        %v508 = vadd.f32 %v463, %v464
        %509 = vadd.xlane.f32.xlu0 %v508
        %v510 = vpop.xlane.xlu0 %509
        %v511 = vadd.f32 %v465, %v466
        %512 = vadd.xlane.f32.xlu0 %v511
        %v513 = vpop.xlane.xlu0 %512
        %v514 = vadd.f32 %v467, %v468
        %515 = vadd.xlane.f32.xlu0 %v514
        %v516 = vpop.xlane.xlu0 %515
        %v517 = vmul.f32 %v471, %v388
        %v518 = vmul.f32 %v474, %v388
        %v519 = vmul.f32 %v477, %v388
        %v520 = vmul.f32 %v480, %v388
        %v521 = vmul.f32 %v483, %v388
        %v522 = vmul.f32 %v486, %v388
        %v523 = vmul.f32 %v489, %v388
        %v524 = vmul.f32 %v492, %v388
        %v525 = vmul.f32 %v495, %v388
        %v526 = vmul.f32 %v498, %v388
        %v527 = vmul.f32 %v501, %v388
        %v528 = vmul.f32 %v504, %v388
        %v529 = vmul.f32 %v507, %v388
        %v530 = vmul.f32 %v510, %v388
        %v531 = vmul.f32 %v513, %v388
        %v532 = vmul.f32 %v516, %v388
        %v533 = vadd.f32 %v517, 1e-05
        %v534 = vadd.f32 %v518, 1e-05
        %v535 = vadd.f32 %v519, 1e-05
        %v536 = vadd.f32 %v520, 1e-05
        %v537 = vadd.f32 %v521, 1e-05
        %v538 = vadd.f32 %v522, 1e-05
        %v539 = vadd.f32 %v523, 1e-05
        %v540 = vadd.f32 %v524, 1e-05
        %v541 = vadd.f32 %v525, 1e-05
        %v542 = vadd.f32 %v526, 1e-05
        %v543 = vadd.f32 %v527, 1e-05
        %v544 = vadd.f32 %v528, 1e-05
        %v545 = vadd.f32 %v529, 1e-05
        %v546 = vadd.f32 %v530, 1e-05
        %v547 = vadd.f32 %v531, 1e-05
        %v548 = vadd.f32 %v532, 1e-05
        %v549 = vrsqrt.pop %v533
        %v550 = vmul.f32 %v549, %v533
        %v551 = vmul.f32 %v550, %v549
        %v552 = vmul.f32 0.5, %v551
        %v553 = vsub.f32 1.5, %v552
        %v554 = vmul.f32 %v549, %v553
        %vm555 = vweird.f32 %v533
        %vm556 = vweird.f32 %v549
        %vm557 = vmor %vm555, %vm556
        %v558 = vsel %vm557, %v549, %v554
        %v559 = vrsqrt.pop %v534
        %v560 = vmul.f32 %v559, %v534
        %v561 = vmul.f32 %v560, %v559
        %v562 = vmul.f32 0.5, %v561
        %v563 = vsub.f32 1.5, %v562
        %v564 = vmul.f32 %v559, %v563
        %vm565 = vweird.f32 %v534
        %vm566 = vweird.f32 %v559
        %vm567 = vmor %vm565, %vm566
        %v568 = vsel %vm567, %v559, %v564
        %v569 = vrsqrt.pop %v535
        %v570 = vmul.f32 %v569, %v535
        %v571 = vmul.f32 %v570, %v569
        %v572 = vmul.f32 0.5, %v571
        %v573 = vsub.f32 1.5, %v572
        %v574 = vmul.f32 %v569, %v573
        %vm575 = vweird.f32 %v535
        %vm576 = vweird.f32 %v569
        %vm577 = vmor %vm575, %vm576
        %v578 = vsel %vm577, %v569, %v574
        %v579 = vrsqrt.pop %v536
        %v580 = vmul.f32 %v579, %v536
        %v581 = vmul.f32 %v580, %v579
        %v582 = vmul.f32 0.5, %v581
        %v583 = vsub.f32 1.5, %v582
        %v584 = vmul.f32 %v579, %v583
        %vm585 = vweird.f32 %v536
        %vm586 = vweird.f32 %v579
        %vm587 = vmor %vm585, %vm586
        %v588 = vsel %vm587, %v579, %v584
        %v589 = vrsqrt.pop %v537
        %v590 = vmul.f32 %v589, %v537
        %v591 = vmul.f32 %v590, %v589
        %v592 = vmul.f32 0.5, %v591
        %v593 = vsub.f32 1.5, %v592
        %v594 = vmul.f32 %v589, %v593
        %vm595 = vweird.f32 %v537
        %vm596 = vweird.f32 %v589
        %vm597 = vmor %vm595, %vm596
        %v598 = vsel %vm597, %v589, %v594
        %v599 = vrsqrt.pop %v538
        %v600 = vmul.f32 %v599, %v538
        %v601 = vmul.f32 %v600, %v599
        %v602 = vmul.f32 0.5, %v601
        %v603 = vsub.f32 1.5, %v602
        %v604 = vmul.f32 %v599, %v603
        %vm605 = vweird.f32 %v538
        %vm606 = vweird.f32 %v599
        %vm607 = vmor %vm605, %vm606
        %v608 = vsel %vm607, %v599, %v604
        %v609 = vrsqrt.pop %v539
        %v610 = vmul.f32 %v609, %v539
        %v611 = vmul.f32 %v610, %v609
        %v612 = vmul.f32 0.5, %v611
        %v613 = vsub.f32 1.5, %v612
        %v614 = vmul.f32 %v609, %v613
        %vm615 = vweird.f32 %v539
        %vm616 = vweird.f32 %v609
        %vm617 = vmor %vm615, %vm616
        %v618 = vsel %vm617, %v609, %v614
        %v619 = vrsqrt.pop %v540
        %v620 = vmul.f32 %v619, %v540
        %v621 = vmul.f32 %v620, %v619
        %v622 = vmul.f32 0.5, %v621
        %v623 = vsub.f32 1.5, %v622
        %v624 = vmul.f32 %v619, %v623
        %vm625 = vweird.f32 %v540
        %vm626 = vweird.f32 %v619
        %vm627 = vmor %vm625, %vm626
        %v628 = vsel %vm627, %v619, %v624
        %v629 = vrsqrt.pop %v541
        %v630 = vmul.f32 %v629, %v541
        %v631 = vmul.f32 %v630, %v629
        %v632 = vmul.f32 0.5, %v631
        %v633 = vsub.f32 1.5, %v632
        %v634 = vmul.f32 %v629, %v633
        %vm635 = vweird.f32 %v541
        %vm636 = vweird.f32 %v629
        %vm637 = vmor %vm635, %vm636
        %v638 = vsel %vm637, %v629, %v634
        %v639 = vrsqrt.pop %v542
        %v640 = vmul.f32 %v639, %v542
        %v641 = vmul.f32 %v640, %v639
        %v642 = vmul.f32 0.5, %v641
        %v643 = vsub.f32 1.5, %v642
        %v644 = vmul.f32 %v639, %v643
        %vm645 = vweird.f32 %v542
        %vm646 = vweird.f32 %v639
        %vm647 = vmor %vm645, %vm646
        %v648 = vsel %vm647, %v639, %v644
        %v649 = vrsqrt.pop %v543
        %v650 = vmul.f32 %v649, %v543
        %v651 = vmul.f32 %v650, %v649
        %v652 = vmul.f32 0.5, %v651
        %v653 = vsub.f32 1.5, %v652
        %v654 = vmul.f32 %v649, %v653
        %vm655 = vweird.f32 %v543
        %vm656 = vweird.f32 %v649
        %vm657 = vmor %vm655, %vm656
        %v658 = vsel %vm657, %v649, %v654
        %v659 = vrsqrt.pop %v544
        %v660 = vmul.f32 %v659, %v544
        %v661 = vmul.f32 %v660, %v659
        %v662 = vmul.f32 0.5, %v661
        %v663 = vsub.f32 1.5, %v662
        %v664 = vmul.f32 %v659, %v663
        %vm665 = vweird.f32 %v544
        %vm666 = vweird.f32 %v659
        %vm667 = vmor %vm665, %vm666
        %v668 = vsel %vm667, %v659, %v664
        %v669 = vrsqrt.pop %v545
        %v670 = vmul.f32 %v669, %v545
        %v671 = vmul.f32 %v670, %v669
        %v672 = vmul.f32 0.5, %v671
        %v673 = vsub.f32 1.5, %v672
        %v674 = vmul.f32 %v669, %v673
        %vm675 = vweird.f32 %v545
        %vm676 = vweird.f32 %v669
        %vm677 = vmor %vm675, %vm676
        %v678 = vsel %vm677, %v669, %v674
        %v679 = vrsqrt.pop %v546
        %v680 = vmul.f32 %v679, %v546
        %v681 = vmul.f32 %v680, %v679
        %v682 = vmul.f32 0.5, %v681
        %v683 = vsub.f32 1.5, %v682
        %v684 = vmul.f32 %v679, %v683
        %vm685 = vweird.f32 %v546
        %vm686 = vweird.f32 %v679
        %vm687 = vmor %vm685, %vm686
        %v688 = vsel %vm687, %v679, %v684
        %v689 = vrsqrt.pop %v547
        %v690 = vmul.f32 %v689, %v547
        %v691 = vmul.f32 %v690, %v689
        %v692 = vmul.f32 0.5, %v691
        %v693 = vsub.f32 1.5, %v692
        %v694 = vmul.f32 %v689, %v693
        %vm695 = vweird.f32 %v547
        %vm696 = vweird.f32 %v689
        %vm697 = vmor %vm695, %vm696
        %v698 = vsel %vm697, %v689, %v694
        %v699 = vrsqrt.pop %v548
        %v700 = vmul.f32 %v699, %v548
        %v701 = vmul.f32 %v700, %v699
        %v702 = vmul.f32 0.5, %v701
        %v703 = vsub.f32 1.5, %v702
        %v704 = vmul.f32 %v699, %v703
        %vm705 = vweird.f32 %v548
        %vm706 = vweird.f32 %v699
        %vm707 = vmor %vm705, %vm706
        %v708 = vsel %vm707, %v699, %v704
        %v709 = vmul.f32 %v405, %v558
        %v710 = vmul.f32 %v406, %v558
        %v711 = vmul.f32 %v407, %v568
        %v712 = vmul.f32 %v408, %v568
        %v713 = vmul.f32 %v409, %v578
        %v714 = vmul.f32 %v410, %v578
        %v715 = vmul.f32 %v411, %v588
        %v716 = vmul.f32 %v412, %v588
        %v717 = vmul.f32 %v413, %v598
        %v718 = vmul.f32 %v414, %v598
        %v719 = vmul.f32 %v415, %v608
        %v720 = vmul.f32 %v416, %v608
        %v721 = vmul.f32 %v417, %v618
        %v722 = vmul.f32 %v418, %v618
        %v723 = vmul.f32 %v419, %v628
        %v724 = vmul.f32 %v420, %v628
        %v725 = vmul.f32 %v421, %v638
        %v726 = vmul.f32 %v422, %v638
        %v727 = vmul.f32 %v423, %v648
        %v728 = vmul.f32 %v424, %v648
        %v729 = vmul.f32 %v425, %v658
        %v730 = vmul.f32 %v426, %v658
        %v731 = vmul.f32 %v427, %v668
        %v732 = vmul.f32 %v428, %v668
        %v733 = vmul.f32 %v429, %v678
        %v734 = vmul.f32 %v430, %v678
        %v735 = vmul.f32 %v431, %v688
        %v736 = vmul.f32 %v432, %v688
        %v737 = vmul.f32 %v433, %v698
        %v738 = vmul.f32 %v434, %v698
        %v739 = vmul.f32 %v435, %v708
        %v740 = vmul.f32 %v436, %v708
        %v742 = vperm.slane %v332, 0
        %v743 = vperm.slane %v332, 1
        %v746 = vmul.f32 %v709, %v742
        %v747 = vmul.f32 %v710, %v743
        %v748 = vmul.f32 %v711, %v742
        %v749 = vmul.f32 %v712, %v743
        %v750 = vmul.f32 %v713, %v742
        %v751 = vmul.f32 %v714, %v743
        %v752 = vmul.f32 %v715, %v742
        %v753 = vmul.f32 %v716, %v743
        %v754 = vmul.f32 %v717, %v742
        %v755 = vmul.f32 %v718, %v743
        %v756 = vmul.f32 %v719, %v742
        %v757 = vmul.f32 %v720, %v743
        %v758 = vmul.f32 %v721, %v742
        %v759 = vmul.f32 %v722, %v743
        %v760 = vmul.f32 %v723, %v742
        %v761 = vmul.f32 %v724, %v743
        %v762 = vmul.f32 %v725, %v742
        %v763 = vmul.f32 %v726, %v743
        %v764 = vmul.f32 %v727, %v742
        %v765 = vmul.f32 %v728, %v743
        %v766 = vmul.f32 %v729, %v742
        %v767 = vmul.f32 %v730, %v743
        %v768 = vmul.f32 %v731, %v742
        %v769 = vmul.f32 %v732, %v743
        %v770 = vmul.f32 %v733, %v742
        %v771 = vmul.f32 %v734, %v743
        %v772 = vmul.f32 %v735, %v742
        %v773 = vmul.f32 %v736, %v743
        %v774 = vmul.f32 %v737, %v742
        %v775 = vmul.f32 %v738, %v743
        %v776 = vmul.f32 %v739, %v742
        %v777 = vmul.f32 %v740, %v743
        %v779 = vperm.slane %v333, 0
        %v780 = vperm.slane %v333, 1
        %v783 = vadd.f32 %v746, %v779
        %v784 = vadd.f32 %v747, %v780
        %v785 = vadd.f32 %v748, %v779
        %v786 = vadd.f32 %v749, %v780
        %v787 = vadd.f32 %v750, %v779
        %v788 = vadd.f32 %v751, %v780
        %v789 = vadd.f32 %v752, %v779
        %v790 = vadd.f32 %v753, %v780
        %v791 = vadd.f32 %v754, %v779
        %v792 = vadd.f32 %v755, %v780
        %v793 = vadd.f32 %v756, %v779
        %v794 = vadd.f32 %v757, %v780
        %v795 = vadd.f32 %v758, %v779
        %v796 = vadd.f32 %v759, %v780
        %v797 = vadd.f32 %v760, %v779
        %v798 = vadd.f32 %v761, %v780
        %v799 = vadd.f32 %v762, %v779
        %v800 = vadd.f32 %v763, %v780
        %v801 = vadd.f32 %v764, %v779
        %v802 = vadd.f32 %v765, %v780
        %v803 = vadd.f32 %v766, %v779
        %v804 = vadd.f32 %v767, %v780
        %v805 = vadd.f32 %v768, %v779
        %v806 = vadd.f32 %v769, %v780
        %v807 = vadd.f32 %v770, %v779
        %v808 = vadd.f32 %v771, %v780
        %v809 = vadd.f32 %v772, %v779
        %v810 = vadd.f32 %v773, %v780
        %v811 = vadd.f32 %v774, %v779
        %v812 = vadd.f32 %v775, %v780
        %v813 = vadd.f32 %v776, %v779
        %v814 = vadd.f32 %v777, %v780
        %v815 = vld [vmem:[%s251] sm:$0xff]
        %v816 = vld [vmem:[%s251 + $0x8] sm:$0xff]
        %v817 = vld [vmem:[%s251 + $0x10] sm:$0xff]
        %v818 = vld [vmem:[%s251 + $0x18] sm:$0xff]
        %v819 = vld [vmem:[%s251 + $0x20] sm:$0xff]
        %v820 = vld [vmem:[%s251 + $0x28] sm:$0xff]
        %v821 = vld [vmem:[%s251 + $0x30] sm:$0xff]
        %v822 = vld [vmem:[%s251 + $0x38] sm:$0xff]
        %v823 = vld [vmem:[%s251 + $0x40] sm:$0xff]
        %v824 = vld [vmem:[%s251 + $0x48] sm:$0xff]
        %v825 = vld [vmem:[%s251 + $0x50] sm:$0xff]
        %v826 = vld [vmem:[%s251 + $0x58] sm:$0xff]
        %v827 = vld [vmem:[%s251 + $0x60] sm:$0xff]
        %v828 = vld [vmem:[%s251 + $0x68] sm:$0xff]
        %v829 = vld [vmem:[%s251 + $0x70] sm:$0xff]
        %v830 = vld [vmem:[%s251 + $0x78] sm:$0xff]
        %v831 = vld [vmem:[%s251 + $0x80] sm:$0xff]
        %v832 = vld [vmem:[%s251 + $0x88] sm:$0xff]
        %v833 = vld [vmem:[%s251 + $0x90] sm:$0xff]
        %v834 = vld [vmem:[%s251 + $0x98] sm:$0xff]
        %v835 = vld [vmem:[%s251 + $0xa0] sm:$0xff]
        %v836 = vld [vmem:[%s251 + $0xa8] sm:$0xff]
        %v837 = vld [vmem:[%s251 + $0xb0] sm:$0xff]
        %v838 = vld [vmem:[%s251 + $0xb8] sm:$0xff]
        %v839 = vld [vmem:[%s251 + $0xc0] sm:$0xff]
        %v840 = vld [vmem:[%s251 + $0xc8] sm:$0xff]
        %v841 = vld [vmem:[%s251 + $0xd0] sm:$0xff]
        %v842 = vld [vmem:[%s251 + $0xd8] sm:$0xff]
        %v843 = vld [vmem:[%s251 + $0xe0] sm:$0xff]
        %v844 = vld [vmem:[%s251 + $0xe8] sm:$0xff]
        %v845 = vld [vmem:[%s251 + $0xf0] sm:$0xff]
        %v846 = vld [vmem:[%s251 + $0xf8] sm:$0xff]
        %v847 = vld [vmem:[%s251 + $0x100] sm:$0xff]
        %v848 = vld [vmem:[%s251 + $0x108] sm:$0xff]
        %v849 = vld [vmem:[%s251 + $0x110] sm:$0xff]
        %v850 = vld [vmem:[%s251 + $0x118] sm:$0xff]
        %v851 = vld [vmem:[%s251 + $0x120] sm:$0xff]
        %v852 = vld [vmem:[%s251 + $0x128] sm:$0xff]
        %v853 = vld [vmem:[%s251 + $0x130] sm:$0xff]
        %v854 = vld [vmem:[%s251 + $0x138] sm:$0xff]
        %v855 = vld [vmem:[%s251 + $0x140] sm:$0xff]
        %v856 = vld [vmem:[%s251 + $0x148] sm:$0xff]
        %v857 = vld [vmem:[%s251 + $0x150] sm:$0xff]
        %v858 = vld [vmem:[%s251 + $0x158] sm:$0xff]
        %v859 = vld [vmem:[%s251 + $0x160] sm:$0xff]
        %v860 = vld [vmem:[%s251 + $0x168] sm:$0xff]
        %v861 = vld [vmem:[%s251 + $0x170] sm:$0xff]
        %v862 = vld [vmem:[%s251 + $0x178] sm:$0xff]
        %v863 = vld [vmem:[%s251 + $0x180] sm:$0xff]
        %v864 = vld [vmem:[%s251 + $0x188] sm:$0xff]
        %v865 = vld [vmem:[%s251 + $0x190] sm:$0xff]
        %v866 = vld [vmem:[%s251 + $0x198] sm:$0xff]
        %v867 = vld [vmem:[%s251 + $0x1a0] sm:$0xff]
        %v868 = vld [vmem:[%s251 + $0x1a8] sm:$0xff]
        %v869 = vld [vmem:[%s251 + $0x1b0] sm:$0xff]
        %v870 = vld [vmem:[%s251 + $0x1b8] sm:$0xff]
        %v871 = vld [vmem:[%s251 + $0x1c0] sm:$0xff]
        %v872 = vld [vmem:[%s251 + $0x1c8] sm:$0xff]
        %v873 = vld [vmem:[%s251 + $0x1d0] sm:$0xff]
        %v874 = vld [vmem:[%s251 + $0x1d8] sm:$0xff]
        %v875 = vld [vmem:[%s251 + $0x1e0] sm:$0xff]
        %v876 = vld [vmem:[%s251 + $0x1e8] sm:$0xff]
        %v877 = vld [vmem:[%s251 + $0x1f0] sm:$0xff]
        %v878 = vld [vmem:[%s251 + $0x1f8] sm:$0xff]
        %v879 = vld [vmem:[%s297] sm:$0x3]
        %v881 = vperm.slane %v879, 0
        %v882 = vperm.slane %v879, 1
        %885 = vmatpush.msra.mxu0 %v845
        %886 = vmatpush.msra.mxu0 %v843
        %887 = vmatpush.msra.mxu0 %v841
        %888 = vmatpush.msra.mxu0 %v839
        %889 = vmatpush.msra.mxu0 %v837
        %890 = vmatpush.msra.mxu0 %v835
        %891 = vmatpush.msra.mxu0 %v833
        %892 = vmatpush.msra.mxu0 %v831
        %893 = vmatpush.msra.mxu0 %v829
        %894 = vmatpush.msra.mxu0 %v827
        %895 = vmatpush.msra.mxu0 %v825
        %896 = vmatpush.msra.mxu0 %v823
        %897 = vmatpush.msra.mxu0 %v821
        %898 = vmatpush.msra.mxu0 %v819
        %899 = vmatpush.msra.mxu0 %v817
        %900 = vmatpush.msra.mxu0 %v815
        %901 = vmatmul.f32.gmra.mxu0 %v783
        %v902 = vpop.f32.mrf.mxu0
        %v903 = vadd.f32 %v881, %v902
        %904 = vmatmul.f32.gmra.mxu0 %v785
        %v905 = vpop.f32.mrf.mxu0
        %v906 = vadd.f32 %v881, %v905
        %907 = vmatmul.f32.gmra.mxu0 %v787
        %v908 = vpop.f32.mrf.mxu0
        %v909 = vadd.f32 %v881, %v908
        %910 = vmatmul.f32.gmra.mxu0 %v789
        %v911 = vpop.f32.mrf.mxu0
        %v912 = vadd.f32 %v881, %v911
        %913 = vmatmul.f32.gmra.mxu0 %v791
        %v914 = vpop.f32.mrf.mxu0
        %v915 = vadd.f32 %v881, %v914
        %916 = vmatmul.f32.gmra.mxu0 %v793
        %v917 = vpop.f32.mrf.mxu0
        %v918 = vadd.f32 %v881, %v917
        %919 = vmatmul.f32.gmra.mxu0 %v795
        %v920 = vpop.f32.mrf.mxu0
        %v921 = vadd.f32 %v881, %v920
        %922 = vmatmul.f32.gmra.mxu0 %v797
        %v923 = vpop.f32.mrf.mxu0
        %v924 = vadd.f32 %v881, %v923
        %925 = vmatmul.f32.gmra.mxu0 %v799
        %v926 = vpop.f32.mrf.mxu0
        %v927 = vadd.f32 %v881, %v926
        %928 = vmatmul.f32.gmra.mxu0 %v801
        %v929 = vpop.f32.mrf.mxu0
        %v930 = vadd.f32 %v881, %v929
        %931 = vmatmul.f32.gmra.mxu0 %v803
        %v932 = vpop.f32.mrf.mxu0
        %v933 = vadd.f32 %v881, %v932
        %934 = vmatmul.f32.gmra.mxu0 %v805
        %v935 = vpop.f32.mrf.mxu0
        %v936 = vadd.f32 %v881, %v935
        %937 = vmatmul.f32.gmra.mxu0 %v807
        %v938 = vpop.f32.mrf.mxu0
        %v939 = vadd.f32 %v881, %v938
        %940 = vmatmul.f32.gmra.mxu0 %v809
        %v941 = vpop.f32.mrf.mxu0
        %v942 = vadd.f32 %v881, %v941
        %943 = vmatmul.f32.gmra.mxu0 %v811
        %v944 = vpop.f32.mrf.mxu0
        %v945 = vadd.f32 %v881, %v944
        %946 = vmatmul.f32.gmra.mxu0 %v813
        %v947 = vpop.f32.mrf.mxu0
        %v948 = vadd.f32 %v881, %v947
        %949 = vdwg.mxu0
        %950 = vmatpush.msra.mxu0 %v877
        %951 = vmatpush.msra.mxu0 %v875
        %952 = vmatpush.msra.mxu0 %v873
        %953 = vmatpush.msra.mxu0 %v871
        %954 = vmatpush.msra.mxu0 %v869
        %955 = vmatpush.msra.mxu0 %v867
        %956 = vmatpush.msra.mxu0 %v865
        %957 = vmatpush.msra.mxu0 %v863
        %958 = vmatpush.msra.mxu0 %v861
        %959 = vmatpush.msra.mxu0 %v859
        %960 = vmatpush.msra.mxu0 %v857
        %961 = vmatpush.msra.mxu0 %v855
        %962 = vmatpush.msra.mxu0 %v853
        %963 = vmatpush.msra.mxu0 %v851
        %964 = vmatpush.msra.mxu0 %v849
        %965 = vmatpush.msra.mxu0 %v847
        %966 = vmatmul.f32.gmra.mxu0 %v784
        %v967 = vpop.f32.mrf.mxu0
        %v968 = vadd.f32 %v903, %v967
        %969 = vmatmul.f32.gmra.mxu0 %v786
        %v970 = vpop.f32.mrf.mxu0
        %v971 = vadd.f32 %v906, %v970
        %972 = vmatmul.f32.gmra.mxu0 %v788
        %v973 = vpop.f32.mrf.mxu0
        %v974 = vadd.f32 %v909, %v973
        %975 = vmatmul.f32.gmra.mxu0 %v790
        %v976 = vpop.f32.mrf.mxu0
        %v977 = vadd.f32 %v912, %v976
        %978 = vmatmul.f32.gmra.mxu0 %v792
        %v979 = vpop.f32.mrf.mxu0
        %v980 = vadd.f32 %v915, %v979
        %981 = vmatmul.f32.gmra.mxu0 %v794
        %v982 = vpop.f32.mrf.mxu0
        %v983 = vadd.f32 %v918, %v982
        %984 = vmatmul.f32.gmra.mxu0 %v796
        %v985 = vpop.f32.mrf.mxu0
        %v986 = vadd.f32 %v921, %v985
        %987 = vmatmul.f32.gmra.mxu0 %v798
        %v988 = vpop.f32.mrf.mxu0
        %v989 = vadd.f32 %v924, %v988
        %990 = vmatmul.f32.gmra.mxu0 %v800
        %v991 = vpop.f32.mrf.mxu0
        %v992 = vadd.f32 %v927, %v991
        %993 = vmatmul.f32.gmra.mxu0 %v802
        %v994 = vpop.f32.mrf.mxu0
        %v995 = vadd.f32 %v930, %v994
        %996 = vmatmul.f32.gmra.mxu0 %v804
        %v997 = vpop.f32.mrf.mxu0
        %v998 = vadd.f32 %v933, %v997
        %999 = vmatmul.f32.gmra.mxu0 %v806
        %v1000 = vpop.f32.mrf.mxu0
        %v1001 = vadd.f32 %v936, %v1000
        %1002 = vmatmul.f32.gmra.mxu0 %v808
        %v1003 = vpop.f32.mrf.mxu0
        %v1004 = vadd.f32 %v939, %v1003
        %1005 = vmatmul.f32.gmra.mxu0 %v810
        %v1006 = vpop.f32.mrf.mxu0
        %v1007 = vadd.f32 %v942, %v1006
        %1008 = vmatmul.f32.gmra.mxu0 %v812
        %v1009 = vpop.f32.mrf.mxu0
        %v1010 = vadd.f32 %v945, %v1009
        %1011 = vmatmul.f32.gmra.mxu0 %v814
        %v1012 = vpop.f32.mrf.mxu0
        %v1013 = vadd.f32 %v948, %v1012
        %1014 = vdwg.mxu0
        %1015 = vmatpush.msra.mxu0 %v846
        %1016 = vmatpush.msra.mxu0 %v844
        %1017 = vmatpush.msra.mxu0 %v842
        %1018 = vmatpush.msra.mxu0 %v840
        %1019 = vmatpush.msra.mxu0 %v838
        %1020 = vmatpush.msra.mxu0 %v836
        %1021 = vmatpush.msra.mxu0 %v834
        %1022 = vmatpush.msra.mxu0 %v832
        %1023 = vmatpush.msra.mxu0 %v830
        %1024 = vmatpush.msra.mxu0 %v828
        %1025 = vmatpush.msra.mxu0 %v826
        %1026 = vmatpush.msra.mxu0 %v824
        %1027 = vmatpush.msra.mxu0 %v822
        %1028 = vmatpush.msra.mxu0 %v820
        %1029 = vmatpush.msra.mxu0 %v818
        %1030 = vmatpush.msra.mxu0 %v816
        %1031 = vmatmul.f32.gmra.mxu0 %v783
        %v1032 = vpop.f32.mrf.mxu0
        %v1033 = vadd.f32 %v882, %v1032
        %1034 = vmatmul.f32.gmra.mxu0 %v785
        %v1035 = vpop.f32.mrf.mxu0
        %v1036 = vadd.f32 %v882, %v1035
        %1037 = vmatmul.f32.gmra.mxu0 %v787
        %v1038 = vpop.f32.mrf.mxu0
        %v1039 = vadd.f32 %v882, %v1038
        %1040 = vmatmul.f32.gmra.mxu0 %v789
        %v1041 = vpop.f32.mrf.mxu0
        %v1042 = vadd.f32 %v882, %v1041
        %1043 = vmatmul.f32.gmra.mxu0 %v791
        %v1044 = vpop.f32.mrf.mxu0
        %v1045 = vadd.f32 %v882, %v1044
        %1046 = vmatmul.f32.gmra.mxu0 %v793
        %v1047 = vpop.f32.mrf.mxu0
        %v1048 = vadd.f32 %v882, %v1047
        %1049 = vmatmul.f32.gmra.mxu0 %v795
        %v1050 = vpop.f32.mrf.mxu0
        %v1051 = vadd.f32 %v882, %v1050
        %1052 = vmatmul.f32.gmra.mxu0 %v797
        %v1053 = vpop.f32.mrf.mxu0
        %v1054 = vadd.f32 %v882, %v1053
        %1055 = vmatmul.f32.gmra.mxu0 %v799
        %v1056 = vpop.f32.mrf.mxu0
        %v1057 = vadd.f32 %v882, %v1056
        %1058 = vmatmul.f32.gmra.mxu0 %v801
        %v1059 = vpop.f32.mrf.mxu0
        %v1060 = vadd.f32 %v882, %v1059
        %1061 = vmatmul.f32.gmra.mxu0 %v803
        %v1062 = vpop.f32.mrf.mxu0
        %v1063 = vadd.f32 %v882, %v1062
        %1064 = vmatmul.f32.gmra.mxu0 %v805
        %v1065 = vpop.f32.mrf.mxu0
        %v1066 = vadd.f32 %v882, %v1065
        %1067 = vmatmul.f32.gmra.mxu0 %v807
        %v1068 = vpop.f32.mrf.mxu0
        %v1069 = vadd.f32 %v882, %v1068
        %1070 = vmatmul.f32.gmra.mxu0 %v809
        %v1071 = vpop.f32.mrf.mxu0
        %v1072 = vadd.f32 %v882, %v1071
        %1073 = vmatmul.f32.gmra.mxu0 %v811
        %v1074 = vpop.f32.mrf.mxu0
        %v1075 = vadd.f32 %v882, %v1074
        %1076 = vmatmul.f32.gmra.mxu0 %v813
        %v1077 = vpop.f32.mrf.mxu0
        %v1078 = vadd.f32 %v882, %v1077
        %1079 = vdwg.mxu0
        %1080 = vmatpush.msra.mxu0 %v878
        %1081 = vmatpush.msra.mxu0 %v876
        %1082 = vmatpush.msra.mxu0 %v874
        %1083 = vmatpush.msra.mxu0 %v872
        %1084 = vmatpush.msra.mxu0 %v870
        %1085 = vmatpush.msra.mxu0 %v868
        %1086 = vmatpush.msra.mxu0 %v866
        %1087 = vmatpush.msra.mxu0 %v864
        %1088 = vmatpush.msra.mxu0 %v862
        %1089 = vmatpush.msra.mxu0 %v860
        %1090 = vmatpush.msra.mxu0 %v858
        %1091 = vmatpush.msra.mxu0 %v856
        %1092 = vmatpush.msra.mxu0 %v854
        %1093 = vmatpush.msra.mxu0 %v852
        %1094 = vmatpush.msra.mxu0 %v850
        %1095 = vmatpush.msra.mxu0 %v848
        %1096 = vmatmul.f32.gmra.mxu0 %v784
        %v1097 = vpop.f32.mrf.mxu0
        %v1098 = vadd.f32 %v1033, %v1097
        %1099 = vmatmul.f32.gmra.mxu0 %v786
        %v1100 = vpop.f32.mrf.mxu0
        %v1101 = vadd.f32 %v1036, %v1100
        %1102 = vmatmul.f32.gmra.mxu0 %v788
        %v1103 = vpop.f32.mrf.mxu0
        %v1104 = vadd.f32 %v1039, %v1103
        %1105 = vmatmul.f32.gmra.mxu0 %v790
        %v1106 = vpop.f32.mrf.mxu0
        %v1107 = vadd.f32 %v1042, %v1106
        %1108 = vmatmul.f32.gmra.mxu0 %v792
        %v1109 = vpop.f32.mrf.mxu0
        %v1110 = vadd.f32 %v1045, %v1109
        %1111 = vmatmul.f32.gmra.mxu0 %v794
        %v1112 = vpop.f32.mrf.mxu0
        %v1113 = vadd.f32 %v1048, %v1112
        %1114 = vmatmul.f32.gmra.mxu0 %v796
        %v1115 = vpop.f32.mrf.mxu0
        %v1116 = vadd.f32 %v1051, %v1115
        %1117 = vmatmul.f32.gmra.mxu0 %v798
        %v1118 = vpop.f32.mrf.mxu0
        %v1119 = vadd.f32 %v1054, %v1118
        %1120 = vmatmul.f32.gmra.mxu0 %v800
        %v1121 = vpop.f32.mrf.mxu0
        %v1122 = vadd.f32 %v1057, %v1121
        %1123 = vmatmul.f32.gmra.mxu0 %v802
        %v1124 = vpop.f32.mrf.mxu0
        %v1125 = vadd.f32 %v1060, %v1124
        %1126 = vmatmul.f32.gmra.mxu0 %v804
        %v1127 = vpop.f32.mrf.mxu0
        %v1128 = vadd.f32 %v1063, %v1127
        %1129 = vmatmul.f32.gmra.mxu0 %v806
        %v1130 = vpop.f32.mrf.mxu0
        %v1131 = vadd.f32 %v1066, %v1130
        %1132 = vmatmul.f32.gmra.mxu0 %v808
        %v1133 = vpop.f32.mrf.mxu0
        %v1134 = vadd.f32 %v1069, %v1133
        %1135 = vmatmul.f32.gmra.mxu0 %v810
        %v1136 = vpop.f32.mrf.mxu0
        %v1137 = vadd.f32 %v1072, %v1136
        %1138 = vmatmul.f32.gmra.mxu0 %v812
        %v1139 = vpop.f32.mrf.mxu0
        %v1140 = vadd.f32 %v1075, %v1139
        %1141 = vmatmul.f32.gmra.mxu0 %v814
        %v1142 = vpop.f32.mrf.mxu0
        %v1143 = vadd.f32 %v1078, %v1142
        %1144 = vdwg.mxu0
        %1145 = vst [vmem:[%s287] sm:$0xff] %v968
        %1146 = vst [vmem:[%s287 + $0x8] sm:$0xff] %v1098
        %1147 = vst [vmem:[%s287 + $0x10] sm:$0xff] %v971
        %1148 = vst [vmem:[%s287 + $0x18] sm:$0xff] %v1101
        %1149 = vst [vmem:[%s287 + $0x20] sm:$0xff] %v974
        %1150 = vst [vmem:[%s287 + $0x28] sm:$0xff] %v1104
        %1151 = vst [vmem:[%s287 + $0x30] sm:$0xff] %v977
        %1152 = vst [vmem:[%s287 + $0x38] sm:$0xff] %v1107
        %1153 = vst [vmem:[%s287 + $0x40] sm:$0xff] %v980
        %1154 = vst [vmem:[%s287 + $0x48] sm:$0xff] %v1110
        %1155 = vst [vmem:[%s287 + $0x50] sm:$0xff] %v983
        %1156 = vst [vmem:[%s287 + $0x58] sm:$0xff] %v1113
        %1157 = vst [vmem:[%s287 + $0x60] sm:$0xff] %v986
        %1158 = vst [vmem:[%s287 + $0x68] sm:$0xff] %v1116
        %1159 = vst [vmem:[%s287 + $0x70] sm:$0xff] %v989
        %1160 = vst [vmem:[%s287 + $0x78] sm:$0xff] %v1119
        %1161 = vst [vmem:[%s287 + $0x80] sm:$0xff] %v992
        %1162 = vst [vmem:[%s287 + $0x88] sm:$0xff] %v1122
        %1163 = vst [vmem:[%s287 + $0x90] sm:$0xff] %v995
        %1164 = vst [vmem:[%s287 + $0x98] sm:$0xff] %v1125
        %1165 = vst [vmem:[%s287 + $0xa0] sm:$0xff] %v998
        %1166 = vst [vmem:[%s287 + $0xa8] sm:$0xff] %v1128
        %1167 = vst [vmem:[%s287 + $0xb0] sm:$0xff] %v1001
        %1168 = vst [vmem:[%s287 + $0xb8] sm:$0xff] %v1131
        %1169 = vst [vmem:[%s287 + $0xc0] sm:$0xff] %v1004
        %1170 = vst [vmem:[%s287 + $0xc8] sm:$0xff] %v1134
        %1171 = vst [vmem:[%s287 + $0xd0] sm:$0xff] %v1007
        %1172 = vst [vmem:[%s287 + $0xd8] sm:$0xff] %v1137
        %1173 = vst [vmem:[%s287 + $0xe0] sm:$0xff] %v1010
        %1174 = vst [vmem:[%s287 + $0xe8] sm:$0xff] %v1140
        %1175 = vst [vmem:[%s287 + $0xf0] sm:$0xff] %v1013
        %1176 = vst [vmem:[%s287 + $0xf8] sm:$0xff] %v1143
        %s1177 = sand.u32 %s164, 1
        %s1178 = scalar_lea.sflag [#allocation4], %s1177
        %s1179 = sand.u32 %s164, 1
        %s1180 = smul.addr %s1179, 256
        %s1181 = scalar_lea.vmem [#allocation5], %s1180
        // Predicated region
        $region45: #{gpt_forward.3} parent=39 // pred_check
          %p1182 = pneg %p174
        $region46: #{gpt_forward.3} parent=39 // pred_check_branch
          %1184 = sbr.rel (%p1182) target = $region48
        $region47: #{gpt_forward.3} parent=39 // pred_region
          %s1185 = smul.u32 2, %s27
          %1187 = vsyncadd %s1178, 0
          %s1188 = smul.addr %s26, 64
          %s1189 = sadd.s32 %s1185, %s1188
          %s1190 = smul.addr %s1189, 8
          %s1191 = scalar_lea.hbm %s5, %s1190
          %s1192 = sshll.u32 %s1181, 4
          %s1193 = int_to_ptr.vmem [resolvable:$true] %s1192
          %s1194 = sshll.u32 %s1191, 4
          %s1195 = int_to_ptr.hbm [resolvable:$true] %s1194
          %1200 = dma.vmem_to_hbm [thread:$0]  %s1193, 4096, %s1195, %s1178, 256, 512, 16
        $region48: #{gpt_forward.3} parent=39 // pred_fallthru
          _
      $region40: #{gpt_forward.3} parent=5 // pred_fallthru
        _
      %p1201 = scmp.le.s32.totalorder 2, %s17
      // Predicated region
      $region49: #{gpt_forward.3} parent=5 // pred_check
        %p1202 = pneg %p1201
      $region50: #{gpt_forward.3} parent=5 // pred_check_branch
        %1204 = sbr.rel (%p1202) target = $region52
      $region51: #{gpt_forward.3} parent=5 // pred_region
        %s1205 = ssub.s32 %s17, 2
        // Predicated region
        $region53: #{gpt_forward.3} parent=51 // pred_check
          %p1206 = pneg %p180
        $region54: #{gpt_forward.3} parent=51 // pred_check_branch
          %1208 = sbr.rel (%p1206) target = $region56
        $region55: #{gpt_forward.3} parent=51 // pred_region
          %s1209 = sand.u32 %s165, 1
          %s1210 = scalar_lea.sflag [#allocation4], %s1209
          %s1211 = sand.u32 %s165, 1
          %s1212 = smul.addr %s1211, 256
          %s1213 = scalar_lea.vmem [#allocation5], %s1212
          %1215 = dma.done %s1210, 4096
        $region56: #{gpt_forward.3} parent=51 // pred_fallthru
          _
      $region52: #{gpt_forward.3} parent=5 // pred_fallthru
        _
    $region6: #{gpt_forward.3} parent=1 // loop_footer
      %s21 = sadd.s32 1, %s17
    $region7: #{gpt_forward.3} parent=1 // loop_footer_branch
      %16 = sbr.rel target = $region3
    $region8: #{gpt_forward.3} parent=1 // loop_exit
      _
    %1216 = vsyncpa [#allocation3], 1
    %s1217 = scalar_lea.sflag [#allocation3], 1
    %1218 = vsyncpa %s1217, 1
    %1219 = vsyncpa [#allocation4], 1
    %s1220 = scalar_lea.sflag [#allocation4], 1
    %1221 = vsyncpa %s1220, 1

// kernel: gpt_forward.2
$region0: #{gpt_forward.2}
  #allocation0 [shape = 'u32[]', space=smem, size = 0x4, offset = 0x4, fixed_abs, tag = 'smem constant byte address 0x4 - core index']
  #allocation1 [shape = 'u32[72,128]{1,0:T(1,128)}', space=vmem, size = 0x9000, scoped, tag = 'internal scratch']
  %s0 = inlined_call_operand.vmem [shape: f32[2,128,256], index: 0, kind: input, shape index: {}, may-alias: {0,13}]
  %s1 = inlined_call_operand.vmem [shape: f32[2,1,256], index: 1, kind: input, shape index: {}]
  %s2 = inlined_call_operand.vmem [shape: f32[2,1,256], index: 2, kind: input, shape index: {}]
  %s3 = inlined_call_operand.hbm [shape: f32[2,256,768], index: 3, kind: input, shape index: {}]
  %s4 = inlined_call_operand.vmem [shape: f32[2,1,768], index: 4, kind: input, shape index: {}]
  %s5 = inlined_call_operand.vmem [shape: f32[2,256,256], index: 5, kind: input, shape index: {}]
  %s6 = inlined_call_operand.vmem [shape: f32[2,1,256], index: 6, kind: input, shape index: {}]
  %s7 = inlined_call_operand.vmem [shape: f32[2,1,256], index: 7, kind: input, shape index: {}]
  %s8 = inlined_call_operand.vmem [shape: f32[2,1,256], index: 8, kind: input, shape index: {}]
  %s9 = inlined_call_operand.vmem [shape: f32[2,256,1024], index: 9, kind: input, shape index: {}]
  %s10 = inlined_call_operand.vmem [shape: f32[2,1,1024], index: 10, kind: input, shape index: {}]
  %s11 = inlined_call_operand.hbm [shape: f32[2,1024,256], index: 11, kind: input, shape index: {}]
  %s12 = inlined_call_operand.vmem [shape: f32[2,1,256], index: 12, kind: input, shape index: {}]
  %s13 = inlined_call_operand.vmem [shape: f32[2,128,256], index: 13, kind: output, shape index: {}, may-alias: {0,13}]
  %s14 = sld [smem:[#allocation0]]
  $region97: #{gpt_forward.2} parent=0
    _
  %s16 = ssub.s32 1, %s14
  %s17 = scalar_select 0, %s16, %s14
  $region1: #{gpt_forward.2} parent=0
    #allocation2 [shape = 'u8[1572864]{0}', space=vmem, size = 0x180000, scoped, tag = 'input window, operand 3']
    #allocation3 [shape = 's32[2]{0}', space=sflag, size = 0x8, scoped, tag = 'scoped memory for gpt_forward.2']
    #allocation4 [shape = 'u8[2097152]{0}', space=vmem, size = 0x200000, scoped, tag = 'input window, operand 11']
    #allocation5 [shape = 's32[2]{0}', space=sflag, size = 0x8, scoped, tag = 'scoped memory for gpt_forward.2']
    %18 = vsyncpa [#allocation3], 0
    %s19 = scalar_lea.sflag [#allocation3], 1
    %20 = vsyncpa %s19, 0
    %21 = vsyncpa [#allocation5], 0
    %s22 = scalar_lea.sflag [#allocation5], 1
    %23 = vsyncpa %s22, 0
    loop: start=0, step=1, limit=6
    $region2: #{gpt_forward.2} parent=1 // loop_pre_header
      _
    $region3: #{gpt_forward.2} parent=1 // loop_header
      %s25 = sphi 0, %s29
      %p26 = scmp.ge.s32.totalorder %s25, 6
      %s32 = sphi 0, %s44
      %s33 = sphi 0, %s40
      %s34 = sphi 0, %s32
      %s35 = sphi 0, %s33
      %s36 = sphi 0, %s34
      %s37 = sphi 0, %s35
      %s47 = sphi 0, %s49
      %s50 = sphi 0, %s47
      %s51 = sphi 0, %s50
      %s67 = sphi 0, %s51
      %s73 = sphi 0, %s75
      %s76 = sphi 0, %s73
      %s77 = sphi 0, %s76
      %s93 = sphi 0, %s77
      %s99 = sphi 0, %s101
      %s102 = sphi 0, %s99
      %s103 = sphi 0, %s102
      %s119 = sphi 0, %s103
      %s125 = sphi 0, %s127
      %s128 = sphi 0, %s125
      %s129 = sphi 0, %s128
      %s145 = sphi 0, %s129
      %s151 = sphi 0, %s153
      %s154 = sphi 0, %s151
      %s155 = sphi 0, %s154
      %s171 = sphi 0, %s155
      %s177 = sphi 0, %s179
      %s180 = sphi 0, %s177
      %s181 = sphi 0, %s180
      %s197 = sphi 0, %s181
      %s203 = sphi 0, %s205
      %s206 = sphi 0, %s203
      %s207 = sphi 0, %s206
      %s223 = sphi 0, %s207
      %s229 = sphi 0, %s231
      %s232 = sphi 0, %s229
      %s233 = sphi 0, %s232
      %s249 = sphi 0, %s233
      %s255 = sphi 0, %s257
      %s258 = sphi 0, %s255
      %s259 = sphi 0, %s258
      %s275 = sphi 0, %s259
      %s281 = sphi 0, %s283
      %s284 = sphi 0, %s281
      %s285 = sphi 0, %s284
      %s301 = sphi 0, %s285
      %s307 = sphi 0, %s309
      %s310 = sphi 0, %s307
      %s311 = sphi 0, %s310
      %s327 = sphi 0, %s311
      %s333 = sphi 0, %s335
      %s336 = sphi 0, %s333
      %s337 = sphi 0, %s336
      %s353 = sphi 0, %s337
      %s359 = sphi 0, %s361
      %s362 = sphi 0, %s359
      %s363 = sphi 0, %s362
      %s379 = sphi 0, %s363
      %s385 = sphi 0, %s387
      %s388 = sphi 0, %s385
      %s389 = sphi 0, %s388
      %s405 = sphi 0, %s389
    $region4: #{gpt_forward.2} parent=1 // loop_header_branch
      %28 = sbr.rel (%p26) target = $region8
    $region5: #{gpt_forward.2} parent=1 // loop_body
      %s30 = ssub.s32 %s25, 1
      %s31 = ssub.s32 %s25, 2
      %s38 = sadd.s32 1, %s33
      %p39 = scmp.ge.s32.totalorder %s38, 2
      %s40 = scalar_select %p39, 0, %s38
      %s41 = sadd.s32 1, %s32
      %s42 = scalar_select %p39, %s41, %s32
      %p43 = scmp.ge.s32.totalorder %s42, 2
      %s44 = scalar_select %p43, 0, %s42
      %s45 = ssub.s32 %s32, %s44
      %p46 = scmp.eq.s32.totalorder %s45, 0
      %s48 = sadd.s32 %s47, 1
      %s49 = scalar_select %p46, %s47, %s48
      %p52 = pneg %p46
      %p53 = scmp.eq.s32.totalorder %s25, 3
      %p54 = por %p52, %p53
      %p55 = scmp.ne.s32.totalorder %s47, %s50
      %p56 = scmp.eq.s32.totalorder %s25, 0
      %p57 = por %p55, %p56
      %p58 = scmp.ne.s32.totalorder %s47, %s50
      %p59 = scmp.eq.s32.totalorder %s30, 3
      %p60 = por %p58, %p59
      %p61 = scmp.ne.s32.totalorder %s50, %s51
      %p62 = scmp.eq.s32.totalorder %s30, 0
      %p63 = por %p61, %p62
      %p64 = scmp.ne.s32.totalorder %s50, %s51
      %p65 = scmp.eq.s32.totalorder %s31, 3
      %p66 = por %p64, %p65
      %p68 = scmp.ne.s32.totalorder %s51, %s67
      %p69 = scmp.eq.s32.totalorder %s31, 0
      %p70 = por %p68, %p69
      %s71 = ssub.s32 %s33, %s40
      %p72 = scmp.eq.s32.totalorder %s71, 0
      %s74 = sadd.s32 %s73, 1
      %s75 = scalar_select %p72, %s73, %s74
      %p78 = pneg %p72
      %p79 = scmp.eq.s32.totalorder %s25, 3
      %p80 = por %p78, %p79
      %p81 = scmp.ne.s32.totalorder %s73, %s76
      %p82 = scmp.eq.s32.totalorder %s25, 0
      %p83 = por %p81, %p82
      %p84 = scmp.ne.s32.totalorder %s73, %s76
      %p85 = scmp.eq.s32.totalorder %s30, 3
      %p86 = por %p84, %p85
      %p87 = scmp.ne.s32.totalorder %s76, %s77
      %p88 = scmp.eq.s32.totalorder %s30, 0
      %p89 = por %p87, %p88
      %p90 = scmp.ne.s32.totalorder %s76, %s77
      %p91 = scmp.eq.s32.totalorder %s31, 3
      %p92 = por %p90, %p91
      %p94 = scmp.ne.s32.totalorder %s77, %s93
      %p95 = scmp.eq.s32.totalorder %s31, 0
      %p96 = por %p94, %p95
      %s97 = ssub.s32 %s33, %s40
      %p98 = scmp.eq.s32.totalorder %s97, 0
      %s100 = sadd.s32 %s99, 1
      %s101 = scalar_select %p98, %s99, %s100
      %p104 = pneg %p98
      %p105 = scmp.eq.s32.totalorder %s25, 3
      %p106 = por %p104, %p105
      %p107 = scmp.ne.s32.totalorder %s99, %s102
      %p108 = scmp.eq.s32.totalorder %s25, 0
      %p109 = por %p107, %p108
      %p110 = scmp.ne.s32.totalorder %s99, %s102
      %p111 = scmp.eq.s32.totalorder %s30, 3
      %p112 = por %p110, %p111
      %p113 = scmp.ne.s32.totalorder %s102, %s103
      %p114 = scmp.eq.s32.totalorder %s30, 0
      %p115 = por %p113, %p114
      %p116 = scmp.ne.s32.totalorder %s102, %s103
      %p117 = scmp.eq.s32.totalorder %s31, 3
      %p118 = por %p116, %p117
      %p120 = scmp.ne.s32.totalorder %s103, %s119
      %p121 = scmp.eq.s32.totalorder %s31, 0
      %p122 = por %p120, %p121
      %s123 = ssub.s32 %s33, %s40
      %p124 = scmp.eq.s32.totalorder %s123, 0
      %s126 = sadd.s32 %s125, 1
      %s127 = scalar_select %p124, %s125, %s126
      %p130 = pneg %p124
      %p131 = scmp.eq.s32.totalorder %s25, 3
      %p132 = por %p130, %p131
      %p133 = scmp.ne.s32.totalorder %s125, %s128
      %p134 = scmp.eq.s32.totalorder %s25, 0
      %p135 = por %p133, %p134
      %p136 = scmp.ne.s32.totalorder %s125, %s128
      %p137 = scmp.eq.s32.totalorder %s30, 3
      %p138 = por %p136, %p137
      %p139 = scmp.ne.s32.totalorder %s128, %s129
      %p140 = scmp.eq.s32.totalorder %s30, 0
      %p141 = por %p139, %p140
      %p142 = scmp.ne.s32.totalorder %s128, %s129
      %p143 = scmp.eq.s32.totalorder %s31, 3
      %p144 = por %p142, %p143
      %p146 = scmp.ne.s32.totalorder %s129, %s145
      %p147 = scmp.eq.s32.totalorder %s31, 0
      %p148 = por %p146, %p147
      %s149 = ssub.s32 %s33, %s40
      %p150 = scmp.eq.s32.totalorder %s149, 0
      %s152 = sadd.s32 %s151, 1
      %s153 = scalar_select %p150, %s151, %s152
      %p156 = pneg %p150
      %p157 = scmp.eq.s32.totalorder %s25, 3
      %p158 = por %p156, %p157
      %p159 = scmp.ne.s32.totalorder %s151, %s154
      %p160 = scmp.eq.s32.totalorder %s25, 0
      %p161 = por %p159, %p160
      %p162 = scmp.ne.s32.totalorder %s151, %s154
      %p163 = scmp.eq.s32.totalorder %s30, 3
      %p164 = por %p162, %p163
      %p165 = scmp.ne.s32.totalorder %s154, %s155
      %p166 = scmp.eq.s32.totalorder %s30, 0
      %p167 = por %p165, %p166
      %p168 = scmp.ne.s32.totalorder %s154, %s155
      %p169 = scmp.eq.s32.totalorder %s31, 3
      %p170 = por %p168, %p169
      %p172 = scmp.ne.s32.totalorder %s155, %s171
      %p173 = scmp.eq.s32.totalorder %s31, 0
      %p174 = por %p172, %p173
      %s175 = ssub.s32 %s33, %s40
      %p176 = scmp.eq.s32.totalorder %s175, 0
      %s178 = sadd.s32 %s177, 1
      %s179 = scalar_select %p176, %s177, %s178
      %p182 = pneg %p176
      %p183 = scmp.eq.s32.totalorder %s25, 3
      %p184 = por %p182, %p183
      %p185 = scmp.ne.s32.totalorder %s177, %s180
      %p186 = scmp.eq.s32.totalorder %s25, 0
      %p187 = por %p185, %p186
      %p188 = scmp.ne.s32.totalorder %s177, %s180
      %p189 = scmp.eq.s32.totalorder %s30, 3
      %p190 = por %p188, %p189
      %p191 = scmp.ne.s32.totalorder %s180, %s181
      %p192 = scmp.eq.s32.totalorder %s30, 0
      %p193 = por %p191, %p192
      %p194 = scmp.ne.s32.totalorder %s180, %s181
      %p195 = scmp.eq.s32.totalorder %s31, 3
      %p196 = por %p194, %p195
      %p198 = scmp.ne.s32.totalorder %s181, %s197
      %p199 = scmp.eq.s32.totalorder %s31, 0
      %p200 = por %p198, %p199
      %s201 = ssub.s32 %s33, %s40
      %p202 = scmp.eq.s32.totalorder %s201, 0
      %s204 = sadd.s32 %s203, 1
      %s205 = scalar_select %p202, %s203, %s204
      %p208 = pneg %p202
      %p209 = scmp.eq.s32.totalorder %s25, 3
      %p210 = por %p208, %p209
      %p211 = scmp.ne.s32.totalorder %s203, %s206
      %p212 = scmp.eq.s32.totalorder %s25, 0
      %p213 = por %p211, %p212
      %p214 = scmp.ne.s32.totalorder %s203, %s206
      %p215 = scmp.eq.s32.totalorder %s30, 3
      %p216 = por %p214, %p215
      %p217 = scmp.ne.s32.totalorder %s206, %s207
      %p218 = scmp.eq.s32.totalorder %s30, 0
      %p219 = por %p217, %p218
      %p220 = scmp.ne.s32.totalorder %s206, %s207
      %p221 = scmp.eq.s32.totalorder %s31, 3
      %p222 = por %p220, %p221
      %p224 = scmp.ne.s32.totalorder %s207, %s223
      %p225 = scmp.eq.s32.totalorder %s31, 0
      %p226 = por %p224, %p225
      %s227 = ssub.s32 %s33, %s40
      %p228 = scmp.eq.s32.totalorder %s227, 0
      %s230 = sadd.s32 %s229, 1
      %s231 = scalar_select %p228, %s229, %s230
      %p234 = pneg %p228
      %p235 = scmp.eq.s32.totalorder %s25, 3
      %p236 = por %p234, %p235
      %p237 = scmp.ne.s32.totalorder %s229, %s232
      %p238 = scmp.eq.s32.totalorder %s25, 0
      %p239 = por %p237, %p238
      %p240 = scmp.ne.s32.totalorder %s229, %s232
      %p241 = scmp.eq.s32.totalorder %s30, 3
      %p242 = por %p240, %p241
      %p243 = scmp.ne.s32.totalorder %s232, %s233
      %p244 = scmp.eq.s32.totalorder %s30, 0
      %p245 = por %p243, %p244
      %p246 = scmp.ne.s32.totalorder %s232, %s233
      %p247 = scmp.eq.s32.totalorder %s31, 3
      %p248 = por %p246, %p247
      %p250 = scmp.ne.s32.totalorder %s233, %s249
      %p251 = scmp.eq.s32.totalorder %s31, 0
      %p252 = por %p250, %p251
      %s253 = ssub.s32 %s33, %s40
      %p254 = scmp.eq.s32.totalorder %s253, 0
      %s256 = sadd.s32 %s255, 1
      %s257 = scalar_select %p254, %s255, %s256
      %p260 = pneg %p254
      %p261 = scmp.eq.s32.totalorder %s25, 3
      %p262 = por %p260, %p261
      %p263 = scmp.ne.s32.totalorder %s255, %s258
      %p264 = scmp.eq.s32.totalorder %s25, 0
      %p265 = por %p263, %p264
      %p266 = scmp.ne.s32.totalorder %s255, %s258
      %p267 = scmp.eq.s32.totalorder %s30, 3
      %p268 = por %p266, %p267
      %p269 = scmp.ne.s32.totalorder %s258, %s259
      %p270 = scmp.eq.s32.totalorder %s30, 0
      %p271 = por %p269, %p270
      %p272 = scmp.ne.s32.totalorder %s258, %s259
      %p273 = scmp.eq.s32.totalorder %s31, 3
      %p274 = por %p272, %p273
      %p276 = scmp.ne.s32.totalorder %s259, %s275
      %p277 = scmp.eq.s32.totalorder %s31, 0
      %p278 = por %p276, %p277
      %s279 = ssub.s32 %s33, %s40
      %p280 = scmp.eq.s32.totalorder %s279, 0
      %s282 = sadd.s32 %s281, 1
      %s283 = scalar_select %p280, %s281, %s282
      %p286 = pneg %p280
      %p287 = scmp.eq.s32.totalorder %s25, 3
      %p288 = por %p286, %p287
      %p289 = scmp.ne.s32.totalorder %s281, %s284
      %p290 = scmp.eq.s32.totalorder %s25, 0
      %p291 = por %p289, %p290
      %p292 = scmp.ne.s32.totalorder %s281, %s284
      %p293 = scmp.eq.s32.totalorder %s30, 3
      %p294 = por %p292, %p293
      %p295 = scmp.ne.s32.totalorder %s284, %s285
      %p296 = scmp.eq.s32.totalorder %s30, 0
      %p297 = por %p295, %p296
      %p298 = scmp.ne.s32.totalorder %s284, %s285
      %p299 = scmp.eq.s32.totalorder %s31, 3
      %p300 = por %p298, %p299
      %p302 = scmp.ne.s32.totalorder %s285, %s301
      %p303 = scmp.eq.s32.totalorder %s31, 0
      %p304 = por %p302, %p303
      %s305 = ssub.s32 %s33, %s40
      %p306 = scmp.eq.s32.totalorder %s305, 0
      %s308 = sadd.s32 %s307, 1
      %s309 = scalar_select %p306, %s307, %s308
      %p312 = pneg %p306
      %p313 = scmp.eq.s32.totalorder %s25, 3
      %p314 = por %p312, %p313
      %p315 = scmp.ne.s32.totalorder %s307, %s310
      %p316 = scmp.eq.s32.totalorder %s25, 0
      %p317 = por %p315, %p316
      %p318 = scmp.ne.s32.totalorder %s307, %s310
      %p319 = scmp.eq.s32.totalorder %s30, 3
      %p320 = por %p318, %p319
      %p321 = scmp.ne.s32.totalorder %s310, %s311
      %p322 = scmp.eq.s32.totalorder %s30, 0
      %p323 = por %p321, %p322
      %p324 = scmp.ne.s32.totalorder %s310, %s311
      %p325 = scmp.eq.s32.totalorder %s31, 3
      %p326 = por %p324, %p325
      %p328 = scmp.ne.s32.totalorder %s311, %s327
      %p329 = scmp.eq.s32.totalorder %s31, 0
      %p330 = por %p328, %p329
      %s331 = ssub.s32 %s33, %s40
      %p332 = scmp.eq.s32.totalorder %s331, 0
      %s334 = sadd.s32 %s333, 1
      %s335 = scalar_select %p332, %s333, %s334
      %p338 = pneg %p332
      %p339 = scmp.eq.s32.totalorder %s25, 3
      %p340 = por %p338, %p339
      %p341 = scmp.ne.s32.totalorder %s333, %s336
      %p342 = scmp.eq.s32.totalorder %s25, 0
      %p343 = por %p341, %p342
      %p344 = scmp.ne.s32.totalorder %s333, %s336
      %p345 = scmp.eq.s32.totalorder %s30, 3
      %p346 = por %p344, %p345
      %p347 = scmp.ne.s32.totalorder %s336, %s337
      %p348 = scmp.eq.s32.totalorder %s30, 0
      %p349 = por %p347, %p348
      %p350 = scmp.ne.s32.totalorder %s336, %s337
      %p351 = scmp.eq.s32.totalorder %s31, 3
      %p352 = por %p350, %p351
      %p354 = scmp.ne.s32.totalorder %s337, %s353
      %p355 = scmp.eq.s32.totalorder %s31, 0
      %p356 = por %p354, %p355
      %s357 = ssub.s32 %s33, %s40
      %p358 = scmp.eq.s32.totalorder %s357, 0
      %s360 = sadd.s32 %s359, 1
      %s361 = scalar_select %p358, %s359, %s360
      %p364 = pneg %p358
      %p365 = scmp.eq.s32.totalorder %s25, 3
      %p366 = por %p364, %p365
      %p367 = scmp.ne.s32.totalorder %s359, %s362
      %p368 = scmp.eq.s32.totalorder %s25, 0
      %p369 = por %p367, %p368
      %p370 = scmp.ne.s32.totalorder %s359, %s362
      %p371 = scmp.eq.s32.totalorder %s30, 3
      %p372 = por %p370, %p371
      %p373 = scmp.ne.s32.totalorder %s362, %s363
      %p374 = scmp.eq.s32.totalorder %s30, 0
      %p375 = por %p373, %p374
      %p376 = scmp.ne.s32.totalorder %s362, %s363
      %p377 = scmp.eq.s32.totalorder %s31, 3
      %p378 = por %p376, %p377
      %p380 = scmp.ne.s32.totalorder %s363, %s379
      %p381 = scmp.eq.s32.totalorder %s31, 0
      %p382 = por %p380, %p381
      %s383 = ssub.s32 %s32, %s44
      %p384 = scmp.eq.s32.totalorder %s383, 0
      %s386 = sadd.s32 %s385, 1
      %s387 = scalar_select %p384, %s385, %s386
      %p390 = pneg %p384
      %p391 = scmp.eq.s32.totalorder %s25, 3
      %p392 = por %p390, %p391
      %p393 = scmp.ne.s32.totalorder %s385, %s388
      %p394 = scmp.eq.s32.totalorder %s25, 0
      %p395 = por %p393, %p394
      %p396 = scmp.ne.s32.totalorder %s385, %s388
      %p397 = scmp.eq.s32.totalorder %s30, 3
      %p398 = por %p396, %p397
      %p399 = scmp.ne.s32.totalorder %s388, %s389
      %p400 = scmp.eq.s32.totalorder %s30, 0
      %p401 = por %p399, %p400
      %p402 = scmp.ne.s32.totalorder %s388, %s389
      %p403 = scmp.eq.s32.totalorder %s31, 3
      %p404 = por %p402, %p403
      %p406 = scmp.ne.s32.totalorder %s389, %s405
      %p407 = scmp.eq.s32.totalorder %s31, 0
      %p408 = por %p406, %p407
      %p409 = scmp.le.s32.totalorder 1, %s25
      %p410 = scmp.lt.s32.totalorder %s25, 5
      %p411 = pnand %p409, %p410
      %p412 = pneg %p411
      // Predicated region
      $region9: #{gpt_forward.2} parent=5 // pred_check
        _
      $region10: #{gpt_forward.2} parent=5 // pred_check_branch
        %414 = sbr.rel (%p411) target = $region12
      $region11: #{gpt_forward.2} parent=5 // pred_region
        %s415 = ssub.s32 %s25, 1
      $region12: #{gpt_forward.2} parent=5 // pred_fallthru
        _
      %p416 = scmp.lt.s32.totalorder %s25, 4
      // Predicated region
      $region13: #{gpt_forward.2} parent=5 // pred_check
        %p417 = pneg %p416
      $region14: #{gpt_forward.2} parent=5 // pred_check_branch
        %419 = sbr.rel (%p417) target = $region16
      $region15: #{gpt_forward.2} parent=5 // pred_region
        // Predicated region
        $region17: #{gpt_forward.2} parent=15 // pred_check
          %p420 = pneg %p57
        $region18: #{gpt_forward.2} parent=15 // pred_check_branch
          %422 = sbr.rel (%p420) target = $region20
        $region19: #{gpt_forward.2} parent=15 // pred_region
          %p423 = scmp.lt.s32.totalorder %s32, 1
          %s424 = scalar_select %p423, %s32, 1
          %s425 = smul.addr %s424, 32
          %s426 = smul.addr %s425, 8
          %s427 = scalar_lea.vmem %s0, %s426
        $region20: #{gpt_forward.2} parent=15 // pred_fallthru
          _
        // Predicated region
        $region21: #{gpt_forward.2} parent=15 // pred_check
          %p428 = pneg %p83
        $region22: #{gpt_forward.2} parent=15 // pred_check_branch
          %430 = sbr.rel (%p428) target = $region24
        $region23: #{gpt_forward.2} parent=15 // pred_region
          %p431 = scmp.lt.s32.totalorder %s33, 1
          %s432 = scalar_select %p431, %s33, 1
          %s433 = smul.addr %s432, 2
          %s434 = scalar_lea.vmem %s1, %s433
        $region24: #{gpt_forward.2} parent=15 // pred_fallthru
          _
        // Predicated region
        $region25: #{gpt_forward.2} parent=15 // pred_check
          %p435 = pneg %p109
        $region26: #{gpt_forward.2} parent=15 // pred_check_branch
          %437 = sbr.rel (%p435) target = $region28
        $region27: #{gpt_forward.2} parent=15 // pred_region
          %p438 = scmp.lt.s32.totalorder %s33, 1
          %s439 = scalar_select %p438, %s33, 1
          %s440 = smul.addr %s439, 2
          %s441 = scalar_lea.vmem %s2, %s440
        $region28: #{gpt_forward.2} parent=15 // pred_fallthru
          _
        // Predicated region
        $region29: #{gpt_forward.2} parent=15 // pred_check
          %p442 = pneg %p135
        $region30: #{gpt_forward.2} parent=15 // pred_check_branch
          %444 = sbr.rel (%p442) target = $region32
        $region31: #{gpt_forward.2} parent=15 // pred_region
          %s445 = sand.u32 %s125, 1
          %s446 = scalar_lea.sflag [#allocation3], %s445
          %s447 = sand.u32 %s125, 1
          %s448 = smul.addr %s447, 1536
          %s449 = scalar_lea.vmem [#allocation2], %s448
          %451 = vsyncadd %s446, 0
          %s452 = smul.addr %s33, 192
          %s453 = smul.addr %s452, 8
          %s454 = scalar_lea.hbm %s3, %s453
          %s455 = sshll.u32 %s454, 4
          %s456 = int_to_ptr.hbm [resolvable:$true] %s455
          %s457 = sshll.u32 %s449, 4
          %s458 = int_to_ptr.vmem [resolvable:$true] %s457
          %463 = dma.hbm_to_vmem [thread:$0]  %s456, 24576, %s458, %s446, 768, 768, 48
        $region32: #{gpt_forward.2} parent=15 // pred_fallthru
          _
        // Predicated region
        $region33: #{gpt_forward.2} parent=15 // pred_check
          %p464 = pneg %p161
        $region34: #{gpt_forward.2} parent=15 // pred_check_branch
          %466 = sbr.rel (%p464) target = $region36
        $region35: #{gpt_forward.2} parent=15 // pred_region
          %p467 = scmp.lt.s32.totalorder %s33, 1
          %s468 = scalar_select %p467, %s33, 1
          %s469 = smul.addr %s468, 6
          %s470 = scalar_lea.vmem %s4, %s469
        $region36: #{gpt_forward.2} parent=15 // pred_fallthru
          _
        // Predicated region
        $region37: #{gpt_forward.2} parent=15 // pred_check
          %p471 = pneg %p187
        $region38: #{gpt_forward.2} parent=15 // pred_check_branch
          %473 = sbr.rel (%p471) target = $region40
        $region39: #{gpt_forward.2} parent=15 // pred_region
          %p474 = scmp.lt.s32.totalorder %s33, 1
          %s475 = scalar_select %p474, %s33, 1
          %s476 = smul.addr %s475, 64
          %s477 = smul.addr %s476, 8
          %s478 = scalar_lea.vmem %s5, %s477
        $region40: #{gpt_forward.2} parent=15 // pred_fallthru
          _
        // Predicated region
        $region41: #{gpt_forward.2} parent=15 // pred_check
          %p479 = pneg %p213
        $region42: #{gpt_forward.2} parent=15 // pred_check_branch
          %481 = sbr.rel (%p479) target = $region44
        $region43: #{gpt_forward.2} parent=15 // pred_region
          %p482 = scmp.lt.s32.totalorder %s33, 1
          %s483 = scalar_select %p482, %s33, 1
          %s484 = smul.addr %s483, 2
          %s485 = scalar_lea.vmem %s6, %s484
        $region44: #{gpt_forward.2} parent=15 // pred_fallthru
          _
        // Predicated region
        $region45: #{gpt_forward.2} parent=15 // pred_check
          %p486 = pneg %p239
        $region46: #{gpt_forward.2} parent=15 // pred_check_branch
          %488 = sbr.rel (%p486) target = $region48
        $region47: #{gpt_forward.2} parent=15 // pred_region
          %p489 = scmp.lt.s32.totalorder %s33, 1
          %s490 = scalar_select %p489, %s33, 1
          %s491 = smul.addr %s490, 2
          %s492 = scalar_lea.vmem %s7, %s491
        $region48: #{gpt_forward.2} parent=15 // pred_fallthru
          _
        // Predicated region
        $region49: #{gpt_forward.2} parent=15 // pred_check
          %p493 = pneg %p265
        $region50: #{gpt_forward.2} parent=15 // pred_check_branch
          %495 = sbr.rel (%p493) target = $region52
        $region51: #{gpt_forward.2} parent=15 // pred_region
          %p496 = scmp.lt.s32.totalorder %s33, 1
          %s497 = scalar_select %p496, %s33, 1
          %s498 = smul.addr %s497, 2
          %s499 = scalar_lea.vmem %s8, %s498
        $region52: #{gpt_forward.2} parent=15 // pred_fallthru
          _
        // Predicated region
        $region53: #{gpt_forward.2} parent=15 // pred_check
          %p500 = pneg %p291
        $region54: #{gpt_forward.2} parent=15 // pred_check_branch
          %502 = sbr.rel (%p500) target = $region56
        $region55: #{gpt_forward.2} parent=15 // pred_region
          %p503 = scmp.lt.s32.totalorder %s33, 1
          %s504 = scalar_select %p503, %s33, 1
          %s505 = smul.addr %s504, 256
          %s506 = smul.addr %s505, 8
          %s507 = scalar_lea.vmem %s9, %s506
        $region56: #{gpt_forward.2} parent=15 // pred_fallthru
          _
        // Predicated region
        $region57: #{gpt_forward.2} parent=15 // pred_check
          %p508 = pneg %p317
        $region58: #{gpt_forward.2} parent=15 // pred_check_branch
          %510 = sbr.rel (%p508) target = $region60
        $region59: #{gpt_forward.2} parent=15 // pred_region
          %p511 = scmp.lt.s32.totalorder %s33, 1
          %s512 = scalar_select %p511, %s33, 1
          %s513 = smul.addr %s512, 8
          %s514 = scalar_lea.vmem %s10, %s513
        $region60: #{gpt_forward.2} parent=15 // pred_fallthru
          _
        // Predicated region
        $region61: #{gpt_forward.2} parent=15 // pred_check
          %p515 = pneg %p343
        $region62: #{gpt_forward.2} parent=15 // pred_check_branch
          %517 = sbr.rel (%p515) target = $region64
        $region63: #{gpt_forward.2} parent=15 // pred_region
          %s518 = sand.u32 %s333, 1
          %s519 = scalar_lea.sflag [#allocation5], %s518
          %s520 = sand.u32 %s333, 1
          %s521 = smul.addr %s520, 2048
          %s522 = scalar_lea.vmem [#allocation4], %s521
          %524 = vsyncadd %s519, 0
          %s525 = smul.addr %s33, 256
          %s526 = smul.addr %s525, 8
          %s527 = scalar_lea.hbm %s11, %s526
          %s528 = sshll.u32 %s527, 4
          %s529 = int_to_ptr.hbm [resolvable:$true] %s528
          %s530 = sshll.u32 %s522, 4
          %s531 = int_to_ptr.vmem [resolvable:$true] %s530
          %536 = dma.hbm_to_vmem [thread:$0]  %s529, 32768, %s531, %s519, 256, 256, 16
        $region64: #{gpt_forward.2} parent=15 // pred_fallthru
          _
        // Predicated region
        $region65: #{gpt_forward.2} parent=15 // pred_check
          %p537 = pneg %p369
        $region66: #{gpt_forward.2} parent=15 // pred_check_branch
          %539 = sbr.rel (%p537) target = $region68
        $region67: #{gpt_forward.2} parent=15 // pred_region
          %p540 = scmp.lt.s32.totalorder %s33, 1
          %s541 = scalar_select %p540, %s33, 1
          %s542 = smul.addr %s541, 2
          %s543 = scalar_lea.vmem %s12, %s542
        $region68: #{gpt_forward.2} parent=15 // pred_fallthru
          _
      $region16: #{gpt_forward.2} parent=5 // pred_fallthru
        _
      %p544 = scmp.le.s32.totalorder 1, %s25
      %p545 = scmp.lt.s32.totalorder %s25, 5
      %p546 = pnand %p544, %p545
      %p547 = pneg %p546
      // Predicated region
      $region69: #{gpt_forward.2} parent=5 // pred_check
        _
      $region70: #{gpt_forward.2} parent=5 // pred_check_branch
        %549 = sbr.rel (%p546) target = $region72
      $region71: #{gpt_forward.2} parent=5 // pred_region
        %s550 = ssub.s32 %s25, 1
        %s551 = sand.u32 %s128, 1
        %s552 = scalar_lea.sflag [#allocation3], %s551
        %s553 = sand.u32 %s128, 1
        %s554 = smul.addr %s553, 1536
        %s555 = scalar_lea.vmem [#allocation2], %s554
        // Predicated region
        $region73: #{gpt_forward.2} parent=71 // pred_check
          %p556 = pneg %p141
        $region74: #{gpt_forward.2} parent=71 // pred_check_branch
          %558 = sbr.rel (%p556) target = $region76
        $region75: #{gpt_forward.2} parent=71 // pred_region
          %560 = dma.done %s552, 24576
        $region76: #{gpt_forward.2} parent=71 // pred_fallthru
          _
        %s561 = sand.u32 %s336, 1
        %s562 = scalar_lea.sflag [#allocation5], %s561
        %s563 = sand.u32 %s336, 1
        %s564 = smul.addr %s563, 2048
        %s565 = scalar_lea.vmem [#allocation4], %s564
        // Predicated region
        $region77: #{gpt_forward.2} parent=71 // pred_check
          %p566 = pneg %p349
        $region78: #{gpt_forward.2} parent=71 // pred_check_branch
          %568 = sbr.rel (%p566) target = $region80
        $region79: #{gpt_forward.2} parent=71 // pred_region
          %570 = dma.done %s562, 32768
        $region80: #{gpt_forward.2} parent=71 // pred_fallthru
          _
        %p571 = scmp.lt.s32.totalorder %s34, 1
        %s572 = scalar_select %p571, %s34, 1
        %s573 = smul.addr %s572, 32
        %s574 = smul.addr %s573, 8
        %s575 = scalar_lea.vmem %s0, %s574
        %p576 = pneg %p63
        %p577 = pneg %p60
        %p578 = scmp.lt.s32.totalorder %s35, 1
        %s579 = scalar_select %p578, %s35, 1
        %s580 = smul.addr %s579, 2
        %s581 = scalar_lea.vmem %s1, %s580
        %p582 = pneg %p89
        %p583 = pneg %p86
        %p584 = scmp.lt.s32.totalorder %s35, 1
        %s585 = scalar_select %p584, %s35, 1
        %s586 = smul.addr %s585, 2
        %s587 = scalar_lea.vmem %s2, %s586
        %p588 = pneg %p115
        %p589 = pneg %p112
        %s590 = sand.u32 %s128, 1
        %s591 = scalar_lea.sflag [#allocation3], %s590
        %s592 = sand.u32 %s128, 1
        %s593 = smul.addr %s592, 1536
        %s594 = scalar_lea.vmem [#allocation2], %s593
        %p595 = pneg %p141
        %p596 = pneg %p138
        %p597 = scmp.lt.s32.totalorder %s35, 1
        %s598 = scalar_select %p597, %s35, 1
        %s599 = smul.addr %s598, 6
        %s600 = scalar_lea.vmem %s4, %s599
        %p601 = pneg %p167
        %p602 = pneg %p164
        %p603 = scmp.lt.s32.totalorder %s35, 1
        %s604 = scalar_select %p603, %s35, 1
        %s605 = smul.addr %s604, 64
        %s606 = smul.addr %s605, 8
        %s607 = scalar_lea.vmem %s5, %s606
        %p608 = pneg %p193
        %p609 = pneg %p190
        %p610 = scmp.lt.s32.totalorder %s35, 1
        %s611 = scalar_select %p610, %s35, 1
        %s612 = smul.addr %s611, 2
        %s613 = scalar_lea.vmem %s6, %s612
        %p614 = pneg %p219
        %p615 = pneg %p216
        %p616 = scmp.lt.s32.totalorder %s35, 1
        %s617 = scalar_select %p616, %s35, 1
        %s618 = smul.addr %s617, 2
        %s619 = scalar_lea.vmem %s7, %s618
        %p620 = pneg %p245
        %p621 = pneg %p242
        %p622 = scmp.lt.s32.totalorder %s35, 1
        %s623 = scalar_select %p622, %s35, 1
        %s624 = smul.addr %s623, 2
        %s625 = scalar_lea.vmem %s8, %s624
        %p626 = pneg %p271
        %p627 = pneg %p268
        %p628 = scmp.lt.s32.totalorder %s35, 1
        %s629 = scalar_select %p628, %s35, 1
        %s630 = smul.addr %s629, 256
        %s631 = smul.addr %s630, 8
        %s632 = scalar_lea.vmem %s9, %s631
        %p633 = pneg %p297
        %p634 = pneg %p294
        %p635 = scmp.lt.s32.totalorder %s35, 1
        %s636 = scalar_select %p635, %s35, 1
        %s637 = smul.addr %s636, 8
        %s638 = scalar_lea.vmem %s10, %s637
        %p639 = pneg %p323
        %p640 = pneg %p320
        %s641 = sand.u32 %s336, 1
        %s642 = scalar_lea.sflag [#allocation5], %s641
        %s643 = sand.u32 %s336, 1
        %s644 = smul.addr %s643, 2048
        %s645 = scalar_lea.vmem [#allocation4], %s644
        %p646 = pneg %p349
        %p647 = pneg %p346
        %p648 = scmp.lt.s32.totalorder %s35, 1
        %s649 = scalar_select %p648, %s35, 1
        %s650 = smul.addr %s649, 2
        %s651 = scalar_lea.vmem %s12, %s650
        %p652 = pneg %p375
        %p653 = pneg %p372
        %p654 = pneg %p401
        %p655 = pneg %p398
        %p656 = scmp.lt.s32.totalorder %s34, 1
        %s657 = scalar_select %p656, %s34, 1
        %s658 = smul.addr %s657, 32
        %s659 = smul.addr %s658, 8
        %s660 = scalar_lea.vmem %s13, %s659
        %p661 = scmp.lt.s32.totalorder %s34, 1
        %s662 = scalar_select %p661, %s34, 1
        %s663 = smul.addr %s662, 32
        %s664 = smul.addr %s663, 8
        %s665 = scalar_lea.vmem %s0, %s664
        %p666 = scmp.lt.s32.totalorder %s35, 1
        %s667 = scalar_select %p666, %s35, 1
        %s668 = smul.addr %s667, 2
        %s669 = scalar_lea.vmem %s1, %s668
        %p670 = scmp.lt.s32.totalorder %s35, 1
        %s671 = scalar_select %p670, %s35, 1
        %s672 = smul.addr %s671, 2
        %s673 = scalar_lea.vmem %s2, %s672
        %p674 = scmp.lt.s32.totalorder %s35, 1
        %s675 = scalar_select %p674, %s35, 1
        %s676 = smul.addr %s675, 6
        %s677 = scalar_lea.vmem %s4, %s676
        %p678 = scmp.lt.s32.totalorder %s35, 1
        %s679 = scalar_select %p678, %s35, 1
        %s680 = smul.addr %s679, 64
        %s681 = smul.addr %s680, 8
        %s682 = scalar_lea.vmem %s5, %s681
        %p683 = scmp.lt.s32.totalorder %s35, 1
        %s684 = scalar_select %p683, %s35, 1
        %s685 = smul.addr %s684, 2
        %s686 = scalar_lea.vmem %s6, %s685
        %p687 = scmp.lt.s32.totalorder %s35, 1
        %s688 = scalar_select %p687, %s35, 1
        %s689 = smul.addr %s688, 2
        %s690 = scalar_lea.vmem %s7, %s689
        %p691 = scmp.lt.s32.totalorder %s35, 1
        %s692 = scalar_select %p691, %s35, 1
        %s693 = smul.addr %s692, 2
        %s694 = scalar_lea.vmem %s8, %s693
        %p695 = scmp.lt.s32.totalorder %s35, 1
        %s696 = scalar_select %p695, %s35, 1
        %s697 = smul.addr %s696, 256
        %s698 = smul.addr %s697, 8
        %s699 = scalar_lea.vmem %s9, %s698
        %p700 = scmp.lt.s32.totalorder %s35, 1
        %s701 = scalar_select %p700, %s35, 1
        %s702 = smul.addr %s701, 8
        %s703 = scalar_lea.vmem %s10, %s702
        %p704 = scmp.lt.s32.totalorder %s35, 1
        %s705 = scalar_select %p704, %s35, 1
        %s706 = smul.addr %s705, 2
        %s707 = scalar_lea.vmem %s12, %s706
        %p708 = scmp.lt.s32.totalorder %s34, 1
        %s709 = scalar_select %p708, %s34, 1
        %s710 = smul.addr %s709, 32
        %s711 = smul.addr %s710, 8
        %s712 = scalar_lea.vmem %s13, %s711
        %p713 = scmp.eq.s32.totalorder %s35, 0
        // Predicated region
        $region81: #{gpt_forward.2} parent=71 // pred_check
          %p714 = pneg %p713
        $region82: #{gpt_forward.2} parent=71 // pred_check_branch
          %716 = sbr.rel (%p714) target = $region84
        $region83: #{gpt_forward.2} parent=71 // pred_region
          %v717 = vld [vmem:[%s665] sm:$0xff]
          %v718 = vld [vmem:[%s665 + $0x8] sm:$0xff]
          %v719 = vld [vmem:[%s665 + $0x10] sm:$0xff]
          %v720 = vld [vmem:[%s665 + $0x18] sm:$0xff]
          %v721 = vld [vmem:[%s665 + $0x20] sm:$0xff]
          %v722 = vld [vmem:[%s665 + $0x28] sm:$0xff]
          %v723 = vld [vmem:[%s665 + $0x30] sm:$0xff]
          %v724 = vld [vmem:[%s665 + $0x38] sm:$0xff]
          %v725 = vld [vmem:[%s665 + $0x40] sm:$0xff]
          %v726 = vld [vmem:[%s665 + $0x48] sm:$0xff]
          %v727 = vld [vmem:[%s665 + $0x50] sm:$0xff]
          %v728 = vld [vmem:[%s665 + $0x58] sm:$0xff]
          %v729 = vld [vmem:[%s665 + $0x60] sm:$0xff]
          %v730 = vld [vmem:[%s665 + $0x68] sm:$0xff]
          %v731 = vld [vmem:[%s665 + $0x70] sm:$0xff]
          %v732 = vld [vmem:[%s665 + $0x78] sm:$0xff]
          %v733 = vld [vmem:[%s665 + $0x80] sm:$0xff]
          %v734 = vld [vmem:[%s665 + $0x88] sm:$0xff]
          %v735 = vld [vmem:[%s665 + $0x90] sm:$0xff]
          %v736 = vld [vmem:[%s665 + $0x98] sm:$0xff]
          %v737 = vld [vmem:[%s665 + $0xa0] sm:$0xff]
          %v738 = vld [vmem:[%s665 + $0xa8] sm:$0xff]
          %v739 = vld [vmem:[%s665 + $0xb0] sm:$0xff]
          %v740 = vld [vmem:[%s665 + $0xb8] sm:$0xff]
          %v741 = vld [vmem:[%s665 + $0xc0] sm:$0xff]
          %v742 = vld [vmem:[%s665 + $0xc8] sm:$0xff]
          %v743 = vld [vmem:[%s665 + $0xd0] sm:$0xff]
          %v744 = vld [vmem:[%s665 + $0xd8] sm:$0xff]
          %v745 = vld [vmem:[%s665 + $0xe0] sm:$0xff]
          %v746 = vld [vmem:[%s665 + $0xe8] sm:$0xff]
          %v747 = vld [vmem:[%s665 + $0xf0] sm:$0xff]
          %v748 = vld [vmem:[%s665 + $0xf8] sm:$0xff]
          %749 = vst [vmem:[%s712] sm:$0xff] %v717
          %750 = vst [vmem:[%s712 + $0x8] sm:$0xff] %v718
          %751 = vst [vmem:[%s712 + $0x10] sm:$0xff] %v719
          %752 = vst [vmem:[%s712 + $0x18] sm:$0xff] %v720
          %753 = vst [vmem:[%s712 + $0x20] sm:$0xff] %v721
          %754 = vst [vmem:[%s712 + $0x28] sm:$0xff] %v722
          %755 = vst [vmem:[%s712 + $0x30] sm:$0xff] %v723
          %756 = vst [vmem:[%s712 + $0x38] sm:$0xff] %v724
          %757 = vst [vmem:[%s712 + $0x40] sm:$0xff] %v725
          %758 = vst [vmem:[%s712 + $0x48] sm:$0xff] %v726
          %759 = vst [vmem:[%s712 + $0x50] sm:$0xff] %v727
          %760 = vst [vmem:[%s712 + $0x58] sm:$0xff] %v728
          %761 = vst [vmem:[%s712 + $0x60] sm:$0xff] %v729
          %762 = vst [vmem:[%s712 + $0x68] sm:$0xff] %v730
          %763 = vst [vmem:[%s712 + $0x70] sm:$0xff] %v731
          %764 = vst [vmem:[%s712 + $0x78] sm:$0xff] %v732
          %765 = vst [vmem:[%s712 + $0x80] sm:$0xff] %v733
          %766 = vst [vmem:[%s712 + $0x88] sm:$0xff] %v734
          %767 = vst [vmem:[%s712 + $0x90] sm:$0xff] %v735
          %768 = vst [vmem:[%s712 + $0x98] sm:$0xff] %v736
          %769 = vst [vmem:[%s712 + $0xa0] sm:$0xff] %v737
          %770 = vst [vmem:[%s712 + $0xa8] sm:$0xff] %v738
          %771 = vst [vmem:[%s712 + $0xb0] sm:$0xff] %v739
          %772 = vst [vmem:[%s712 + $0xb8] sm:$0xff] %v740
          %773 = vst [vmem:[%s712 + $0xc0] sm:$0xff] %v741
          %774 = vst [vmem:[%s712 + $0xc8] sm:$0xff] %v742
          %775 = vst [vmem:[%s712 + $0xd0] sm:$0xff] %v743
          %776 = vst [vmem:[%s712 + $0xd8] sm:$0xff] %v744
          %777 = vst [vmem:[%s712 + $0xe0] sm:$0xff] %v745
          %778 = vst [vmem:[%s712 + $0xe8] sm:$0xff] %v746
          %779 = vst [vmem:[%s712 + $0xf0] sm:$0xff] %v747
          %780 = vst [vmem:[%s712 + $0xf8] sm:$0xff] %v748
        $region84: #{gpt_forward.2} parent=71 // pred_fallthru
          _
        %v781 = vld [vmem:[%s712] sm:$0xff]
        %v782 = vld [vmem:[%s712 + $0x8] sm:$0xff]
        %v783 = vld [vmem:[%s712 + $0x10] sm:$0xff]
        %v784 = vld [vmem:[%s712 + $0x18] sm:$0xff]
        %v785 = vld [vmem:[%s712 + $0x20] sm:$0xff]
        %v786 = vld [vmem:[%s712 + $0x28] sm:$0xff]
        %v787 = vld [vmem:[%s712 + $0x30] sm:$0xff]
        %v788 = vld [vmem:[%s712 + $0x38] sm:$0xff]
        %v789 = vld [vmem:[%s712 + $0x40] sm:$0xff]
        %v790 = vld [vmem:[%s712 + $0x48] sm:$0xff]
        %v791 = vld [vmem:[%s712 + $0x50] sm:$0xff]
        %v792 = vld [vmem:[%s712 + $0x58] sm:$0xff]
        %v793 = vld [vmem:[%s712 + $0x60] sm:$0xff]
        %v794 = vld [vmem:[%s712 + $0x68] sm:$0xff]
        %v795 = vld [vmem:[%s712 + $0x70] sm:$0xff]
        %v796 = vld [vmem:[%s712 + $0x78] sm:$0xff]
        %v797 = vld [vmem:[%s712 + $0x80] sm:$0xff]
        %v798 = vld [vmem:[%s712 + $0x88] sm:$0xff]
        %v799 = vld [vmem:[%s712 + $0x90] sm:$0xff]
        %v800 = vld [vmem:[%s712 + $0x98] sm:$0xff]
        %v801 = vld [vmem:[%s712 + $0xa0] sm:$0xff]
        %v802 = vld [vmem:[%s712 + $0xa8] sm:$0xff]
        %v803 = vld [vmem:[%s712 + $0xb0] sm:$0xff]
        %v804 = vld [vmem:[%s712 + $0xb8] sm:$0xff]
        %v805 = vld [vmem:[%s712 + $0xc0] sm:$0xff]
        %v806 = vld [vmem:[%s712 + $0xc8] sm:$0xff]
        %v807 = vld [vmem:[%s712 + $0xd0] sm:$0xff]
        %v808 = vld [vmem:[%s712 + $0xd8] sm:$0xff]
        %v809 = vld [vmem:[%s712 + $0xe0] sm:$0xff]
        %v810 = vld [vmem:[%s712 + $0xe8] sm:$0xff]
        %v811 = vld [vmem:[%s712 + $0xf0] sm:$0xff]
        %v812 = vld [vmem:[%s712 + $0xf8] sm:$0xff]
        %v813 = vld [vmem:[%s669] sm:$0x3]
        %v814 = vld [vmem:[%s673] sm:$0x3]
        %v815 = vadd.f32 %v781, %v782
        %816 = vadd.xlane.f32.xlu0 %v815
        %v817 = vpop.xlane.xlu0 %816
        %v818 = vadd.f32 %v783, %v784
        %819 = vadd.xlane.f32.xlu0 %v818
        %v820 = vpop.xlane.xlu0 %819
        %v821 = vadd.f32 %v785, %v786
        %822 = vadd.xlane.f32.xlu0 %v821
        %v823 = vpop.xlane.xlu0 %822
        %v824 = vadd.f32 %v787, %v788
        %825 = vadd.xlane.f32.xlu0 %v824
        %v826 = vpop.xlane.xlu0 %825
        %v827 = vadd.f32 %v789, %v790
        %828 = vadd.xlane.f32.xlu0 %v827
        %v829 = vpop.xlane.xlu0 %828
        %v830 = vadd.f32 %v791, %v792
        %831 = vadd.xlane.f32.xlu0 %v830
        %v832 = vpop.xlane.xlu0 %831
        %v833 = vadd.f32 %v793, %v794
        %834 = vadd.xlane.f32.xlu0 %v833
        %v835 = vpop.xlane.xlu0 %834
        %v836 = vadd.f32 %v795, %v796
        %837 = vadd.xlane.f32.xlu0 %v836
        %v838 = vpop.xlane.xlu0 %837
        %v839 = vadd.f32 %v797, %v798
        %840 = vadd.xlane.f32.xlu0 %v839
        %v841 = vpop.xlane.xlu0 %840
        %v842 = vadd.f32 %v799, %v800
        %843 = vadd.xlane.f32.xlu0 %v842
        %v844 = vpop.xlane.xlu0 %843
        %v845 = vadd.f32 %v801, %v802
        %846 = vadd.xlane.f32.xlu0 %v845
        %v847 = vpop.xlane.xlu0 %846
        %v848 = vadd.f32 %v803, %v804
        %849 = vadd.xlane.f32.xlu0 %v848
        %v850 = vpop.xlane.xlu0 %849
        %v851 = vadd.f32 %v805, %v806
        %852 = vadd.xlane.f32.xlu0 %v851
        %v853 = vpop.xlane.xlu0 %852
        %v854 = vadd.f32 %v807, %v808
        %855 = vadd.xlane.f32.xlu0 %v854
        %v856 = vpop.xlane.xlu0 %855
        %v857 = vadd.f32 %v809, %v810
        %858 = vadd.xlane.f32.xlu0 %v857
        %v859 = vpop.xlane.xlu0 %858
        %v860 = vadd.f32 %v811, %v812
        %861 = vadd.xlane.f32.xlu0 %v860
        %v862 = vpop.xlane.xlu0 %861
        %v863 = vrcp.pop 256.0
        %v864 = vmul.f32 256.0, %v863
        %v865 = vsub.f32 1.0, %v864
        %v866 = vmul.f32 %v863, %v865
        %v867 = vadd.f32 %v863, %v866
        %vm868 = vweird.f32 %v863
        %v869 = vsel %vm868, %v863, %v867
        %v870 = vmul.f32 %v817, %v869
        %v871 = vmul.f32 %v820, %v869
        %v872 = vmul.f32 %v823, %v869
        %v873 = vmul.f32 %v826, %v869
        %v874 = vmul.f32 %v829, %v869
        %v875 = vmul.f32 %v832, %v869
        %v876 = vmul.f32 %v835, %v869
        %v877 = vmul.f32 %v838, %v869
        %v878 = vmul.f32 %v841, %v869
        %v879 = vmul.f32 %v844, %v869
        %v880 = vmul.f32 %v847, %v869
        %v881 = vmul.f32 %v850, %v869
        %v882 = vmul.f32 %v853, %v869
        %v883 = vmul.f32 %v856, %v869
        %v884 = vmul.f32 %v859, %v869
        %v885 = vmul.f32 %v862, %v869
        %v886 = vsub.f32 %v781, %v870
        %v887 = vsub.f32 %v782, %v870
        %v888 = vsub.f32 %v783, %v871
        %v889 = vsub.f32 %v784, %v871
        %v890 = vsub.f32 %v785, %v872
        %v891 = vsub.f32 %v786, %v872
        %v892 = vsub.f32 %v787, %v873
        %v893 = vsub.f32 %v788, %v873
        %v894 = vsub.f32 %v789, %v874
        %v895 = vsub.f32 %v790, %v874
        %v896 = vsub.f32 %v791, %v875
        %v897 = vsub.f32 %v792, %v875
        %v898 = vsub.f32 %v793, %v876
        %v899 = vsub.f32 %v794, %v876
        %v900 = vsub.f32 %v795, %v877
        %v901 = vsub.f32 %v796, %v877
        %v902 = vsub.f32 %v797, %v878
        %v903 = vsub.f32 %v798, %v878
        %v904 = vsub.f32 %v799, %v879
        %v905 = vsub.f32 %v800, %v879
        %v906 = vsub.f32 %v801, %v880
        %v907 = vsub.f32 %v802, %v880
        %v908 = vsub.f32 %v803, %v881
        %v909 = vsub.f32 %v804, %v881
        %v910 = vsub.f32 %v805, %v882
        %v911 = vsub.f32 %v806, %v882
        %v912 = vsub.f32 %v807, %v883
        %v913 = vsub.f32 %v808, %v883
        %v914 = vsub.f32 %v809, %v884
        %v915 = vsub.f32 %v810, %v884
        %v916 = vsub.f32 %v811, %v885
        %v917 = vsub.f32 %v812, %v885
        %v918 = vmul.f32 %v886, %v886
        %v919 = vmul.f32 %v887, %v887
        %v920 = vmul.f32 %v888, %v888
        %v921 = vmul.f32 %v889, %v889
        %v922 = vmul.f32 %v890, %v890
        %v923 = vmul.f32 %v891, %v891
        %v924 = vmul.f32 %v892, %v892
        %v925 = vmul.f32 %v893, %v893
        %v926 = vmul.f32 %v894, %v894
        %v927 = vmul.f32 %v895, %v895
        %v928 = vmul.f32 %v896, %v896
        %v929 = vmul.f32 %v897, %v897
        %v930 = vmul.f32 %v898, %v898
        %v931 = vmul.f32 %v899, %v899
        %v932 = vmul.f32 %v900, %v900
        %v933 = vmul.f32 %v901, %v901
        %v934 = vmul.f32 %v902, %v902
        %v935 = vmul.f32 %v903, %v903
        %v936 = vmul.f32 %v904, %v904
        %v937 = vmul.f32 %v905, %v905
        %v938 = vmul.f32 %v906, %v906
        %v939 = vmul.f32 %v907, %v907
        %v940 = vmul.f32 %v908, %v908
        %v941 = vmul.f32 %v909, %v909
        %v942 = vmul.f32 %v910, %v910
        %v943 = vmul.f32 %v911, %v911
        %v944 = vmul.f32 %v912, %v912
        %v945 = vmul.f32 %v913, %v913
        %v946 = vmul.f32 %v914, %v914
        %v947 = vmul.f32 %v915, %v915
        %v948 = vmul.f32 %v916, %v916
        %v949 = vmul.f32 %v917, %v917
        %v950 = vadd.f32 %v918, %v919
        %951 = vadd.xlane.f32.xlu0 %v950
        %v952 = vpop.xlane.xlu0 %951
        %v953 = vadd.f32 %v920, %v921
        %954 = vadd.xlane.f32.xlu0 %v953
        %v955 = vpop.xlane.xlu0 %954
        %v956 = vadd.f32 %v922, %v923
        %957 = vadd.xlane.f32.xlu0 %v956
        %v958 = vpop.xlane.xlu0 %957
        %v959 = vadd.f32 %v924, %v925
        %960 = vadd.xlane.f32.xlu0 %v959
        %v961 = vpop.xlane.xlu0 %960
        %v962 = vadd.f32 %v926, %v927
        %963 = vadd.xlane.f32.xlu0 %v962
        %v964 = vpop.xlane.xlu0 %963
        %v965 = vadd.f32 %v928, %v929
        %966 = vadd.xlane.f32.xlu0 %v965
        %v967 = vpop.xlane.xlu0 %966
        %v968 = vadd.f32 %v930, %v931
        %969 = vadd.xlane.f32.xlu0 %v968
        %v970 = vpop.xlane.xlu0 %969
        %v971 = vadd.f32 %v932, %v933
        %972 = vadd.xlane.f32.xlu0 %v971
        %v973 = vpop.xlane.xlu0 %972
        %v974 = vadd.f32 %v934, %v935
        %975 = vadd.xlane.f32.xlu0 %v974
        %v976 = vpop.xlane.xlu0 %975
        %v977 = vadd.f32 %v936, %v937
        %978 = vadd.xlane.f32.xlu0 %v977
        %v979 = vpop.xlane.xlu0 %978
        %v980 = vadd.f32 %v938, %v939
        %981 = vadd.xlane.f32.xlu0 %v980
        %v982 = vpop.xlane.xlu0 %981
        %v983 = vadd.f32 %v940, %v941
        %984 = vadd.xlane.f32.xlu0 %v983
        %v985 = vpop.xlane.xlu0 %984
        %v986 = vadd.f32 %v942, %v943
        %987 = vadd.xlane.f32.xlu0 %v986
        %v988 = vpop.xlane.xlu0 %987
        %v989 = vadd.f32 %v944, %v945
        %990 = vadd.xlane.f32.xlu0 %v989
        %v991 = vpop.xlane.xlu0 %990
        %v992 = vadd.f32 %v946, %v947
        %993 = vadd.xlane.f32.xlu0 %v992
        %v994 = vpop.xlane.xlu0 %993
        %v995 = vadd.f32 %v948, %v949
        %996 = vadd.xlane.f32.xlu0 %v995
        %v997 = vpop.xlane.xlu0 %996
        %v998 = vmul.f32 %v952, %v869
        %v999 = vmul.f32 %v955, %v869
        %v1000 = vmul.f32 %v958, %v869
        %v1001 = vmul.f32 %v961, %v869
        %v1002 = vmul.f32 %v964, %v869
        %v1003 = vmul.f32 %v967, %v869
        %v1004 = vmul.f32 %v970, %v869
        %v1005 = vmul.f32 %v973, %v869
        %v1006 = vmul.f32 %v976, %v869
        %v1007 = vmul.f32 %v979, %v869
        %v1008 = vmul.f32 %v982, %v869
        %v1009 = vmul.f32 %v985, %v869
        %v1010 = vmul.f32 %v988, %v869
        %v1011 = vmul.f32 %v991, %v869
        %v1012 = vmul.f32 %v994, %v869
        %v1013 = vmul.f32 %v997, %v869
        %v1014 = vadd.f32 %v998, 1e-05
        %v1015 = vadd.f32 %v999, 1e-05
        %v1016 = vadd.f32 %v1000, 1e-05
        %v1017 = vadd.f32 %v1001, 1e-05
        %v1018 = vadd.f32 %v1002, 1e-05
        %v1019 = vadd.f32 %v1003, 1e-05
        %v1020 = vadd.f32 %v1004, 1e-05
        %v1021 = vadd.f32 %v1005, 1e-05
        %v1022 = vadd.f32 %v1006, 1e-05
        %v1023 = vadd.f32 %v1007, 1e-05
        %v1024 = vadd.f32 %v1008, 1e-05
        %v1025 = vadd.f32 %v1009, 1e-05
        %v1026 = vadd.f32 %v1010, 1e-05
        %v1027 = vadd.f32 %v1011, 1e-05
        %v1028 = vadd.f32 %v1012, 1e-05
        %v1029 = vadd.f32 %v1013, 1e-05
        %v1030 = vrsqrt.pop %v1014
        %v1031 = vmul.f32 %v1030, %v1014
        %v1032 = vmul.f32 %v1031, %v1030
        %v1033 = vmul.f32 0.5, %v1032
        %v1034 = vsub.f32 1.5, %v1033
        %v1035 = vmul.f32 %v1030, %v1034
        %vm1036 = vweird.f32 %v1014
        %vm1037 = vweird.f32 %v1030
        %vm1038 = vmor %vm1036, %vm1037
        %v1039 = vsel %vm1038, %v1030, %v1035
        %v1040 = vrsqrt.pop %v1015
        %v1041 = vmul.f32 %v1040, %v1015
        %v1042 = vmul.f32 %v1041, %v1040
        %v1043 = vmul.f32 0.5, %v1042
        %v1044 = vsub.f32 1.5, %v1043
        %v1045 = vmul.f32 %v1040, %v1044
        %vm1046 = vweird.f32 %v1015
        %vm1047 = vweird.f32 %v1040
        %vm1048 = vmor %vm1046, %vm1047
        %v1049 = vsel %vm1048, %v1040, %v1045
        %v1050 = vrsqrt.pop %v1016
        %v1051 = vmul.f32 %v1050, %v1016
        %v1052 = vmul.f32 %v1051, %v1050
        %v1053 = vmul.f32 0.5, %v1052
        %v1054 = vsub.f32 1.5, %v1053
        %v1055 = vmul.f32 %v1050, %v1054
        %vm1056 = vweird.f32 %v1016
        %vm1057 = vweird.f32 %v1050
        %vm1058 = vmor %vm1056, %vm1057
        %v1059 = vsel %vm1058, %v1050, %v1055
        %v1060 = vrsqrt.pop %v1017
        %v1061 = vmul.f32 %v1060, %v1017
        %v1062 = vmul.f32 %v1061, %v1060
        %v1063 = vmul.f32 0.5, %v1062
        %v1064 = vsub.f32 1.5, %v1063
        %v1065 = vmul.f32 %v1060, %v1064
        %vm1066 = vweird.f32 %v1017
        %vm1067 = vweird.f32 %v1060
        %vm1068 = vmor %vm1066, %vm1067
        %v1069 = vsel %vm1068, %v1060, %v1065
        %v1070 = vrsqrt.pop %v1018
        %v1071 = vmul.f32 %v1070, %v1018
        %v1072 = vmul.f32 %v1071, %v1070
        %v1073 = vmul.f32 0.5, %v1072
        %v1074 = vsub.f32 1.5, %v1073
        %v1075 = vmul.f32 %v1070, %v1074
        %vm1076 = vweird.f32 %v1018
        %vm1077 = vweird.f32 %v1070
        %vm1078 = vmor %vm1076, %vm1077
        %v1079 = vsel %vm1078, %v1070, %v1075
        %v1080 = vrsqrt.pop %v1019
        %v1081 = vmul.f32 %v1080, %v1019
        %v1082 = vmul.f32 %v1081, %v1080
        %v1083 = vmul.f32 0.5, %v1082
        %v1084 = vsub.f32 1.5, %v1083
        %v1085 = vmul.f32 %v1080, %v1084
        %vm1086 = vweird.f32 %v1019
        %vm1087 = vweird.f32 %v1080
        %vm1088 = vmor %vm1086, %vm1087
        %v1089 = vsel %vm1088, %v1080, %v1085
        %v1090 = vrsqrt.pop %v1020
        %v1091 = vmul.f32 %v1090, %v1020
        %v1092 = vmul.f32 %v1091, %v1090
        %v1093 = vmul.f32 0.5, %v1092
        %v1094 = vsub.f32 1.5, %v1093
        %v1095 = vmul.f32 %v1090, %v1094
        %vm1096 = vweird.f32 %v1020
        %vm1097 = vweird.f32 %v1090
        %vm1098 = vmor %vm1096, %vm1097
        %v1099 = vsel %vm1098, %v1090, %v1095
        %v1100 = vrsqrt.pop %v1021
        %v1101 = vmul.f32 %v1100, %v1021
        %v1102 = vmul.f32 %v1101, %v1100
        %v1103 = vmul.f32 0.5, %v1102
        %v1104 = vsub.f32 1.5, %v1103
        %v1105 = vmul.f32 %v1100, %v1104
        %vm1106 = vweird.f32 %v1021
        %vm1107 = vweird.f32 %v1100
        %vm1108 = vmor %vm1106, %vm1107
        %v1109 = vsel %vm1108, %v1100, %v1105
        %v1110 = vrsqrt.pop %v1022
        %v1111 = vmul.f32 %v1110, %v1022
        %v1112 = vmul.f32 %v1111, %v1110
        %v1113 = vmul.f32 0.5, %v1112
        %v1114 = vsub.f32 1.5, %v1113
        %v1115 = vmul.f32 %v1110, %v1114
        %vm1116 = vweird.f32 %v1022
        %vm1117 = vweird.f32 %v1110
        %vm1118 = vmor %vm1116, %vm1117
        %v1119 = vsel %vm1118, %v1110, %v1115
        %v1120 = vrsqrt.pop %v1023
        %v1121 = vmul.f32 %v1120, %v1023
        %v1122 = vmul.f32 %v1121, %v1120
        %v1123 = vmul.f32 0.5, %v1122
        %v1124 = vsub.f32 1.5, %v1123
        %v1125 = vmul.f32 %v1120, %v1124
        %vm1126 = vweird.f32 %v1023
        %vm1127 = vweird.f32 %v1120
        %vm1128 = vmor %vm1126, %vm1127
        %v1129 = vsel %vm1128, %v1120, %v1125
        %v1130 = vrsqrt.pop %v1024
        %v1131 = vmul.f32 %v1130, %v1024
        %v1132 = vmul.f32 %v1131, %v1130
        %v1133 = vmul.f32 0.5, %v1132
        %v1134 = vsub.f32 1.5, %v1133
        %v1135 = vmul.f32 %v1130, %v1134
        %vm1136 = vweird.f32 %v1024
        %vm1137 = vweird.f32 %v1130
        %vm1138 = vmor %vm1136, %vm1137
        %v1139 = vsel %vm1138, %v1130, %v1135
        %v1140 = vrsqrt.pop %v1025
        %v1141 = vmul.f32 %v1140, %v1025
        %v1142 = vmul.f32 %v1141, %v1140
        %v1143 = vmul.f32 0.5, %v1142
        %v1144 = vsub.f32 1.5, %v1143
        %v1145 = vmul.f32 %v1140, %v1144
        %vm1146 = vweird.f32 %v1025
        %vm1147 = vweird.f32 %v1140
        %vm1148 = vmor %vm1146, %vm1147
        %v1149 = vsel %vm1148, %v1140, %v1145
        %v1150 = vrsqrt.pop %v1026
        %v1151 = vmul.f32 %v1150, %v1026
        %v1152 = vmul.f32 %v1151, %v1150
        %v1153 = vmul.f32 0.5, %v1152
        %v1154 = vsub.f32 1.5, %v1153
        %v1155 = vmul.f32 %v1150, %v1154
        %vm1156 = vweird.f32 %v1026
        %vm1157 = vweird.f32 %v1150
        %vm1158 = vmor %vm1156, %vm1157
        %v1159 = vsel %vm1158, %v1150, %v1155
        %v1160 = vrsqrt.pop %v1027
        %v1161 = vmul.f32 %v1160, %v1027
        %v1162 = vmul.f32 %v1161, %v1160
        %v1163 = vmul.f32 0.5, %v1162
        %v1164 = vsub.f32 1.5, %v1163
        %v1165 = vmul.f32 %v1160, %v1164
        %vm1166 = vweird.f32 %v1027
        %vm1167 = vweird.f32 %v1160
        %vm1168 = vmor %vm1166, %vm1167
        %v1169 = vsel %vm1168, %v1160, %v1165
        %v1170 = vrsqrt.pop %v1028
        %v1171 = vmul.f32 %v1170, %v1028
        %v1172 = vmul.f32 %v1171, %v1170
        %v1173 = vmul.f32 0.5, %v1172
        %v1174 = vsub.f32 1.5, %v1173
        %v1175 = vmul.f32 %v1170, %v1174
        %vm1176 = vweird.f32 %v1028
        %vm1177 = vweird.f32 %v1170
        %vm1178 = vmor %vm1176, %vm1177
        %v1179 = vsel %vm1178, %v1170, %v1175
        %v1180 = vrsqrt.pop %v1029
        %v1181 = vmul.f32 %v1180, %v1029
        %v1182 = vmul.f32 %v1181, %v1180
        %v1183 = vmul.f32 0.5, %v1182
        %v1184 = vsub.f32 1.5, %v1183
        %v1185 = vmul.f32 %v1180, %v1184
        %vm1186 = vweird.f32 %v1029
        %vm1187 = vweird.f32 %v1180
        %vm1188 = vmor %vm1186, %vm1187
        %v1189 = vsel %vm1188, %v1180, %v1185
        %v1190 = vmul.f32 %v886, %v1039
        %v1191 = vmul.f32 %v887, %v1039
        %v1192 = vmul.f32 %v888, %v1049
        %v1193 = vmul.f32 %v889, %v1049
        %v1194 = vmul.f32 %v890, %v1059
        %v1195 = vmul.f32 %v891, %v1059
        %v1196 = vmul.f32 %v892, %v1069
        %v1197 = vmul.f32 %v893, %v1069
        %v1198 = vmul.f32 %v894, %v1079
        %v1199 = vmul.f32 %v895, %v1079
        %v1200 = vmul.f32 %v896, %v1089
        %v1201 = vmul.f32 %v897, %v1089
        %v1202 = vmul.f32 %v898, %v1099
        %v1203 = vmul.f32 %v899, %v1099
        %v1204 = vmul.f32 %v900, %v1109
        %v1205 = vmul.f32 %v901, %v1109
        %v1206 = vmul.f32 %v902, %v1119
        %v1207 = vmul.f32 %v903, %v1119
        %v1208 = vmul.f32 %v904, %v1129
        %v1209 = vmul.f32 %v905, %v1129
        %v1210 = vmul.f32 %v906, %v1139
        %v1211 = vmul.f32 %v907, %v1139
        %v1212 = vmul.f32 %v908, %v1149
        %v1213 = vmul.f32 %v909, %v1149
        %v1214 = vmul.f32 %v910, %v1159
        %v1215 = vmul.f32 %v911, %v1159
        %v1216 = vmul.f32 %v912, %v1169
        %v1217 = vmul.f32 %v913, %v1169
        %v1218 = vmul.f32 %v914, %v1179
        %v1219 = vmul.f32 %v915, %v1179
        %v1220 = vmul.f32 %v916, %v1189
        %v1221 = vmul.f32 %v917, %v1189
        %v1223 = vperm.slane %v813, 0
        %v1224 = vperm.slane %v813, 1
        %v1227 = vmul.f32 %v1190, %v1223
        %v1228 = vmul.f32 %v1191, %v1224
        %v1229 = vmul.f32 %v1192, %v1223
        %v1230 = vmul.f32 %v1193, %v1224
        %v1231 = vmul.f32 %v1194, %v1223
        %v1232 = vmul.f32 %v1195, %v1224
        %v1233 = vmul.f32 %v1196, %v1223
        %v1234 = vmul.f32 %v1197, %v1224
        %v1235 = vmul.f32 %v1198, %v1223
        %v1236 = vmul.f32 %v1199, %v1224
        %v1237 = vmul.f32 %v1200, %v1223
        %v1238 = vmul.f32 %v1201, %v1224
        %v1239 = vmul.f32 %v1202, %v1223
        %v1240 = vmul.f32 %v1203, %v1224
        %v1241 = vmul.f32 %v1204, %v1223
        %v1242 = vmul.f32 %v1205, %v1224
        %v1243 = vmul.f32 %v1206, %v1223
        %v1244 = vmul.f32 %v1207, %v1224
        %v1245 = vmul.f32 %v1208, %v1223
        %v1246 = vmul.f32 %v1209, %v1224
        %v1247 = vmul.f32 %v1210, %v1223
        %v1248 = vmul.f32 %v1211, %v1224
        %v1249 = vmul.f32 %v1212, %v1223
        %v1250 = vmul.f32 %v1213, %v1224
        %v1251 = vmul.f32 %v1214, %v1223
        %v1252 = vmul.f32 %v1215, %v1224
        %v1253 = vmul.f32 %v1216, %v1223
        %v1254 = vmul.f32 %v1217, %v1224
        %v1255 = vmul.f32 %v1218, %v1223
        %v1256 = vmul.f32 %v1219, %v1224
        %v1257 = vmul.f32 %v1220, %v1223
        %v1258 = vmul.f32 %v1221, %v1224
        %v1260 = vperm.slane %v814, 0
        %v1261 = vperm.slane %v814, 1
        %v1264 = vadd.f32 %v1227, %v1260
        %v1265 = vadd.f32 %v1228, %v1261
        %v1266 = vadd.f32 %v1229, %v1260
        %v1267 = vadd.f32 %v1230, %v1261
        %v1268 = vadd.f32 %v1231, %v1260
        %v1269 = vadd.f32 %v1232, %v1261
        %v1270 = vadd.f32 %v1233, %v1260
        %v1271 = vadd.f32 %v1234, %v1261
        %v1272 = vadd.f32 %v1235, %v1260
        %v1273 = vadd.f32 %v1236, %v1261
        %v1274 = vadd.f32 %v1237, %v1260
        %v1275 = vadd.f32 %v1238, %v1261
        %v1276 = vadd.f32 %v1239, %v1260
        %v1277 = vadd.f32 %v1240, %v1261
        %v1278 = vadd.f32 %v1241, %v1260
        %v1279 = vadd.f32 %v1242, %v1261
        %v1280 = vadd.f32 %v1243, %v1260
        %v1281 = vadd.f32 %v1244, %v1261
        %v1282 = vadd.f32 %v1245, %v1260
        %v1283 = vadd.f32 %v1246, %v1261
        %v1284 = vadd.f32 %v1247, %v1260
        %v1285 = vadd.f32 %v1248, %v1261
        %v1286 = vadd.f32 %v1249, %v1260
        %v1287 = vadd.f32 %v1250, %v1261
        %v1288 = vadd.f32 %v1251, %v1260
        %v1289 = vadd.f32 %v1252, %v1261
        %v1290 = vadd.f32 %v1253, %v1260
        %v1291 = vadd.f32 %v1254, %v1261
        %v1292 = vadd.f32 %v1255, %v1260
        %v1293 = vadd.f32 %v1256, %v1261
        %v1294 = vadd.f32 %v1257, %v1260
        %v1295 = vadd.f32 %v1258, %v1261
        %v1296 = vld [vmem:[%s555] sm:$0xff]
        %v1297 = vld [vmem:[%s555 + $0x8] sm:$0xff]
        %v1298 = vld [vmem:[%s555 + $0x10] sm:$0xff]
        %v1299 = vld [vmem:[%s555 + $0x18] sm:$0xff]
        %v1300 = vld [vmem:[%s555 + $0x20] sm:$0xff]
        %v1301 = vld [vmem:[%s555 + $0x28] sm:$0xff]
        %v1302 = vld [vmem:[%s555 + $0x30] sm:$0xff]
        %v1303 = vld [vmem:[%s555 + $0x38] sm:$0xff]
        %v1304 = vld [vmem:[%s555 + $0x40] sm:$0xff]
        %v1305 = vld [vmem:[%s555 + $0x48] sm:$0xff]
        %v1306 = vld [vmem:[%s555 + $0x50] sm:$0xff]
        %v1307 = vld [vmem:[%s555 + $0x58] sm:$0xff]
        %v1308 = vld [vmem:[%s555 + $0x60] sm:$0xff]
        %v1309 = vld [vmem:[%s555 + $0x68] sm:$0xff]
        %v1310 = vld [vmem:[%s555 + $0x70] sm:$0xff]
        %v1311 = vld [vmem:[%s555 + $0x78] sm:$0xff]
        %v1312 = vld [vmem:[%s555 + $0x80] sm:$0xff]
        %v1313 = vld [vmem:[%s555 + $0x88] sm:$0xff]
        %v1314 = vld [vmem:[%s555 + $0x90] sm:$0xff]
        %v1315 = vld [vmem:[%s555 + $0x98] sm:$0xff]
        %v1316 = vld [vmem:[%s555 + $0xa0] sm:$0xff]
        %v1317 = vld [vmem:[%s555 + $0xa8] sm:$0xff]
        %v1318 = vld [vmem:[%s555 + $0xb0] sm:$0xff]
        %v1319 = vld [vmem:[%s555 + $0xb8] sm:$0xff]
        %v1320 = vld [vmem:[%s555 + $0xc0] sm:$0xff]
        %v1321 = vld [vmem:[%s555 + $0xc8] sm:$0xff]
        %v1322 = vld [vmem:[%s555 + $0xd0] sm:$0xff]
        %v1323 = vld [vmem:[%s555 + $0xd8] sm:$0xff]
        %v1324 = vld [vmem:[%s555 + $0xe0] sm:$0xff]
        %v1325 = vld [vmem:[%s555 + $0xe8] sm:$0xff]
        %v1326 = vld [vmem:[%s555 + $0xf0] sm:$0xff]
        %v1327 = vld [vmem:[%s555 + $0xf8] sm:$0xff]
        %v1328 = vld [vmem:[%s555 + $0x100] sm:$0xff]
        %v1329 = vld [vmem:[%s555 + $0x108] sm:$0xff]
        %v1330 = vld [vmem:[%s555 + $0x110] sm:$0xff]
        %v1331 = vld [vmem:[%s555 + $0x118] sm:$0xff]
        %v1332 = vld [vmem:[%s555 + $0x120] sm:$0xff]
        %v1333 = vld [vmem:[%s555 + $0x128] sm:$0xff]
        %v1334 = vld [vmem:[%s555 + $0x130] sm:$0xff]
        %v1335 = vld [vmem:[%s555 + $0x138] sm:$0xff]
        %v1336 = vld [vmem:[%s555 + $0x140] sm:$0xff]
        %v1337 = vld [vmem:[%s555 + $0x148] sm:$0xff]
        %v1338 = vld [vmem:[%s555 + $0x150] sm:$0xff]
        %v1339 = vld [vmem:[%s555 + $0x158] sm:$0xff]
        %v1340 = vld [vmem:[%s555 + $0x160] sm:$0xff]
        %v1341 = vld [vmem:[%s555 + $0x168] sm:$0xff]
        %v1342 = vld [vmem:[%s555 + $0x170] sm:$0xff]
        %v1343 = vld [vmem:[%s555 + $0x178] sm:$0xff]
        %v1344 = vld [vmem:[%s555 + $0x180] sm:$0xff]
        %v1345 = vld [vmem:[%s555 + $0x188] sm:$0xff]
        %v1346 = vld [vmem:[%s555 + $0x190] sm:$0xff]
        %v1347 = vld [vmem:[%s555 + $0x198] sm:$0xff]
        %v1348 = vld [vmem:[%s555 + $0x1a0] sm:$0xff]
        %v1349 = vld [vmem:[%s555 + $0x1a8] sm:$0xff]
        %v1350 = vld [vmem:[%s555 + $0x1b0] sm:$0xff]
        %v1351 = vld [vmem:[%s555 + $0x1b8] sm:$0xff]
        %v1352 = vld [vmem:[%s555 + $0x1c0] sm:$0xff]
        %v1353 = vld [vmem:[%s555 + $0x1c8] sm:$0xff]
        %v1354 = vld [vmem:[%s555 + $0x1d0] sm:$0xff]
        %v1355 = vld [vmem:[%s555 + $0x1d8] sm:$0xff]
        %v1356 = vld [vmem:[%s555 + $0x1e0] sm:$0xff]
        %v1357 = vld [vmem:[%s555 + $0x1e8] sm:$0xff]
        %v1358 = vld [vmem:[%s555 + $0x1f0] sm:$0xff]
        %v1359 = vld [vmem:[%s555 + $0x1f8] sm:$0xff]
        %v1360 = vld [vmem:[%s555 + $0x200] sm:$0xff]
        %v1361 = vld [vmem:[%s555 + $0x208] sm:$0xff]
        %v1362 = vld [vmem:[%s555 + $0x210] sm:$0xff]
        %v1363 = vld [vmem:[%s555 + $0x218] sm:$0xff]
        %v1364 = vld [vmem:[%s555 + $0x220] sm:$0xff]
        %v1365 = vld [vmem:[%s555 + $0x228] sm:$0xff]
        %v1366 = vld [vmem:[%s555 + $0x230] sm:$0xff]
        %v1367 = vld [vmem:[%s555 + $0x238] sm:$0xff]
        %v1368 = vld [vmem:[%s555 + $0x240] sm:$0xff]
        %v1369 = vld [vmem:[%s555 + $0x248] sm:$0xff]
        %v1370 = vld [vmem:[%s555 + $0x250] sm:$0xff]
        %v1371 = vld [vmem:[%s555 + $0x258] sm:$0xff]
        %v1372 = vld [vmem:[%s555 + $0x260] sm:$0xff]
        %v1373 = vld [vmem:[%s555 + $0x268] sm:$0xff]
        %v1374 = vld [vmem:[%s555 + $0x270] sm:$0xff]
        %v1375 = vld [vmem:[%s555 + $0x278] sm:$0xff]
        %v1376 = vld [vmem:[%s555 + $0x280] sm:$0xff]
        %v1377 = vld [vmem:[%s555 + $0x288] sm:$0xff]
        %v1378 = vld [vmem:[%s555 + $0x290] sm:$0xff]
        %v1379 = vld [vmem:[%s555 + $0x298] sm:$0xff]
        %v1380 = vld [vmem:[%s555 + $0x2a0] sm:$0xff]
        %v1381 = vld [vmem:[%s555 + $0x2a8] sm:$0xff]
        %v1382 = vld [vmem:[%s555 + $0x2b0] sm:$0xff]
        %v1383 = vld [vmem:[%s555 + $0x2b8] sm:$0xff]
        %v1384 = vld [vmem:[%s555 + $0x2c0] sm:$0xff]
        %v1385 = vld [vmem:[%s555 + $0x2c8] sm:$0xff]
        %v1386 = vld [vmem:[%s555 + $0x2d0] sm:$0xff]
        %v1387 = vld [vmem:[%s555 + $0x2d8] sm:$0xff]
        %v1388 = vld [vmem:[%s555 + $0x2e0] sm:$0xff]
        %v1389 = vld [vmem:[%s555 + $0x2e8] sm:$0xff]
        %v1390 = vld [vmem:[%s555 + $0x2f0] sm:$0xff]
        %v1391 = vld [vmem:[%s555 + $0x2f8] sm:$0xff]
        %v1392 = vld [vmem:[%s555 + $0x300] sm:$0xff]
        %v1393 = vld [vmem:[%s555 + $0x308] sm:$0xff]
        %v1394 = vld [vmem:[%s555 + $0x310] sm:$0xff]
        %v1395 = vld [vmem:[%s555 + $0x318] sm:$0xff]
        %v1396 = vld [vmem:[%s555 + $0x320] sm:$0xff]
        %v1397 = vld [vmem:[%s555 + $0x328] sm:$0xff]
        %v1398 = vld [vmem:[%s555 + $0x330] sm:$0xff]
        %v1399 = vld [vmem:[%s555 + $0x338] sm:$0xff]
        %v1400 = vld [vmem:[%s555 + $0x340] sm:$0xff]
        %v1401 = vld [vmem:[%s555 + $0x348] sm:$0xff]
        %v1402 = vld [vmem:[%s555 + $0x350] sm:$0xff]
        %v1403 = vld [vmem:[%s555 + $0x358] sm:$0xff]
        %v1404 = vld [vmem:[%s555 + $0x360] sm:$0xff]
        %v1405 = vld [vmem:[%s555 + $0x368] sm:$0xff]
        %v1406 = vld [vmem:[%s555 + $0x370] sm:$0xff]
        %v1407 = vld [vmem:[%s555 + $0x378] sm:$0xff]
        %v1408 = vld [vmem:[%s555 + $0x380] sm:$0xff]
        %v1409 = vld [vmem:[%s555 + $0x388] sm:$0xff]
        %v1410 = vld [vmem:[%s555 + $0x390] sm:$0xff]
        %v1411 = vld [vmem:[%s555 + $0x398] sm:$0xff]
        %v1412 = vld [vmem:[%s555 + $0x3a0] sm:$0xff]
        %v1413 = vld [vmem:[%s555 + $0x3a8] sm:$0xff]
        %v1414 = vld [vmem:[%s555 + $0x3b0] sm:$0xff]
        %v1415 = vld [vmem:[%s555 + $0x3b8] sm:$0xff]
        %v1416 = vld [vmem:[%s555 + $0x3c0] sm:$0xff]
        %v1417 = vld [vmem:[%s555 + $0x3c8] sm:$0xff]
        %v1418 = vld [vmem:[%s555 + $0x3d0] sm:$0xff]
        %v1419 = vld [vmem:[%s555 + $0x3d8] sm:$0xff]
        %v1420 = vld [vmem:[%s555 + $0x3e0] sm:$0xff]
        %v1421 = vld [vmem:[%s555 + $0x3e8] sm:$0xff]
        %v1422 = vld [vmem:[%s555 + $0x3f0] sm:$0xff]
        %v1423 = vld [vmem:[%s555 + $0x3f8] sm:$0xff]
        %v1424 = vld [vmem:[%s555 + $0x400] sm:$0xff]
        %v1425 = vld [vmem:[%s555 + $0x408] sm:$0xff]
        %v1426 = vld [vmem:[%s555 + $0x410] sm:$0xff]
        %v1427 = vld [vmem:[%s555 + $0x418] sm:$0xff]
        %v1428 = vld [vmem:[%s555 + $0x420] sm:$0xff]
        %v1429 = vld [vmem:[%s555 + $0x428] sm:$0xff]
        %v1430 = vld [vmem:[%s555 + $0x430] sm:$0xff]
        %v1431 = vld [vmem:[%s555 + $0x438] sm:$0xff]
        %v1432 = vld [vmem:[%s555 + $0x440] sm:$0xff]
        %v1433 = vld [vmem:[%s555 + $0x448] sm:$0xff]
        %v1434 = vld [vmem:[%s555 + $0x450] sm:$0xff]
        %v1435 = vld [vmem:[%s555 + $0x458] sm:$0xff]
        %v1436 = vld [vmem:[%s555 + $0x460] sm:$0xff]
        %v1437 = vld [vmem:[%s555 + $0x468] sm:$0xff]
        %v1438 = vld [vmem:[%s555 + $0x470] sm:$0xff]
        %v1439 = vld [vmem:[%s555 + $0x478] sm:$0xff]
        %v1440 = vld [vmem:[%s555 + $0x480] sm:$0xff]
        %v1441 = vld [vmem:[%s555 + $0x488] sm:$0xff]
        %v1442 = vld [vmem:[%s555 + $0x490] sm:$0xff]
        %v1443 = vld [vmem:[%s555 + $0x498] sm:$0xff]
        %v1444 = vld [vmem:[%s555 + $0x4a0] sm:$0xff]
        %v1445 = vld [vmem:[%s555 + $0x4a8] sm:$0xff]
        %v1446 = vld [vmem:[%s555 + $0x4b0] sm:$0xff]
        %v1447 = vld [vmem:[%s555 + $0x4b8] sm:$0xff]
        %v1448 = vld [vmem:[%s555 + $0x4c0] sm:$0xff]
        %v1449 = vld [vmem:[%s555 + $0x4c8] sm:$0xff]
        %v1450 = vld [vmem:[%s555 + $0x4d0] sm:$0xff]
        %v1451 = vld [vmem:[%s555 + $0x4d8] sm:$0xff]
        %v1452 = vld [vmem:[%s555 + $0x4e0] sm:$0xff]
        %v1453 = vld [vmem:[%s555 + $0x4e8] sm:$0xff]
        %v1454 = vld [vmem:[%s555 + $0x4f0] sm:$0xff]
        %v1455 = vld [vmem:[%s555 + $0x4f8] sm:$0xff]
        %v1456 = vld [vmem:[%s555 + $0x500] sm:$0xff]
        %v1457 = vld [vmem:[%s555 + $0x508] sm:$0xff]
        %v1458 = vld [vmem:[%s555 + $0x510] sm:$0xff]
        %v1459 = vld [vmem:[%s555 + $0x518] sm:$0xff]
        %v1460 = vld [vmem:[%s555 + $0x520] sm:$0xff]
        %v1461 = vld [vmem:[%s555 + $0x528] sm:$0xff]
        %v1462 = vld [vmem:[%s555 + $0x530] sm:$0xff]
        %v1463 = vld [vmem:[%s555 + $0x538] sm:$0xff]
        %v1464 = vld [vmem:[%s555 + $0x540] sm:$0xff]
        %v1465 = vld [vmem:[%s555 + $0x548] sm:$0xff]
        %v1466 = vld [vmem:[%s555 + $0x550] sm:$0xff]
        %v1467 = vld [vmem:[%s555 + $0x558] sm:$0xff]
        %v1468 = vld [vmem:[%s555 + $0x560] sm:$0xff]
        %v1469 = vld [vmem:[%s555 + $0x568] sm:$0xff]
        %v1470 = vld [vmem:[%s555 + $0x570] sm:$0xff]
        %v1471 = vld [vmem:[%s555 + $0x578] sm:$0xff]
        %v1472 = vld [vmem:[%s555 + $0x580] sm:$0xff]
        %v1473 = vld [vmem:[%s555 + $0x588] sm:$0xff]
        %v1474 = vld [vmem:[%s555 + $0x590] sm:$0xff]
        %v1475 = vld [vmem:[%s555 + $0x598] sm:$0xff]
        %v1476 = vld [vmem:[%s555 + $0x5a0] sm:$0xff]
        %v1477 = vld [vmem:[%s555 + $0x5a8] sm:$0xff]
        %v1478 = vld [vmem:[%s555 + $0x5b0] sm:$0xff]
        %v1479 = vld [vmem:[%s555 + $0x5b8] sm:$0xff]
        %v1480 = vld [vmem:[%s555 + $0x5c0] sm:$0xff]
        %v1481 = vld [vmem:[%s555 + $0x5c8] sm:$0xff]
        %v1482 = vld [vmem:[%s555 + $0x5d0] sm:$0xff]
        %v1483 = vld [vmem:[%s555 + $0x5d8] sm:$0xff]
        %v1484 = vld [vmem:[%s555 + $0x5e0] sm:$0xff]
        %v1485 = vld [vmem:[%s555 + $0x5e8] sm:$0xff]
        %v1486 = vld [vmem:[%s555 + $0x5f0] sm:$0xff]
        %v1487 = vld [vmem:[%s555 + $0x5f8] sm:$0xff]
        %v1488 = vld [vmem:[%s677] sm:$0x3f]
        %v1490 = vperm.slane %v1488, 0
        %v1491 = vperm.slane %v1488, 1
        %v1492 = vperm.slane %v1488, 2
        %v1493 = vperm.slane %v1488, 3
        %v1494 = vperm.slane %v1488, 4
        %v1495 = vperm.slane %v1488, 5
        %1502 = vmatpush.msra.mxu0 %v1386
        %1503 = vmatpush.msra.mxu0 %v1380
        %1504 = vmatpush.msra.mxu0 %v1374
        %1505 = vmatpush.msra.mxu0 %v1368
        %1506 = vmatpush.msra.mxu0 %v1362
        %1507 = vmatpush.msra.mxu0 %v1356
        %1508 = vmatpush.msra.mxu0 %v1350
        %1509 = vmatpush.msra.mxu0 %v1344
        %1510 = vmatpush.msra.mxu0 %v1338
        %1511 = vmatpush.msra.mxu0 %v1332
        %1512 = vmatpush.msra.mxu0 %v1326
        %1513 = vmatpush.msra.mxu0 %v1320
        %1514 = vmatpush.msra.mxu0 %v1314
        %1515 = vmatpush.msra.mxu0 %v1308
        %1516 = vmatpush.msra.mxu0 %v1302
        %1517 = vmatpush.msra.mxu0 %v1296
        %1518 = vmatmul.f32.gmra.mxu0 %v1264
        %v1519 = vpop.f32.mrf.mxu0
        %v1520 = vadd.f32 %v1490, %v1519
        %1521 = vmatmul.f32.gmra.mxu0 %v1266
        %v1522 = vpop.f32.mrf.mxu0
        %v1523 = vadd.f32 %v1490, %v1522
        %1524 = vmatmul.f32.gmra.mxu0 %v1268
        %v1525 = vpop.f32.mrf.mxu0
        %v1526 = vadd.f32 %v1490, %v1525
        %1527 = vmatmul.f32.gmra.mxu0 %v1270
        %v1528 = vpop.f32.mrf.mxu0
        %v1529 = vadd.f32 %v1490, %v1528
        %1530 = vmatmul.f32.gmra.mxu0 %v1272
        %v1531 = vpop.f32.mrf.mxu0
        %v1532 = vadd.f32 %v1490, %v1531
        %1533 = vmatmul.f32.gmra.mxu0 %v1274
        %v1534 = vpop.f32.mrf.mxu0
        %v1535 = vadd.f32 %v1490, %v1534
        %1536 = vmatmul.f32.gmra.mxu0 %v1276
        %v1537 = vpop.f32.mrf.mxu0
        %v1538 = vadd.f32 %v1490, %v1537
        %1539 = vmatmul.f32.gmra.mxu0 %v1278
        %v1540 = vpop.f32.mrf.mxu0
        %v1541 = vadd.f32 %v1490, %v1540
        %1542 = vmatmul.f32.gmra.mxu0 %v1280
        %v1543 = vpop.f32.mrf.mxu0
        %v1544 = vadd.f32 %v1490, %v1543
        %1545 = vmatmul.f32.gmra.mxu0 %v1282
        %v1546 = vpop.f32.mrf.mxu0
        %v1547 = vadd.f32 %v1490, %v1546
        %1548 = vmatmul.f32.gmra.mxu0 %v1284
        %v1549 = vpop.f32.mrf.mxu0
        %v1550 = vadd.f32 %v1490, %v1549
        %1551 = vmatmul.f32.gmra.mxu0 %v1286
        %v1552 = vpop.f32.mrf.mxu0
        %v1553 = vadd.f32 %v1490, %v1552
        %1554 = vmatmul.f32.gmra.mxu0 %v1288
        %v1555 = vpop.f32.mrf.mxu0
        %v1556 = vadd.f32 %v1490, %v1555
        %1557 = vmatmul.f32.gmra.mxu0 %v1290
        %v1558 = vpop.f32.mrf.mxu0
        %v1559 = vadd.f32 %v1490, %v1558
        %1560 = vmatmul.f32.gmra.mxu0 %v1292
        %v1561 = vpop.f32.mrf.mxu0
        %v1562 = vadd.f32 %v1490, %v1561
        %1563 = vmatmul.f32.gmra.mxu0 %v1294
        %v1564 = vpop.f32.mrf.mxu0
        %v1565 = vadd.f32 %v1490, %v1564
        %1566 = vdwg.mxu0
        %1567 = vmatpush.msra.mxu0 %v1482
        %1568 = vmatpush.msra.mxu0 %v1476
        %1569 = vmatpush.msra.mxu0 %v1470
        %1570 = vmatpush.msra.mxu0 %v1464
        %1571 = vmatpush.msra.mxu0 %v1458
        %1572 = vmatpush.msra.mxu0 %v1452
        %1573 = vmatpush.msra.mxu0 %v1446
        %1574 = vmatpush.msra.mxu0 %v1440
        %1575 = vmatpush.msra.mxu0 %v1434
        %1576 = vmatpush.msra.mxu0 %v1428
        %1577 = vmatpush.msra.mxu0 %v1422
        %1578 = vmatpush.msra.mxu0 %v1416
        %1579 = vmatpush.msra.mxu0 %v1410
        %1580 = vmatpush.msra.mxu0 %v1404
        %1581 = vmatpush.msra.mxu0 %v1398
        %1582 = vmatpush.msra.mxu0 %v1392
        %1583 = vmatmul.f32.gmra.mxu0 %v1265
        %v1584 = vpop.f32.mrf.mxu0
        %v1585 = vadd.f32 %v1520, %v1584
        %1586 = vmatmul.f32.gmra.mxu0 %v1267
        %v1587 = vpop.f32.mrf.mxu0
        %v1588 = vadd.f32 %v1523, %v1587
        %1589 = vmatmul.f32.gmra.mxu0 %v1269
        %v1590 = vpop.f32.mrf.mxu0
        %v1591 = vadd.f32 %v1526, %v1590
        %1592 = vmatmul.f32.gmra.mxu0 %v1271
        %v1593 = vpop.f32.mrf.mxu0
        %v1594 = vadd.f32 %v1529, %v1593
        %1595 = vmatmul.f32.gmra.mxu0 %v1273
        %v1596 = vpop.f32.mrf.mxu0
        %v1597 = vadd.f32 %v1532, %v1596
        %1598 = vmatmul.f32.gmra.mxu0 %v1275
        %v1599 = vpop.f32.mrf.mxu0
        %v1600 = vadd.f32 %v1535, %v1599
        %1601 = vmatmul.f32.gmra.mxu0 %v1277
        %v1602 = vpop.f32.mrf.mxu0
        %v1603 = vadd.f32 %v1538, %v1602
        %1604 = vmatmul.f32.gmra.mxu0 %v1279
        %v1605 = vpop.f32.mrf.mxu0
        %v1606 = vadd.f32 %v1541, %v1605
        %1607 = vmatmul.f32.gmra.mxu0 %v1281
        %v1608 = vpop.f32.mrf.mxu0
        %v1609 = vadd.f32 %v1544, %v1608
        %1610 = vmatmul.f32.gmra.mxu0 %v1283
        %v1611 = vpop.f32.mrf.mxu0
        %v1612 = vadd.f32 %v1547, %v1611
        %1613 = vmatmul.f32.gmra.mxu0 %v1285
        %v1614 = vpop.f32.mrf.mxu0
        %v1615 = vadd.f32 %v1550, %v1614
        %1616 = vmatmul.f32.gmra.mxu0 %v1287
        %v1617 = vpop.f32.mrf.mxu0
        %v1618 = vadd.f32 %v1553, %v1617
        %1619 = vmatmul.f32.gmra.mxu0 %v1289
        %v1620 = vpop.f32.mrf.mxu0
        %v1621 = vadd.f32 %v1556, %v1620
        %1622 = vmatmul.f32.gmra.mxu0 %v1291
        %v1623 = vpop.f32.mrf.mxu0
        %v1624 = vadd.f32 %v1559, %v1623
        %1625 = vmatmul.f32.gmra.mxu0 %v1293
        %v1626 = vpop.f32.mrf.mxu0
        %v1627 = vadd.f32 %v1562, %v1626
        %1628 = vmatmul.f32.gmra.mxu0 %v1295
        %v1629 = vpop.f32.mrf.mxu0
        %v1630 = vadd.f32 %v1565, %v1629
        %1631 = vdwg.mxu0
        %1632 = vmatpush.msra.mxu0 %v1387
        %1633 = vmatpush.msra.mxu0 %v1381
        %1634 = vmatpush.msra.mxu0 %v1375
        %1635 = vmatpush.msra.mxu0 %v1369
        %1636 = vmatpush.msra.mxu0 %v1363
        %1637 = vmatpush.msra.mxu0 %v1357
        %1638 = vmatpush.msra.mxu0 %v1351
        %1639 = vmatpush.msra.mxu0 %v1345
        %1640 = vmatpush.msra.mxu0 %v1339
        %1641 = vmatpush.msra.mxu0 %v1333
        %1642 = vmatpush.msra.mxu0 %v1327
        %1643 = vmatpush.msra.mxu0 %v1321
        %1644 = vmatpush.msra.mxu0 %v1315
        %1645 = vmatpush.msra.mxu0 %v1309
        %1646 = vmatpush.msra.mxu0 %v1303
        %1647 = vmatpush.msra.mxu0 %v1297
        %1648 = vmatmul.f32.gmra.mxu0 %v1264
        %v1649 = vpop.f32.mrf.mxu0
        %v1650 = vadd.f32 %v1491, %v1649
        %1651 = vmatmul.f32.gmra.mxu0 %v1266
        %v1652 = vpop.f32.mrf.mxu0
        %v1653 = vadd.f32 %v1491, %v1652
        %1654 = vmatmul.f32.gmra.mxu0 %v1268
        %v1655 = vpop.f32.mrf.mxu0
        %v1656 = vadd.f32 %v1491, %v1655
        %1657 = vmatmul.f32.gmra.mxu0 %v1270
        %v1658 = vpop.f32.mrf.mxu0
        %v1659 = vadd.f32 %v1491, %v1658
        %1660 = vmatmul.f32.gmra.mxu0 %v1272
        %v1661 = vpop.f32.mrf.mxu0
        %v1662 = vadd.f32 %v1491, %v1661
        %1663 = vmatmul.f32.gmra.mxu0 %v1274
        %v1664 = vpop.f32.mrf.mxu0
        %v1665 = vadd.f32 %v1491, %v1664
        %1666 = vmatmul.f32.gmra.mxu0 %v1276
        %v1667 = vpop.f32.mrf.mxu0
        %v1668 = vadd.f32 %v1491, %v1667
        %1669 = vmatmul.f32.gmra.mxu0 %v1278
        %v1670 = vpop.f32.mrf.mxu0
        %v1671 = vadd.f32 %v1491, %v1670
        %1672 = vmatmul.f32.gmra.mxu0 %v1280
        %v1673 = vpop.f32.mrf.mxu0
        %v1674 = vadd.f32 %v1491, %v1673
        %1675 = vmatmul.f32.gmra.mxu0 %v1282
        %v1676 = vpop.f32.mrf.mxu0
        %v1677 = vadd.f32 %v1491, %v1676
        %1678 = vmatmul.f32.gmra.mxu0 %v1284
        %v1679 = vpop.f32.mrf.mxu0
        %v1680 = vadd.f32 %v1491, %v1679
        %1681 = vmatmul.f32.gmra.mxu0 %v1286
        %v1682 = vpop.f32.mrf.mxu0
        %v1683 = vadd.f32 %v1491, %v1682
        %1684 = vmatmul.f32.gmra.mxu0 %v1288
        %v1685 = vpop.f32.mrf.mxu0
        %v1686 = vadd.f32 %v1491, %v1685
        %1687 = vmatmul.f32.gmra.mxu0 %v1290
        %v1688 = vpop.f32.mrf.mxu0
        %v1689 = vadd.f32 %v1491, %v1688
        %1690 = vmatmul.f32.gmra.mxu0 %v1292
        %v1691 = vpop.f32.mrf.mxu0
        %v1692 = vadd.f32 %v1491, %v1691
        %1693 = vmatmul.f32.gmra.mxu0 %v1294
        %v1694 = vpop.f32.mrf.mxu0
        %v1695 = vadd.f32 %v1491, %v1694
        %1696 = vdwg.mxu0
        %1697 = vmatpush.msra.mxu0 %v1483
        %1698 = vmatpush.msra.mxu0 %v1477
        %1699 = vmatpush.msra.mxu0 %v1471
        %1700 = vmatpush.msra.mxu0 %v1465
        %1701 = vmatpush.msra.mxu0 %v1459
        %1702 = vmatpush.msra.mxu0 %v1453
        %1703 = vmatpush.msra.mxu0 %v1447
        %1704 = vmatpush.msra.mxu0 %v1441
        %1705 = vmatpush.msra.mxu0 %v1435
        %1706 = vmatpush.msra.mxu0 %v1429
        %1707 = vmatpush.msra.mxu0 %v1423
        %1708 = vmatpush.msra.mxu0 %v1417
        %1709 = vmatpush.msra.mxu0 %v1411
        %1710 = vmatpush.msra.mxu0 %v1405
        %1711 = vmatpush.msra.mxu0 %v1399
        %1712 = vmatpush.msra.mxu0 %v1393
        %1713 = vmatmul.f32.gmra.mxu0 %v1265
        %v1714 = vpop.f32.mrf.mxu0
        %v1715 = vadd.f32 %v1650, %v1714
        %1716 = vmatmul.f32.gmra.mxu0 %v1267
        %v1717 = vpop.f32.mrf.mxu0
        %v1718 = vadd.f32 %v1653, %v1717
        %1719 = vmatmul.f32.gmra.mxu0 %v1269
        %v1720 = vpop.f32.mrf.mxu0
        %v1721 = vadd.f32 %v1656, %v1720
        %1722 = vmatmul.f32.gmra.mxu0 %v1271
        %v1723 = vpop.f32.mrf.mxu0
        %v1724 = vadd.f32 %v1659, %v1723
        %1725 = vmatmul.f32.gmra.mxu0 %v1273
        %v1726 = vpop.f32.mrf.mxu0
        %v1727 = vadd.f32 %v1662, %v1726
        %1728 = vmatmul.f32.gmra.mxu0 %v1275
        %v1729 = vpop.f32.mrf.mxu0
        %v1730 = vadd.f32 %v1665, %v1729
        %1731 = vmatmul.f32.gmra.mxu0 %v1277
        %v1732 = vpop.f32.mrf.mxu0
        %v1733 = vadd.f32 %v1668, %v1732
        %1734 = vmatmul.f32.gmra.mxu0 %v1279
        %v1735 = vpop.f32.mrf.mxu0
        %v1736 = vadd.f32 %v1671, %v1735
        %1737 = vmatmul.f32.gmra.mxu0 %v1281
        %v1738 = vpop.f32.mrf.mxu0
        %v1739 = vadd.f32 %v1674, %v1738
        %1740 = vmatmul.f32.gmra.mxu0 %v1283
        %v1741 = vpop.f32.mrf.mxu0
        %v1742 = vadd.f32 %v1677, %v1741
        %1743 = vmatmul.f32.gmra.mxu0 %v1285
        %v1744 = vpop.f32.mrf.mxu0
        %v1745 = vadd.f32 %v1680, %v1744
        %1746 = vmatmul.f32.gmra.mxu0 %v1287
        %v1747 = vpop.f32.mrf.mxu0
        %v1748 = vadd.f32 %v1683, %v1747
        %1749 = vmatmul.f32.gmra.mxu0 %v1289
        %v1750 = vpop.f32.mrf.mxu0
        %v1751 = vadd.f32 %v1686, %v1750
        %1752 = vmatmul.f32.gmra.mxu0 %v1291
        %v1753 = vpop.f32.mrf.mxu0
        %v1754 = vadd.f32 %v1689, %v1753
        %1755 = vmatmul.f32.gmra.mxu0 %v1293
        %v1756 = vpop.f32.mrf.mxu0
        %v1757 = vadd.f32 %v1692, %v1756
        %1758 = vmatmul.f32.gmra.mxu0 %v1295
        %v1759 = vpop.f32.mrf.mxu0
        %v1760 = vadd.f32 %v1695, %v1759
        %1761 = vdwg.mxu0
        %1762 = vmatpush.msra.mxu0 %v1388
        %1763 = vmatpush.msra.mxu0 %v1382
        %1764 = vmatpush.msra.mxu0 %v1376
        %1765 = vmatpush.msra.mxu0 %v1370
        %1766 = vmatpush.msra.mxu0 %v1364
        %1767 = vmatpush.msra.mxu0 %v1358
        %1768 = vmatpush.msra.mxu0 %v1352
        %1769 = vmatpush.msra.mxu0 %v1346
        %1770 = vmatpush.msra.mxu0 %v1340
        %1771 = vmatpush.msra.mxu0 %v1334
        %1772 = vmatpush.msra.mxu0 %v1328
        %1773 = vmatpush.msra.mxu0 %v1322
        %1774 = vmatpush.msra.mxu0 %v1316
        %1775 = vmatpush.msra.mxu0 %v1310
        %1776 = vmatpush.msra.mxu0 %v1304
        %1777 = vmatpush.msra.mxu0 %v1298
        %1778 = vmatmul.f32.gmra.mxu0 %v1264
        %v1779 = vpop.f32.mrf.mxu0
        %v1780 = vadd.f32 %v1492, %v1779
        %1781 = vmatmul.f32.gmra.mxu0 %v1266
        %v1782 = vpop.f32.mrf.mxu0
        %v1783 = vadd.f32 %v1492, %v1782
        %1784 = vmatmul.f32.gmra.mxu0 %v1268
        %v1785 = vpop.f32.mrf.mxu0
        %v1786 = vadd.f32 %v1492, %v1785
        %1787 = vmatmul.f32.gmra.mxu0 %v1270
        %v1788 = vpop.f32.mrf.mxu0
        %v1789 = vadd.f32 %v1492, %v1788
        %1790 = vmatmul.f32.gmra.mxu0 %v1272
        %v1791 = vpop.f32.mrf.mxu0
        %v1792 = vadd.f32 %v1492, %v1791
        %1793 = vmatmul.f32.gmra.mxu0 %v1274
        %v1794 = vpop.f32.mrf.mxu0
        %v1795 = vadd.f32 %v1492, %v1794
        %1796 = vmatmul.f32.gmra.mxu0 %v1276
        %v1797 = vpop.f32.mrf.mxu0
        %v1798 = vadd.f32 %v1492, %v1797
        %1799 = vmatmul.f32.gmra.mxu0 %v1278
        %v1800 = vpop.f32.mrf.mxu0
        %v1801 = vadd.f32 %v1492, %v1800
        %1802 = vmatmul.f32.gmra.mxu0 %v1280
        %v1803 = vpop.f32.mrf.mxu0
        %v1804 = vadd.f32 %v1492, %v1803
        %1805 = vmatmul.f32.gmra.mxu0 %v1282
        %v1806 = vpop.f32.mrf.mxu0
        %v1807 = vadd.f32 %v1492, %v1806
        %1808 = vmatmul.f32.gmra.mxu0 %v1284
        %v1809 = vpop.f32.mrf.mxu0
        %v1810 = vadd.f32 %v1492, %v1809
        %1811 = vmatmul.f32.gmra.mxu0 %v1286
        %v1812 = vpop.f32.mrf.mxu0
        %v1813 = vadd.f32 %v1492, %v1812
        %1814 = vmatmul.f32.gmra.mxu0 %v1288
        %v1815 = vpop.f32.mrf.mxu0
        %v1816 = vadd.f32 %v1492, %v1815
        %1817 = vmatmul.f32.gmra.mxu0 %v1290
        %v1818 = vpop.f32.mrf.mxu0
        %v1819 = vadd.f32 %v1492, %v1818
        %1820 = vmatmul.f32.gmra.mxu0 %v1292
        %v1821 = vpop.f32.mrf.mxu0
        %v1822 = vadd.f32 %v1492, %v1821
        %1823 = vmatmul.f32.gmra.mxu0 %v1294
        %v1824 = vpop.f32.mrf.mxu0
        %v1825 = vadd.f32 %v1492, %v1824
        %1826 = vdwg.mxu0
        %1827 = vmatpush.msra.mxu0 %v1484
        %1828 = vmatpush.msra.mxu0 %v1478
        %1829 = vmatpush.msra.mxu0 %v1472
        %1830 = vmatpush.msra.mxu0 %v1466
        %1831 = vmatpush.msra.mxu0 %v1460
        %1832 = vmatpush.msra.mxu0 %v1454
        %1833 = vmatpush.msra.mxu0 %v1448
        %1834 = vmatpush.msra.mxu0 %v1442
        %1835 = vmatpush.msra.mxu0 %v1436
        %1836 = vmatpush.msra.mxu0 %v1430
        %1837 = vmatpush.msra.mxu0 %v1424
        %1838 = vmatpush.msra.mxu0 %v1418
        %1839 = vmatpush.msra.mxu0 %v1412
        %1840 = vmatpush.msra.mxu0 %v1406
        %1841 = vmatpush.msra.mxu0 %v1400
        %1842 = vmatpush.msra.mxu0 %v1394
        %1843 = vmatmul.f32.gmra.mxu0 %v1265
        %v1844 = vpop.f32.mrf.mxu0
        %v1845 = vadd.f32 %v1780, %v1844
        %1846 = vmatmul.f32.gmra.mxu0 %v1267
        %v1847 = vpop.f32.mrf.mxu0
        %v1848 = vadd.f32 %v1783, %v1847
        %1849 = vmatmul.f32.gmra.mxu0 %v1269
        %v1850 = vpop.f32.mrf.mxu0
        %v1851 = vadd.f32 %v1786, %v1850
        %1852 = vmatmul.f32.gmra.mxu0 %v1271
        %v1853 = vpop.f32.mrf.mxu0
        %v1854 = vadd.f32 %v1789, %v1853
        %1855 = vmatmul.f32.gmra.mxu0 %v1273
        %v1856 = vpop.f32.mrf.mxu0
        %v1857 = vadd.f32 %v1792, %v1856
        %1858 = vmatmul.f32.gmra.mxu0 %v1275
        %v1859 = vpop.f32.mrf.mxu0
        %v1860 = vadd.f32 %v1795, %v1859
        %1861 = vmatmul.f32.gmra.mxu0 %v1277
        %v1862 = vpop.f32.mrf.mxu0
        %v1863 = vadd.f32 %v1798, %v1862
        %1864 = vmatmul.f32.gmra.mxu0 %v1279
        %v1865 = vpop.f32.mrf.mxu0
        %v1866 = vadd.f32 %v1801, %v1865
        %1867 = vmatmul.f32.gmra.mxu0 %v1281
        %v1868 = vpop.f32.mrf.mxu0
        %v1869 = vadd.f32 %v1804, %v1868
        %1870 = vmatmul.f32.gmra.mxu0 %v1283
        %v1871 = vpop.f32.mrf.mxu0
        %v1872 = vadd.f32 %v1807, %v1871
        %1873 = vmatmul.f32.gmra.mxu0 %v1285
        %v1874 = vpop.f32.mrf.mxu0
        %v1875 = vadd.f32 %v1810, %v1874
        %1876 = vmatmul.f32.gmra.mxu0 %v1287
        %v1877 = vpop.f32.mrf.mxu0
        %v1878 = vadd.f32 %v1813, %v1877
        %1879 = vmatmul.f32.gmra.mxu0 %v1289
        %v1880 = vpop.f32.mrf.mxu0
        %v1881 = vadd.f32 %v1816, %v1880
        %1882 = vmatmul.f32.gmra.mxu0 %v1291
        %v1883 = vpop.f32.mrf.mxu0
        %v1884 = vadd.f32 %v1819, %v1883
        %1885 = vmatmul.f32.gmra.mxu0 %v1293
        %v1886 = vpop.f32.mrf.mxu0
        %v1887 = vadd.f32 %v1822, %v1886
        %1888 = vmatmul.f32.gmra.mxu0 %v1295
        %v1889 = vpop.f32.mrf.mxu0
        %v1890 = vadd.f32 %v1825, %v1889
        %1891 = vdwg.mxu0
        %1892 = vmatpush.msra.mxu0 %v1389
        %1893 = vmatpush.msra.mxu0 %v1383
        %1894 = vmatpush.msra.mxu0 %v1377
        %1895 = vmatpush.msra.mxu0 %v1371
        %1896 = vmatpush.msra.mxu0 %v1365
        %1897 = vmatpush.msra.mxu0 %v1359
        %1898 = vmatpush.msra.mxu0 %v1353
        %1899 = vmatpush.msra.mxu0 %v1347
        %1900 = vmatpush.msra.mxu0 %v1341
        %1901 = vmatpush.msra.mxu0 %v1335
        %1902 = vmatpush.msra.mxu0 %v1329
        %1903 = vmatpush.msra.mxu0 %v1323
        %1904 = vmatpush.msra.mxu0 %v1317
        %1905 = vmatpush.msra.mxu0 %v1311
        %1906 = vmatpush.msra.mxu0 %v1305
        %1907 = vmatpush.msra.mxu0 %v1299
        %1908 = vmatmul.f32.gmra.mxu0 %v1264
        %v1909 = vpop.f32.mrf.mxu0
        %v1910 = vadd.f32 %v1493, %v1909
        %1911 = vmatmul.f32.gmra.mxu0 %v1266
        %v1912 = vpop.f32.mrf.mxu0
        %v1913 = vadd.f32 %v1493, %v1912
        %1914 = vmatmul.f32.gmra.mxu0 %v1268
        %v1915 = vpop.f32.mrf.mxu0
        %v1916 = vadd.f32 %v1493, %v1915
        %1917 = vmatmul.f32.gmra.mxu0 %v1270
        %v1918 = vpop.f32.mrf.mxu0
        %v1919 = vadd.f32 %v1493, %v1918
        %1920 = vmatmul.f32.gmra.mxu0 %v1272
        %v1921 = vpop.f32.mrf.mxu0
        %v1922 = vadd.f32 %v1493, %v1921
        %1923 = vmatmul.f32.gmra.mxu0 %v1274
        %v1924 = vpop.f32.mrf.mxu0
        %v1925 = vadd.f32 %v1493, %v1924
        %1926 = vmatmul.f32.gmra.mxu0 %v1276
        %v1927 = vpop.f32.mrf.mxu0
        %v1928 = vadd.f32 %v1493, %v1927
        %1929 = vmatmul.f32.gmra.mxu0 %v1278
        %v1930 = vpop.f32.mrf.mxu0
        %v1931 = vadd.f32 %v1493, %v1930
        %1932 = vmatmul.f32.gmra.mxu0 %v1280
        %v1933 = vpop.f32.mrf.mxu0
        %v1934 = vadd.f32 %v1493, %v1933
        %1935 = vmatmul.f32.gmra.mxu0 %v1282
        %v1936 = vpop.f32.mrf.mxu0
        %v1937 = vadd.f32 %v1493, %v1936
        %1938 = vmatmul.f32.gmra.mxu0 %v1284
        %v1939 = vpop.f32.mrf.mxu0
        %v1940 = vadd.f32 %v1493, %v1939
        %1941 = vmatmul.f32.gmra.mxu0 %v1286
        %v1942 = vpop.f32.mrf.mxu0
        %v1943 = vadd.f32 %v1493, %v1942
        %1944 = vmatmul.f32.gmra.mxu0 %v1288
        %v1945 = vpop.f32.mrf.mxu0
        %v1946 = vadd.f32 %v1493, %v1945
        %1947 = vmatmul.f32.gmra.mxu0 %v1290
        %v1948 = vpop.f32.mrf.mxu0
        %v1949 = vadd.f32 %v1493, %v1948
        %1950 = vmatmul.f32.gmra.mxu0 %v1292
        %v1951 = vpop.f32.mrf.mxu0
        %v1952 = vadd.f32 %v1493, %v1951
        %1953 = vmatmul.f32.gmra.mxu0 %v1294
        %v1954 = vpop.f32.mrf.mxu0
        %v1955 = vadd.f32 %v1493, %v1954
        %1956 = vdwg.mxu0
        %1957 = vmatpush.msra.mxu0 %v1485
        %1958 = vmatpush.msra.mxu0 %v1479
        %1959 = vmatpush.msra.mxu0 %v1473
        %1960 = vmatpush.msra.mxu0 %v1467
        %1961 = vmatpush.msra.mxu0 %v1461
        %1962 = vmatpush.msra.mxu0 %v1455
        %1963 = vmatpush.msra.mxu0 %v1449
        %1964 = vmatpush.msra.mxu0 %v1443
        %1965 = vmatpush.msra.mxu0 %v1437
        %1966 = vmatpush.msra.mxu0 %v1431
        %1967 = vmatpush.msra.mxu0 %v1425
        %1968 = vmatpush.msra.mxu0 %v1419
        %1969 = vmatpush.msra.mxu0 %v1413
        %1970 = vmatpush.msra.mxu0 %v1407
        %1971 = vmatpush.msra.mxu0 %v1401
        %1972 = vmatpush.msra.mxu0 %v1395
        %1973 = vmatmul.f32.gmra.mxu0 %v1265
        %v1974 = vpop.f32.mrf.mxu0
        %v1975 = vadd.f32 %v1910, %v1974
        %1976 = vmatmul.f32.gmra.mxu0 %v1267
        %v1977 = vpop.f32.mrf.mxu0
        %v1978 = vadd.f32 %v1913, %v1977
        %1979 = vmatmul.f32.gmra.mxu0 %v1269
        %v1980 = vpop.f32.mrf.mxu0
        %v1981 = vadd.f32 %v1916, %v1980
        %1982 = vmatmul.f32.gmra.mxu0 %v1271
        %v1983 = vpop.f32.mrf.mxu0
        %v1984 = vadd.f32 %v1919, %v1983
        %1985 = vmatmul.f32.gmra.mxu0 %v1273
        %v1986 = vpop.f32.mrf.mxu0
        %v1987 = vadd.f32 %v1922, %v1986
        %1988 = vmatmul.f32.gmra.mxu0 %v1275
        %v1989 = vpop.f32.mrf.mxu0
        %v1990 = vadd.f32 %v1925, %v1989
        %1991 = vmatmul.f32.gmra.mxu0 %v1277
        %v1992 = vpop.f32.mrf.mxu0
        %v1993 = vadd.f32 %v1928, %v1992
        %1994 = vmatmul.f32.gmra.mxu0 %v1279
        %v1995 = vpop.f32.mrf.mxu0
        %v1996 = vadd.f32 %v1931, %v1995
        %1997 = vmatmul.f32.gmra.mxu0 %v1281
        %v1998 = vpop.f32.mrf.mxu0
        %v1999 = vadd.f32 %v1934, %v1998
        %2000 = vmatmul.f32.gmra.mxu0 %v1283
        %v2001 = vpop.f32.mrf.mxu0
        %v2002 = vadd.f32 %v1937, %v2001
        %2003 = vmatmul.f32.gmra.mxu0 %v1285
        %v2004 = vpop.f32.mrf.mxu0
        %v2005 = vadd.f32 %v1940, %v2004
        %2006 = vmatmul.f32.gmra.mxu0 %v1287
        %v2007 = vpop.f32.mrf.mxu0
        %v2008 = vadd.f32 %v1943, %v2007
        %2009 = vmatmul.f32.gmra.mxu0 %v1289
        %v2010 = vpop.f32.mrf.mxu0
        %v2011 = vadd.f32 %v1946, %v2010
        %2012 = vmatmul.f32.gmra.mxu0 %v1291
        %v2013 = vpop.f32.mrf.mxu0
        %v2014 = vadd.f32 %v1949, %v2013
        %2015 = vmatmul.f32.gmra.mxu0 %v1293
        %v2016 = vpop.f32.mrf.mxu0
        %v2017 = vadd.f32 %v1952, %v2016
        %2018 = vmatmul.f32.gmra.mxu0 %v1295
        %v2019 = vpop.f32.mrf.mxu0
        %v2020 = vadd.f32 %v1955, %v2019
        %2021 = vdwg.mxu0
        %2022 = vmatpush.msra.mxu0 %v1390
        %2023 = vmatpush.msra.mxu0 %v1384
        %2024 = vmatpush.msra.mxu0 %v1378
        %2025 = vmatpush.msra.mxu0 %v1372
        %2026 = vmatpush.msra.mxu0 %v1366
        %2027 = vmatpush.msra.mxu0 %v1360
        %2028 = vmatpush.msra.mxu0 %v1354
        %2029 = vmatpush.msra.mxu0 %v1348
        %2030 = vmatpush.msra.mxu0 %v1342
        %2031 = vmatpush.msra.mxu0 %v1336
        %2032 = vmatpush.msra.mxu0 %v1330
        %2033 = vmatpush.msra.mxu0 %v1324
        %2034 = vmatpush.msra.mxu0 %v1318
        %2035 = vmatpush.msra.mxu0 %v1312
        %2036 = vmatpush.msra.mxu0 %v1306
        %2037 = vmatpush.msra.mxu0 %v1300
        %2038 = vmatmul.f32.gmra.mxu0 %v1264
        %v2039 = vpop.f32.mrf.mxu0
        %v2040 = vadd.f32 %v1494, %v2039
        %2041 = vmatmul.f32.gmra.mxu0 %v1266
        %v2042 = vpop.f32.mrf.mxu0
        %v2043 = vadd.f32 %v1494, %v2042
        %2044 = vmatmul.f32.gmra.mxu0 %v1268
        %v2045 = vpop.f32.mrf.mxu0
        %v2046 = vadd.f32 %v1494, %v2045
        %2047 = vmatmul.f32.gmra.mxu0 %v1270
        %v2048 = vpop.f32.mrf.mxu0
        %v2049 = vadd.f32 %v1494, %v2048
        %2050 = vmatmul.f32.gmra.mxu0 %v1272
        %v2051 = vpop.f32.mrf.mxu0
        %v2052 = vadd.f32 %v1494, %v2051
        %2053 = vmatmul.f32.gmra.mxu0 %v1274
        %v2054 = vpop.f32.mrf.mxu0
        %v2055 = vadd.f32 %v1494, %v2054
        %2056 = vmatmul.f32.gmra.mxu0 %v1276
        %v2057 = vpop.f32.mrf.mxu0
        %v2058 = vadd.f32 %v1494, %v2057
        %2059 = vmatmul.f32.gmra.mxu0 %v1278
        %v2060 = vpop.f32.mrf.mxu0
        %v2061 = vadd.f32 %v1494, %v2060
        %2062 = vmatmul.f32.gmra.mxu0 %v1280
        %v2063 = vpop.f32.mrf.mxu0
        %v2064 = vadd.f32 %v1494, %v2063
        %2065 = vmatmul.f32.gmra.mxu0 %v1282
        %v2066 = vpop.f32.mrf.mxu0
        %v2067 = vadd.f32 %v1494, %v2066
        %2068 = vmatmul.f32.gmra.mxu0 %v1284
        %v2069 = vpop.f32.mrf.mxu0
        %v2070 = vadd.f32 %v1494, %v2069
        %2071 = vmatmul.f32.gmra.mxu0 %v1286
        %v2072 = vpop.f32.mrf.mxu0
        %v2073 = vadd.f32 %v1494, %v2072
        %2074 = vmatmul.f32.gmra.mxu0 %v1288
        %v2075 = vpop.f32.mrf.mxu0
        %v2076 = vadd.f32 %v1494, %v2075
        %2077 = vmatmul.f32.gmra.mxu0 %v1290
        %v2078 = vpop.f32.mrf.mxu0
        %v2079 = vadd.f32 %v1494, %v2078
        %2080 = vmatmul.f32.gmra.mxu0 %v1292
        %v2081 = vpop.f32.mrf.mxu0
        %v2082 = vadd.f32 %v1494, %v2081
        %2083 = vmatmul.f32.gmra.mxu0 %v1294
        %v2084 = vpop.f32.mrf.mxu0
        %v2085 = vadd.f32 %v1494, %v2084
        %2086 = vdwg.mxu0
        %2087 = vmatpush.msra.mxu0 %v1486
        %2088 = vmatpush.msra.mxu0 %v1480
        %2089 = vmatpush.msra.mxu0 %v1474
        %2090 = vmatpush.msra.mxu0 %v1468
        %2091 = vmatpush.msra.mxu0 %v1462
        %2092 = vmatpush.msra.mxu0 %v1456
        %2093 = vmatpush.msra.mxu0 %v1450
        %2094 = vmatpush.msra.mxu0 %v1444
        %2095 = vmatpush.msra.mxu0 %v1438
        %2096 = vmatpush.msra.mxu0 %v1432
        %2097 = vmatpush.msra.mxu0 %v1426
        %2098 = vmatpush.msra.mxu0 %v1420
        %2099 = vmatpush.msra.mxu0 %v1414
        %2100 = vmatpush.msra.mxu0 %v1408
        %2101 = vmatpush.msra.mxu0 %v1402
        %2102 = vmatpush.msra.mxu0 %v1396
        %2103 = vmatmul.f32.gmra.mxu0 %v1265
        %v2104 = vpop.f32.mrf.mxu0
        %v2105 = vadd.f32 %v2040, %v2104
        %2106 = vmatmul.f32.gmra.mxu0 %v1267
        %v2107 = vpop.f32.mrf.mxu0
        %v2108 = vadd.f32 %v2043, %v2107
        %2109 = vmatmul.f32.gmra.mxu0 %v1269
        %v2110 = vpop.f32.mrf.mxu0
        %v2111 = vadd.f32 %v2046, %v2110
        %2112 = vmatmul.f32.gmra.mxu0 %v1271
        %v2113 = vpop.f32.mrf.mxu0
        %v2114 = vadd.f32 %v2049, %v2113
        %2115 = vmatmul.f32.gmra.mxu0 %v1273
        %v2116 = vpop.f32.mrf.mxu0
        %v2117 = vadd.f32 %v2052, %v2116
        %2118 = vmatmul.f32.gmra.mxu0 %v1275
        %v2119 = vpop.f32.mrf.mxu0
        %v2120 = vadd.f32 %v2055, %v2119
        %2121 = vmatmul.f32.gmra.mxu0 %v1277
        %v2122 = vpop.f32.mrf.mxu0
        %v2123 = vadd.f32 %v2058, %v2122
        %2124 = vmatmul.f32.gmra.mxu0 %v1279
        %v2125 = vpop.f32.mrf.mxu0
        %v2126 = vadd.f32 %v2061, %v2125
        %2127 = vmatmul.f32.gmra.mxu0 %v1281
        %v2128 = vpop.f32.mrf.mxu0
        %v2129 = vadd.f32 %v2064, %v2128
        %2130 = vmatmul.f32.gmra.mxu0 %v1283
        %v2131 = vpop.f32.mrf.mxu0
        %v2132 = vadd.f32 %v2067, %v2131
        %2133 = vmatmul.f32.gmra.mxu0 %v1285
        %v2134 = vpop.f32.mrf.mxu0
        %v2135 = vadd.f32 %v2070, %v2134
        %2136 = vmatmul.f32.gmra.mxu0 %v1287
        %v2137 = vpop.f32.mrf.mxu0
        %v2138 = vadd.f32 %v2073, %v2137
        %2139 = vmatmul.f32.gmra.mxu0 %v1289
        %v2140 = vpop.f32.mrf.mxu0
        %v2141 = vadd.f32 %v2076, %v2140
        %2142 = vmatmul.f32.gmra.mxu0 %v1291
        %v2143 = vpop.f32.mrf.mxu0
        %v2144 = vadd.f32 %v2079, %v2143
        %2145 = vmatmul.f32.gmra.mxu0 %v1293
        %v2146 = vpop.f32.mrf.mxu0
        %v2147 = vadd.f32 %v2082, %v2146
        %2148 = vmatmul.f32.gmra.mxu0 %v1295
        %v2149 = vpop.f32.mrf.mxu0
        %v2150 = vadd.f32 %v2085, %v2149
        %2151 = vdwg.mxu0
        %2152 = vmatpush.msra.mxu0 %v1391
        %2153 = vmatpush.msra.mxu0 %v1385
        %2154 = vmatpush.msra.mxu0 %v1379
        %2155 = vmatpush.msra.mxu0 %v1373
        %2156 = vmatpush.msra.mxu0 %v1367
        %2157 = vmatpush.msra.mxu0 %v1361
        %2158 = vmatpush.msra.mxu0 %v1355
        %2159 = vmatpush.msra.mxu0 %v1349
        %2160 = vmatpush.msra.mxu0 %v1343
        %2161 = vmatpush.msra.mxu0 %v1337
        %2162 = vmatpush.msra.mxu0 %v1331
        %2163 = vmatpush.msra.mxu0 %v1325
        %2164 = vmatpush.msra.mxu0 %v1319
        %2165 = vmatpush.msra.mxu0 %v1313
        %2166 = vmatpush.msra.mxu0 %v1307
        %2167 = vmatpush.msra.mxu0 %v1301
        %2168 = vmatmul.f32.gmra.mxu0 %v1264
        %v2169 = vpop.f32.mrf.mxu0
        %v2170 = vadd.f32 %v1495, %v2169
        %2171 = vmatmul.f32.gmra.mxu0 %v1266
        %v2172 = vpop.f32.mrf.mxu0
        %v2173 = vadd.f32 %v1495, %v2172
        %2174 = vmatmul.f32.gmra.mxu0 %v1268
        %v2175 = vpop.f32.mrf.mxu0
        %v2176 = vadd.f32 %v1495, %v2175
        %2177 = vmatmul.f32.gmra.mxu0 %v1270
        %v2178 = vpop.f32.mrf.mxu0
        %v2179 = vadd.f32 %v1495, %v2178
        %2180 = vmatmul.f32.gmra.mxu0 %v1272
        %v2181 = vpop.f32.mrf.mxu0
        %v2182 = vadd.f32 %v1495, %v2181
        %2183 = vmatmul.f32.gmra.mxu0 %v1274
        %v2184 = vpop.f32.mrf.mxu0
        %v2185 = vadd.f32 %v1495, %v2184
        %2186 = vmatmul.f32.gmra.mxu0 %v1276
        %v2187 = vpop.f32.mrf.mxu0
        %v2188 = vadd.f32 %v1495, %v2187
        %2189 = vmatmul.f32.gmra.mxu0 %v1278
        %v2190 = vpop.f32.mrf.mxu0
        %v2191 = vadd.f32 %v1495, %v2190
        %2192 = vmatmul.f32.gmra.mxu0 %v1280
        %v2193 = vpop.f32.mrf.mxu0
        %v2194 = vadd.f32 %v1495, %v2193
        %2195 = vmatmul.f32.gmra.mxu0 %v1282
        %v2196 = vpop.f32.mrf.mxu0
        %v2197 = vadd.f32 %v1495, %v2196
        %2198 = vmatmul.f32.gmra.mxu0 %v1284
        %v2199 = vpop.f32.mrf.mxu0
        %v2200 = vadd.f32 %v1495, %v2199
        %2201 = vmatmul.f32.gmra.mxu0 %v1286
        %v2202 = vpop.f32.mrf.mxu0
        %v2203 = vadd.f32 %v1495, %v2202
        %2204 = vmatmul.f32.gmra.mxu0 %v1288
        %v2205 = vpop.f32.mrf.mxu0
        %v2206 = vadd.f32 %v1495, %v2205
        %2207 = vmatmul.f32.gmra.mxu0 %v1290
        %v2208 = vpop.f32.mrf.mxu0
        %v2209 = vadd.f32 %v1495, %v2208
        %2210 = vmatmul.f32.gmra.mxu0 %v1292
        %v2211 = vpop.f32.mrf.mxu0
        %v2212 = vadd.f32 %v1495, %v2211
        %2213 = vmatmul.f32.gmra.mxu0 %v1294
        %v2214 = vpop.f32.mrf.mxu0
        %v2215 = vadd.f32 %v1495, %v2214
        %2216 = vdwg.mxu0
        %2217 = vmatpush.msra.mxu0 %v1487
        %2218 = vmatpush.msra.mxu0 %v1481
        %2219 = vmatpush.msra.mxu0 %v1475
        %2220 = vmatpush.msra.mxu0 %v1469
        %2221 = vmatpush.msra.mxu0 %v1463
        %2222 = vmatpush.msra.mxu0 %v1457
        %2223 = vmatpush.msra.mxu0 %v1451
        %2224 = vmatpush.msra.mxu0 %v1445
        %2225 = vmatpush.msra.mxu0 %v1439
        %2226 = vmatpush.msra.mxu0 %v1433
        %2227 = vmatpush.msra.mxu0 %v1427
        %2228 = vmatpush.msra.mxu0 %v1421
        %2229 = vmatpush.msra.mxu0 %v1415
        %2230 = vmatpush.msra.mxu0 %v1409
        %2231 = vmatpush.msra.mxu0 %v1403
        %2232 = vmatpush.msra.mxu0 %v1397
        %2233 = vmatmul.f32.gmra.mxu0 %v1265
        %v2234 = vpop.f32.mrf.mxu0
        %v2235 = vadd.f32 %v2170, %v2234
        %2236 = vmatmul.f32.gmra.mxu0 %v1267
        %v2237 = vpop.f32.mrf.mxu0
        %v2238 = vadd.f32 %v2173, %v2237
        %2239 = vmatmul.f32.gmra.mxu0 %v1269
        %v2240 = vpop.f32.mrf.mxu0
        %v2241 = vadd.f32 %v2176, %v2240
        %2242 = vmatmul.f32.gmra.mxu0 %v1271
        %v2243 = vpop.f32.mrf.mxu0
        %v2244 = vadd.f32 %v2179, %v2243
        %2245 = vmatmul.f32.gmra.mxu0 %v1273
        %v2246 = vpop.f32.mrf.mxu0
        %v2247 = vadd.f32 %v2182, %v2246
        %2248 = vmatmul.f32.gmra.mxu0 %v1275
        %v2249 = vpop.f32.mrf.mxu0
        %v2250 = vadd.f32 %v2185, %v2249
        %2251 = vmatmul.f32.gmra.mxu0 %v1277
        %v2252 = vpop.f32.mrf.mxu0
        %v2253 = vadd.f32 %v2188, %v2252
        %2254 = vmatmul.f32.gmra.mxu0 %v1279
        %v2255 = vpop.f32.mrf.mxu0
        %v2256 = vadd.f32 %v2191, %v2255
        %2257 = vmatmul.f32.gmra.mxu0 %v1281
        %v2258 = vpop.f32.mrf.mxu0
        %v2259 = vadd.f32 %v2194, %v2258
        %2260 = vmatmul.f32.gmra.mxu0 %v1283
        %v2261 = vpop.f32.mrf.mxu0
        %v2262 = vadd.f32 %v2197, %v2261
        %2263 = vmatmul.f32.gmra.mxu0 %v1285
        %v2264 = vpop.f32.mrf.mxu0
        %v2265 = vadd.f32 %v2200, %v2264
        %2266 = vmatmul.f32.gmra.mxu0 %v1287
        %v2267 = vpop.f32.mrf.mxu0
        %v2268 = vadd.f32 %v2203, %v2267
        %2269 = vmatmul.f32.gmra.mxu0 %v1289
        %v2270 = vpop.f32.mrf.mxu0
        %v2271 = vadd.f32 %v2206, %v2270
        %2272 = vmatmul.f32.gmra.mxu0 %v1291
        %v2273 = vpop.f32.mrf.mxu0
        %v2274 = vadd.f32 %v2209, %v2273
        %2275 = vmatmul.f32.gmra.mxu0 %v1293
        %v2276 = vpop.f32.mrf.mxu0
        %v2277 = vadd.f32 %v2212, %v2276
        %2278 = vmatmul.f32.gmra.mxu0 %v1295
        %v2279 = vpop.f32.mrf.mxu0
        %v2280 = vadd.f32 %v2215, %v2279
        %2281 = vdwg.mxu0
        %v2282 = vlaneseq
        %v2283 = vshrl.u32 %v2282, 7
        %v2284 = vadd.s32 %v2283, 8
        %v2285 = vadd.s32 %v2283, 16
        %v2286 = vadd.s32 %v2283, 24
        %v2287 = vadd.s32 %v2283, 32
        %v2288 = vadd.s32 %v2283, 40
        %v2289 = vadd.s32 %v2283, 48
        %v2290 = vadd.s32 %v2283, 56
        %v2291 = vadd.s32 %v2283, 64
        %v2292 = vadd.s32 %v2283, 72
        %v2293 = vadd.s32 %v2283, 80
        %v2294 = vadd.s32 %v2283, 88
        %v2295 = vadd.s32 %v2283, 96
        %v2296 = vadd.s32 %v2283, 104
        %v2297 = vadd.s32 %v2283, 112
        %v2298 = vadd.s32 %v2283, 120
        %v2299 = vlaneseq
        %v2300 = vand.u32 %v2299, 127
        %vm2301 = vcmp.ge.s32.totalorder %v2283, %v2300
        %vm2302 = vcmp.ge.s32.totalorder %v2284, %v2300
        %vm2303 = vcmp.ge.s32.totalorder %v2285, %v2300
        %vm2304 = vcmp.ge.s32.totalorder %v2286, %v2300
        %vm2305 = vcmp.ge.s32.totalorder %v2287, %v2300
        %vm2306 = vcmp.ge.s32.totalorder %v2288, %v2300
        %vm2307 = vcmp.ge.s32.totalorder %v2289, %v2300
        %vm2308 = vcmp.ge.s32.totalorder %v2290, %v2300
        %vm2309 = vcmp.ge.s32.totalorder %v2291, %v2300
        %vm2310 = vcmp.ge.s32.totalorder %v2292, %v2300
        %vm2311 = vcmp.ge.s32.totalorder %v2293, %v2300
        %vm2312 = vcmp.ge.s32.totalorder %v2294, %v2300
        %vm2313 = vcmp.ge.s32.totalorder %v2295, %v2300
        %vm2314 = vcmp.ge.s32.totalorder %v2296, %v2300
        %vm2315 = vcmp.ge.s32.totalorder %v2297, %v2300
        %vm2316 = vcmp.ge.s32.totalorder %v2298, %v2300
        %v2317 = vsel %vm2301, 0.0, -1e+30
        %v2318 = vsel %vm2302, 0.0, -1e+30
        %v2319 = vsel %vm2303, 0.0, -1e+30
        %v2320 = vsel %vm2304, 0.0, -1e+30
        %v2321 = vsel %vm2305, 0.0, -1e+30
        %v2322 = vsel %vm2306, 0.0, -1e+30
        %v2323 = vsel %vm2307, 0.0, -1e+30
        %v2324 = vsel %vm2308, 0.0, -1e+30
        %v2325 = vsel %vm2309, 0.0, -1e+30
        %v2326 = vsel %vm2310, 0.0, -1e+30
        %v2327 = vsel %vm2311, 0.0, -1e+30
        %v2328 = vsel %vm2312, 0.0, -1e+30
        %v2329 = vsel %vm2313, 0.0, -1e+30
        %v2330 = vsel %vm2314, 0.0, -1e+30
        %v2331 = vsel %vm2315, 0.0, -1e+30
        %v2332 = vsel %vm2316, 0.0, -1e+30
        %2333 = vmatpush.xpose.msra.mxu0 %v1890
        %2334 = vmatpush.xpose.msra.mxu0 %v1887
        %2335 = vmatpush.xpose.msra.mxu0 %v1884
        %2336 = vmatpush.xpose.msra.mxu0 %v1881
        %2337 = vmatpush.xpose.msra.mxu0 %v1878
        %2338 = vmatpush.xpose.msra.mxu0 %v1875
        %2339 = vmatpush.xpose.msra.mxu0 %v1872
        %2340 = vmatpush.xpose.msra.mxu0 %v1869
        %2341 = vmatpush.xpose.msra.mxu0 %v1866
        %2342 = vmatpush.xpose.msra.mxu0 %v1863
        %2343 = vmatpush.xpose.msra.mxu0 %v1860
        %2344 = vmatpush.xpose.msra.mxu0 %v1857
        %2345 = vmatpush.xpose.msra.mxu0 %v1854
        %2346 = vmatpush.xpose.msra.mxu0 %v1851
        %2347 = vmatpush.xpose.msra.mxu0 %v1848
        %2348 = vmatpush.xpose.msra.mxu0 %v1845
        %2349 = vmatmul.f32.gmra.mxu0 %v1585
        %v2350 = vpop.f32.mrf.mxu0
        %v2351 = vadd.f32 0.0, %v2350
        %2352 = vmatmul.f32.gmra.mxu0 %v1588
        %v2353 = vpop.f32.mrf.mxu0
        %v2354 = vadd.f32 0.0, %v2353
        %2355 = vmatmul.f32.gmra.mxu0 %v1591
        %v2356 = vpop.f32.mrf.mxu0
        %v2357 = vadd.f32 0.0, %v2356
        %2358 = vmatmul.f32.gmra.mxu0 %v1594
        %v2359 = vpop.f32.mrf.mxu0
        %v2360 = vadd.f32 0.0, %v2359
        %2361 = vmatmul.f32.gmra.mxu0 %v1597
        %v2362 = vpop.f32.mrf.mxu0
        %v2363 = vadd.f32 0.0, %v2362
        %2364 = vmatmul.f32.gmra.mxu0 %v1600
        %v2365 = vpop.f32.mrf.mxu0
        %v2366 = vadd.f32 0.0, %v2365
        %2367 = vmatmul.f32.gmra.mxu0 %v1603
        %v2368 = vpop.f32.mrf.mxu0
        %v2369 = vadd.f32 0.0, %v2368
        %2370 = vmatmul.f32.gmra.mxu0 %v1606
        %v2371 = vpop.f32.mrf.mxu0
        %v2372 = vadd.f32 0.0, %v2371
        %2373 = vmatmul.f32.gmra.mxu0 %v1609
        %v2374 = vpop.f32.mrf.mxu0
        %v2375 = vadd.f32 0.0, %v2374
        %2376 = vmatmul.f32.gmra.mxu0 %v1612
        %v2377 = vpop.f32.mrf.mxu0
        %v2378 = vadd.f32 0.0, %v2377
        %2379 = vmatmul.f32.gmra.mxu0 %v1615
        %v2380 = vpop.f32.mrf.mxu0
        %v2381 = vadd.f32 0.0, %v2380
        %2382 = vmatmul.f32.gmra.mxu0 %v1618
        %v2383 = vpop.f32.mrf.mxu0
        %v2384 = vadd.f32 0.0, %v2383
        %2385 = vmatmul.f32.gmra.mxu0 %v1621
        %v2386 = vpop.f32.mrf.mxu0
        %v2387 = vadd.f32 0.0, %v2386
        %2388 = vmatmul.f32.gmra.mxu0 %v1624
        %v2389 = vpop.f32.mrf.mxu0
        %v2390 = vadd.f32 0.0, %v2389
        %2391 = vmatmul.f32.gmra.mxu0 %v1627
        %v2392 = vpop.f32.mrf.mxu0
        %v2393 = vadd.f32 0.0, %v2392
        %2394 = vmatmul.f32.gmra.mxu0 %v1630
        %v2395 = vpop.f32.mrf.mxu0
        %v2396 = vadd.f32 0.0, %v2395
        %2397 = vdwg.mxu0
        %v2398 = vmul.f32 %v2351, 0.0625
        %v2399 = vmul.f32 %v2354, 0.0625
        %v2400 = vmul.f32 %v2357, 0.0625
        %v2401 = vmul.f32 %v2360, 0.0625
        %v2402 = vmul.f32 %v2363, 0.0625
        %v2403 = vmul.f32 %v2366, 0.0625
        %v2404 = vmul.f32 %v2369, 0.0625
        %v2405 = vmul.f32 %v2372, 0.0625
        %v2406 = vmul.f32 %v2375, 0.0625
        %v2407 = vmul.f32 %v2378, 0.0625
        %v2408 = vmul.f32 %v2381, 0.0625
        %v2409 = vmul.f32 %v2384, 0.0625
        %v2410 = vmul.f32 %v2387, 0.0625
        %v2411 = vmul.f32 %v2390, 0.0625
        %v2412 = vmul.f32 %v2393, 0.0625
        %v2413 = vmul.f32 %v2396, 0.0625
        %v2414 = vadd.f32 %v2398, %v2317
        %v2415 = vadd.f32 %v2399, %v2318
        %v2416 = vadd.f32 %v2400, %v2319
        %v2417 = vadd.f32 %v2401, %v2320
        %v2418 = vadd.f32 %v2402, %v2321
        %v2419 = vadd.f32 %v2403, %v2322
        %v2420 = vadd.f32 %v2404, %v2323
        %v2421 = vadd.f32 %v2405, %v2324
        %v2422 = vadd.f32 %v2406, %v2325
        %v2423 = vadd.f32 %v2407, %v2326
        %v2424 = vadd.f32 %v2408, %v2327
        %v2425 = vadd.f32 %v2409, %v2328
        %v2426 = vadd.f32 %v2410, %v2329
        %v2427 = vadd.f32 %v2411, %v2330
        %v2428 = vadd.f32 %v2412, %v2331
        %v2429 = vadd.f32 %v2413, %v2332
        %2430 = vmax.xlane.f32.xlu0 %v2414
        %v2431 = vpop.xlane.xlu0 %2430
        %2432 = vmax.xlane.f32.xlu0 %v2415
        %v2433 = vpop.xlane.xlu0 %2432
        %2434 = vmax.xlane.f32.xlu0 %v2416
        %v2435 = vpop.xlane.xlu0 %2434
        %2436 = vmax.xlane.f32.xlu0 %v2417
        %v2437 = vpop.xlane.xlu0 %2436
        %2438 = vmax.xlane.f32.xlu0 %v2418
        %v2439 = vpop.xlane.xlu0 %2438
        %2440 = vmax.xlane.f32.xlu0 %v2419
        %v2441 = vpop.xlane.xlu0 %2440
        %2442 = vmax.xlane.f32.xlu0 %v2420
        %v2443 = vpop.xlane.xlu0 %2442
        %2444 = vmax.xlane.f32.xlu0 %v2421
        %v2445 = vpop.xlane.xlu0 %2444
        %2446 = vmax.xlane.f32.xlu0 %v2422
        %v2447 = vpop.xlane.xlu0 %2446
        %2448 = vmax.xlane.f32.xlu0 %v2423
        %v2449 = vpop.xlane.xlu0 %2448
        %2450 = vmax.xlane.f32.xlu0 %v2424
        %v2451 = vpop.xlane.xlu0 %2450
        %2452 = vmax.xlane.f32.xlu0 %v2425
        %v2453 = vpop.xlane.xlu0 %2452
        %2454 = vmax.xlane.f32.xlu0 %v2426
        %v2455 = vpop.xlane.xlu0 %2454
        %2456 = vmax.xlane.f32.xlu0 %v2427
        %v2457 = vpop.xlane.xlu0 %2456
        %2458 = vmax.xlane.f32.xlu0 %v2428
        %v2459 = vpop.xlane.xlu0 %2458
        %2460 = vmax.xlane.f32.xlu0 %v2429
        %v2461 = vpop.xlane.xlu0 %2460
        %v2462 = vsub.f32 %v2414, %v2431
        %v2463 = vsub.f32 %v2415, %v2433
        %v2464 = vsub.f32 %v2416, %v2435
        %v2465 = vsub.f32 %v2417, %v2437
        %v2466 = vsub.f32 %v2418, %v2439
        %v2467 = vsub.f32 %v2419, %v2441
        %v2468 = vsub.f32 %v2420, %v2443
        %v2469 = vsub.f32 %v2421, %v2445
        %v2470 = vsub.f32 %v2422, %v2447
        %v2471 = vsub.f32 %v2423, %v2449
        %v2472 = vsub.f32 %v2424, %v2451
        %v2473 = vsub.f32 %v2425, %v2453
        %v2474 = vsub.f32 %v2426, %v2455
        %v2475 = vsub.f32 %v2427, %v2457
        %v2476 = vsub.f32 %v2428, %v2459
        %v2477 = vsub.f32 %v2429, %v2461
        %v2478 = vmul.f32 %v2462, 1.442695
        %v2479 = vpow.pop %v2478
        %v2480 = vmul.f32 %v2463, 1.442695
        %v2481 = vpow.pop %v2480
        %v2482 = vmul.f32 %v2464, 1.442695
        %v2483 = vpow.pop %v2482
        %v2484 = vmul.f32 %v2465, 1.442695
        %v2485 = vpow.pop %v2484
        %v2486 = vmul.f32 %v2466, 1.442695
        %v2487 = vpow.pop %v2486
        %v2488 = vmul.f32 %v2467, 1.442695
        %v2489 = vpow.pop %v2488
        %v2490 = vmul.f32 %v2468, 1.442695
        %v2491 = vpow.pop %v2490
        %v2492 = vmul.f32 %v2469, 1.442695
        %v2493 = vpow.pop %v2492
        %v2494 = vmul.f32 %v2470, 1.442695
        %v2495 = vpow.pop %v2494
        %v2496 = vmul.f32 %v2471, 1.442695
        %v2497 = vpow.pop %v2496
        %v2498 = vmul.f32 %v2472, 1.442695
        %v2499 = vpow.pop %v2498
        %v2500 = vmul.f32 %v2473, 1.442695
        %v2501 = vpow.pop %v2500
        %v2502 = vmul.f32 %v2474, 1.442695
        %v2503 = vpow.pop %v2502
        %v2504 = vmul.f32 %v2475, 1.442695
        %v2505 = vpow.pop %v2504
        %v2506 = vmul.f32 %v2476, 1.442695
        %v2507 = vpow.pop %v2506
        %v2508 = vmul.f32 %v2477, 1.442695
        %v2509 = vpow.pop %v2508
        %2510 = vadd.xlane.f32.xlu0 %v2479
        %v2511 = vpop.xlane.xlu0 %2510
        %2512 = vadd.xlane.f32.xlu0 %v2481
        %v2513 = vpop.xlane.xlu0 %2512
        %2514 = vadd.xlane.f32.xlu0 %v2483
        %v2515 = vpop.xlane.xlu0 %2514
        %2516 = vadd.xlane.f32.xlu0 %v2485
        %v2517 = vpop.xlane.xlu0 %2516
        %2518 = vadd.xlane.f32.xlu0 %v2487
        %v2519 = vpop.xlane.xlu0 %2518
        %2520 = vadd.xlane.f32.xlu0 %v2489
        %v2521 = vpop.xlane.xlu0 %2520
        %2522 = vadd.xlane.f32.xlu0 %v2491
        %v2523 = vpop.xlane.xlu0 %2522
        %2524 = vadd.xlane.f32.xlu0 %v2493
        %v2525 = vpop.xlane.xlu0 %2524
        %2526 = vadd.xlane.f32.xlu0 %v2495
        %v2527 = vpop.xlane.xlu0 %2526
        %2528 = vadd.xlane.f32.xlu0 %v2497
        %v2529 = vpop.xlane.xlu0 %2528
        %2530 = vadd.xlane.f32.xlu0 %v2499
        %v2531 = vpop.xlane.xlu0 %2530
        %2532 = vadd.xlane.f32.xlu0 %v2501
        %v2533 = vpop.xlane.xlu0 %2532
        %2534 = vadd.xlane.f32.xlu0 %v2503
        %v2535 = vpop.xlane.xlu0 %2534
        %2536 = vadd.xlane.f32.xlu0 %v2505
        %v2537 = vpop.xlane.xlu0 %2536
        %2538 = vadd.xlane.f32.xlu0 %v2507
        %v2539 = vpop.xlane.xlu0 %2538
        %2540 = vadd.xlane.f32.xlu0 %v2509
        %v2541 = vpop.xlane.xlu0 %2540
        %v2542 = vrcp.pop %v2511
        %v2543 = vmul.f32 %v2511, %v2542
        %v2544 = vsub.f32 1.0, %v2543
        %v2545 = vmul.f32 %v2542, %v2544
        %v2546 = vadd.f32 %v2542, %v2545
        %vm2547 = vweird.f32 %v2511
        %vm2548 = vweird.f32 %v2542
        %vm2549 = vmor %vm2547, %vm2548
        %v2550 = vsel %vm2549, %v2542, %v2546
        %v2551 = vand.u32 2147483647, %v2511
        %vm2552 = vcmp.eq.f32.partialorder %v2551, 8.507059e+37
        %v2553 = vand.u32 %v2511, 2147483648
        %v2554 = vor.u32 1.1754944e-38, %v2553
        %v2555 = vsel %vm2552, %v2554, %v2550
        %v2556 = vrcp.pop %v2513
        %v2557 = vmul.f32 %v2513, %v2556
        %v2558 = vsub.f32 1.0, %v2557
        %v2559 = vmul.f32 %v2556, %v2558
        %v2560 = vadd.f32 %v2556, %v2559
        %vm2561 = vweird.f32 %v2513
        %vm2562 = vweird.f32 %v2556
        %vm2563 = vmor %vm2561, %vm2562
        %v2564 = vsel %vm2563, %v2556, %v2560
        %v2565 = vand.u32 2147483647, %v2513
        %vm2566 = vcmp.eq.f32.partialorder %v2565, 8.507059e+37
        %v2567 = vand.u32 %v2513, 2147483648
        %v2568 = vor.u32 1.1754944e-38, %v2567
        %v2569 = vsel %vm2566, %v2568, %v2564
        %v2570 = vrcp.pop %v2515
        %v2571 = vmul.f32 %v2515, %v2570
        %v2572 = vsub.f32 1.0, %v2571
        %v2573 = vmul.f32 %v2570, %v2572
        %v2574 = vadd.f32 %v2570, %v2573
        %vm2575 = vweird.f32 %v2515
        %vm2576 = vweird.f32 %v2570
        %vm2577 = vmor %vm2575, %vm2576
        %v2578 = vsel %vm2577, %v2570, %v2574
        %v2579 = vand.u32 2147483647, %v2515
        %vm2580 = vcmp.eq.f32.partialorder %v2579, 8.507059e+37
        %v2581 = vand.u32 %v2515, 2147483648
        %v2582 = vor.u32 1.1754944e-38, %v2581
        %v2583 = vsel %vm2580, %v2582, %v2578
        %v2584 = vrcp.pop %v2517
        %v2585 = vmul.f32 %v2517, %v2584
        %v2586 = vsub.f32 1.0, %v2585
        %v2587 = vmul.f32 %v2584, %v2586
        %v2588 = vadd.f32 %v2584, %v2587
        %vm2589 = vweird.f32 %v2517
        %vm2590 = vweird.f32 %v2584
        %vm2591 = vmor %vm2589, %vm2590
        %v2592 = vsel %vm2591, %v2584, %v2588
        %v2593 = vand.u32 2147483647, %v2517
        %vm2594 = vcmp.eq.f32.partialorder %v2593, 8.507059e+37
        %v2595 = vand.u32 %v2517, 2147483648
        %v2596 = vor.u32 1.1754944e-38, %v2595
        %v2597 = vsel %vm2594, %v2596, %v2592
        %v2598 = vrcp.pop %v2519
        %v2599 = vmul.f32 %v2519, %v2598
        %v2600 = vsub.f32 1.0, %v2599
        %v2601 = vmul.f32 %v2598, %v2600
        %v2602 = vadd.f32 %v2598, %v2601
        %vm2603 = vweird.f32 %v2519
        %vm2604 = vweird.f32 %v2598
        %vm2605 = vmor %vm2603, %vm2604
        %v2606 = vsel %vm2605, %v2598, %v2602
        %v2607 = vand.u32 2147483647, %v2519
        %vm2608 = vcmp.eq.f32.partialorder %v2607, 8.507059e+37
        %v2609 = vand.u32 %v2519, 2147483648
        %v2610 = vor.u32 1.1754944e-38, %v2609
        %v2611 = vsel %vm2608, %v2610, %v2606
        %v2612 = vrcp.pop %v2521
        %v2613 = vmul.f32 %v2521, %v2612
        %v2614 = vsub.f32 1.0, %v2613
        %v2615 = vmul.f32 %v2612, %v2614
        %v2616 = vadd.f32 %v2612, %v2615
        %vm2617 = vweird.f32 %v2521
        %vm2618 = vweird.f32 %v2612
        %vm2619 = vmor %vm2617, %vm2618
        %v2620 = vsel %vm2619, %v2612, %v2616
        %v2621 = vand.u32 2147483647, %v2521
        %vm2622 = vcmp.eq.f32.partialorder %v2621, 8.507059e+37
        %v2623 = vand.u32 %v2521, 2147483648
        %v2624 = vor.u32 1.1754944e-38, %v2623
        %v2625 = vsel %vm2622, %v2624, %v2620
        %v2626 = vrcp.pop %v2523
        %v2627 = vmul.f32 %v2523, %v2626
        %v2628 = vsub.f32 1.0, %v2627
        %v2629 = vmul.f32 %v2626, %v2628
        %v2630 = vadd.f32 %v2626, %v2629
        %vm2631 = vweird.f32 %v2523
        %vm2632 = vweird.f32 %v2626
        %vm2633 = vmor %vm2631, %vm2632
        %v2634 = vsel %vm2633, %v2626, %v2630
        %v2635 = vand.u32 2147483647, %v2523
        %vm2636 = vcmp.eq.f32.partialorder %v2635, 8.507059e+37
        %v2637 = vand.u32 %v2523, 2147483648
        %v2638 = vor.u32 1.1754944e-38, %v2637
        %v2639 = vsel %vm2636, %v2638, %v2634
        %v2640 = vrcp.pop %v2525
        %v2641 = vmul.f32 %v2525, %v2640
        %v2642 = vsub.f32 1.0, %v2641
        %v2643 = vmul.f32 %v2640, %v2642
        %v2644 = vadd.f32 %v2640, %v2643
        %vm2645 = vweird.f32 %v2525
        %vm2646 = vweird.f32 %v2640
        %vm2647 = vmor %vm2645, %vm2646
        %v2648 = vsel %vm2647, %v2640, %v2644
        %v2649 = vand.u32 2147483647, %v2525
        %vm2650 = vcmp.eq.f32.partialorder %v2649, 8.507059e+37
        %v2651 = vand.u32 %v2525, 2147483648
        %v2652 = vor.u32 1.1754944e-38, %v2651
        %v2653 = vsel %vm2650, %v2652, %v2648
        %v2654 = vrcp.pop %v2527
        %v2655 = vmul.f32 %v2527, %v2654
        %v2656 = vsub.f32 1.0, %v2655
        %v2657 = vmul.f32 %v2654, %v2656
        %v2658 = vadd.f32 %v2654, %v2657
        %vm2659 = vweird.f32 %v2527
        %vm2660 = vweird.f32 %v2654
        %vm2661 = vmor %vm2659, %vm2660
        %v2662 = vsel %vm2661, %v2654, %v2658
        %v2663 = vand.u32 2147483647, %v2527
        %vm2664 = vcmp.eq.f32.partialorder %v2663, 8.507059e+37
        %v2665 = vand.u32 %v2527, 2147483648
        %v2666 = vor.u32 1.1754944e-38, %v2665
        %v2667 = vsel %vm2664, %v2666, %v2662
        %v2668 = vrcp.pop %v2529
        %v2669 = vmul.f32 %v2529, %v2668
        %v2670 = vsub.f32 1.0, %v2669
        %v2671 = vmul.f32 %v2668, %v2670
        %v2672 = vadd.f32 %v2668, %v2671
        %vm2673 = vweird.f32 %v2529
        %vm2674 = vweird.f32 %v2668
        %vm2675 = vmor %vm2673, %vm2674
        %v2676 = vsel %vm2675, %v2668, %v2672
        %v2677 = vand.u32 2147483647, %v2529
        %vm2678 = vcmp.eq.f32.partialorder %v2677, 8.507059e+37
        %v2679 = vand.u32 %v2529, 2147483648
        %v2680 = vor.u32 1.1754944e-38, %v2679
        %v2681 = vsel %vm2678, %v2680, %v2676
        %v2682 = vrcp.pop %v2531
        %v2683 = vmul.f32 %v2531, %v2682
        %v2684 = vsub.f32 1.0, %v2683
        %v2685 = vmul.f32 %v2682, %v2684
        %v2686 = vadd.f32 %v2682, %v2685
        %vm2687 = vweird.f32 %v2531
        %vm2688 = vweird.f32 %v2682
        %vm2689 = vmor %vm2687, %vm2688
        %v2690 = vsel %vm2689, %v2682, %v2686
        %v2691 = vand.u32 2147483647, %v2531
        %vm2692 = vcmp.eq.f32.partialorder %v2691, 8.507059e+37
        %v2693 = vand.u32 %v2531, 2147483648
        %v2694 = vor.u32 1.1754944e-38, %v2693
        %v2695 = vsel %vm2692, %v2694, %v2690
        %v2696 = vrcp.pop %v2533
        %v2697 = vmul.f32 %v2533, %v2696
        %v2698 = vsub.f32 1.0, %v2697
        %v2699 = vmul.f32 %v2696, %v2698
        %v2700 = vadd.f32 %v2696, %v2699
        %vm2701 = vweird.f32 %v2533
        %vm2702 = vweird.f32 %v2696
        %vm2703 = vmor %vm2701, %vm2702
        %v2704 = vsel %vm2703, %v2696, %v2700
        %v2705 = vand.u32 2147483647, %v2533
        %vm2706 = vcmp.eq.f32.partialorder %v2705, 8.507059e+37
        %v2707 = vand.u32 %v2533, 2147483648
        %v2708 = vor.u32 1.1754944e-38, %v2707
        %v2709 = vsel %vm2706, %v2708, %v2704
        %v2710 = vrcp.pop %v2535
        %v2711 = vmul.f32 %v2535, %v2710
        %v2712 = vsub.f32 1.0, %v2711
        %v2713 = vmul.f32 %v2710, %v2712
        %v2714 = vadd.f32 %v2710, %v2713
        %vm2715 = vweird.f32 %v2535
        %vm2716 = vweird.f32 %v2710
        %vm2717 = vmor %vm2715, %vm2716
        %v2718 = vsel %vm2717, %v2710, %v2714
        %v2719 = vand.u32 2147483647, %v2535
        %vm2720 = vcmp.eq.f32.partialorder %v2719, 8.507059e+37
        %v2721 = vand.u32 %v2535, 2147483648
        %v2722 = vor.u32 1.1754944e-38, %v2721
        %v2723 = vsel %vm2720, %v2722, %v2718
        %v2724 = vrcp.pop %v2537
        %v2725 = vmul.f32 %v2537, %v2724
        %v2726 = vsub.f32 1.0, %v2725
        %v2727 = vmul.f32 %v2724, %v2726
        %v2728 = vadd.f32 %v2724, %v2727
        %vm2729 = vweird.f32 %v2537
        %vm2730 = vweird.f32 %v2724
        %vm2731 = vmor %vm2729, %vm2730
        %v2732 = vsel %vm2731, %v2724, %v2728
        %v2733 = vand.u32 2147483647, %v2537
        %vm2734 = vcmp.eq.f32.partialorder %v2733, 8.507059e+37
        %v2735 = vand.u32 %v2537, 2147483648
        %v2736 = vor.u32 1.1754944e-38, %v2735
        %v2737 = vsel %vm2734, %v2736, %v2732
        %v2738 = vrcp.pop %v2539
        %v2739 = vmul.f32 %v2539, %v2738
        %v2740 = vsub.f32 1.0, %v2739
        %v2741 = vmul.f32 %v2738, %v2740
        %v2742 = vadd.f32 %v2738, %v2741
        %vm2743 = vweird.f32 %v2539
        %vm2744 = vweird.f32 %v2738
        %vm2745 = vmor %vm2743, %vm2744
        %v2746 = vsel %vm2745, %v2738, %v2742
        %v2747 = vand.u32 2147483647, %v2539
        %vm2748 = vcmp.eq.f32.partialorder %v2747, 8.507059e+37
        %v2749 = vand.u32 %v2539, 2147483648
        %v2750 = vor.u32 1.1754944e-38, %v2749
        %v2751 = vsel %vm2748, %v2750, %v2746
        %v2752 = vrcp.pop %v2541
        %v2753 = vmul.f32 %v2541, %v2752
        %v2754 = vsub.f32 1.0, %v2753
        %v2755 = vmul.f32 %v2752, %v2754
        %v2756 = vadd.f32 %v2752, %v2755
        %vm2757 = vweird.f32 %v2541
        %vm2758 = vweird.f32 %v2752
        %vm2759 = vmor %vm2757, %vm2758
        %v2760 = vsel %vm2759, %v2752, %v2756
        %v2761 = vand.u32 2147483647, %v2541
        %vm2762 = vcmp.eq.f32.partialorder %v2761, 8.507059e+37
        %v2763 = vand.u32 %v2541, 2147483648
        %v2764 = vor.u32 1.1754944e-38, %v2763
        %v2765 = vsel %vm2762, %v2764, %v2760
        %v2766 = vmul.f32 %v2479, %v2555
        %v2767 = vmul.f32 %v2481, %v2569
        %v2768 = vmul.f32 %v2483, %v2583
        %v2769 = vmul.f32 %v2485, %v2597
        %v2770 = vmul.f32 %v2487, %v2611
        %v2771 = vmul.f32 %v2489, %v2625
        %v2772 = vmul.f32 %v2491, %v2639
        %v2773 = vmul.f32 %v2493, %v2653
        %v2774 = vmul.f32 %v2495, %v2667
        %v2775 = vmul.f32 %v2497, %v2681
        %v2776 = vmul.f32 %v2499, %v2695
        %v2777 = vmul.f32 %v2501, %v2709
        %v2778 = vmul.f32 %v2503, %v2723
        %v2779 = vmul.f32 %v2505, %v2737
        %v2780 = vmul.f32 %v2507, %v2751
        %v2781 = vmul.f32 %v2509, %v2765
        %2782 = vmatpush.msra.mxu0 %v2150
        %2783 = vmatpush.msra.mxu0 %v2147
        %2784 = vmatpush.msra.mxu0 %v2144
        %2785 = vmatpush.msra.mxu0 %v2141
        %2786 = vmatpush.msra.mxu0 %v2138
        %2787 = vmatpush.msra.mxu0 %v2135
        %2788 = vmatpush.msra.mxu0 %v2132
        %2789 = vmatpush.msra.mxu0 %v2129
        %2790 = vmatpush.msra.mxu0 %v2126
        %2791 = vmatpush.msra.mxu0 %v2123
        %2792 = vmatpush.msra.mxu0 %v2120
        %2793 = vmatpush.msra.mxu0 %v2117
        %2794 = vmatpush.msra.mxu0 %v2114
        %2795 = vmatpush.msra.mxu0 %v2111
        %2796 = vmatpush.msra.mxu0 %v2108
        %2797 = vmatpush.msra.mxu0 %v2105
        %2798 = vmatmul.f32.gmra.mxu0 %v2766
        %v2799 = vpop.f32.mrf.mxu0
        %v2800 = vadd.f32 0.0, %v2799
        %2801 = vmatmul.f32.gmra.mxu0 %v2767
        %v2802 = vpop.f32.mrf.mxu0
        %v2803 = vadd.f32 0.0, %v2802
        %2804 = vmatmul.f32.gmra.mxu0 %v2768
        %v2805 = vpop.f32.mrf.mxu0
        %v2806 = vadd.f32 0.0, %v2805
        %2807 = vmatmul.f32.gmra.mxu0 %v2769
        %v2808 = vpop.f32.mrf.mxu0
        %v2809 = vadd.f32 0.0, %v2808
        %2810 = vmatmul.f32.gmra.mxu0 %v2770
        %v2811 = vpop.f32.mrf.mxu0
        %v2812 = vadd.f32 0.0, %v2811
        %2813 = vmatmul.f32.gmra.mxu0 %v2771
        %v2814 = vpop.f32.mrf.mxu0
        %v2815 = vadd.f32 0.0, %v2814
        %2816 = vmatmul.f32.gmra.mxu0 %v2772
        %v2817 = vpop.f32.mrf.mxu0
        %v2818 = vadd.f32 0.0, %v2817
        %2819 = vmatmul.f32.gmra.mxu0 %v2773
        %v2820 = vpop.f32.mrf.mxu0
        %v2821 = vadd.f32 0.0, %v2820
        %2822 = vmatmul.f32.gmra.mxu0 %v2774
        %v2823 = vpop.f32.mrf.mxu0
        %v2824 = vadd.f32 0.0, %v2823
        %2825 = vmatmul.f32.gmra.mxu0 %v2775
        %v2826 = vpop.f32.mrf.mxu0
        %v2827 = vadd.f32 0.0, %v2826
        %2828 = vmatmul.f32.gmra.mxu0 %v2776
        %v2829 = vpop.f32.mrf.mxu0
        %v2830 = vadd.f32 0.0, %v2829
        %2831 = vmatmul.f32.gmra.mxu0 %v2777
        %v2832 = vpop.f32.mrf.mxu0
        %v2833 = vadd.f32 0.0, %v2832
        %2834 = vmatmul.f32.gmra.mxu0 %v2778
        %v2835 = vpop.f32.mrf.mxu0
        %v2836 = vadd.f32 0.0, %v2835
        %2837 = vmatmul.f32.gmra.mxu0 %v2779
        %v2838 = vpop.f32.mrf.mxu0
        %v2839 = vadd.f32 0.0, %v2838
        %2840 = vmatmul.f32.gmra.mxu0 %v2780
        %v2841 = vpop.f32.mrf.mxu0
        %v2842 = vadd.f32 0.0, %v2841
        %2843 = vmatmul.f32.gmra.mxu0 %v2781
        %v2844 = vpop.f32.mrf.mxu0
        %v2845 = vadd.f32 0.0, %v2844
        %2846 = vdwg.mxu0
        %2847 = vmatpush.xpose.msra.mxu0 %v2020
        %2848 = vmatpush.xpose.msra.mxu0 %v2017
        %2849 = vmatpush.xpose.msra.mxu0 %v2014
        %2850 = vmatpush.xpose.msra.mxu0 %v2011
        %2851 = vmatpush.xpose.msra.mxu0 %v2008
        %2852 = vmatpush.xpose.msra.mxu0 %v2005
        %2853 = vmatpush.xpose.msra.mxu0 %v2002
        %2854 = vmatpush.xpose.msra.mxu0 %v1999
        %2855 = vmatpush.xpose.msra.mxu0 %v1996
        %2856 = vmatpush.xpose.msra.mxu0 %v1993
        %2857 = vmatpush.xpose.msra.mxu0 %v1990
        %2858 = vmatpush.xpose.msra.mxu0 %v1987
        %2859 = vmatpush.xpose.msra.mxu0 %v1984
        %2860 = vmatpush.xpose.msra.mxu0 %v1981
        %2861 = vmatpush.xpose.msra.mxu0 %v1978
        %2862 = vmatpush.xpose.msra.mxu0 %v1975
        %2863 = vmatmul.f32.gmra.mxu0 %v1715
        %v2864 = vpop.f32.mrf.mxu0
        %v2865 = vadd.f32 0.0, %v2864
        %2866 = vmatmul.f32.gmra.mxu0 %v1718
        %v2867 = vpop.f32.mrf.mxu0
        %v2868 = vadd.f32 0.0, %v2867
        %2869 = vmatmul.f32.gmra.mxu0 %v1721
        %v2870 = vpop.f32.mrf.mxu0
        %v2871 = vadd.f32 0.0, %v2870
        %2872 = vmatmul.f32.gmra.mxu0 %v1724
        %v2873 = vpop.f32.mrf.mxu0
        %v2874 = vadd.f32 0.0, %v2873
        %2875 = vmatmul.f32.gmra.mxu0 %v1727
        %v2876 = vpop.f32.mrf.mxu0
        %v2877 = vadd.f32 0.0, %v2876
        %2878 = vmatmul.f32.gmra.mxu0 %v1730
        %v2879 = vpop.f32.mrf.mxu0
        %v2880 = vadd.f32 0.0, %v2879
        %2881 = vmatmul.f32.gmra.mxu0 %v1733
        %v2882 = vpop.f32.mrf.mxu0
        %v2883 = vadd.f32 0.0, %v2882
        %2884 = vmatmul.f32.gmra.mxu0 %v1736
        %v2885 = vpop.f32.mrf.mxu0
        %v2886 = vadd.f32 0.0, %v2885
        %2887 = vmatmul.f32.gmra.mxu0 %v1739
        %v2888 = vpop.f32.mrf.mxu0
        %v2889 = vadd.f32 0.0, %v2888
        %2890 = vmatmul.f32.gmra.mxu0 %v1742
        %v2891 = vpop.f32.mrf.mxu0
        %v2892 = vadd.f32 0.0, %v2891
        %2893 = vmatmul.f32.gmra.mxu0 %v1745
        %v2894 = vpop.f32.mrf.mxu0
        %v2895 = vadd.f32 0.0, %v2894
        %2896 = vmatmul.f32.gmra.mxu0 %v1748
        %v2897 = vpop.f32.mrf.mxu0
        %v2898 = vadd.f32 0.0, %v2897
        %2899 = vmatmul.f32.gmra.mxu0 %v1751
        %v2900 = vpop.f32.mrf.mxu0
        %v2901 = vadd.f32 0.0, %v2900
        %2902 = vmatmul.f32.gmra.mxu0 %v1754
        %v2903 = vpop.f32.mrf.mxu0
        %v2904 = vadd.f32 0.0, %v2903
        %2905 = vmatmul.f32.gmra.mxu0 %v1757
        %v2906 = vpop.f32.mrf.mxu0
        %v2907 = vadd.f32 0.0, %v2906
        %2908 = vmatmul.f32.gmra.mxu0 %v1760
        %v2909 = vpop.f32.mrf.mxu0
        %v2910 = vadd.f32 0.0, %v2909
        %2911 = vdwg.mxu0
        %v2912 = vmul.f32 %v2865, 0.0625
        %v2913 = vmul.f32 %v2868, 0.0625
        %v2914 = vmul.f32 %v2871, 0.0625
        %v2915 = vmul.f32 %v2874, 0.0625
        %v2916 = vmul.f32 %v2877, 0.0625
        %v2917 = vmul.f32 %v2880, 0.0625
        %v2918 = vmul.f32 %v2883, 0.0625
        %v2919 = vmul.f32 %v2886, 0.0625
        %v2920 = vmul.f32 %v2889, 0.0625
        %v2921 = vmul.f32 %v2892, 0.0625
        %v2922 = vmul.f32 %v2895, 0.0625
        %v2923 = vmul.f32 %v2898, 0.0625
        %v2924 = vmul.f32 %v2901, 0.0625
        %v2925 = vmul.f32 %v2904, 0.0625
        %v2926 = vmul.f32 %v2907, 0.0625
        %v2927 = vmul.f32 %v2910, 0.0625
        %v2928 = vadd.f32 %v2912, %v2317
        %v2929 = vadd.f32 %v2913, %v2318
        %v2930 = vadd.f32 %v2914, %v2319
        %v2931 = vadd.f32 %v2915, %v2320
        %v2932 = vadd.f32 %v2916, %v2321
        %v2933 = vadd.f32 %v2917, %v2322
        %v2934 = vadd.f32 %v2918, %v2323
        %v2935 = vadd.f32 %v2919, %v2324
        %v2936 = vadd.f32 %v2920, %v2325
        %v2937 = vadd.f32 %v2921, %v2326
        %v2938 = vadd.f32 %v2922, %v2327
        %v2939 = vadd.f32 %v2923, %v2328
        %v2940 = vadd.f32 %v2924, %v2329
        %v2941 = vadd.f32 %v2925, %v2330
        %v2942 = vadd.f32 %v2926, %v2331
        %v2943 = vadd.f32 %v2927, %v2332
        %2944 = vmax.xlane.f32.xlu0 %v2928
        %v2945 = vpop.xlane.xlu0 %2944
        %2946 = vmax.xlane.f32.xlu0 %v2929
        %v2947 = vpop.xlane.xlu0 %2946
        %2948 = vmax.xlane.f32.xlu0 %v2930
        %v2949 = vpop.xlane.xlu0 %2948
        %2950 = vmax.xlane.f32.xlu0 %v2931
        %v2951 = vpop.xlane.xlu0 %2950
        %2952 = vmax.xlane.f32.xlu0 %v2932
        %v2953 = vpop.xlane.xlu0 %2952
        %2954 = vmax.xlane.f32.xlu0 %v2933
        %v2955 = vpop.xlane.xlu0 %2954
        %2956 = vmax.xlane.f32.xlu0 %v2934
        %v2957 = vpop.xlane.xlu0 %2956
        %2958 = vmax.xlane.f32.xlu0 %v2935
        %v2959 = vpop.xlane.xlu0 %2958
        %2960 = vmax.xlane.f32.xlu0 %v2936
        %v2961 = vpop.xlane.xlu0 %2960
        %2962 = vmax.xlane.f32.xlu0 %v2937
        %v2963 = vpop.xlane.xlu0 %2962
        %2964 = vmax.xlane.f32.xlu0 %v2938
        %v2965 = vpop.xlane.xlu0 %2964
        %2966 = vmax.xlane.f32.xlu0 %v2939
        %v2967 = vpop.xlane.xlu0 %2966
        %2968 = vmax.xlane.f32.xlu0 %v2940
        %v2969 = vpop.xlane.xlu0 %2968
        %2970 = vmax.xlane.f32.xlu0 %v2941
        %v2971 = vpop.xlane.xlu0 %2970
        %2972 = vmax.xlane.f32.xlu0 %v2942
        %v2973 = vpop.xlane.xlu0 %2972
        %2974 = vmax.xlane.f32.xlu0 %v2943
        %v2975 = vpop.xlane.xlu0 %2974
        %v2976 = vsub.f32 %v2928, %v2945
        %v2977 = vsub.f32 %v2929, %v2947
        %v2978 = vsub.f32 %v2930, %v2949
        %v2979 = vsub.f32 %v2931, %v2951
        %v2980 = vsub.f32 %v2932, %v2953
        %v2981 = vsub.f32 %v2933, %v2955
        %v2982 = vsub.f32 %v2934, %v2957
        %v2983 = vsub.f32 %v2935, %v2959
        %v2984 = vsub.f32 %v2936, %v2961
        %v2985 = vsub.f32 %v2937, %v2963
        %v2986 = vsub.f32 %v2938, %v2965
        %v2987 = vsub.f32 %v2939, %v2967
        %v2988 = vsub.f32 %v2940, %v2969
        %v2989 = vsub.f32 %v2941, %v2971
        %v2990 = vsub.f32 %v2942, %v2973
        %v2991 = vsub.f32 %v2943, %v2975
        %v2992 = vmul.f32 %v2976, 1.442695
        %v2993 = vpow.pop %v2992
        %v2994 = vmul.f32 %v2977, 1.442695
        %v2995 = vpow.pop %v2994
        %v2996 = vmul.f32 %v2978, 1.442695
        %v2997 = vpow.pop %v2996
        %v2998 = vmul.f32 %v2979, 1.442695
        %v2999 = vpow.pop %v2998
        %v3000 = vmul.f32 %v2980, 1.442695
        %v3001 = vpow.pop %v3000
        %v3002 = vmul.f32 %v2981, 1.442695
        %v3003 = vpow.pop %v3002
        %v3004 = vmul.f32 %v2982, 1.442695
        %v3005 = vpow.pop %v3004
        %v3006 = vmul.f32 %v2983, 1.442695
        %v3007 = vpow.pop %v3006
        %v3008 = vmul.f32 %v2984, 1.442695
        %v3009 = vpow.pop %v3008
        %v3010 = vmul.f32 %v2985, 1.442695
        %v3011 = vpow.pop %v3010
        %v3012 = vmul.f32 %v2986, 1.442695
        %v3013 = vpow.pop %v3012
        %v3014 = vmul.f32 %v2987, 1.442695
        %v3015 = vpow.pop %v3014
        %v3016 = vmul.f32 %v2988, 1.442695
        %v3017 = vpow.pop %v3016
        %v3018 = vmul.f32 %v2989, 1.442695
        %v3019 = vpow.pop %v3018
        %v3020 = vmul.f32 %v2990, 1.442695
        %v3021 = vpow.pop %v3020
        %v3022 = vmul.f32 %v2991, 1.442695
        %v3023 = vpow.pop %v3022
        %3024 = vadd.xlane.f32.xlu0 %v2993
        %v3025 = vpop.xlane.xlu0 %3024
        %3026 = vadd.xlane.f32.xlu0 %v2995
        %v3027 = vpop.xlane.xlu0 %3026
        %3028 = vadd.xlane.f32.xlu0 %v2997
        %v3029 = vpop.xlane.xlu0 %3028
        %3030 = vadd.xlane.f32.xlu0 %v2999
        %v3031 = vpop.xlane.xlu0 %3030
        %3032 = vadd.xlane.f32.xlu0 %v3001
        %v3033 = vpop.xlane.xlu0 %3032
        %3034 = vadd.xlane.f32.xlu0 %v3003
        %v3035 = vpop.xlane.xlu0 %3034
        %3036 = vadd.xlane.f32.xlu0 %v3005
        %v3037 = vpop.xlane.xlu0 %3036
        %3038 = vadd.xlane.f32.xlu0 %v3007
        %v3039 = vpop.xlane.xlu0 %3038
        %3040 = vadd.xlane.f32.xlu0 %v3009
        %v3041 = vpop.xlane.xlu0 %3040
        %3042 = vadd.xlane.f32.xlu0 %v3011
        %v3043 = vpop.xlane.xlu0 %3042
        %3044 = vadd.xlane.f32.xlu0 %v3013
        %v3045 = vpop.xlane.xlu0 %3044
        %3046 = vadd.xlane.f32.xlu0 %v3015
        %v3047 = vpop.xlane.xlu0 %3046
        %3048 = vadd.xlane.f32.xlu0 %v3017
        %v3049 = vpop.xlane.xlu0 %3048
        %3050 = vadd.xlane.f32.xlu0 %v3019
        %v3051 = vpop.xlane.xlu0 %3050
        %3052 = vadd.xlane.f32.xlu0 %v3021
        %v3053 = vpop.xlane.xlu0 %3052
        %3054 = vadd.xlane.f32.xlu0 %v3023
        %v3055 = vpop.xlane.xlu0 %3054
        %v3056 = vrcp.pop %v3025
        %v3057 = vmul.f32 %v3025, %v3056
        %v3058 = vsub.f32 1.0, %v3057
        %v3059 = vmul.f32 %v3056, %v3058
        %v3060 = vadd.f32 %v3056, %v3059
        %vm3061 = vweird.f32 %v3025
        %vm3062 = vweird.f32 %v3056
        %vm3063 = vmor %vm3061, %vm3062
        %v3064 = vsel %vm3063, %v3056, %v3060
        %v3065 = vand.u32 2147483647, %v3025
        %vm3066 = vcmp.eq.f32.partialorder %v3065, 8.507059e+37
        %v3067 = vand.u32 %v3025, 2147483648
        %v3068 = vor.u32 1.1754944e-38, %v3067
        %v3069 = vsel %vm3066, %v3068, %v3064
        %v3070 = vrcp.pop %v3027
        %v3071 = vmul.f32 %v3027, %v3070
        %v3072 = vsub.f32 1.0, %v3071
        %v3073 = vmul.f32 %v3070, %v3072
        %v3074 = vadd.f32 %v3070, %v3073
        %vm3075 = vweird.f32 %v3027
        %vm3076 = vweird.f32 %v3070
        %vm3077 = vmor %vm3075, %vm3076
        %v3078 = vsel %vm3077, %v3070, %v3074
        %v3079 = vand.u32 2147483647, %v3027
        %vm3080 = vcmp.eq.f32.partialorder %v3079, 8.507059e+37
        %v3081 = vand.u32 %v3027, 2147483648
        %v3082 = vor.u32 1.1754944e-38, %v3081
        %v3083 = vsel %vm3080, %v3082, %v3078
        %v3084 = vrcp.pop %v3029
        %v3085 = vmul.f32 %v3029, %v3084
        %v3086 = vsub.f32 1.0, %v3085
        %v3087 = vmul.f32 %v3084, %v3086
        %v3088 = vadd.f32 %v3084, %v3087
        %vm3089 = vweird.f32 %v3029
        %vm3090 = vweird.f32 %v3084
        %vm3091 = vmor %vm3089, %vm3090
        %v3092 = vsel %vm3091, %v3084, %v3088
        %v3093 = vand.u32 2147483647, %v3029
        %vm3094 = vcmp.eq.f32.partialorder %v3093, 8.507059e+37
        %v3095 = vand.u32 %v3029, 2147483648
        %v3096 = vor.u32 1.1754944e-38, %v3095
        %v3097 = vsel %vm3094, %v3096, %v3092
        %v3098 = vrcp.pop %v3031
        %v3099 = vmul.f32 %v3031, %v3098
        %v3100 = vsub.f32 1.0, %v3099
        %v3101 = vmul.f32 %v3098, %v3100
        %v3102 = vadd.f32 %v3098, %v3101
        %vm3103 = vweird.f32 %v3031
        %vm3104 = vweird.f32 %v3098
        %vm3105 = vmor %vm3103, %vm3104
        %v3106 = vsel %vm3105, %v3098, %v3102
        %v3107 = vand.u32 2147483647, %v3031
        %vm3108 = vcmp.eq.f32.partialorder %v3107, 8.507059e+37
        %v3109 = vand.u32 %v3031, 2147483648
        %v3110 = vor.u32 1.1754944e-38, %v3109
        %v3111 = vsel %vm3108, %v3110, %v3106
        %v3112 = vrcp.pop %v3033
        %v3113 = vmul.f32 %v3033, %v3112
        %v3114 = vsub.f32 1.0, %v3113
        %v3115 = vmul.f32 %v3112, %v3114
        %v3116 = vadd.f32 %v3112, %v3115
        %vm3117 = vweird.f32 %v3033
        %vm3118 = vweird.f32 %v3112
        %vm3119 = vmor %vm3117, %vm3118
        %v3120 = vsel %vm3119, %v3112, %v3116
        %v3121 = vand.u32 2147483647, %v3033
        %vm3122 = vcmp.eq.f32.partialorder %v3121, 8.507059e+37
        %v3123 = vand.u32 %v3033, 2147483648
        %v3124 = vor.u32 1.1754944e-38, %v3123
        %v3125 = vsel %vm3122, %v3124, %v3120
        %v3126 = vrcp.pop %v3035
        %v3127 = vmul.f32 %v3035, %v3126
        %v3128 = vsub.f32 1.0, %v3127
        %v3129 = vmul.f32 %v3126, %v3128
        %v3130 = vadd.f32 %v3126, %v3129
        %vm3131 = vweird.f32 %v3035
        %vm3132 = vweird.f32 %v3126
        %vm3133 = vmor %vm3131, %vm3132
        %v3134 = vsel %vm3133, %v3126, %v3130
        %v3135 = vand.u32 2147483647, %v3035
        %vm3136 = vcmp.eq.f32.partialorder %v3135, 8.507059e+37
        %v3137 = vand.u32 %v3035, 2147483648
        %v3138 = vor.u32 1.1754944e-38, %v3137
        %v3139 = vsel %vm3136, %v3138, %v3134
        %v3140 = vrcp.pop %v3037
        %v3141 = vmul.f32 %v3037, %v3140
        %v3142 = vsub.f32 1.0, %v3141
        %v3143 = vmul.f32 %v3140, %v3142
        %v3144 = vadd.f32 %v3140, %v3143
        %vm3145 = vweird.f32 %v3037
        %vm3146 = vweird.f32 %v3140
        %vm3147 = vmor %vm3145, %vm3146
        %v3148 = vsel %vm3147, %v3140, %v3144
        %v3149 = vand.u32 2147483647, %v3037
        %vm3150 = vcmp.eq.f32.partialorder %v3149, 8.507059e+37
        %v3151 = vand.u32 %v3037, 2147483648
        %v3152 = vor.u32 1.1754944e-38, %v3151
        %v3153 = vsel %vm3150, %v3152, %v3148
        %v3154 = vrcp.pop %v3039
        %v3155 = vmul.f32 %v3039, %v3154
        %v3156 = vsub.f32 1.0, %v3155
        %v3157 = vmul.f32 %v3154, %v3156
        %v3158 = vadd.f32 %v3154, %v3157
        %vm3159 = vweird.f32 %v3039
        %vm3160 = vweird.f32 %v3154
        %vm3161 = vmor %vm3159, %vm3160
        %v3162 = vsel %vm3161, %v3154, %v3158
        %v3163 = vand.u32 2147483647, %v3039
        %vm3164 = vcmp.eq.f32.partialorder %v3163, 8.507059e+37
        %v3165 = vand.u32 %v3039, 2147483648
        %v3166 = vor.u32 1.1754944e-38, %v3165
        %v3167 = vsel %vm3164, %v3166, %v3162
        %v3168 = vrcp.pop %v3041
        %v3169 = vmul.f32 %v3041, %v3168
        %v3170 = vsub.f32 1.0, %v3169
        %v3171 = vmul.f32 %v3168, %v3170
        %v3172 = vadd.f32 %v3168, %v3171
        %vm3173 = vweird.f32 %v3041
        %vm3174 = vweird.f32 %v3168
        %vm3175 = vmor %vm3173, %vm3174
        %v3176 = vsel %vm3175, %v3168, %v3172
        %v3177 = vand.u32 2147483647, %v3041
        %vm3178 = vcmp.eq.f32.partialorder %v3177, 8.507059e+37
        %v3179 = vand.u32 %v3041, 2147483648
        %v3180 = vor.u32 1.1754944e-38, %v3179
        %v3181 = vsel %vm3178, %v3180, %v3176
        %v3182 = vrcp.pop %v3043
        %v3183 = vmul.f32 %v3043, %v3182
        %v3184 = vsub.f32 1.0, %v3183
        %v3185 = vmul.f32 %v3182, %v3184
        %v3186 = vadd.f32 %v3182, %v3185
        %vm3187 = vweird.f32 %v3043
        %vm3188 = vweird.f32 %v3182
        %vm3189 = vmor %vm3187, %vm3188
        %v3190 = vsel %vm3189, %v3182, %v3186
        %v3191 = vand.u32 2147483647, %v3043
        %vm3192 = vcmp.eq.f32.partialorder %v3191, 8.507059e+37
        %v3193 = vand.u32 %v3043, 2147483648
        %v3194 = vor.u32 1.1754944e-38, %v3193
        %v3195 = vsel %vm3192, %v3194, %v3190
        %v3196 = vrcp.pop %v3045
        %v3197 = vmul.f32 %v3045, %v3196
        %v3198 = vsub.f32 1.0, %v3197
        %v3199 = vmul.f32 %v3196, %v3198
        %v3200 = vadd.f32 %v3196, %v3199
        %vm3201 = vweird.f32 %v3045
        %vm3202 = vweird.f32 %v3196
        %vm3203 = vmor %vm3201, %vm3202
        %v3204 = vsel %vm3203, %v3196, %v3200
        %v3205 = vand.u32 2147483647, %v3045
        %vm3206 = vcmp.eq.f32.partialorder %v3205, 8.507059e+37
        %v3207 = vand.u32 %v3045, 2147483648
        %v3208 = vor.u32 1.1754944e-38, %v3207
        %v3209 = vsel %vm3206, %v3208, %v3204
        %v3210 = vrcp.pop %v3047
        %v3211 = vmul.f32 %v3047, %v3210
        %v3212 = vsub.f32 1.0, %v3211
        %v3213 = vmul.f32 %v3210, %v3212
        %v3214 = vadd.f32 %v3210, %v3213
        %vm3215 = vweird.f32 %v3047
        %vm3216 = vweird.f32 %v3210
        %vm3217 = vmor %vm3215, %vm3216
        %v3218 = vsel %vm3217, %v3210, %v3214
        %v3219 = vand.u32 2147483647, %v3047
        %vm3220 = vcmp.eq.f32.partialorder %v3219, 8.507059e+37
        %v3221 = vand.u32 %v3047, 2147483648
        %v3222 = vor.u32 1.1754944e-38, %v3221
        %v3223 = vsel %vm3220, %v3222, %v3218
        %v3224 = vrcp.pop %v3049
        %v3225 = vmul.f32 %v3049, %v3224
        %v3226 = vsub.f32 1.0, %v3225
        %v3227 = vmul.f32 %v3224, %v3226
        %v3228 = vadd.f32 %v3224, %v3227
        %vm3229 = vweird.f32 %v3049
        %vm3230 = vweird.f32 %v3224
        %vm3231 = vmor %vm3229, %vm3230
        %v3232 = vsel %vm3231, %v3224, %v3228
        %v3233 = vand.u32 2147483647, %v3049
        %vm3234 = vcmp.eq.f32.partialorder %v3233, 8.507059e+37
        %v3235 = vand.u32 %v3049, 2147483648
        %v3236 = vor.u32 1.1754944e-38, %v3235
        %v3237 = vsel %vm3234, %v3236, %v3232
        %v3238 = vrcp.pop %v3051
        %v3239 = vmul.f32 %v3051, %v3238
        %v3240 = vsub.f32 1.0, %v3239
        %v3241 = vmul.f32 %v3238, %v3240
        %v3242 = vadd.f32 %v3238, %v3241
        %vm3243 = vweird.f32 %v3051
        %vm3244 = vweird.f32 %v3238
        %vm3245 = vmor %vm3243, %vm3244
        %v3246 = vsel %vm3245, %v3238, %v3242
        %v3247 = vand.u32 2147483647, %v3051
        %vm3248 = vcmp.eq.f32.partialorder %v3247, 8.507059e+37
        %v3249 = vand.u32 %v3051, 2147483648
        %v3250 = vor.u32 1.1754944e-38, %v3249
        %v3251 = vsel %vm3248, %v3250, %v3246
        %v3252 = vrcp.pop %v3053
        %v3253 = vmul.f32 %v3053, %v3252
        %v3254 = vsub.f32 1.0, %v3253
        %v3255 = vmul.f32 %v3252, %v3254
        %v3256 = vadd.f32 %v3252, %v3255
        %vm3257 = vweird.f32 %v3053
        %vm3258 = vweird.f32 %v3252
        %vm3259 = vmor %vm3257, %vm3258
        %v3260 = vsel %vm3259, %v3252, %v3256
        %v3261 = vand.u32 2147483647, %v3053
        %vm3262 = vcmp.eq.f32.partialorder %v3261, 8.507059e+37
        %v3263 = vand.u32 %v3053, 2147483648
        %v3264 = vor.u32 1.1754944e-38, %v3263
        %v3265 = vsel %vm3262, %v3264, %v3260
        %v3266 = vrcp.pop %v3055
        %v3267 = vmul.f32 %v3055, %v3266
        %v3268 = vsub.f32 1.0, %v3267
        %v3269 = vmul.f32 %v3266, %v3268
        %v3270 = vadd.f32 %v3266, %v3269
        %vm3271 = vweird.f32 %v3055
        %vm3272 = vweird.f32 %v3266
        %vm3273 = vmor %vm3271, %vm3272
        %v3274 = vsel %vm3273, %v3266, %v3270
        %v3275 = vand.u32 2147483647, %v3055
        %vm3276 = vcmp.eq.f32.partialorder %v3275, 8.507059e+37
        %v3277 = vand.u32 %v3055, 2147483648
        %v3278 = vor.u32 1.1754944e-38, %v3277
        %v3279 = vsel %vm3276, %v3278, %v3274
        %v3280 = vmul.f32 %v2993, %v3069
        %v3281 = vmul.f32 %v2995, %v3083
        %v3282 = vmul.f32 %v2997, %v3097
        %v3283 = vmul.f32 %v2999, %v3111
        %v3284 = vmul.f32 %v3001, %v3125
        %v3285 = vmul.f32 %v3003, %v3139
        %v3286 = vmul.f32 %v3005, %v3153
        %v3287 = vmul.f32 %v3007, %v3167
        %v3288 = vmul.f32 %v3009, %v3181
        %v3289 = vmul.f32 %v3011, %v3195
        %v3290 = vmul.f32 %v3013, %v3209
        %v3291 = vmul.f32 %v3015, %v3223
        %v3292 = vmul.f32 %v3017, %v3237
        %v3293 = vmul.f32 %v3019, %v3251
        %v3294 = vmul.f32 %v3021, %v3265
        %v3295 = vmul.f32 %v3023, %v3279
        %3296 = vmatpush.msra.mxu0 %v2280
        %3297 = vmatpush.msra.mxu0 %v2277
        %3298 = vmatpush.msra.mxu0 %v2274
        %3299 = vmatpush.msra.mxu0 %v2271
        %3300 = vmatpush.msra.mxu0 %v2268
        %3301 = vmatpush.msra.mxu0 %v2265
        %3302 = vmatpush.msra.mxu0 %v2262
        %3303 = vmatpush.msra.mxu0 %v2259
        %3304 = vmatpush.msra.mxu0 %v2256
        %3305 = vmatpush.msra.mxu0 %v2253
        %3306 = vmatpush.msra.mxu0 %v2250
        %3307 = vmatpush.msra.mxu0 %v2247
        %3308 = vmatpush.msra.mxu0 %v2244
        %3309 = vmatpush.msra.mxu0 %v2241
        %3310 = vmatpush.msra.mxu0 %v2238
        %3311 = vmatpush.msra.mxu0 %v2235
        %3312 = vmatmul.f32.gmra.mxu0 %v3280
        %v3313 = vpop.f32.mrf.mxu0
        %v3314 = vadd.f32 0.0, %v3313
        %3315 = vmatmul.f32.gmra.mxu0 %v3281
        %v3316 = vpop.f32.mrf.mxu0
        %v3317 = vadd.f32 0.0, %v3316
        %3318 = vmatmul.f32.gmra.mxu0 %v3282
        %v3319 = vpop.f32.mrf.mxu0
        %v3320 = vadd.f32 0.0, %v3319
        %3321 = vmatmul.f32.gmra.mxu0 %v3283
        %v3322 = vpop.f32.mrf.mxu0
        %v3323 = vadd.f32 0.0, %v3322
        %3324 = vmatmul.f32.gmra.mxu0 %v3284
        %v3325 = vpop.f32.mrf.mxu0
        %v3326 = vadd.f32 0.0, %v3325
        %3327 = vmatmul.f32.gmra.mxu0 %v3285
        %v3328 = vpop.f32.mrf.mxu0
        %v3329 = vadd.f32 0.0, %v3328
        %3330 = vmatmul.f32.gmra.mxu0 %v3286
        %v3331 = vpop.f32.mrf.mxu0
        %v3332 = vadd.f32 0.0, %v3331
        %3333 = vmatmul.f32.gmra.mxu0 %v3287
        %v3334 = vpop.f32.mrf.mxu0
        %v3335 = vadd.f32 0.0, %v3334
        %3336 = vmatmul.f32.gmra.mxu0 %v3288
        %v3337 = vpop.f32.mrf.mxu0
        %v3338 = vadd.f32 0.0, %v3337
        %3339 = vmatmul.f32.gmra.mxu0 %v3289
        %v3340 = vpop.f32.mrf.mxu0
        %v3341 = vadd.f32 0.0, %v3340
        %3342 = vmatmul.f32.gmra.mxu0 %v3290
        %v3343 = vpop.f32.mrf.mxu0
        %v3344 = vadd.f32 0.0, %v3343
        %3345 = vmatmul.f32.gmra.mxu0 %v3291
        %v3346 = vpop.f32.mrf.mxu0
        %v3347 = vadd.f32 0.0, %v3346
        %3348 = vmatmul.f32.gmra.mxu0 %v3292
        %v3349 = vpop.f32.mrf.mxu0
        %v3350 = vadd.f32 0.0, %v3349
        %3351 = vmatmul.f32.gmra.mxu0 %v3293
        %v3352 = vpop.f32.mrf.mxu0
        %v3353 = vadd.f32 0.0, %v3352
        %3354 = vmatmul.f32.gmra.mxu0 %v3294
        %v3355 = vpop.f32.mrf.mxu0
        %v3356 = vadd.f32 0.0, %v3355
        %3357 = vmatmul.f32.gmra.mxu0 %v3295
        %v3358 = vpop.f32.mrf.mxu0
        %v3359 = vadd.f32 0.0, %v3358
        %3360 = vdwg.mxu0
        %v3361 = vld [vmem:[%s682] sm:$0xff]
        %v3362 = vld [vmem:[%s682 + $0x8] sm:$0xff]
        %v3363 = vld [vmem:[%s682 + $0x10] sm:$0xff]
        %v3364 = vld [vmem:[%s682 + $0x18] sm:$0xff]
        %v3365 = vld [vmem:[%s682 + $0x20] sm:$0xff]
        %v3366 = vld [vmem:[%s682 + $0x28] sm:$0xff]
        %v3367 = vld [vmem:[%s682 + $0x30] sm:$0xff]
        %v3368 = vld [vmem:[%s682 + $0x38] sm:$0xff]
        %v3369 = vld [vmem:[%s682 + $0x40] sm:$0xff]
        %v3370 = vld [vmem:[%s682 + $0x48] sm:$0xff]
        %v3371 = vld [vmem:[%s682 + $0x50] sm:$0xff]
        %v3372 = vld [vmem:[%s682 + $0x58] sm:$0xff]
        %v3373 = vld [vmem:[%s682 + $0x60] sm:$0xff]
        %v3374 = vld [vmem:[%s682 + $0x68] sm:$0xff]
        %v3375 = vld [vmem:[%s682 + $0x70] sm:$0xff]
        %v3376 = vld [vmem:[%s682 + $0x78] sm:$0xff]
        %v3377 = vld [vmem:[%s682 + $0x80] sm:$0xff]
        %v3378 = vld [vmem:[%s682 + $0x88] sm:$0xff]
        %v3379 = vld [vmem:[%s682 + $0x90] sm:$0xff]
        %v3380 = vld [vmem:[%s682 + $0x98] sm:$0xff]
        %v3381 = vld [vmem:[%s682 + $0xa0] sm:$0xff]
        %v3382 = vld [vmem:[%s682 + $0xa8] sm:$0xff]
        %v3383 = vld [vmem:[%s682 + $0xb0] sm:$0xff]
        %v3384 = vld [vmem:[%s682 + $0xb8] sm:$0xff]
        %v3385 = vld [vmem:[%s682 + $0xc0] sm:$0xff]
        %v3386 = vld [vmem:[%s682 + $0xc8] sm:$0xff]
        %v3387 = vld [vmem:[%s682 + $0xd0] sm:$0xff]
        %v3388 = vld [vmem:[%s682 + $0xd8] sm:$0xff]
        %v3389 = vld [vmem:[%s682 + $0xe0] sm:$0xff]
        %v3390 = vld [vmem:[%s682 + $0xe8] sm:$0xff]
        %v3391 = vld [vmem:[%s682 + $0xf0] sm:$0xff]
        %v3392 = vld [vmem:[%s682 + $0xf8] sm:$0xff]
        %v3393 = vld [vmem:[%s682 + $0x100] sm:$0xff]
        %v3394 = vld [vmem:[%s682 + $0x108] sm:$0xff]
        %v3395 = vld [vmem:[%s682 + $0x110] sm:$0xff]
        %v3396 = vld [vmem:[%s682 + $0x118] sm:$0xff]
        %v3397 = vld [vmem:[%s682 + $0x120] sm:$0xff]
        %v3398 = vld [vmem:[%s682 + $0x128] sm:$0xff]
        %v3399 = vld [vmem:[%s682 + $0x130] sm:$0xff]
        %v3400 = vld [vmem:[%s682 + $0x138] sm:$0xff]
        %v3401 = vld [vmem:[%s682 + $0x140] sm:$0xff]
        %v3402 = vld [vmem:[%s682 + $0x148] sm:$0xff]
        %v3403 = vld [vmem:[%s682 + $0x150] sm:$0xff]
        %v3404 = vld [vmem:[%s682 + $0x158] sm:$0xff]
        %v3405 = vld [vmem:[%s682 + $0x160] sm:$0xff]
        %v3406 = vld [vmem:[%s682 + $0x168] sm:$0xff]
        %v3407 = vld [vmem:[%s682 + $0x170] sm:$0xff]
        %v3408 = vld [vmem:[%s682 + $0x178] sm:$0xff]
        %v3409 = vld [vmem:[%s682 + $0x180] sm:$0xff]
        %v3410 = vld [vmem:[%s682 + $0x188] sm:$0xff]
        %v3411 = vld [vmem:[%s682 + $0x190] sm:$0xff]
        %v3412 = vld [vmem:[%s682 + $0x198] sm:$0xff]
        %v3413 = vld [vmem:[%s682 + $0x1a0] sm:$0xff]
        %v3414 = vld [vmem:[%s682 + $0x1a8] sm:$0xff]
        %v3415 = vld [vmem:[%s682 + $0x1b0] sm:$0xff]
        %v3416 = vld [vmem:[%s682 + $0x1b8] sm:$0xff]
        %v3417 = vld [vmem:[%s682 + $0x1c0] sm:$0xff]
        %v3418 = vld [vmem:[%s682 + $0x1c8] sm:$0xff]
        %v3419 = vld [vmem:[%s682 + $0x1d0] sm:$0xff]
        %v3420 = vld [vmem:[%s682 + $0x1d8] sm:$0xff]
        %v3421 = vld [vmem:[%s682 + $0x1e0] sm:$0xff]
        %v3422 = vld [vmem:[%s682 + $0x1e8] sm:$0xff]
        %v3423 = vld [vmem:[%s682 + $0x1f0] sm:$0xff]
        %v3424 = vld [vmem:[%s682 + $0x1f8] sm:$0xff]
        %v3425 = vld [vmem:[%s686] sm:$0x3]
        %v3427 = vperm.slane %v3425, 0
        %v3428 = vperm.slane %v3425, 1
        %3431 = vmatpush.msra.mxu0 %v3391
        %3432 = vmatpush.msra.mxu0 %v3389
        %3433 = vmatpush.msra.mxu0 %v3387
        %3434 = vmatpush.msra.mxu0 %v3385
        %3435 = vmatpush.msra.mxu0 %v3383
        %3436 = vmatpush.msra.mxu0 %v3381
        %3437 = vmatpush.msra.mxu0 %v3379
        %3438 = vmatpush.msra.mxu0 %v3377
        %3439 = vmatpush.msra.mxu0 %v3375
        %3440 = vmatpush.msra.mxu0 %v3373
        %3441 = vmatpush.msra.mxu0 %v3371
        %3442 = vmatpush.msra.mxu0 %v3369
        %3443 = vmatpush.msra.mxu0 %v3367
        %3444 = vmatpush.msra.mxu0 %v3365
        %3445 = vmatpush.msra.mxu0 %v3363
        %3446 = vmatpush.msra.mxu0 %v3361
        %3447 = vmatmul.f32.gmra.mxu0 %v2800
        %v3448 = vpop.f32.mrf.mxu0
        %v3449 = vadd.f32 %v3427, %v3448
        %3450 = vmatmul.f32.gmra.mxu0 %v2803
        %v3451 = vpop.f32.mrf.mxu0
        %v3452 = vadd.f32 %v3427, %v3451
        %3453 = vmatmul.f32.gmra.mxu0 %v2806
        %v3454 = vpop.f32.mrf.mxu0
        %v3455 = vadd.f32 %v3427, %v3454
        %3456 = vmatmul.f32.gmra.mxu0 %v2809
        %v3457 = vpop.f32.mrf.mxu0
        %v3458 = vadd.f32 %v3427, %v3457
        %3459 = vmatmul.f32.gmra.mxu0 %v2812
        %v3460 = vpop.f32.mrf.mxu0
        %v3461 = vadd.f32 %v3427, %v3460
        %3462 = vmatmul.f32.gmra.mxu0 %v2815
        %v3463 = vpop.f32.mrf.mxu0
        %v3464 = vadd.f32 %v3427, %v3463
        %3465 = vmatmul.f32.gmra.mxu0 %v2818
        %v3466 = vpop.f32.mrf.mxu0
        %v3467 = vadd.f32 %v3427, %v3466
        %3468 = vmatmul.f32.gmra.mxu0 %v2821
        %v3469 = vpop.f32.mrf.mxu0
        %v3470 = vadd.f32 %v3427, %v3469
        %3471 = vmatmul.f32.gmra.mxu0 %v2824
        %v3472 = vpop.f32.mrf.mxu0
        %v3473 = vadd.f32 %v3427, %v3472
        %3474 = vmatmul.f32.gmra.mxu0 %v2827
        %v3475 = vpop.f32.mrf.mxu0
        %v3476 = vadd.f32 %v3427, %v3475
        %3477 = vmatmul.f32.gmra.mxu0 %v2830
        %v3478 = vpop.f32.mrf.mxu0
        %v3479 = vadd.f32 %v3427, %v3478
        %3480 = vmatmul.f32.gmra.mxu0 %v2833
        %v3481 = vpop.f32.mrf.mxu0
        %v3482 = vadd.f32 %v3427, %v3481
        %3483 = vmatmul.f32.gmra.mxu0 %v2836
        %v3484 = vpop.f32.mrf.mxu0
        %v3485 = vadd.f32 %v3427, %v3484
        %3486 = vmatmul.f32.gmra.mxu0 %v2839
        %v3487 = vpop.f32.mrf.mxu0
        %v3488 = vadd.f32 %v3427, %v3487
        %3489 = vmatmul.f32.gmra.mxu0 %v2842
        %v3490 = vpop.f32.mrf.mxu0
        %v3491 = vadd.f32 %v3427, %v3490
        %3492 = vmatmul.f32.gmra.mxu0 %v2845
        %v3493 = vpop.f32.mrf.mxu0
        %v3494 = vadd.f32 %v3427, %v3493
        %3495 = vdwg.mxu0
        %3496 = vmatpush.msra.mxu0 %v3423
        %3497 = vmatpush.msra.mxu0 %v3421
        %3498 = vmatpush.msra.mxu0 %v3419
        %3499 = vmatpush.msra.mxu0 %v3417
        %3500 = vmatpush.msra.mxu0 %v3415
        %3501 = vmatpush.msra.mxu0 %v3413
        %3502 = vmatpush.msra.mxu0 %v3411
        %3503 = vmatpush.msra.mxu0 %v3409
        %3504 = vmatpush.msra.mxu0 %v3407
        %3505 = vmatpush.msra.mxu0 %v3405
        %3506 = vmatpush.msra.mxu0 %v3403
        %3507 = vmatpush.msra.mxu0 %v3401
        %3508 = vmatpush.msra.mxu0 %v3399
        %3509 = vmatpush.msra.mxu0 %v3397
        %3510 = vmatpush.msra.mxu0 %v3395
        %3511 = vmatpush.msra.mxu0 %v3393
        %3512 = vmatmul.f32.gmra.mxu0 %v3314
        %v3513 = vpop.f32.mrf.mxu0
        %v3514 = vadd.f32 %v3449, %v3513
        %3515 = vmatmul.f32.gmra.mxu0 %v3317
        %v3516 = vpop.f32.mrf.mxu0
        %v3517 = vadd.f32 %v3452, %v3516
        %3518 = vmatmul.f32.gmra.mxu0 %v3320
        %v3519 = vpop.f32.mrf.mxu0
        %v3520 = vadd.f32 %v3455, %v3519
        %3521 = vmatmul.f32.gmra.mxu0 %v3323
        %v3522 = vpop.f32.mrf.mxu0
        %v3523 = vadd.f32 %v3458, %v3522
        %3524 = vmatmul.f32.gmra.mxu0 %v3326
        %v3525 = vpop.f32.mrf.mxu0
        %v3526 = vadd.f32 %v3461, %v3525
        %3527 = vmatmul.f32.gmra.mxu0 %v3329
        %v3528 = vpop.f32.mrf.mxu0
        %v3529 = vadd.f32 %v3464, %v3528
        %3530 = vmatmul.f32.gmra.mxu0 %v3332
        %v3531 = vpop.f32.mrf.mxu0
        %v3532 = vadd.f32 %v3467, %v3531
        %3533 = vmatmul.f32.gmra.mxu0 %v3335
        %v3534 = vpop.f32.mrf.mxu0
        %v3535 = vadd.f32 %v3470, %v3534
        %3536 = vmatmul.f32.gmra.mxu0 %v3338
        %v3537 = vpop.f32.mrf.mxu0
        %v3538 = vadd.f32 %v3473, %v3537
        %3539 = vmatmul.f32.gmra.mxu0 %v3341
        %v3540 = vpop.f32.mrf.mxu0
        %v3541 = vadd.f32 %v3476, %v3540
        %3542 = vmatmul.f32.gmra.mxu0 %v3344
        %v3543 = vpop.f32.mrf.mxu0
        %v3544 = vadd.f32 %v3479, %v3543
        %3545 = vmatmul.f32.gmra.mxu0 %v3347
        %v3546 = vpop.f32.mrf.mxu0
        %v3547 = vadd.f32 %v3482, %v3546
        %3548 = vmatmul.f32.gmra.mxu0 %v3350
        %v3549 = vpop.f32.mrf.mxu0
        %v3550 = vadd.f32 %v3485, %v3549
        %3551 = vmatmul.f32.gmra.mxu0 %v3353
        %v3552 = vpop.f32.mrf.mxu0
        %v3553 = vadd.f32 %v3488, %v3552
        %3554 = vmatmul.f32.gmra.mxu0 %v3356
        %v3555 = vpop.f32.mrf.mxu0
        %v3556 = vadd.f32 %v3491, %v3555
        %3557 = vmatmul.f32.gmra.mxu0 %v3359
        %v3558 = vpop.f32.mrf.mxu0
        %v3559 = vadd.f32 %v3494, %v3558
        %3560 = vdwg.mxu0
        %3561 = vmatpush.msra.mxu0 %v3392
        %3562 = vmatpush.msra.mxu0 %v3390
        %3563 = vmatpush.msra.mxu0 %v3388
        %3564 = vmatpush.msra.mxu0 %v3386
        %3565 = vmatpush.msra.mxu0 %v3384
        %3566 = vmatpush.msra.mxu0 %v3382
        %3567 = vmatpush.msra.mxu0 %v3380
        %3568 = vmatpush.msra.mxu0 %v3378
        %3569 = vmatpush.msra.mxu0 %v3376
        %3570 = vmatpush.msra.mxu0 %v3374
        %3571 = vmatpush.msra.mxu0 %v3372
        %3572 = vmatpush.msra.mxu0 %v3370
        %3573 = vmatpush.msra.mxu0 %v3368
        %3574 = vmatpush.msra.mxu0 %v3366
        %3575 = vmatpush.msra.mxu0 %v3364
        %3576 = vmatpush.msra.mxu0 %v3362
        %3577 = vmatmul.f32.gmra.mxu0 %v2800
        %v3578 = vpop.f32.mrf.mxu0
        %v3579 = vadd.f32 %v3428, %v3578
        %3580 = vmatmul.f32.gmra.mxu0 %v2803
        %v3581 = vpop.f32.mrf.mxu0
        %v3582 = vadd.f32 %v3428, %v3581
        %3583 = vmatmul.f32.gmra.mxu0 %v2806
        %v3584 = vpop.f32.mrf.mxu0
        %v3585 = vadd.f32 %v3428, %v3584
        %3586 = vmatmul.f32.gmra.mxu0 %v2809
        %v3587 = vpop.f32.mrf.mxu0
        %v3588 = vadd.f32 %v3428, %v3587
        %3589 = vmatmul.f32.gmra.mxu0 %v2812
        %v3590 = vpop.f32.mrf.mxu0
        %v3591 = vadd.f32 %v3428, %v3590
        %3592 = vmatmul.f32.gmra.mxu0 %v2815
        %v3593 = vpop.f32.mrf.mxu0
        %v3594 = vadd.f32 %v3428, %v3593
        %3595 = vmatmul.f32.gmra.mxu0 %v2818
        %v3596 = vpop.f32.mrf.mxu0
        %v3597 = vadd.f32 %v3428, %v3596
        %3598 = vmatmul.f32.gmra.mxu0 %v2821
        %v3599 = vpop.f32.mrf.mxu0
        %v3600 = vadd.f32 %v3428, %v3599
        %3601 = vmatmul.f32.gmra.mxu0 %v2824
        %v3602 = vpop.f32.mrf.mxu0
        %v3603 = vadd.f32 %v3428, %v3602
        %3604 = vmatmul.f32.gmra.mxu0 %v2827
        %v3605 = vpop.f32.mrf.mxu0
        %v3606 = vadd.f32 %v3428, %v3605
        %3607 = vmatmul.f32.gmra.mxu0 %v2830
        %v3608 = vpop.f32.mrf.mxu0
        %v3609 = vadd.f32 %v3428, %v3608
        %3610 = vmatmul.f32.gmra.mxu0 %v2833
        %v3611 = vpop.f32.mrf.mxu0
        %v3612 = vadd.f32 %v3428, %v3611
        %3613 = vmatmul.f32.gmra.mxu0 %v2836
        %v3614 = vpop.f32.mrf.mxu0
        %v3615 = vadd.f32 %v3428, %v3614
        %3616 = vmatmul.f32.gmra.mxu0 %v2839
        %v3617 = vpop.f32.mrf.mxu0
        %v3618 = vadd.f32 %v3428, %v3617
        %3619 = vmatmul.f32.gmra.mxu0 %v2842
        %v3620 = vpop.f32.mrf.mxu0
        %v3621 = vadd.f32 %v3428, %v3620
        %3622 = vmatmul.f32.gmra.mxu0 %v2845
        %v3623 = vpop.f32.mrf.mxu0
        %v3624 = vadd.f32 %v3428, %v3623
        %3625 = vdwg.mxu0
        %3626 = vmatpush.msra.mxu0 %v3424
        %3627 = vmatpush.msra.mxu0 %v3422
        %3628 = vmatpush.msra.mxu0 %v3420
        %3629 = vmatpush.msra.mxu0 %v3418
        %3630 = vmatpush.msra.mxu0 %v3416
        %3631 = vmatpush.msra.mxu0 %v3414
        %3632 = vmatpush.msra.mxu0 %v3412
        %3633 = vmatpush.msra.mxu0 %v3410
        %3634 = vmatpush.msra.mxu0 %v3408
        %3635 = vmatpush.msra.mxu0 %v3406
        %3636 = vmatpush.msra.mxu0 %v3404
        %3637 = vmatpush.msra.mxu0 %v3402
        %3638 = vmatpush.msra.mxu0 %v3400
        %3639 = vmatpush.msra.mxu0 %v3398
        %3640 = vmatpush.msra.mxu0 %v3396
        %3641 = vmatpush.msra.mxu0 %v3394
        %3642 = vmatmul.f32.gmra.mxu0 %v3314
        %v3643 = vpop.f32.mrf.mxu0
        %v3644 = vadd.f32 %v3579, %v3643
        %3645 = vmatmul.f32.gmra.mxu0 %v3317
        %v3646 = vpop.f32.mrf.mxu0
        %v3647 = vadd.f32 %v3582, %v3646
        %3648 = vmatmul.f32.gmra.mxu0 %v3320
        %v3649 = vpop.f32.mrf.mxu0
        %v3650 = vadd.f32 %v3585, %v3649
        %3651 = vmatmul.f32.gmra.mxu0 %v3323
        %v3652 = vpop.f32.mrf.mxu0
        %v3653 = vadd.f32 %v3588, %v3652
        %3654 = vmatmul.f32.gmra.mxu0 %v3326
        %v3655 = vpop.f32.mrf.mxu0
        %v3656 = vadd.f32 %v3591, %v3655
        %3657 = vmatmul.f32.gmra.mxu0 %v3329
        %v3658 = vpop.f32.mrf.mxu0
        %v3659 = vadd.f32 %v3594, %v3658
        %3660 = vmatmul.f32.gmra.mxu0 %v3332
        %v3661 = vpop.f32.mrf.mxu0
        %v3662 = vadd.f32 %v3597, %v3661
        %3663 = vmatmul.f32.gmra.mxu0 %v3335
        %v3664 = vpop.f32.mrf.mxu0
        %v3665 = vadd.f32 %v3600, %v3664
        %3666 = vmatmul.f32.gmra.mxu0 %v3338
        %v3667 = vpop.f32.mrf.mxu0
        %v3668 = vadd.f32 %v3603, %v3667
        %3669 = vmatmul.f32.gmra.mxu0 %v3341
        %v3670 = vpop.f32.mrf.mxu0
        %v3671 = vadd.f32 %v3606, %v3670
        %3672 = vmatmul.f32.gmra.mxu0 %v3344
        %v3673 = vpop.f32.mrf.mxu0
        %v3674 = vadd.f32 %v3609, %v3673
        %3675 = vmatmul.f32.gmra.mxu0 %v3347
        %v3676 = vpop.f32.mrf.mxu0
        %v3677 = vadd.f32 %v3612, %v3676
        %3678 = vmatmul.f32.gmra.mxu0 %v3350
        %v3679 = vpop.f32.mrf.mxu0
        %v3680 = vadd.f32 %v3615, %v3679
        %3681 = vmatmul.f32.gmra.mxu0 %v3353
        %v3682 = vpop.f32.mrf.mxu0
        %v3683 = vadd.f32 %v3618, %v3682
        %3684 = vmatmul.f32.gmra.mxu0 %v3356
        %v3685 = vpop.f32.mrf.mxu0
        %v3686 = vadd.f32 %v3621, %v3685
        %3687 = vmatmul.f32.gmra.mxu0 %v3359
        %v3688 = vpop.f32.mrf.mxu0
        %v3689 = vadd.f32 %v3624, %v3688
        %3690 = vdwg.mxu0
        %v3691 = vadd.f32 %v781, %v3514
        %v3692 = vadd.f32 %v782, %v3644
        %v3693 = vadd.f32 %v783, %v3517
        %v3694 = vadd.f32 %v784, %v3647
        %v3695 = vadd.f32 %v785, %v3520
        %v3696 = vadd.f32 %v786, %v3650
        %v3697 = vadd.f32 %v787, %v3523
        %v3698 = vadd.f32 %v788, %v3653
        %v3699 = vadd.f32 %v789, %v3526
        %v3700 = vadd.f32 %v790, %v3656
        %v3701 = vadd.f32 %v791, %v3529
        %v3702 = vadd.f32 %v792, %v3659
        %v3703 = vadd.f32 %v793, %v3532
        %v3704 = vadd.f32 %v794, %v3662
        %v3705 = vadd.f32 %v795, %v3535
        %v3706 = vadd.f32 %v796, %v3665
        %v3707 = vadd.f32 %v797, %v3538
        %v3708 = vadd.f32 %v798, %v3668
        %v3709 = vadd.f32 %v799, %v3541
        %v3710 = vadd.f32 %v800, %v3671
        %v3711 = vadd.f32 %v801, %v3544
        %v3712 = vadd.f32 %v802, %v3674
        %v3713 = vadd.f32 %v803, %v3547
        %v3714 = vadd.f32 %v804, %v3677
        %v3715 = vadd.f32 %v805, %v3550
        %v3716 = vadd.f32 %v806, %v3680
        %v3717 = vadd.f32 %v807, %v3553
        %v3718 = vadd.f32 %v808, %v3683
        %v3719 = vadd.f32 %v809, %v3556
        %v3720 = vadd.f32 %v810, %v3686
        %v3721 = vadd.f32 %v811, %v3559
        %v3722 = vadd.f32 %v812, %v3689
        %v3723 = vld [vmem:[%s690] sm:$0x3]
        %v3724 = vld [vmem:[%s694] sm:$0x3]
        %v3725 = vadd.f32 %v3691, %v3692
        %3726 = vadd.xlane.f32.xlu0 %v3725
        %v3727 = vpop.xlane.xlu0 %3726
        %v3728 = vadd.f32 %v3693, %v3694
        %3729 = vadd.xlane.f32.xlu0 %v3728
        %v3730 = vpop.xlane.xlu0 %3729
        %v3731 = vadd.f32 %v3695, %v3696
        %3732 = vadd.xlane.f32.xlu0 %v3731
        %v3733 = vpop.xlane.xlu0 %3732
        %v3734 = vadd.f32 %v3697, %v3698
        %3735 = vadd.xlane.f32.xlu0 %v3734
        %v3736 = vpop.xlane.xlu0 %3735
        %v3737 = vadd.f32 %v3699, %v3700
        %3738 = vadd.xlane.f32.xlu0 %v3737
        %v3739 = vpop.xlane.xlu0 %3738
        %v3740 = vadd.f32 %v3701, %v3702
        %3741 = vadd.xlane.f32.xlu0 %v3740
        %v3742 = vpop.xlane.xlu0 %3741
        %v3743 = vadd.f32 %v3703, %v3704
        %3744 = vadd.xlane.f32.xlu0 %v3743
        %v3745 = vpop.xlane.xlu0 %3744
        %v3746 = vadd.f32 %v3705, %v3706
        %3747 = vadd.xlane.f32.xlu0 %v3746
        %v3748 = vpop.xlane.xlu0 %3747
        %v3749 = vadd.f32 %v3707, %v3708
        %3750 = vadd.xlane.f32.xlu0 %v3749
        %v3751 = vpop.xlane.xlu0 %3750
        %v3752 = vadd.f32 %v3709, %v3710
        %3753 = vadd.xlane.f32.xlu0 %v3752
        %v3754 = vpop.xlane.xlu0 %3753
        %v3755 = vadd.f32 %v3711, %v3712
        %3756 = vadd.xlane.f32.xlu0 %v3755
        %v3757 = vpop.xlane.xlu0 %3756
        %v3758 = vadd.f32 %v3713, %v3714
        %3759 = vadd.xlane.f32.xlu0 %v3758
        %v3760 = vpop.xlane.xlu0 %3759
        %v3761 = vadd.f32 %v3715, %v3716
        %3762 = vadd.xlane.f32.xlu0 %v3761
        %v3763 = vpop.xlane.xlu0 %3762
        %v3764 = vadd.f32 %v3717, %v3718
        %3765 = vadd.xlane.f32.xlu0 %v3764
        %v3766 = vpop.xlane.xlu0 %3765
        %v3767 = vadd.f32 %v3719, %v3720
        %3768 = vadd.xlane.f32.xlu0 %v3767
        %v3769 = vpop.xlane.xlu0 %3768
        %v3770 = vadd.f32 %v3721, %v3722
        %3771 = vadd.xlane.f32.xlu0 %v3770
        %v3772 = vpop.xlane.xlu0 %3771
        %v3773 = vmul.f32 %v3727, %v869
        %v3774 = vmul.f32 %v3730, %v869
        %v3775 = vmul.f32 %v3733, %v869
        %v3776 = vmul.f32 %v3736, %v869
        %v3777 = vmul.f32 %v3739, %v869
        %v3778 = vmul.f32 %v3742, %v869
        %v3779 = vmul.f32 %v3745, %v869
        %v3780 = vmul.f32 %v3748, %v869
        %v3781 = vmul.f32 %v3751, %v869
        %v3782 = vmul.f32 %v3754, %v869
        %v3783 = vmul.f32 %v3757, %v869
        %v3784 = vmul.f32 %v3760, %v869
        %v3785 = vmul.f32 %v3763, %v869
        %v3786 = vmul.f32 %v3766, %v869
        %v3787 = vmul.f32 %v3769, %v869
        %v3788 = vmul.f32 %v3772, %v869
        %v3789 = vsub.f32 %v3691, %v3773
        %v3790 = vsub.f32 %v3692, %v3773
        %v3791 = vsub.f32 %v3693, %v3774
        %v3792 = vsub.f32 %v3694, %v3774
        %v3793 = vsub.f32 %v3695, %v3775
        %v3794 = vsub.f32 %v3696, %v3775
        %v3795 = vsub.f32 %v3697, %v3776
        %v3796 = vsub.f32 %v3698, %v3776
        %v3797 = vsub.f32 %v3699, %v3777
        %v3798 = vsub.f32 %v3700, %v3777
        %v3799 = vsub.f32 %v3701, %v3778
        %v3800 = vsub.f32 %v3702, %v3778
        %v3801 = vsub.f32 %v3703, %v3779
        %v3802 = vsub.f32 %v3704, %v3779
        %v3803 = vsub.f32 %v3705, %v3780
        %v3804 = vsub.f32 %v3706, %v3780
        %v3805 = vsub.f32 %v3707, %v3781
        %v3806 = vsub.f32 %v3708, %v3781
        %v3807 = vsub.f32 %v3709, %v3782
        %v3808 = vsub.f32 %v3710, %v3782
        %v3809 = vsub.f32 %v3711, %v3783
        %v3810 = vsub.f32 %v3712, %v3783
        %v3811 = vsub.f32 %v3713, %v3784
        %v3812 = vsub.f32 %v3714, %v3784
        %v3813 = vsub.f32 %v3715, %v3785
        %v3814 = vsub.f32 %v3716, %v3785
        %v3815 = vsub.f32 %v3717, %v3786
        %v3816 = vsub.f32 %v3718, %v3786
        %v3817 = vsub.f32 %v3719, %v3787
        %v3818 = vsub.f32 %v3720, %v3787
        %v3819 = vsub.f32 %v3721, %v3788
        %v3820 = vsub.f32 %v3722, %v3788
        %v3821 = vmul.f32 %v3789, %v3789
        %v3822 = vmul.f32 %v3790, %v3790
        %v3823 = vmul.f32 %v3791, %v3791
        %v3824 = vmul.f32 %v3792, %v3792
        %v3825 = vmul.f32 %v3793, %v3793
        %v3826 = vmul.f32 %v3794, %v3794
        %v3827 = vmul.f32 %v3795, %v3795
        %v3828 = vmul.f32 %v3796, %v3796
        %v3829 = vmul.f32 %v3797, %v3797
        %v3830 = vmul.f32 %v3798, %v3798
        %v3831 = vmul.f32 %v3799, %v3799
        %v3832 = vmul.f32 %v3800, %v3800
        %v3833 = vmul.f32 %v3801, %v3801
        %v3834 = vmul.f32 %v3802, %v3802
        %v3835 = vmul.f32 %v3803, %v3803
        %v3836 = vmul.f32 %v3804, %v3804
        %v3837 = vmul.f32 %v3805, %v3805
        %v3838 = vmul.f32 %v3806, %v3806
        %v3839 = vmul.f32 %v3807, %v3807
        %v3840 = vmul.f32 %v3808, %v3808
        %v3841 = vmul.f32 %v3809, %v3809
        %v3842 = vmul.f32 %v3810, %v3810
        %v3843 = vmul.f32 %v3811, %v3811
        %v3844 = vmul.f32 %v3812, %v3812
        %v3845 = vmul.f32 %v3813, %v3813
        %v3846 = vmul.f32 %v3814, %v3814
        %v3847 = vmul.f32 %v3815, %v3815
        %v3848 = vmul.f32 %v3816, %v3816
        %v3849 = vmul.f32 %v3817, %v3817
        %v3850 = vmul.f32 %v3818, %v3818
        %v3851 = vmul.f32 %v3819, %v3819
        %v3852 = vmul.f32 %v3820, %v3820
        %v3853 = vadd.f32 %v3821, %v3822
        %3854 = vadd.xlane.f32.xlu0 %v3853
        %v3855 = vpop.xlane.xlu0 %3854
        %v3856 = vadd.f32 %v3823, %v3824
        %3857 = vadd.xlane.f32.xlu0 %v3856
        %v3858 = vpop.xlane.xlu0 %3857
        %v3859 = vadd.f32 %v3825, %v3826
        %3860 = vadd.xlane.f32.xlu0 %v3859
        %v3861 = vpop.xlane.xlu0 %3860
        %v3862 = vadd.f32 %v3827, %v3828
        %3863 = vadd.xlane.f32.xlu0 %v3862
        %v3864 = vpop.xlane.xlu0 %3863
        %v3865 = vadd.f32 %v3829, %v3830
        %3866 = vadd.xlane.f32.xlu0 %v3865
        %v3867 = vpop.xlane.xlu0 %3866
        %v3868 = vadd.f32 %v3831, %v3832
        %3869 = vadd.xlane.f32.xlu0 %v3868
        %v3870 = vpop.xlane.xlu0 %3869
        %v3871 = vadd.f32 %v3833, %v3834
        %3872 = vadd.xlane.f32.xlu0 %v3871
        %v3873 = vpop.xlane.xlu0 %3872
        %v3874 = vadd.f32 %v3835, %v3836
        %3875 = vadd.xlane.f32.xlu0 %v3874
        %v3876 = vpop.xlane.xlu0 %3875
        %v3877 = vadd.f32 %v3837, %v3838
        %3878 = vadd.xlane.f32.xlu0 %v3877
        %v3879 = vpop.xlane.xlu0 %3878
        %v3880 = vadd.f32 %v3839, %v3840
        %3881 = vadd.xlane.f32.xlu0 %v3880
        %v3882 = vpop.xlane.xlu0 %3881
        %v3883 = vadd.f32 %v3841, %v3842
        %3884 = vadd.xlane.f32.xlu0 %v3883
        %v3885 = vpop.xlane.xlu0 %3884
        %v3886 = vadd.f32 %v3843, %v3844
        %3887 = vadd.xlane.f32.xlu0 %v3886
        %v3888 = vpop.xlane.xlu0 %3887
        %v3889 = vadd.f32 %v3845, %v3846
        %3890 = vadd.xlane.f32.xlu0 %v3889
        %v3891 = vpop.xlane.xlu0 %3890
        %v3892 = vadd.f32 %v3847, %v3848
        %3893 = vadd.xlane.f32.xlu0 %v3892
        %v3894 = vpop.xlane.xlu0 %3893
        %v3895 = vadd.f32 %v3849, %v3850
        %3896 = vadd.xlane.f32.xlu0 %v3895
        %v3897 = vpop.xlane.xlu0 %3896
        %v3898 = vadd.f32 %v3851, %v3852
        %3899 = vadd.xlane.f32.xlu0 %v3898
        %v3900 = vpop.xlane.xlu0 %3899
        %v3901 = vmul.f32 %v3855, %v869
        %v3902 = vmul.f32 %v3858, %v869
        %v3903 = vmul.f32 %v3861, %v869
        %v3904 = vmul.f32 %v3864, %v869
        %v3905 = vmul.f32 %v3867, %v869
        %v3906 = vmul.f32 %v3870, %v869
        %v3907 = vmul.f32 %v3873, %v869
        %v3908 = vmul.f32 %v3876, %v869
        %v3909 = vmul.f32 %v3879, %v869
        %v3910 = vmul.f32 %v3882, %v869
        %v3911 = vmul.f32 %v3885, %v869
        %v3912 = vmul.f32 %v3888, %v869
        %v3913 = vmul.f32 %v3891, %v869
        %v3914 = vmul.f32 %v3894, %v869
        %v3915 = vmul.f32 %v3897, %v869
        %v3916 = vmul.f32 %v3900, %v869
        %v3917 = vadd.f32 %v3901, 1e-05
        %v3918 = vadd.f32 %v3902, 1e-05
        %v3919 = vadd.f32 %v3903, 1e-05
        %v3920 = vadd.f32 %v3904, 1e-05
        %v3921 = vadd.f32 %v3905, 1e-05
        %v3922 = vadd.f32 %v3906, 1e-05
        %v3923 = vadd.f32 %v3907, 1e-05
        %v3924 = vadd.f32 %v3908, 1e-05
        %v3925 = vadd.f32 %v3909, 1e-05
        %v3926 = vadd.f32 %v3910, 1e-05
        %v3927 = vadd.f32 %v3911, 1e-05
        %v3928 = vadd.f32 %v3912, 1e-05
        %v3929 = vadd.f32 %v3913, 1e-05
        %v3930 = vadd.f32 %v3914, 1e-05
        %v3931 = vadd.f32 %v3915, 1e-05
        %v3932 = vadd.f32 %v3916, 1e-05
        %v3933 = vrsqrt.pop %v3917
        %v3934 = vmul.f32 %v3933, %v3917
        %v3935 = vmul.f32 %v3934, %v3933
        %v3936 = vmul.f32 0.5, %v3935
        %v3937 = vsub.f32 1.5, %v3936
        %v3938 = vmul.f32 %v3933, %v3937
        %vm3939 = vweird.f32 %v3917
        %vm3940 = vweird.f32 %v3933
        %vm3941 = vmor %vm3939, %vm3940
        %v3942 = vsel %vm3941, %v3933, %v3938
        %v3943 = vrsqrt.pop %v3918
        %v3944 = vmul.f32 %v3943, %v3918
        %v3945 = vmul.f32 %v3944, %v3943
        %v3946 = vmul.f32 0.5, %v3945
        %v3947 = vsub.f32 1.5, %v3946
        %v3948 = vmul.f32 %v3943, %v3947
        %vm3949 = vweird.f32 %v3918
        %vm3950 = vweird.f32 %v3943
        %vm3951 = vmor %vm3949, %vm3950
        %v3952 = vsel %vm3951, %v3943, %v3948
        %v3953 = vrsqrt.pop %v3919
        %v3954 = vmul.f32 %v3953, %v3919
        %v3955 = vmul.f32 %v3954, %v3953
        %v3956 = vmul.f32 0.5, %v3955
        %v3957 = vsub.f32 1.5, %v3956
        %v3958 = vmul.f32 %v3953, %v3957
        %vm3959 = vweird.f32 %v3919
        %vm3960 = vweird.f32 %v3953
        %vm3961 = vmor %vm3959, %vm3960
        %v3962 = vsel %vm3961, %v3953, %v3958
        %v3963 = vrsqrt.pop %v3920
        %v3964 = vmul.f32 %v3963, %v3920
        %v3965 = vmul.f32 %v3964, %v3963
        %v3966 = vmul.f32 0.5, %v3965
        %v3967 = vsub.f32 1.5, %v3966
        %v3968 = vmul.f32 %v3963, %v3967
        %vm3969 = vweird.f32 %v3920
        %vm3970 = vweird.f32 %v3963
        %vm3971 = vmor %vm3969, %vm3970
        %v3972 = vsel %vm3971, %v3963, %v3968
        %v3973 = vrsqrt.pop %v3921
        %v3974 = vmul.f32 %v3973, %v3921
        %v3975 = vmul.f32 %v3974, %v3973
        %v3976 = vmul.f32 0.5, %v3975
        %v3977 = vsub.f32 1.5, %v3976
        %v3978 = vmul.f32 %v3973, %v3977
        %vm3979 = vweird.f32 %v3921
        %vm3980 = vweird.f32 %v3973
        %vm3981 = vmor %vm3979, %vm3980
        %v3982 = vsel %vm3981, %v3973, %v3978
        %v3983 = vrsqrt.pop %v3922
        %v3984 = vmul.f32 %v3983, %v3922
        %v3985 = vmul.f32 %v3984, %v3983
        %v3986 = vmul.f32 0.5, %v3985
        %v3987 = vsub.f32 1.5, %v3986
        %v3988 = vmul.f32 %v3983, %v3987
        %vm3989 = vweird.f32 %v3922
        %vm3990 = vweird.f32 %v3983
        %vm3991 = vmor %vm3989, %vm3990
        %v3992 = vsel %vm3991, %v3983, %v3988
        %v3993 = vrsqrt.pop %v3923
        %v3994 = vmul.f32 %v3993, %v3923
        %v3995 = vmul.f32 %v3994, %v3993
        %v3996 = vmul.f32 0.5, %v3995
        %v3997 = vsub.f32 1.5, %v3996
        %v3998 = vmul.f32 %v3993, %v3997
        %vm3999 = vweird.f32 %v3923
        %vm4000 = vweird.f32 %v3993
        %vm4001 = vmor %vm3999, %vm4000
        %v4002 = vsel %vm4001, %v3993, %v3998
        %v4003 = vrsqrt.pop %v3924
        %v4004 = vmul.f32 %v4003, %v3924
        %v4005 = vmul.f32 %v4004, %v4003
        %v4006 = vmul.f32 0.5, %v4005
        %v4007 = vsub.f32 1.5, %v4006
        %v4008 = vmul.f32 %v4003, %v4007
        %vm4009 = vweird.f32 %v3924
        %vm4010 = vweird.f32 %v4003
        %vm4011 = vmor %vm4009, %vm4010
        %v4012 = vsel %vm4011, %v4003, %v4008
        %v4013 = vrsqrt.pop %v3925
        %v4014 = vmul.f32 %v4013, %v3925
        %v4015 = vmul.f32 %v4014, %v4013
        %v4016 = vmul.f32 0.5, %v4015
        %v4017 = vsub.f32 1.5, %v4016
        %v4018 = vmul.f32 %v4013, %v4017
        %vm4019 = vweird.f32 %v3925
        %vm4020 = vweird.f32 %v4013
        %vm4021 = vmor %vm4019, %vm4020
        %v4022 = vsel %vm4021, %v4013, %v4018
        %v4023 = vrsqrt.pop %v3926
        %v4024 = vmul.f32 %v4023, %v3926
        %v4025 = vmul.f32 %v4024, %v4023
        %v4026 = vmul.f32 0.5, %v4025
        %v4027 = vsub.f32 1.5, %v4026
        %v4028 = vmul.f32 %v4023, %v4027
        %vm4029 = vweird.f32 %v3926
        %vm4030 = vweird.f32 %v4023
        %vm4031 = vmor %vm4029, %vm4030
        %v4032 = vsel %vm4031, %v4023, %v4028
        %v4033 = vrsqrt.pop %v3927
        %v4034 = vmul.f32 %v4033, %v3927
        %v4035 = vmul.f32 %v4034, %v4033
        %v4036 = vmul.f32 0.5, %v4035
        %v4037 = vsub.f32 1.5, %v4036
        %v4038 = vmul.f32 %v4033, %v4037
        %vm4039 = vweird.f32 %v3927
        %vm4040 = vweird.f32 %v4033
        %vm4041 = vmor %vm4039, %vm4040
        %v4042 = vsel %vm4041, %v4033, %v4038
        %v4043 = vrsqrt.pop %v3928
        %v4044 = vmul.f32 %v4043, %v3928
        %v4045 = vmul.f32 %v4044, %v4043
        %v4046 = vmul.f32 0.5, %v4045
        %v4047 = vsub.f32 1.5, %v4046
        %v4048 = vmul.f32 %v4043, %v4047
        %vm4049 = vweird.f32 %v3928
        %vm4050 = vweird.f32 %v4043
        %vm4051 = vmor %vm4049, %vm4050
        %v4052 = vsel %vm4051, %v4043, %v4048
        %v4053 = vrsqrt.pop %v3929
        %v4054 = vmul.f32 %v4053, %v3929
        %v4055 = vmul.f32 %v4054, %v4053
        %v4056 = vmul.f32 0.5, %v4055
        %v4057 = vsub.f32 1.5, %v4056
        %v4058 = vmul.f32 %v4053, %v4057
        %vm4059 = vweird.f32 %v3929
        %vm4060 = vweird.f32 %v4053
        %vm4061 = vmor %vm4059, %vm4060
        %v4062 = vsel %vm4061, %v4053, %v4058
        %v4063 = vrsqrt.pop %v3930
        %v4064 = vmul.f32 %v4063, %v3930
        %v4065 = vmul.f32 %v4064, %v4063
        %v4066 = vmul.f32 0.5, %v4065
        %v4067 = vsub.f32 1.5, %v4066
        %v4068 = vmul.f32 %v4063, %v4067
        %vm4069 = vweird.f32 %v3930
        %vm4070 = vweird.f32 %v4063
        %vm4071 = vmor %vm4069, %vm4070
        %v4072 = vsel %vm4071, %v4063, %v4068
        %v4073 = vrsqrt.pop %v3931
        %v4074 = vmul.f32 %v4073, %v3931
        %v4075 = vmul.f32 %v4074, %v4073
        %v4076 = vmul.f32 0.5, %v4075
        %v4077 = vsub.f32 1.5, %v4076
        %v4078 = vmul.f32 %v4073, %v4077
        %vm4079 = vweird.f32 %v3931
        %vm4080 = vweird.f32 %v4073
        %vm4081 = vmor %vm4079, %vm4080
        %v4082 = vsel %vm4081, %v4073, %v4078
        %v4083 = vrsqrt.pop %v3932
        %v4084 = vmul.f32 %v4083, %v3932
        %v4085 = vmul.f32 %v4084, %v4083
        %v4086 = vmul.f32 0.5, %v4085
        %v4087 = vsub.f32 1.5, %v4086
        %v4088 = vmul.f32 %v4083, %v4087
        %vm4089 = vweird.f32 %v3932
        %vm4090 = vweird.f32 %v4083
        %vm4091 = vmor %vm4089, %vm4090
        %v4092 = vsel %vm4091, %v4083, %v4088
        %v4093 = vmul.f32 %v3789, %v3942
        %v4094 = vmul.f32 %v3790, %v3942
        %v4095 = vmul.f32 %v3791, %v3952
        %v4096 = vmul.f32 %v3792, %v3952
        %v4097 = vmul.f32 %v3793, %v3962
        %v4098 = vmul.f32 %v3794, %v3962
        %v4099 = vmul.f32 %v3795, %v3972
        %v4100 = vmul.f32 %v3796, %v3972
        %v4101 = vmul.f32 %v3797, %v3982
        %v4102 = vmul.f32 %v3798, %v3982
        %v4103 = vmul.f32 %v3799, %v3992
        %v4104 = vmul.f32 %v3800, %v3992
        %v4105 = vmul.f32 %v3801, %v4002
        %v4106 = vmul.f32 %v3802, %v4002
        %v4107 = vmul.f32 %v3803, %v4012
        %v4108 = vmul.f32 %v3804, %v4012
        %v4109 = vmul.f32 %v3805, %v4022
        %v4110 = vmul.f32 %v3806, %v4022
        %v4111 = vmul.f32 %v3807, %v4032
        %v4112 = vmul.f32 %v3808, %v4032
        %v4113 = vmul.f32 %v3809, %v4042
        %v4114 = vmul.f32 %v3810, %v4042
        %v4115 = vmul.f32 %v3811, %v4052
        %v4116 = vmul.f32 %v3812, %v4052
        %v4117 = vmul.f32 %v3813, %v4062
        %v4118 = vmul.f32 %v3814, %v4062
        %v4119 = vmul.f32 %v3815, %v4072
        %v4120 = vmul.f32 %v3816, %v4072
        %v4121 = vmul.f32 %v3817, %v4082
        %v4122 = vmul.f32 %v3818, %v4082
        %v4123 = vmul.f32 %v3819, %v4092
        %v4124 = vmul.f32 %v3820, %v4092
        %v4126 = vperm.slane %v3723, 0
        %v4127 = vperm.slane %v3723, 1
        %v4130 = vmul.f32 %v4093, %v4126
        %v4131 = vmul.f32 %v4094, %v4127
        %v4132 = vmul.f32 %v4095, %v4126
        %v4133 = vmul.f32 %v4096, %v4127
        %v4134 = vmul.f32 %v4097, %v4126
        %v4135 = vmul.f32 %v4098, %v4127
        %v4136 = vmul.f32 %v4099, %v4126
        %v4137 = vmul.f32 %v4100, %v4127
        %v4138 = vmul.f32 %v4101, %v4126
        %v4139 = vmul.f32 %v4102, %v4127
        %v4140 = vmul.f32 %v4103, %v4126
        %v4141 = vmul.f32 %v4104, %v4127
        %v4142 = vmul.f32 %v4105, %v4126
        %v4143 = vmul.f32 %v4106, %v4127
        %v4144 = vmul.f32 %v4107, %v4126
        %v4145 = vmul.f32 %v4108, %v4127
        %v4146 = vmul.f32 %v4109, %v4126
        %v4147 = vmul.f32 %v4110, %v4127
        %v4148 = vmul.f32 %v4111, %v4126
        %v4149 = vmul.f32 %v4112, %v4127
        %v4150 = vmul.f32 %v4113, %v4126
        %v4151 = vmul.f32 %v4114, %v4127
        %v4152 = vmul.f32 %v4115, %v4126
        %v4153 = vmul.f32 %v4116, %v4127
        %v4154 = vmul.f32 %v4117, %v4126
        %v4155 = vmul.f32 %v4118, %v4127
        %v4156 = vmul.f32 %v4119, %v4126
        %v4157 = vmul.f32 %v4120, %v4127
        %v4158 = vmul.f32 %v4121, %v4126
        %v4159 = vmul.f32 %v4122, %v4127
        %v4160 = vmul.f32 %v4123, %v4126
        %v4161 = vmul.f32 %v4124, %v4127
        %v4163 = vperm.slane %v3724, 0
        %v4164 = vperm.slane %v3724, 1
        %v4167 = vadd.f32 %v4130, %v4163
        %v4168 = vadd.f32 %v4131, %v4164
        %v4169 = vadd.f32 %v4132, %v4163
        %v4170 = vadd.f32 %v4133, %v4164
        %v4171 = vadd.f32 %v4134, %v4163
        %v4172 = vadd.f32 %v4135, %v4164
        %v4173 = vadd.f32 %v4136, %v4163
        %v4174 = vadd.f32 %v4137, %v4164
        %v4175 = vadd.f32 %v4138, %v4163
        %v4176 = vadd.f32 %v4139, %v4164
        %v4177 = vadd.f32 %v4140, %v4163
        %v4178 = vadd.f32 %v4141, %v4164
        %v4179 = vadd.f32 %v4142, %v4163
        %v4180 = vadd.f32 %v4143, %v4164
        %v4181 = vadd.f32 %v4144, %v4163
        %v4182 = vadd.f32 %v4145, %v4164
        %v4183 = vadd.f32 %v4146, %v4163
        %v4184 = vadd.f32 %v4147, %v4164
        %v4185 = vadd.f32 %v4148, %v4163
        %v4186 = vadd.f32 %v4149, %v4164
        %v4187 = vadd.f32 %v4150, %v4163
        %v4188 = vadd.f32 %v4151, %v4164
        %v4189 = vadd.f32 %v4152, %v4163
        %v4190 = vadd.f32 %v4153, %v4164
        %v4191 = vadd.f32 %v4154, %v4163
        %v4192 = vadd.f32 %v4155, %v4164
        %v4193 = vadd.f32 %v4156, %v4163
        %v4194 = vadd.f32 %v4157, %v4164
        %v4195 = vadd.f32 %v4158, %v4163
        %v4196 = vadd.f32 %v4159, %v4164
        %v4197 = vadd.f32 %v4160, %v4163
        %v4198 = vadd.f32 %v4161, %v4164
        %v4199 = vld [vmem:[%s699] sm:$0xff]
        %v4200 = vld [vmem:[%s699 + $0x8] sm:$0xff]
        %v4201 = vld [vmem:[%s699 + $0x10] sm:$0xff]
        %v4202 = vld [vmem:[%s699 + $0x18] sm:$0xff]
        %v4203 = vld [vmem:[%s699 + $0x20] sm:$0xff]
        %v4204 = vld [vmem:[%s699 + $0x28] sm:$0xff]
        %v4205 = vld [vmem:[%s699 + $0x30] sm:$0xff]
        %v4206 = vld [vmem:[%s699 + $0x38] sm:$0xff]
        %v4207 = vld [vmem:[%s699 + $0x40] sm:$0xff]
        %v4208 = vld [vmem:[%s699 + $0x48] sm:$0xff]
        %v4209 = vld [vmem:[%s699 + $0x50] sm:$0xff]
        %v4210 = vld [vmem:[%s699 + $0x58] sm:$0xff]
        %v4211 = vld [vmem:[%s699 + $0x60] sm:$0xff]
        %v4212 = vld [vmem:[%s699 + $0x68] sm:$0xff]
        %v4213 = vld [vmem:[%s699 + $0x70] sm:$0xff]
        %v4214 = vld [vmem:[%s699 + $0x78] sm:$0xff]
        %v4215 = vld [vmem:[%s699 + $0x80] sm:$0xff]
        %v4216 = vld [vmem:[%s699 + $0x88] sm:$0xff]
        %v4217 = vld [vmem:[%s699 + $0x90] sm:$0xff]
        %v4218 = vld [vmem:[%s699 + $0x98] sm:$0xff]
        %v4219 = vld [vmem:[%s699 + $0xa0] sm:$0xff]
        %v4220 = vld [vmem:[%s699 + $0xa8] sm:$0xff]
        %v4221 = vld [vmem:[%s699 + $0xb0] sm:$0xff]
        %v4222 = vld [vmem:[%s699 + $0xb8] sm:$0xff]
        %v4223 = vld [vmem:[%s699 + $0xc0] sm:$0xff]
        %v4224 = vld [vmem:[%s699 + $0xc8] sm:$0xff]
        %v4225 = vld [vmem:[%s699 + $0xd0] sm:$0xff]
        %v4226 = vld [vmem:[%s699 + $0xd8] sm:$0xff]
        %v4227 = vld [vmem:[%s699 + $0xe0] sm:$0xff]
        %v4228 = vld [vmem:[%s699 + $0xe8] sm:$0xff]
        %v4229 = vld [vmem:[%s699 + $0xf0] sm:$0xff]
        %v4230 = vld [vmem:[%s699 + $0xf8] sm:$0xff]
        %v4231 = vld [vmem:[%s699 + $0x100] sm:$0xff]
        %v4232 = vld [vmem:[%s699 + $0x108] sm:$0xff]
        %v4233 = vld [vmem:[%s699 + $0x110] sm:$0xff]
        %v4234 = vld [vmem:[%s699 + $0x118] sm:$0xff]
        %v4235 = vld [vmem:[%s699 + $0x120] sm:$0xff]
        %v4236 = vld [vmem:[%s699 + $0x128] sm:$0xff]
        %v4237 = vld [vmem:[%s699 + $0x130] sm:$0xff]
        %v4238 = vld [vmem:[%s699 + $0x138] sm:$0xff]
        %v4239 = vld [vmem:[%s699 + $0x140] sm:$0xff]
        %v4240 = vld [vmem:[%s699 + $0x148] sm:$0xff]
        %v4241 = vld [vmem:[%s699 + $0x150] sm:$0xff]
        %v4242 = vld [vmem:[%s699 + $0x158] sm:$0xff]
        %v4243 = vld [vmem:[%s699 + $0x160] sm:$0xff]
        %v4244 = vld [vmem:[%s699 + $0x168] sm:$0xff]
        %v4245 = vld [vmem:[%s699 + $0x170] sm:$0xff]
        %v4246 = vld [vmem:[%s699 + $0x178] sm:$0xff]
        %v4247 = vld [vmem:[%s699 + $0x180] sm:$0xff]
        %v4248 = vld [vmem:[%s699 + $0x188] sm:$0xff]
        %v4249 = vld [vmem:[%s699 + $0x190] sm:$0xff]
        %v4250 = vld [vmem:[%s699 + $0x198] sm:$0xff]
        %v4251 = vld [vmem:[%s699 + $0x1a0] sm:$0xff]
        %v4252 = vld [vmem:[%s699 + $0x1a8] sm:$0xff]
        %v4253 = vld [vmem:[%s699 + $0x1b0] sm:$0xff]
        %v4254 = vld [vmem:[%s699 + $0x1b8] sm:$0xff]
        %v4255 = vld [vmem:[%s699 + $0x1c0] sm:$0xff]
        %v4256 = vld [vmem:[%s699 + $0x1c8] sm:$0xff]
        %v4257 = vld [vmem:[%s699 + $0x1d0] sm:$0xff]
        %v4258 = vld [vmem:[%s699 + $0x1d8] sm:$0xff]
        %v4259 = vld [vmem:[%s699 + $0x1e0] sm:$0xff]
        %v4260 = vld [vmem:[%s699 + $0x1e8] sm:$0xff]
        %v4261 = vld [vmem:[%s699 + $0x1f0] sm:$0xff]
        %v4262 = vld [vmem:[%s699 + $0x1f8] sm:$0xff]
        %v4263 = vld [vmem:[%s699 + $0x200] sm:$0xff]
        %v4264 = vld [vmem:[%s699 + $0x208] sm:$0xff]
        %v4265 = vld [vmem:[%s699 + $0x210] sm:$0xff]
        %v4266 = vld [vmem:[%s699 + $0x218] sm:$0xff]
        %v4267 = vld [vmem:[%s699 + $0x220] sm:$0xff]
        %v4268 = vld [vmem:[%s699 + $0x228] sm:$0xff]
        %v4269 = vld [vmem:[%s699 + $0x230] sm:$0xff]
        %v4270 = vld [vmem:[%s699 + $0x238] sm:$0xff]
        %v4271 = vld [vmem:[%s699 + $0x240] sm:$0xff]
        %v4272 = vld [vmem:[%s699 + $0x248] sm:$0xff]
        %v4273 = vld [vmem:[%s699 + $0x250] sm:$0xff]
        %v4274 = vld [vmem:[%s699 + $0x258] sm:$0xff]
        %v4275 = vld [vmem:[%s699 + $0x260] sm:$0xff]
        %v4276 = vld [vmem:[%s699 + $0x268] sm:$0xff]
        %v4277 = vld [vmem:[%s699 + $0x270] sm:$0xff]
        %v4278 = vld [vmem:[%s699 + $0x278] sm:$0xff]
        %v4279 = vld [vmem:[%s699 + $0x280] sm:$0xff]
        %v4280 = vld [vmem:[%s699 + $0x288] sm:$0xff]
        %v4281 = vld [vmem:[%s699 + $0x290] sm:$0xff]
        %v4282 = vld [vmem:[%s699 + $0x298] sm:$0xff]
        %v4283 = vld [vmem:[%s699 + $0x2a0] sm:$0xff]
        %v4284 = vld [vmem:[%s699 + $0x2a8] sm:$0xff]
        %v4285 = vld [vmem:[%s699 + $0x2b0] sm:$0xff]
        %v4286 = vld [vmem:[%s699 + $0x2b8] sm:$0xff]
        %v4287 = vld [vmem:[%s699 + $0x2c0] sm:$0xff]
        %v4288 = vld [vmem:[%s699 + $0x2c8] sm:$0xff]
        %v4289 = vld [vmem:[%s699 + $0x2d0] sm:$0xff]
        %v4290 = vld [vmem:[%s699 + $0x2d8] sm:$0xff]
        %v4291 = vld [vmem:[%s699 + $0x2e0] sm:$0xff]
        %v4292 = vld [vmem:[%s699 + $0x2e8] sm:$0xff]
        %v4293 = vld [vmem:[%s699 + $0x2f0] sm:$0xff]
        %v4294 = vld [vmem:[%s699 + $0x2f8] sm:$0xff]
        %v4295 = vld [vmem:[%s699 + $0x300] sm:$0xff]
        %v4296 = vld [vmem:[%s699 + $0x308] sm:$0xff]
        %v4297 = vld [vmem:[%s699 + $0x310] sm:$0xff]
        %v4298 = vld [vmem:[%s699 + $0x318] sm:$0xff]
        %v4299 = vld [vmem:[%s699 + $0x320] sm:$0xff]
        %v4300 = vld [vmem:[%s699 + $0x328] sm:$0xff]
        %v4301 = vld [vmem:[%s699 + $0x330] sm:$0xff]
        %v4302 = vld [vmem:[%s699 + $0x338] sm:$0xff]
        %v4303 = vld [vmem:[%s699 + $0x340] sm:$0xff]
        %v4304 = vld [vmem:[%s699 + $0x348] sm:$0xff]
        %v4305 = vld [vmem:[%s699 + $0x350] sm:$0xff]
        %v4306 = vld [vmem:[%s699 + $0x358] sm:$0xff]
        %v4307 = vld [vmem:[%s699 + $0x360] sm:$0xff]
        %v4308 = vld [vmem:[%s699 + $0x368] sm:$0xff]
        %v4309 = vld [vmem:[%s699 + $0x370] sm:$0xff]
        %v4310 = vld [vmem:[%s699 + $0x378] sm:$0xff]
        %v4311 = vld [vmem:[%s699 + $0x380] sm:$0xff]
        %v4312 = vld [vmem:[%s699 + $0x388] sm:$0xff]
        %v4313 = vld [vmem:[%s699 + $0x390] sm:$0xff]
        %v4314 = vld [vmem:[%s699 + $0x398] sm:$0xff]
        %v4315 = vld [vmem:[%s699 + $0x3a0] sm:$0xff]
        %v4316 = vld [vmem:[%s699 + $0x3a8] sm:$0xff]
        %v4317 = vld [vmem:[%s699 + $0x3b0] sm:$0xff]
        %v4318 = vld [vmem:[%s699 + $0x3b8] sm:$0xff]
        %v4319 = vld [vmem:[%s699 + $0x3c0] sm:$0xff]
        %v4320 = vld [vmem:[%s699 + $0x3c8] sm:$0xff]
        %v4321 = vld [vmem:[%s699 + $0x3d0] sm:$0xff]
        %v4322 = vld [vmem:[%s699 + $0x3d8] sm:$0xff]
        %v4323 = vld [vmem:[%s699 + $0x3e0] sm:$0xff]
        %v4324 = vld [vmem:[%s699 + $0x3e8] sm:$0xff]
        %v4325 = vld [vmem:[%s699 + $0x3f0] sm:$0xff]
        %v4326 = vld [vmem:[%s699 + $0x3f8] sm:$0xff]
        %v4327 = vld [vmem:[%s699 + $0x400] sm:$0xff]
        %v4328 = vld [vmem:[%s699 + $0x408] sm:$0xff]
        %v4329 = vld [vmem:[%s699 + $0x410] sm:$0xff]
        %v4330 = vld [vmem:[%s699 + $0x418] sm:$0xff]
        %v4331 = vld [vmem:[%s699 + $0x420] sm:$0xff]
        %v4332 = vld [vmem:[%s699 + $0x428] sm:$0xff]
        %v4333 = vld [vmem:[%s699 + $0x430] sm:$0xff]
        %v4334 = vld [vmem:[%s699 + $0x438] sm:$0xff]
        %v4335 = vld [vmem:[%s699 + $0x440] sm:$0xff]
        %v4336 = vld [vmem:[%s699 + $0x448] sm:$0xff]
        %v4337 = vld [vmem:[%s699 + $0x450] sm:$0xff]
        %v4338 = vld [vmem:[%s699 + $0x458] sm:$0xff]
        %v4339 = vld [vmem:[%s699 + $0x460] sm:$0xff]
        %v4340 = vld [vmem:[%s699 + $0x468] sm:$0xff]
        %v4341 = vld [vmem:[%s699 + $0x470] sm:$0xff]
        %v4342 = vld [vmem:[%s699 + $0x478] sm:$0xff]
        %v4343 = vld [vmem:[%s699 + $0x480] sm:$0xff]
        %v4344 = vld [vmem:[%s699 + $0x488] sm:$0xff]
        %v4345 = vld [vmem:[%s699 + $0x490] sm:$0xff]
        %v4346 = vld [vmem:[%s699 + $0x498] sm:$0xff]
        %v4347 = vld [vmem:[%s699 + $0x4a0] sm:$0xff]
        %v4348 = vld [vmem:[%s699 + $0x4a8] sm:$0xff]
        %v4349 = vld [vmem:[%s699 + $0x4b0] sm:$0xff]
        %v4350 = vld [vmem:[%s699 + $0x4b8] sm:$0xff]
        %v4351 = vld [vmem:[%s699 + $0x4c0] sm:$0xff]
        %v4352 = vld [vmem:[%s699 + $0x4c8] sm:$0xff]
        %v4353 = vld [vmem:[%s699 + $0x4d0] sm:$0xff]
        %v4354 = vld [vmem:[%s699 + $0x4d8] sm:$0xff]
        %v4355 = vld [vmem:[%s699 + $0x4e0] sm:$0xff]
        %v4356 = vld [vmem:[%s699 + $0x4e8] sm:$0xff]
        %v4357 = vld [vmem:[%s699 + $0x4f0] sm:$0xff]
        %v4358 = vld [vmem:[%s699 + $0x4f8] sm:$0xff]
        %v4359 = vld [vmem:[%s699 + $0x500] sm:$0xff]
        %v4360 = vld [vmem:[%s699 + $0x508] sm:$0xff]
        %v4361 = vld [vmem:[%s699 + $0x510] sm:$0xff]
        %v4362 = vld [vmem:[%s699 + $0x518] sm:$0xff]
        %v4363 = vld [vmem:[%s699 + $0x520] sm:$0xff]
        %v4364 = vld [vmem:[%s699 + $0x528] sm:$0xff]
        %v4365 = vld [vmem:[%s699 + $0x530] sm:$0xff]
        %v4366 = vld [vmem:[%s699 + $0x538] sm:$0xff]
        %v4367 = vld [vmem:[%s699 + $0x540] sm:$0xff]
        %v4368 = vld [vmem:[%s699 + $0x548] sm:$0xff]
        %v4369 = vld [vmem:[%s699 + $0x550] sm:$0xff]
        %v4370 = vld [vmem:[%s699 + $0x558] sm:$0xff]
        %v4371 = vld [vmem:[%s699 + $0x560] sm:$0xff]
        %v4372 = vld [vmem:[%s699 + $0x568] sm:$0xff]
        %v4373 = vld [vmem:[%s699 + $0x570] sm:$0xff]
        %v4374 = vld [vmem:[%s699 + $0x578] sm:$0xff]
        %v4375 = vld [vmem:[%s699 + $0x580] sm:$0xff]
        %v4376 = vld [vmem:[%s699 + $0x588] sm:$0xff]
        %v4377 = vld [vmem:[%s699 + $0x590] sm:$0xff]
        %v4378 = vld [vmem:[%s699 + $0x598] sm:$0xff]
        %v4379 = vld [vmem:[%s699 + $0x5a0] sm:$0xff]
        %v4380 = vld [vmem:[%s699 + $0x5a8] sm:$0xff]
        %v4381 = vld [vmem:[%s699 + $0x5b0] sm:$0xff]
        %v4382 = vld [vmem:[%s699 + $0x5b8] sm:$0xff]
        %v4383 = vld [vmem:[%s699 + $0x5c0] sm:$0xff]
        %v4384 = vld [vmem:[%s699 + $0x5c8] sm:$0xff]
        %v4385 = vld [vmem:[%s699 + $0x5d0] sm:$0xff]
        %v4386 = vld [vmem:[%s699 + $0x5d8] sm:$0xff]
        %v4387 = vld [vmem:[%s699 + $0x5e0] sm:$0xff]
        %v4388 = vld [vmem:[%s699 + $0x5e8] sm:$0xff]
        %v4389 = vld [vmem:[%s699 + $0x5f0] sm:$0xff]
        %v4390 = vld [vmem:[%s699 + $0x5f8] sm:$0xff]
        %v4391 = vld [vmem:[%s699 + $0x600] sm:$0xff]
        %v4392 = vld [vmem:[%s699 + $0x608] sm:$0xff]
        %v4393 = vld [vmem:[%s699 + $0x610] sm:$0xff]
        %v4394 = vld [vmem:[%s699 + $0x618] sm:$0xff]
        %v4395 = vld [vmem:[%s699 + $0x620] sm:$0xff]
        %v4396 = vld [vmem:[%s699 + $0x628] sm:$0xff]
        %v4397 = vld [vmem:[%s699 + $0x630] sm:$0xff]
        %v4398 = vld [vmem:[%s699 + $0x638] sm:$0xff]
        %v4399 = vld [vmem:[%s699 + $0x640] sm:$0xff]
        %v4400 = vld [vmem:[%s699 + $0x648] sm:$0xff]
        %v4401 = vld [vmem:[%s699 + $0x650] sm:$0xff]
        %v4402 = vld [vmem:[%s699 + $0x658] sm:$0xff]
        %v4403 = vld [vmem:[%s699 + $0x660] sm:$0xff]
        %v4404 = vld [vmem:[%s699 + $0x668] sm:$0xff]
        %v4405 = vld [vmem:[%s699 + $0x670] sm:$0xff]
        %v4406 = vld [vmem:[%s699 + $0x678] sm:$0xff]
        %v4407 = vld [vmem:[%s699 + $0x680] sm:$0xff]
        %v4408 = vld [vmem:[%s699 + $0x688] sm:$0xff]
        %v4409 = vld [vmem:[%s699 + $0x690] sm:$0xff]
        %v4410 = vld [vmem:[%s699 + $0x698] sm:$0xff]
        %v4411 = vld [vmem:[%s699 + $0x6a0] sm:$0xff]
        %v4412 = vld [vmem:[%s699 + $0x6a8] sm:$0xff]
        %v4413 = vld [vmem:[%s699 + $0x6b0] sm:$0xff]
        %v4414 = vld [vmem:[%s699 + $0x6b8] sm:$0xff]
        %v4415 = vld [vmem:[%s699 + $0x6c0] sm:$0xff]
        %v4416 = vld [vmem:[%s699 + $0x6c8] sm:$0xff]
        %v4417 = vld [vmem:[%s699 + $0x6d0] sm:$0xff]
        %v4418 = vld [vmem:[%s699 + $0x6d8] sm:$0xff]
        %v4419 = vld [vmem:[%s699 + $0x6e0] sm:$0xff]
        %v4420 = vld [vmem:[%s699 + $0x6e8] sm:$0xff]
        %v4421 = vld [vmem:[%s699 + $0x6f0] sm:$0xff]
        %v4422 = vld [vmem:[%s699 + $0x6f8] sm:$0xff]
        %v4423 = vld [vmem:[%s699 + $0x700] sm:$0xff]
        %v4424 = vld [vmem:[%s699 + $0x708] sm:$0xff]
        %v4425 = vld [vmem:[%s699 + $0x710] sm:$0xff]
        %v4426 = vld [vmem:[%s699 + $0x718] sm:$0xff]
        %v4427 = vld [vmem:[%s699 + $0x720] sm:$0xff]
        %v4428 = vld [vmem:[%s699 + $0x728] sm:$0xff]
        %v4429 = vld [vmem:[%s699 + $0x730] sm:$0xff]
        %v4430 = vld [vmem:[%s699 + $0x738] sm:$0xff]
        %v4431 = vld [vmem:[%s699 + $0x740] sm:$0xff]
        %v4432 = vld [vmem:[%s699 + $0x748] sm:$0xff]
        %v4433 = vld [vmem:[%s699 + $0x750] sm:$0xff]
        %v4434 = vld [vmem:[%s699 + $0x758] sm:$0xff]
        %v4435 = vld [vmem:[%s699 + $0x760] sm:$0xff]
        %v4436 = vld [vmem:[%s699 + $0x768] sm:$0xff]
        %v4437 = vld [vmem:[%s699 + $0x770] sm:$0xff]
        %v4438 = vld [vmem:[%s699 + $0x778] sm:$0xff]
        %v4439 = vld [vmem:[%s699 + $0x780] sm:$0xff]
        %v4440 = vld [vmem:[%s699 + $0x788] sm:$0xff]
        %v4441 = vld [vmem:[%s699 + $0x790] sm:$0xff]
        %v4442 = vld [vmem:[%s699 + $0x798] sm:$0xff]
        %v4443 = vld [vmem:[%s699 + $0x7a0] sm:$0xff]
        %v4444 = vld [vmem:[%s699 + $0x7a8] sm:$0xff]
        %v4445 = vld [vmem:[%s699 + $0x7b0] sm:$0xff]
        %v4446 = vld [vmem:[%s699 + $0x7b8] sm:$0xff]
        %v4447 = vld [vmem:[%s699 + $0x7c0] sm:$0xff]
        %v4448 = vld [vmem:[%s699 + $0x7c8] sm:$0xff]
        %v4449 = vld [vmem:[%s699 + $0x7d0] sm:$0xff]
        %v4450 = vld [vmem:[%s699 + $0x7d8] sm:$0xff]
        %v4451 = vld [vmem:[%s699 + $0x7e0] sm:$0xff]
        %v4452 = vld [vmem:[%s699 + $0x7e8] sm:$0xff]
        %v4453 = vld [vmem:[%s699 + $0x7f0] sm:$0xff]
        %v4454 = vld [vmem:[%s699 + $0x7f8] sm:$0xff]
        %v4455 = vld [vmem:[%s703] sm:$0xff]
        %v4457 = vperm.slane %v4455, 0
        %v4458 = vperm.slane %v4455, 1
        %v4459 = vperm.slane %v4455, 2
        %v4460 = vperm.slane %v4455, 3
        %v4461 = vperm.slane %v4455, 4
        %v4462 = vperm.slane %v4455, 5
        %v4463 = vperm.slane %v4455, 6
        %v4464 = vperm.slane %v4455, 7
        %4473 = vmatpush.msra.mxu0 %v4319
        %4474 = vmatpush.msra.mxu0 %v4311
        %4475 = vmatpush.msra.mxu0 %v4303
        %4476 = vmatpush.msra.mxu0 %v4295
        %4477 = vmatpush.msra.mxu0 %v4287
        %4478 = vmatpush.msra.mxu0 %v4279
        %4479 = vmatpush.msra.mxu0 %v4271
        %4480 = vmatpush.msra.mxu0 %v4263
        %4481 = vmatpush.msra.mxu0 %v4255
        %4482 = vmatpush.msra.mxu0 %v4247
        %4483 = vmatpush.msra.mxu0 %v4239
        %4484 = vmatpush.msra.mxu0 %v4231
        %4485 = vmatpush.msra.mxu0 %v4223
        %4486 = vmatpush.msra.mxu0 %v4215
        %4487 = vmatpush.msra.mxu0 %v4207
        %4488 = vmatpush.msra.mxu0 %v4199
        %4489 = vmatmul.f32.gmra.mxu0 %v4167
        %v4490 = vpop.f32.mrf.mxu0
        %v4491 = vadd.f32 %v4457, %v4490
        %4492 = vmatmul.f32.gmra.mxu0 %v4169
        %v4493 = vpop.f32.mrf.mxu0
        %v4494 = vadd.f32 %v4457, %v4493
        %4495 = vmatmul.f32.gmra.mxu0 %v4171
        %v4496 = vpop.f32.mrf.mxu0
        %v4497 = vadd.f32 %v4457, %v4496
        %4498 = vmatmul.f32.gmra.mxu0 %v4173
        %v4499 = vpop.f32.mrf.mxu0
        %v4500 = vadd.f32 %v4457, %v4499
        %4501 = vmatmul.f32.gmra.mxu0 %v4175
        %v4502 = vpop.f32.mrf.mxu0
        %v4503 = vadd.f32 %v4457, %v4502
        %4504 = vmatmul.f32.gmra.mxu0 %v4177
        %v4505 = vpop.f32.mrf.mxu0
        %v4506 = vadd.f32 %v4457, %v4505
        %4507 = vmatmul.f32.gmra.mxu0 %v4179
        %v4508 = vpop.f32.mrf.mxu0
        %v4509 = vadd.f32 %v4457, %v4508
        %4510 = vmatmul.f32.gmra.mxu0 %v4181
        %v4511 = vpop.f32.mrf.mxu0
        %v4512 = vadd.f32 %v4457, %v4511
        %4513 = vmatmul.f32.gmra.mxu0 %v4183
        %v4514 = vpop.f32.mrf.mxu0
        %v4515 = vadd.f32 %v4457, %v4514
        %4516 = vmatmul.f32.gmra.mxu0 %v4185
        %v4517 = vpop.f32.mrf.mxu0
        %v4518 = vadd.f32 %v4457, %v4517
        %4519 = vmatmul.f32.gmra.mxu0 %v4187
        %v4520 = vpop.f32.mrf.mxu0
        %v4521 = vadd.f32 %v4457, %v4520
        %4522 = vmatmul.f32.gmra.mxu0 %v4189
        %v4523 = vpop.f32.mrf.mxu0
        %v4524 = vadd.f32 %v4457, %v4523
        %4525 = vmatmul.f32.gmra.mxu0 %v4191
        %v4526 = vpop.f32.mrf.mxu0
        %v4527 = vadd.f32 %v4457, %v4526
        %4528 = vmatmul.f32.gmra.mxu0 %v4193
        %v4529 = vpop.f32.mrf.mxu0
        %v4530 = vadd.f32 %v4457, %v4529
        %4531 = vmatmul.f32.gmra.mxu0 %v4195
        %v4532 = vpop.f32.mrf.mxu0
        %v4533 = vadd.f32 %v4457, %v4532
        %4534 = vmatmul.f32.gmra.mxu0 %v4197
        %v4535 = vpop.f32.mrf.mxu0
        %v4536 = vadd.f32 %v4457, %v4535
        %4537 = vdwg.mxu0
        %4538 = vmatpush.msra.mxu0 %v4447
        %4539 = vmatpush.msra.mxu0 %v4439
        %4540 = vmatpush.msra.mxu0 %v4431
        %4541 = vmatpush.msra.mxu0 %v4423
        %4542 = vmatpush.msra.mxu0 %v4415
        %4543 = vmatpush.msra.mxu0 %v4407
        %4544 = vmatpush.msra.mxu0 %v4399
        %4545 = vmatpush.msra.mxu0 %v4391
        %4546 = vmatpush.msra.mxu0 %v4383
        %4547 = vmatpush.msra.mxu0 %v4375
        %4548 = vmatpush.msra.mxu0 %v4367
        %4549 = vmatpush.msra.mxu0 %v4359
        %4550 = vmatpush.msra.mxu0 %v4351
        %4551 = vmatpush.msra.mxu0 %v4343
        %4552 = vmatpush.msra.mxu0 %v4335
        %4553 = vmatpush.msra.mxu0 %v4327
        %4554 = vmatmul.f32.gmra.mxu0 %v4168
        %v4555 = vpop.f32.mrf.mxu0
        %v4556 = vadd.f32 %v4491, %v4555
        %4557 = vmatmul.f32.gmra.mxu0 %v4170
        %v4558 = vpop.f32.mrf.mxu0
        %v4559 = vadd.f32 %v4494, %v4558
        %4560 = vmatmul.f32.gmra.mxu0 %v4172
        %v4561 = vpop.f32.mrf.mxu0
        %v4562 = vadd.f32 %v4497, %v4561
        %4563 = vmatmul.f32.gmra.mxu0 %v4174
        %v4564 = vpop.f32.mrf.mxu0
        %v4565 = vadd.f32 %v4500, %v4564
        %4566 = vmatmul.f32.gmra.mxu0 %v4176
        %v4567 = vpop.f32.mrf.mxu0
        %v4568 = vadd.f32 %v4503, %v4567
        %4569 = vmatmul.f32.gmra.mxu0 %v4178
        %v4570 = vpop.f32.mrf.mxu0
        %v4571 = vadd.f32 %v4506, %v4570
        %4572 = vmatmul.f32.gmra.mxu0 %v4180
        %v4573 = vpop.f32.mrf.mxu0
        %v4574 = vadd.f32 %v4509, %v4573
        %4575 = vmatmul.f32.gmra.mxu0 %v4182
        %v4576 = vpop.f32.mrf.mxu0
        %v4577 = vadd.f32 %v4512, %v4576
        %4578 = vmatmul.f32.gmra.mxu0 %v4184
        %v4579 = vpop.f32.mrf.mxu0
        %v4580 = vadd.f32 %v4515, %v4579
        %4581 = vmatmul.f32.gmra.mxu0 %v4186
        %v4582 = vpop.f32.mrf.mxu0
        %v4583 = vadd.f32 %v4518, %v4582
        %4584 = vmatmul.f32.gmra.mxu0 %v4188
        %v4585 = vpop.f32.mrf.mxu0
        %v4586 = vadd.f32 %v4521, %v4585
        %4587 = vmatmul.f32.gmra.mxu0 %v4190
        %v4588 = vpop.f32.mrf.mxu0
        %v4589 = vadd.f32 %v4524, %v4588
        %4590 = vmatmul.f32.gmra.mxu0 %v4192
        %v4591 = vpop.f32.mrf.mxu0
        %v4592 = vadd.f32 %v4527, %v4591
        %4593 = vmatmul.f32.gmra.mxu0 %v4194
        %v4594 = vpop.f32.mrf.mxu0
        %v4595 = vadd.f32 %v4530, %v4594
        %4596 = vmatmul.f32.gmra.mxu0 %v4196
        %v4597 = vpop.f32.mrf.mxu0
        %v4598 = vadd.f32 %v4533, %v4597
        %4599 = vmatmul.f32.gmra.mxu0 %v4198
        %v4600 = vpop.f32.mrf.mxu0
        %v4601 = vadd.f32 %v4536, %v4600
        %4602 = vdwg.mxu0
        %4603 = vmatpush.msra.mxu0 %v4320
        %4604 = vmatpush.msra.mxu0 %v4312
        %4605 = vmatpush.msra.mxu0 %v4304
        %4606 = vmatpush.msra.mxu0 %v4296
        %4607 = vmatpush.msra.mxu0 %v4288
        %4608 = vmatpush.msra.mxu0 %v4280
        %4609 = vmatpush.msra.mxu0 %v4272
        %4610 = vmatpush.msra.mxu0 %v4264
        %4611 = vmatpush.msra.mxu0 %v4256
        %4612 = vmatpush.msra.mxu0 %v4248
        %4613 = vmatpush.msra.mxu0 %v4240
        %4614 = vmatpush.msra.mxu0 %v4232
        %4615 = vmatpush.msra.mxu0 %v4224
        %4616 = vmatpush.msra.mxu0 %v4216
        %4617 = vmatpush.msra.mxu0 %v4208
        %4618 = vmatpush.msra.mxu0 %v4200
        %4619 = vmatmul.f32.gmra.mxu0 %v4167
        %v4620 = vpop.f32.mrf.mxu0
        %v4621 = vadd.f32 %v4458, %v4620
        %4622 = vmatmul.f32.gmra.mxu0 %v4169
        %v4623 = vpop.f32.mrf.mxu0
        %v4624 = vadd.f32 %v4458, %v4623
        %4625 = vmatmul.f32.gmra.mxu0 %v4171
        %v4626 = vpop.f32.mrf.mxu0
        %v4627 = vadd.f32 %v4458, %v4626
        %4628 = vmatmul.f32.gmra.mxu0 %v4173
        %v4629 = vpop.f32.mrf.mxu0
        %v4630 = vadd.f32 %v4458, %v4629
        %4631 = vmatmul.f32.gmra.mxu0 %v4175
        %v4632 = vpop.f32.mrf.mxu0
        %v4633 = vadd.f32 %v4458, %v4632
        %4634 = vmatmul.f32.gmra.mxu0 %v4177
        %v4635 = vpop.f32.mrf.mxu0
        %v4636 = vadd.f32 %v4458, %v4635
        %4637 = vmatmul.f32.gmra.mxu0 %v4179
        %v4638 = vpop.f32.mrf.mxu0
        %v4639 = vadd.f32 %v4458, %v4638
        %4640 = vmatmul.f32.gmra.mxu0 %v4181
        %v4641 = vpop.f32.mrf.mxu0
        %v4642 = vadd.f32 %v4458, %v4641
        %4643 = vmatmul.f32.gmra.mxu0 %v4183
        %v4644 = vpop.f32.mrf.mxu0
        %v4645 = vadd.f32 %v4458, %v4644
        %4646 = vmatmul.f32.gmra.mxu0 %v4185
        %v4647 = vpop.f32.mrf.mxu0
        %v4648 = vadd.f32 %v4458, %v4647
        %4649 = vmatmul.f32.gmra.mxu0 %v4187
        %v4650 = vpop.f32.mrf.mxu0
        %v4651 = vadd.f32 %v4458, %v4650
        %4652 = vmatmul.f32.gmra.mxu0 %v4189
        %v4653 = vpop.f32.mrf.mxu0
        %v4654 = vadd.f32 %v4458, %v4653
        %4655 = vmatmul.f32.gmra.mxu0 %v4191
        %v4656 = vpop.f32.mrf.mxu0
        %v4657 = vadd.f32 %v4458, %v4656
        %4658 = vmatmul.f32.gmra.mxu0 %v4193
        %v4659 = vpop.f32.mrf.mxu0
        %v4660 = vadd.f32 %v4458, %v4659
        %4661 = vmatmul.f32.gmra.mxu0 %v4195
        %v4662 = vpop.f32.mrf.mxu0
        %v4663 = vadd.f32 %v4458, %v4662
        %4664 = vmatmul.f32.gmra.mxu0 %v4197
        %v4665 = vpop.f32.mrf.mxu0
        %v4666 = vadd.f32 %v4458, %v4665
        %4667 = vdwg.mxu0
        %4668 = vmatpush.msra.mxu0 %v4448
        %4669 = vmatpush.msra.mxu0 %v4440
        %4670 = vmatpush.msra.mxu0 %v4432
        %4671 = vmatpush.msra.mxu0 %v4424
        %4672 = vmatpush.msra.mxu0 %v4416
        %4673 = vmatpush.msra.mxu0 %v4408
        %4674 = vmatpush.msra.mxu0 %v4400
        %4675 = vmatpush.msra.mxu0 %v4392
        %4676 = vmatpush.msra.mxu0 %v4384
        %4677 = vmatpush.msra.mxu0 %v4376
        %4678 = vmatpush.msra.mxu0 %v4368
        %4679 = vmatpush.msra.mxu0 %v4360
        %4680 = vmatpush.msra.mxu0 %v4352
        %4681 = vmatpush.msra.mxu0 %v4344
        %4682 = vmatpush.msra.mxu0 %v4336
        %4683 = vmatpush.msra.mxu0 %v4328
        %4684 = vmatmul.f32.gmra.mxu0 %v4168
        %v4685 = vpop.f32.mrf.mxu0
        %v4686 = vadd.f32 %v4621, %v4685
        %4687 = vmatmul.f32.gmra.mxu0 %v4170
        %v4688 = vpop.f32.mrf.mxu0
        %v4689 = vadd.f32 %v4624, %v4688
        %4690 = vmatmul.f32.gmra.mxu0 %v4172
        %v4691 = vpop.f32.mrf.mxu0
        %v4692 = vadd.f32 %v4627, %v4691
        %4693 = vmatmul.f32.gmra.mxu0 %v4174
        %v4694 = vpop.f32.mrf.mxu0
        %v4695 = vadd.f32 %v4630, %v4694
        %4696 = vmatmul.f32.gmra.mxu0 %v4176
        %v4697 = vpop.f32.mrf.mxu0
        %v4698 = vadd.f32 %v4633, %v4697
        %4699 = vmatmul.f32.gmra.mxu0 %v4178
        %v4700 = vpop.f32.mrf.mxu0
        %v4701 = vadd.f32 %v4636, %v4700
        %4702 = vmatmul.f32.gmra.mxu0 %v4180
        %v4703 = vpop.f32.mrf.mxu0
        %v4704 = vadd.f32 %v4639, %v4703
        %4705 = vmatmul.f32.gmra.mxu0 %v4182
        %v4706 = vpop.f32.mrf.mxu0
        %v4707 = vadd.f32 %v4642, %v4706
        %4708 = vmatmul.f32.gmra.mxu0 %v4184
        %v4709 = vpop.f32.mrf.mxu0
        %v4710 = vadd.f32 %v4645, %v4709
        %4711 = vmatmul.f32.gmra.mxu0 %v4186
        %v4712 = vpop.f32.mrf.mxu0
        %v4713 = vadd.f32 %v4648, %v4712
        %4714 = vmatmul.f32.gmra.mxu0 %v4188
        %v4715 = vpop.f32.mrf.mxu0
        %v4716 = vadd.f32 %v4651, %v4715
        %4717 = vmatmul.f32.gmra.mxu0 %v4190
        %v4718 = vpop.f32.mrf.mxu0
        %v4719 = vadd.f32 %v4654, %v4718
        %4720 = vmatmul.f32.gmra.mxu0 %v4192
        %v4721 = vpop.f32.mrf.mxu0
        %v4722 = vadd.f32 %v4657, %v4721
        %4723 = vmatmul.f32.gmra.mxu0 %v4194
        %v4724 = vpop.f32.mrf.mxu0
        %v4725 = vadd.f32 %v4660, %v4724
        %4726 = vmatmul.f32.gmra.mxu0 %v4196
        %v4727 = vpop.f32.mrf.mxu0
        %v4728 = vadd.f32 %v4663, %v4727
        %4729 = vmatmul.f32.gmra.mxu0 %v4198
        %v4730 = vpop.f32.mrf.mxu0
        %v4731 = vadd.f32 %v4666, %v4730
        %4732 = vdwg.mxu0
        %4733 = vmatpush.msra.mxu0 %v4321
        %4734 = vmatpush.msra.mxu0 %v4313
        %4735 = vmatpush.msra.mxu0 %v4305
        %4736 = vmatpush.msra.mxu0 %v4297
        %4737 = vmatpush.msra.mxu0 %v4289
        %4738 = vmatpush.msra.mxu0 %v4281
        %4739 = vmatpush.msra.mxu0 %v4273
        %4740 = vmatpush.msra.mxu0 %v4265
        %4741 = vmatpush.msra.mxu0 %v4257
        %4742 = vmatpush.msra.mxu0 %v4249
        %4743 = vmatpush.msra.mxu0 %v4241
        %4744 = vmatpush.msra.mxu0 %v4233
        %4745 = vmatpush.msra.mxu0 %v4225
        %4746 = vmatpush.msra.mxu0 %v4217
        %4747 = vmatpush.msra.mxu0 %v4209
        %4748 = vmatpush.msra.mxu0 %v4201
        %4749 = vmatmul.f32.gmra.mxu0 %v4167
        %v4750 = vpop.f32.mrf.mxu0
        %v4751 = vadd.f32 %v4459, %v4750
        %4752 = vmatmul.f32.gmra.mxu0 %v4169
        %v4753 = vpop.f32.mrf.mxu0
        %v4754 = vadd.f32 %v4459, %v4753
        %4755 = vmatmul.f32.gmra.mxu0 %v4171
        %v4756 = vpop.f32.mrf.mxu0
        %v4757 = vadd.f32 %v4459, %v4756
        %4758 = vmatmul.f32.gmra.mxu0 %v4173
        %v4759 = vpop.f32.mrf.mxu0
        %v4760 = vadd.f32 %v4459, %v4759
        %4761 = vmatmul.f32.gmra.mxu0 %v4175
        %v4762 = vpop.f32.mrf.mxu0
        %v4763 = vadd.f32 %v4459, %v4762
        %4764 = vmatmul.f32.gmra.mxu0 %v4177
        %v4765 = vpop.f32.mrf.mxu0
        %v4766 = vadd.f32 %v4459, %v4765
        %4767 = vmatmul.f32.gmra.mxu0 %v4179
        %v4768 = vpop.f32.mrf.mxu0
        %v4769 = vadd.f32 %v4459, %v4768
        %4770 = vmatmul.f32.gmra.mxu0 %v4181
        %v4771 = vpop.f32.mrf.mxu0
        %v4772 = vadd.f32 %v4459, %v4771
        %4773 = vmatmul.f32.gmra.mxu0 %v4183
        %v4774 = vpop.f32.mrf.mxu0
        %v4775 = vadd.f32 %v4459, %v4774
        %4776 = vmatmul.f32.gmra.mxu0 %v4185
        %v4777 = vpop.f32.mrf.mxu0
        %v4778 = vadd.f32 %v4459, %v4777
        %4779 = vmatmul.f32.gmra.mxu0 %v4187
        %v4780 = vpop.f32.mrf.mxu0
        %v4781 = vadd.f32 %v4459, %v4780
        %4782 = vmatmul.f32.gmra.mxu0 %v4189
        %v4783 = vpop.f32.mrf.mxu0
        %v4784 = vadd.f32 %v4459, %v4783
        %4785 = vmatmul.f32.gmra.mxu0 %v4191
        %v4786 = vpop.f32.mrf.mxu0
        %v4787 = vadd.f32 %v4459, %v4786
        %4788 = vmatmul.f32.gmra.mxu0 %v4193
        %v4789 = vpop.f32.mrf.mxu0
        %v4790 = vadd.f32 %v4459, %v4789
        %4791 = vmatmul.f32.gmra.mxu0 %v4195
        %v4792 = vpop.f32.mrf.mxu0
        %v4793 = vadd.f32 %v4459, %v4792
        %4794 = vmatmul.f32.gmra.mxu0 %v4197
        %v4795 = vpop.f32.mrf.mxu0
        %v4796 = vadd.f32 %v4459, %v4795
        %4797 = vdwg.mxu0
        %4798 = vmatpush.msra.mxu0 %v4449
        %4799 = vmatpush.msra.mxu0 %v4441
        %4800 = vmatpush.msra.mxu0 %v4433
        %4801 = vmatpush.msra.mxu0 %v4425
        %4802 = vmatpush.msra.mxu0 %v4417
        %4803 = vmatpush.msra.mxu0 %v4409
        %4804 = vmatpush.msra.mxu0 %v4401
        %4805 = vmatpush.msra.mxu0 %v4393
        %4806 = vmatpush.msra.mxu0 %v4385
        %4807 = vmatpush.msra.mxu0 %v4377
        %4808 = vmatpush.msra.mxu0 %v4369
        %4809 = vmatpush.msra.mxu0 %v4361
        %4810 = vmatpush.msra.mxu0 %v4353
        %4811 = vmatpush.msra.mxu0 %v4345
        %4812 = vmatpush.msra.mxu0 %v4337
        %4813 = vmatpush.msra.mxu0 %v4329
        %4814 = vmatmul.f32.gmra.mxu0 %v4168
        %v4815 = vpop.f32.mrf.mxu0
        %v4816 = vadd.f32 %v4751, %v4815
        %4817 = vmatmul.f32.gmra.mxu0 %v4170
        %v4818 = vpop.f32.mrf.mxu0
        %v4819 = vadd.f32 %v4754, %v4818
        %4820 = vmatmul.f32.gmra.mxu0 %v4172
        %v4821 = vpop.f32.mrf.mxu0
        %v4822 = vadd.f32 %v4757, %v4821
        %4823 = vmatmul.f32.gmra.mxu0 %v4174
        %v4824 = vpop.f32.mrf.mxu0
        %v4825 = vadd.f32 %v4760, %v4824
        %4826 = vmatmul.f32.gmra.mxu0 %v4176
        %v4827 = vpop.f32.mrf.mxu0
        %v4828 = vadd.f32 %v4763, %v4827
        %4829 = vmatmul.f32.gmra.mxu0 %v4178
        %v4830 = vpop.f32.mrf.mxu0
        %v4831 = vadd.f32 %v4766, %v4830
        %4832 = vmatmul.f32.gmra.mxu0 %v4180
        %v4833 = vpop.f32.mrf.mxu0
        %v4834 = vadd.f32 %v4769, %v4833
        %4835 = vmatmul.f32.gmra.mxu0 %v4182
        %v4836 = vpop.f32.mrf.mxu0
        %v4837 = vadd.f32 %v4772, %v4836
        %4838 = vmatmul.f32.gmra.mxu0 %v4184
        %v4839 = vpop.f32.mrf.mxu0
        %v4840 = vadd.f32 %v4775, %v4839
        %4841 = vmatmul.f32.gmra.mxu0 %v4186
        %v4842 = vpop.f32.mrf.mxu0
        %v4843 = vadd.f32 %v4778, %v4842
        %4844 = vmatmul.f32.gmra.mxu0 %v4188
        %v4845 = vpop.f32.mrf.mxu0
        %v4846 = vadd.f32 %v4781, %v4845
        %4847 = vmatmul.f32.gmra.mxu0 %v4190
        %v4848 = vpop.f32.mrf.mxu0
        %v4849 = vadd.f32 %v4784, %v4848
        %4850 = vmatmul.f32.gmra.mxu0 %v4192
        %v4851 = vpop.f32.mrf.mxu0
        %v4852 = vadd.f32 %v4787, %v4851
        %4853 = vmatmul.f32.gmra.mxu0 %v4194
        %v4854 = vpop.f32.mrf.mxu0
        %v4855 = vadd.f32 %v4790, %v4854
        %4856 = vmatmul.f32.gmra.mxu0 %v4196
        %v4857 = vpop.f32.mrf.mxu0
        %v4858 = vadd.f32 %v4793, %v4857
        %4859 = vmatmul.f32.gmra.mxu0 %v4198
        %v4860 = vpop.f32.mrf.mxu0
        %v4861 = vadd.f32 %v4796, %v4860
        %4862 = vdwg.mxu0
        %4863 = vmatpush.msra.mxu0 %v4322
        %4864 = vmatpush.msra.mxu0 %v4314
        %4865 = vmatpush.msra.mxu0 %v4306
        %4866 = vmatpush.msra.mxu0 %v4298
        %4867 = vmatpush.msra.mxu0 %v4290
        %4868 = vmatpush.msra.mxu0 %v4282
        %4869 = vmatpush.msra.mxu0 %v4274
        %4870 = vmatpush.msra.mxu0 %v4266
        %4871 = vmatpush.msra.mxu0 %v4258
        %4872 = vmatpush.msra.mxu0 %v4250
        %4873 = vmatpush.msra.mxu0 %v4242
        %4874 = vmatpush.msra.mxu0 %v4234
        %4875 = vmatpush.msra.mxu0 %v4226
        %4876 = vmatpush.msra.mxu0 %v4218
        %4877 = vmatpush.msra.mxu0 %v4210
        %4878 = vmatpush.msra.mxu0 %v4202
        %4879 = vmatmul.f32.gmra.mxu0 %v4167
        %v4880 = vpop.f32.mrf.mxu0
        %v4881 = vadd.f32 %v4460, %v4880
        %4882 = vmatmul.f32.gmra.mxu0 %v4169
        %v4883 = vpop.f32.mrf.mxu0
        %v4884 = vadd.f32 %v4460, %v4883
        %4885 = vmatmul.f32.gmra.mxu0 %v4171
        %v4886 = vpop.f32.mrf.mxu0
        %v4887 = vadd.f32 %v4460, %v4886
        %4888 = vmatmul.f32.gmra.mxu0 %v4173
        %v4889 = vpop.f32.mrf.mxu0
        %v4890 = vadd.f32 %v4460, %v4889
        %4891 = vmatmul.f32.gmra.mxu0 %v4175
        %v4892 = vpop.f32.mrf.mxu0
        %v4893 = vadd.f32 %v4460, %v4892
        %4894 = vmatmul.f32.gmra.mxu0 %v4177
        %v4895 = vpop.f32.mrf.mxu0
        %v4896 = vadd.f32 %v4460, %v4895
        %4897 = vmatmul.f32.gmra.mxu0 %v4179
        %v4898 = vpop.f32.mrf.mxu0
        %v4899 = vadd.f32 %v4460, %v4898
        %4900 = vmatmul.f32.gmra.mxu0 %v4181
        %v4901 = vpop.f32.mrf.mxu0
        %v4902 = vadd.f32 %v4460, %v4901
        %4903 = vmatmul.f32.gmra.mxu0 %v4183
        %v4904 = vpop.f32.mrf.mxu0
        %v4905 = vadd.f32 %v4460, %v4904
        %4906 = vmatmul.f32.gmra.mxu0 %v4185
        %v4907 = vpop.f32.mrf.mxu0
        %v4908 = vadd.f32 %v4460, %v4907
        %4909 = vmatmul.f32.gmra.mxu0 %v4187
        %v4910 = vpop.f32.mrf.mxu0
        %v4911 = vadd.f32 %v4460, %v4910
        %4912 = vmatmul.f32.gmra.mxu0 %v4189
        %v4913 = vpop.f32.mrf.mxu0
        %v4914 = vadd.f32 %v4460, %v4913
        %4915 = vmatmul.f32.gmra.mxu0 %v4191
        %v4916 = vpop.f32.mrf.mxu0
        %v4917 = vadd.f32 %v4460, %v4916
        %4918 = vmatmul.f32.gmra.mxu0 %v4193
        %v4919 = vpop.f32.mrf.mxu0
        %v4920 = vadd.f32 %v4460, %v4919
        %4921 = vmatmul.f32.gmra.mxu0 %v4195
        %v4922 = vpop.f32.mrf.mxu0
        %v4923 = vadd.f32 %v4460, %v4922
        %4924 = vmatmul.f32.gmra.mxu0 %v4197
        %v4925 = vpop.f32.mrf.mxu0
        %v4926 = vadd.f32 %v4460, %v4925
        %4927 = vdwg.mxu0
        %4928 = vmatpush.msra.mxu0 %v4450
        %4929 = vmatpush.msra.mxu0 %v4442
        %4930 = vmatpush.msra.mxu0 %v4434
        %4931 = vmatpush.msra.mxu0 %v4426
        %4932 = vmatpush.msra.mxu0 %v4418
        %4933 = vmatpush.msra.mxu0 %v4410
        %4934 = vmatpush.msra.mxu0 %v4402
        %4935 = vmatpush.msra.mxu0 %v4394
        %4936 = vmatpush.msra.mxu0 %v4386
        %4937 = vmatpush.msra.mxu0 %v4378
        %4938 = vmatpush.msra.mxu0 %v4370
        %4939 = vmatpush.msra.mxu0 %v4362
        %4940 = vmatpush.msra.mxu0 %v4354
        %4941 = vmatpush.msra.mxu0 %v4346
        %4942 = vmatpush.msra.mxu0 %v4338
        %4943 = vmatpush.msra.mxu0 %v4330
        %4944 = vmatmul.f32.gmra.mxu0 %v4168
        %v4945 = vpop.f32.mrf.mxu0
        %v4946 = vadd.f32 %v4881, %v4945
        %4947 = vmatmul.f32.gmra.mxu0 %v4170
        %v4948 = vpop.f32.mrf.mxu0
        %v4949 = vadd.f32 %v4884, %v4948
        %4950 = vmatmul.f32.gmra.mxu0 %v4172
        %v4951 = vpop.f32.mrf.mxu0
        %v4952 = vadd.f32 %v4887, %v4951
        %4953 = vmatmul.f32.gmra.mxu0 %v4174
        %v4954 = vpop.f32.mrf.mxu0
        %v4955 = vadd.f32 %v4890, %v4954
        %4956 = vmatmul.f32.gmra.mxu0 %v4176
        %v4957 = vpop.f32.mrf.mxu0
        %v4958 = vadd.f32 %v4893, %v4957
        %4959 = vmatmul.f32.gmra.mxu0 %v4178
        %v4960 = vpop.f32.mrf.mxu0
        %v4961 = vadd.f32 %v4896, %v4960
        %4962 = vmatmul.f32.gmra.mxu0 %v4180
        %v4963 = vpop.f32.mrf.mxu0
        %v4964 = vadd.f32 %v4899, %v4963
        %4965 = vmatmul.f32.gmra.mxu0 %v4182
        %v4966 = vpop.f32.mrf.mxu0
        %v4967 = vadd.f32 %v4902, %v4966
        %4968 = vmatmul.f32.gmra.mxu0 %v4184
        %v4969 = vpop.f32.mrf.mxu0
        %v4970 = vadd.f32 %v4905, %v4969
        %4971 = vmatmul.f32.gmra.mxu0 %v4186
        %v4972 = vpop.f32.mrf.mxu0
        %v4973 = vadd.f32 %v4908, %v4972
        %4974 = vmatmul.f32.gmra.mxu0 %v4188
        %v4975 = vpop.f32.mrf.mxu0
        %v4976 = vadd.f32 %v4911, %v4975
        %4977 = vmatmul.f32.gmra.mxu0 %v4190
        %v4978 = vpop.f32.mrf.mxu0
        %v4979 = vadd.f32 %v4914, %v4978
        %4980 = vmatmul.f32.gmra.mxu0 %v4192
        %v4981 = vpop.f32.mrf.mxu0
        %v4982 = vadd.f32 %v4917, %v4981
        %4983 = vmatmul.f32.gmra.mxu0 %v4194
        %v4984 = vpop.f32.mrf.mxu0
        %v4985 = vadd.f32 %v4920, %v4984
        %4986 = vmatmul.f32.gmra.mxu0 %v4196
        %v4987 = vpop.f32.mrf.mxu0
        %v4988 = vadd.f32 %v4923, %v4987
        %4989 = vmatmul.f32.gmra.mxu0 %v4198
        %v4990 = vpop.f32.mrf.mxu0
        %v4991 = vadd.f32 %v4926, %v4990
        %4992 = vdwg.mxu0
        %4993 = vmatpush.msra.mxu0 %v4323
        %4994 = vmatpush.msra.mxu0 %v4315
        %4995 = vmatpush.msra.mxu0 %v4307
        %4996 = vmatpush.msra.mxu0 %v4299
        %4997 = vmatpush.msra.mxu0 %v4291
        %4998 = vmatpush.msra.mxu0 %v4283
        %4999 = vmatpush.msra.mxu0 %v4275
        %5000 = vmatpush.msra.mxu0 %v4267
        %5001 = vmatpush.msra.mxu0 %v4259
        %5002 = vmatpush.msra.mxu0 %v4251
        %5003 = vmatpush.msra.mxu0 %v4243
        %5004 = vmatpush.msra.mxu0 %v4235
        %5005 = vmatpush.msra.mxu0 %v4227
        %5006 = vmatpush.msra.mxu0 %v4219
        %5007 = vmatpush.msra.mxu0 %v4211
        %5008 = vmatpush.msra.mxu0 %v4203
        %5009 = vmatmul.f32.gmra.mxu0 %v4167
        %v5010 = vpop.f32.mrf.mxu0
        %v5011 = vadd.f32 %v4461, %v5010
        %5012 = vmatmul.f32.gmra.mxu0 %v4169
        %v5013 = vpop.f32.mrf.mxu0
        %v5014 = vadd.f32 %v4461, %v5013
        %5015 = vmatmul.f32.gmra.mxu0 %v4171
        %v5016 = vpop.f32.mrf.mxu0
        %v5017 = vadd.f32 %v4461, %v5016
        %5018 = vmatmul.f32.gmra.mxu0 %v4173
        %v5019 = vpop.f32.mrf.mxu0
        %v5020 = vadd.f32 %v4461, %v5019
        %5021 = vmatmul.f32.gmra.mxu0 %v4175
        %v5022 = vpop.f32.mrf.mxu0
        %v5023 = vadd.f32 %v4461, %v5022
        %5024 = vmatmul.f32.gmra.mxu0 %v4177
        %v5025 = vpop.f32.mrf.mxu0
        %v5026 = vadd.f32 %v4461, %v5025
        %5027 = vmatmul.f32.gmra.mxu0 %v4179
        %v5028 = vpop.f32.mrf.mxu0
        %v5029 = vadd.f32 %v4461, %v5028
        %5030 = vmatmul.f32.gmra.mxu0 %v4181
        %v5031 = vpop.f32.mrf.mxu0
        %v5032 = vadd.f32 %v4461, %v5031
        %5033 = vmatmul.f32.gmra.mxu0 %v4183
        %v5034 = vpop.f32.mrf.mxu0
        %v5035 = vadd.f32 %v4461, %v5034
        %5036 = vmatmul.f32.gmra.mxu0 %v4185
        %v5037 = vpop.f32.mrf.mxu0
        %v5038 = vadd.f32 %v4461, %v5037
        %5039 = vmatmul.f32.gmra.mxu0 %v4187
        %v5040 = vpop.f32.mrf.mxu0
        %v5041 = vadd.f32 %v4461, %v5040
        %5042 = vmatmul.f32.gmra.mxu0 %v4189
        %v5043 = vpop.f32.mrf.mxu0
        %v5044 = vadd.f32 %v4461, %v5043
        %5045 = vmatmul.f32.gmra.mxu0 %v4191
        %v5046 = vpop.f32.mrf.mxu0
        %v5047 = vadd.f32 %v4461, %v5046
        %5048 = vmatmul.f32.gmra.mxu0 %v4193
        %v5049 = vpop.f32.mrf.mxu0
        %v5050 = vadd.f32 %v4461, %v5049
        %5051 = vmatmul.f32.gmra.mxu0 %v4195
        %v5052 = vpop.f32.mrf.mxu0
        %v5053 = vadd.f32 %v4461, %v5052
        %5054 = vmatmul.f32.gmra.mxu0 %v4197
        %v5055 = vpop.f32.mrf.mxu0
        %v5056 = vadd.f32 %v4461, %v5055
        %5057 = vdwg.mxu0
        %5058 = vmatpush.msra.mxu0 %v4451
        %5059 = vmatpush.msra.mxu0 %v4443
        %5060 = vmatpush.msra.mxu0 %v4435
        %5061 = vmatpush.msra.mxu0 %v4427
        %5062 = vmatpush.msra.mxu0 %v4419
        %5063 = vmatpush.msra.mxu0 %v4411
        %5064 = vmatpush.msra.mxu0 %v4403
        %5065 = vmatpush.msra.mxu0 %v4395
        %5066 = vmatpush.msra.mxu0 %v4387
        %5067 = vmatpush.msra.mxu0 %v4379
        %5068 = vmatpush.msra.mxu0 %v4371
        %5069 = vmatpush.msra.mxu0 %v4363
        %5070 = vmatpush.msra.mxu0 %v4355
        %5071 = vmatpush.msra.mxu0 %v4347
        %5072 = vmatpush.msra.mxu0 %v4339
        %5073 = vmatpush.msra.mxu0 %v4331
        %5074 = vmatmul.f32.gmra.mxu0 %v4168
        %v5075 = vpop.f32.mrf.mxu0
        %v5076 = vadd.f32 %v5011, %v5075
        %5077 = vmatmul.f32.gmra.mxu0 %v4170
        %v5078 = vpop.f32.mrf.mxu0
        %v5079 = vadd.f32 %v5014, %v5078
        %5080 = vmatmul.f32.gmra.mxu0 %v4172
        %v5081 = vpop.f32.mrf.mxu0
        %v5082 = vadd.f32 %v5017, %v5081
        %5083 = vmatmul.f32.gmra.mxu0 %v4174
        %v5084 = vpop.f32.mrf.mxu0
        %v5085 = vadd.f32 %v5020, %v5084
        %5086 = vmatmul.f32.gmra.mxu0 %v4176
        %v5087 = vpop.f32.mrf.mxu0
        %v5088 = vadd.f32 %v5023, %v5087
        %5089 = vmatmul.f32.gmra.mxu0 %v4178
        %v5090 = vpop.f32.mrf.mxu0
        %v5091 = vadd.f32 %v5026, %v5090
        %5092 = vmatmul.f32.gmra.mxu0 %v4180
        %v5093 = vpop.f32.mrf.mxu0
        %v5094 = vadd.f32 %v5029, %v5093
        %5095 = vmatmul.f32.gmra.mxu0 %v4182
        %v5096 = vpop.f32.mrf.mxu0
        %v5097 = vadd.f32 %v5032, %v5096
        %5098 = vmatmul.f32.gmra.mxu0 %v4184
        %v5099 = vpop.f32.mrf.mxu0
        %v5100 = vadd.f32 %v5035, %v5099
        %5101 = vmatmul.f32.gmra.mxu0 %v4186
        %v5102 = vpop.f32.mrf.mxu0
        %v5103 = vadd.f32 %v5038, %v5102
        %5104 = vmatmul.f32.gmra.mxu0 %v4188
        %v5105 = vpop.f32.mrf.mxu0
        %v5106 = vadd.f32 %v5041, %v5105
        %5107 = vmatmul.f32.gmra.mxu0 %v4190
        %v5108 = vpop.f32.mrf.mxu0
        %v5109 = vadd.f32 %v5044, %v5108
        %5110 = vmatmul.f32.gmra.mxu0 %v4192
        %v5111 = vpop.f32.mrf.mxu0
        %v5112 = vadd.f32 %v5047, %v5111
        %5113 = vmatmul.f32.gmra.mxu0 %v4194
        %v5114 = vpop.f32.mrf.mxu0
        %v5115 = vadd.f32 %v5050, %v5114
        %5116 = vmatmul.f32.gmra.mxu0 %v4196
        %v5117 = vpop.f32.mrf.mxu0
        %v5118 = vadd.f32 %v5053, %v5117
        %5119 = vmatmul.f32.gmra.mxu0 %v4198
        %v5120 = vpop.f32.mrf.mxu0
        %v5121 = vadd.f32 %v5056, %v5120
        %5122 = vdwg.mxu0
        %5123 = vmatpush.msra.mxu0 %v4324
        %5124 = vmatpush.msra.mxu0 %v4316
        %5125 = vmatpush.msra.mxu0 %v4308
        %5126 = vmatpush.msra.mxu0 %v4300
        %5127 = vmatpush.msra.mxu0 %v4292
        %5128 = vmatpush.msra.mxu0 %v4284
        %5129 = vmatpush.msra.mxu0 %v4276
        %5130 = vmatpush.msra.mxu0 %v4268
        %5131 = vmatpush.msra.mxu0 %v4260
        %5132 = vmatpush.msra.mxu0 %v4252
        %5133 = vmatpush.msra.mxu0 %v4244
        %5134 = vmatpush.msra.mxu0 %v4236
        %5135 = vmatpush.msra.mxu0 %v4228
        %5136 = vmatpush.msra.mxu0 %v4220
        %5137 = vmatpush.msra.mxu0 %v4212
        %5138 = vmatpush.msra.mxu0 %v4204
        %5139 = vmatmul.f32.gmra.mxu0 %v4167
        %v5140 = vpop.f32.mrf.mxu0
        %v5141 = vadd.f32 %v4462, %v5140
        %5142 = vmatmul.f32.gmra.mxu0 %v4169
        %v5143 = vpop.f32.mrf.mxu0
        %v5144 = vadd.f32 %v4462, %v5143
        %5145 = vmatmul.f32.gmra.mxu0 %v4171
        %v5146 = vpop.f32.mrf.mxu0
        %v5147 = vadd.f32 %v4462, %v5146
        %5148 = vmatmul.f32.gmra.mxu0 %v4173
        %v5149 = vpop.f32.mrf.mxu0
        %v5150 = vadd.f32 %v4462, %v5149
        %5151 = vmatmul.f32.gmra.mxu0 %v4175
        %v5152 = vpop.f32.mrf.mxu0
        %v5153 = vadd.f32 %v4462, %v5152
        %5154 = vmatmul.f32.gmra.mxu0 %v4177
        %v5155 = vpop.f32.mrf.mxu0
        %v5156 = vadd.f32 %v4462, %v5155
        %5157 = vmatmul.f32.gmra.mxu0 %v4179
        %v5158 = vpop.f32.mrf.mxu0
        %v5159 = vadd.f32 %v4462, %v5158
        %5160 = vmatmul.f32.gmra.mxu0 %v4181
        %v5161 = vpop.f32.mrf.mxu0
        %v5162 = vadd.f32 %v4462, %v5161
        %5163 = vmatmul.f32.gmra.mxu0 %v4183
        %v5164 = vpop.f32.mrf.mxu0
        %v5165 = vadd.f32 %v4462, %v5164
        %5166 = vmatmul.f32.gmra.mxu0 %v4185
        %v5167 = vpop.f32.mrf.mxu0
        %v5168 = vadd.f32 %v4462, %v5167
        %5169 = vmatmul.f32.gmra.mxu0 %v4187
        %v5170 = vpop.f32.mrf.mxu0
        %v5171 = vadd.f32 %v4462, %v5170
        %5172 = vmatmul.f32.gmra.mxu0 %v4189
        %v5173 = vpop.f32.mrf.mxu0
        %v5174 = vadd.f32 %v4462, %v5173
        %5175 = vmatmul.f32.gmra.mxu0 %v4191
        %v5176 = vpop.f32.mrf.mxu0
        %v5177 = vadd.f32 %v4462, %v5176
        %5178 = vmatmul.f32.gmra.mxu0 %v4193
        %v5179 = vpop.f32.mrf.mxu0
        %v5180 = vadd.f32 %v4462, %v5179
        %5181 = vmatmul.f32.gmra.mxu0 %v4195
        %v5182 = vpop.f32.mrf.mxu0
        %v5183 = vadd.f32 %v4462, %v5182
        %5184 = vmatmul.f32.gmra.mxu0 %v4197
        %v5185 = vpop.f32.mrf.mxu0
        %v5186 = vadd.f32 %v4462, %v5185
        %5187 = vdwg.mxu0
        %5188 = vmatpush.msra.mxu0 %v4452
        %5189 = vmatpush.msra.mxu0 %v4444
        %5190 = vmatpush.msra.mxu0 %v4436
        %5191 = vmatpush.msra.mxu0 %v4428
        %5192 = vmatpush.msra.mxu0 %v4420
        %5193 = vmatpush.msra.mxu0 %v4412
        %5194 = vmatpush.msra.mxu0 %v4404
        %5195 = vmatpush.msra.mxu0 %v4396
        %5196 = vmatpush.msra.mxu0 %v4388
        %5197 = vmatpush.msra.mxu0 %v4380
        %5198 = vmatpush.msra.mxu0 %v4372
        %5199 = vmatpush.msra.mxu0 %v4364
        %5200 = vmatpush.msra.mxu0 %v4356
        %5201 = vmatpush.msra.mxu0 %v4348
        %5202 = vmatpush.msra.mxu0 %v4340
        %5203 = vmatpush.msra.mxu0 %v4332
        %5204 = vmatmul.f32.gmra.mxu0 %v4168
        %v5205 = vpop.f32.mrf.mxu0
        %v5206 = vadd.f32 %v5141, %v5205
        %5207 = vmatmul.f32.gmra.mxu0 %v4170
        %v5208 = vpop.f32.mrf.mxu0
        %v5209 = vadd.f32 %v5144, %v5208
        %5210 = vmatmul.f32.gmra.mxu0 %v4172
        %v5211 = vpop.f32.mrf.mxu0
        %v5212 = vadd.f32 %v5147, %v5211
        %5213 = vmatmul.f32.gmra.mxu0 %v4174
        %v5214 = vpop.f32.mrf.mxu0
        %v5215 = vadd.f32 %v5150, %v5214
        %5216 = vmatmul.f32.gmra.mxu0 %v4176
        %v5217 = vpop.f32.mrf.mxu0
        %v5218 = vadd.f32 %v5153, %v5217
        %5219 = vmatmul.f32.gmra.mxu0 %v4178
        %v5220 = vpop.f32.mrf.mxu0
        %v5221 = vadd.f32 %v5156, %v5220
        %5222 = vmatmul.f32.gmra.mxu0 %v4180
        %v5223 = vpop.f32.mrf.mxu0
        %v5224 = vadd.f32 %v5159, %v5223
        %5225 = vmatmul.f32.gmra.mxu0 %v4182
        %v5226 = vpop.f32.mrf.mxu0
        %v5227 = vadd.f32 %v5162, %v5226
        %5228 = vmatmul.f32.gmra.mxu0 %v4184
        %v5229 = vpop.f32.mrf.mxu0
        %v5230 = vadd.f32 %v5165, %v5229
        %5231 = vmatmul.f32.gmra.mxu0 %v4186
        %v5232 = vpop.f32.mrf.mxu0
        %v5233 = vadd.f32 %v5168, %v5232
        %5234 = vmatmul.f32.gmra.mxu0 %v4188
        %v5235 = vpop.f32.mrf.mxu0
        %v5236 = vadd.f32 %v5171, %v5235
        %5237 = vmatmul.f32.gmra.mxu0 %v4190
        %v5238 = vpop.f32.mrf.mxu0
        %v5239 = vadd.f32 %v5174, %v5238
        %5240 = vmatmul.f32.gmra.mxu0 %v4192
        %v5241 = vpop.f32.mrf.mxu0
        %v5242 = vadd.f32 %v5177, %v5241
        %5243 = vmatmul.f32.gmra.mxu0 %v4194
        %v5244 = vpop.f32.mrf.mxu0
        %v5245 = vadd.f32 %v5180, %v5244
        %5246 = vmatmul.f32.gmra.mxu0 %v4196
        %v5247 = vpop.f32.mrf.mxu0
        %v5248 = vadd.f32 %v5183, %v5247
        %5249 = vmatmul.f32.gmra.mxu0 %v4198
        %v5250 = vpop.f32.mrf.mxu0
        %v5251 = vadd.f32 %v5186, %v5250
        %5252 = vdwg.mxu0
        %5253 = vmatpush.msra.mxu0 %v4325
        %5254 = vmatpush.msra.mxu0 %v4317
        %5255 = vmatpush.msra.mxu0 %v4309
        %5256 = vmatpush.msra.mxu0 %v4301
        %5257 = vmatpush.msra.mxu0 %v4293
        %5258 = vmatpush.msra.mxu0 %v4285
        %5259 = vmatpush.msra.mxu0 %v4277
        %5260 = vmatpush.msra.mxu0 %v4269
        %5261 = vmatpush.msra.mxu0 %v4261
        %5262 = vmatpush.msra.mxu0 %v4253
        %5263 = vmatpush.msra.mxu0 %v4245
        %5264 = vmatpush.msra.mxu0 %v4237
        %5265 = vmatpush.msra.mxu0 %v4229
        %5266 = vmatpush.msra.mxu0 %v4221
        %5267 = vmatpush.msra.mxu0 %v4213
        %5268 = vmatpush.msra.mxu0 %v4205
        %5269 = vmatmul.f32.gmra.mxu0 %v4167
        %v5270 = vpop.f32.mrf.mxu0
        %v5271 = vadd.f32 %v4463, %v5270
        %5272 = vmatmul.f32.gmra.mxu0 %v4169
        %v5273 = vpop.f32.mrf.mxu0
        %v5274 = vadd.f32 %v4463, %v5273
        %5275 = vmatmul.f32.gmra.mxu0 %v4171
        %v5276 = vpop.f32.mrf.mxu0
        %v5277 = vadd.f32 %v4463, %v5276
        %5278 = vmatmul.f32.gmra.mxu0 %v4173
        %v5279 = vpop.f32.mrf.mxu0
        %v5280 = vadd.f32 %v4463, %v5279
        %5281 = vmatmul.f32.gmra.mxu0 %v4175
        %v5282 = vpop.f32.mrf.mxu0
        %v5283 = vadd.f32 %v4463, %v5282
        %5284 = vmatmul.f32.gmra.mxu0 %v4177
        %v5285 = vpop.f32.mrf.mxu0
        %v5286 = vadd.f32 %v4463, %v5285
        %5287 = vmatmul.f32.gmra.mxu0 %v4179
        %v5288 = vpop.f32.mrf.mxu0
        %v5289 = vadd.f32 %v4463, %v5288
        %5290 = vmatmul.f32.gmra.mxu0 %v4181
        %v5291 = vpop.f32.mrf.mxu0
        %v5292 = vadd.f32 %v4463, %v5291
        %5293 = vmatmul.f32.gmra.mxu0 %v4183
        %v5294 = vpop.f32.mrf.mxu0
        %v5295 = vadd.f32 %v4463, %v5294
        %5296 = vmatmul.f32.gmra.mxu0 %v4185
        %v5297 = vpop.f32.mrf.mxu0
        %v5298 = vadd.f32 %v4463, %v5297
        %5299 = vmatmul.f32.gmra.mxu0 %v4187
        %v5300 = vpop.f32.mrf.mxu0
        %v5301 = vadd.f32 %v4463, %v5300
        %5302 = vmatmul.f32.gmra.mxu0 %v4189
        %v5303 = vpop.f32.mrf.mxu0
        %v5304 = vadd.f32 %v4463, %v5303
        %5305 = vmatmul.f32.gmra.mxu0 %v4191
        %v5306 = vpop.f32.mrf.mxu0
        %v5307 = vadd.f32 %v4463, %v5306
        %5308 = vmatmul.f32.gmra.mxu0 %v4193
        %v5309 = vpop.f32.mrf.mxu0
        %v5310 = vadd.f32 %v4463, %v5309
        %5311 = vmatmul.f32.gmra.mxu0 %v4195
        %v5312 = vpop.f32.mrf.mxu0
        %v5313 = vadd.f32 %v4463, %v5312
        %5314 = vmatmul.f32.gmra.mxu0 %v4197
        %v5315 = vpop.f32.mrf.mxu0
        %v5316 = vadd.f32 %v4463, %v5315
        %5317 = vdwg.mxu0
        %5318 = vmatpush.msra.mxu0 %v4453
        %5319 = vmatpush.msra.mxu0 %v4445
        %5320 = vmatpush.msra.mxu0 %v4437
        %5321 = vmatpush.msra.mxu0 %v4429
        %5322 = vmatpush.msra.mxu0 %v4421
        %5323 = vmatpush.msra.mxu0 %v4413
        %5324 = vmatpush.msra.mxu0 %v4405
        %5325 = vmatpush.msra.mxu0 %v4397
        %5326 = vmatpush.msra.mxu0 %v4389
        %5327 = vmatpush.msra.mxu0 %v4381
        %5328 = vmatpush.msra.mxu0 %v4373
        %5329 = vmatpush.msra.mxu0 %v4365
        %5330 = vmatpush.msra.mxu0 %v4357
        %5331 = vmatpush.msra.mxu0 %v4349
        %5332 = vmatpush.msra.mxu0 %v4341
        %5333 = vmatpush.msra.mxu0 %v4333
        %5334 = vmatmul.f32.gmra.mxu0 %v4168
        %v5335 = vpop.f32.mrf.mxu0
        %v5336 = vadd.f32 %v5271, %v5335
        %5337 = vmatmul.f32.gmra.mxu0 %v4170
        %v5338 = vpop.f32.mrf.mxu0
        %v5339 = vadd.f32 %v5274, %v5338
        %5340 = vmatmul.f32.gmra.mxu0 %v4172
        %v5341 = vpop.f32.mrf.mxu0
        %v5342 = vadd.f32 %v5277, %v5341
        %5343 = vmatmul.f32.gmra.mxu0 %v4174
        %v5344 = vpop.f32.mrf.mxu0
        %v5345 = vadd.f32 %v5280, %v5344
        %5346 = vmatmul.f32.gmra.mxu0 %v4176
        %v5347 = vpop.f32.mrf.mxu0
        %v5348 = vadd.f32 %v5283, %v5347
        %5349 = vmatmul.f32.gmra.mxu0 %v4178
        %v5350 = vpop.f32.mrf.mxu0
        %v5351 = vadd.f32 %v5286, %v5350
        %5352 = vmatmul.f32.gmra.mxu0 %v4180
        %v5353 = vpop.f32.mrf.mxu0
        %v5354 = vadd.f32 %v5289, %v5353
        %5355 = vmatmul.f32.gmra.mxu0 %v4182
        %v5356 = vpop.f32.mrf.mxu0
        %v5357 = vadd.f32 %v5292, %v5356
        %5358 = vmatmul.f32.gmra.mxu0 %v4184
        %v5359 = vpop.f32.mrf.mxu0
        %v5360 = vadd.f32 %v5295, %v5359
        %5361 = vmatmul.f32.gmra.mxu0 %v4186
        %v5362 = vpop.f32.mrf.mxu0
        %v5363 = vadd.f32 %v5298, %v5362
        %5364 = vmatmul.f32.gmra.mxu0 %v4188
        %v5365 = vpop.f32.mrf.mxu0
        %v5366 = vadd.f32 %v5301, %v5365
        %5367 = vmatmul.f32.gmra.mxu0 %v4190
        %v5368 = vpop.f32.mrf.mxu0
        %v5369 = vadd.f32 %v5304, %v5368
        %5370 = vmatmul.f32.gmra.mxu0 %v4192
        %v5371 = vpop.f32.mrf.mxu0
        %v5372 = vadd.f32 %v5307, %v5371
        %5373 = vmatmul.f32.gmra.mxu0 %v4194
        %v5374 = vpop.f32.mrf.mxu0
        %v5375 = vadd.f32 %v5310, %v5374
        %5376 = vmatmul.f32.gmra.mxu0 %v4196
        %v5377 = vpop.f32.mrf.mxu0
        %v5378 = vadd.f32 %v5313, %v5377
        %5379 = vmatmul.f32.gmra.mxu0 %v4198
        %v5380 = vpop.f32.mrf.mxu0
        %v5381 = vadd.f32 %v5316, %v5380
        %5382 = vdwg.mxu0
        %5383 = vmatpush.msra.mxu0 %v4326
        %5384 = vmatpush.msra.mxu0 %v4318
        %5385 = vmatpush.msra.mxu0 %v4310
        %5386 = vmatpush.msra.mxu0 %v4302
        %5387 = vmatpush.msra.mxu0 %v4294
        %5388 = vmatpush.msra.mxu0 %v4286
        %5389 = vmatpush.msra.mxu0 %v4278
        %5390 = vmatpush.msra.mxu0 %v4270
        %5391 = vmatpush.msra.mxu0 %v4262
        %5392 = vmatpush.msra.mxu0 %v4254
        %5393 = vmatpush.msra.mxu0 %v4246
        %5394 = vmatpush.msra.mxu0 %v4238
        %5395 = vmatpush.msra.mxu0 %v4230
        %5396 = vmatpush.msra.mxu0 %v4222
        %5397 = vmatpush.msra.mxu0 %v4214
        %5398 = vmatpush.msra.mxu0 %v4206
        %5399 = vmatmul.f32.gmra.mxu0 %v4167
        %v5400 = vpop.f32.mrf.mxu0
        %v5401 = vadd.f32 %v4464, %v5400
        %5402 = vmatmul.f32.gmra.mxu0 %v4169
        %v5403 = vpop.f32.mrf.mxu0
        %v5404 = vadd.f32 %v4464, %v5403
        %5405 = vmatmul.f32.gmra.mxu0 %v4171
        %v5406 = vpop.f32.mrf.mxu0
        %v5407 = vadd.f32 %v4464, %v5406
        %5408 = vmatmul.f32.gmra.mxu0 %v4173
        %v5409 = vpop.f32.mrf.mxu0
        %v5410 = vadd.f32 %v4464, %v5409
        %5411 = vmatmul.f32.gmra.mxu0 %v4175
        %v5412 = vpop.f32.mrf.mxu0
        %v5413 = vadd.f32 %v4464, %v5412
        %5414 = vmatmul.f32.gmra.mxu0 %v4177
        %v5415 = vpop.f32.mrf.mxu0
        %v5416 = vadd.f32 %v4464, %v5415
        %5417 = vmatmul.f32.gmra.mxu0 %v4179
        %v5418 = vpop.f32.mrf.mxu0
        %v5419 = vadd.f32 %v4464, %v5418
        %5420 = vmatmul.f32.gmra.mxu0 %v4181
        %v5421 = vpop.f32.mrf.mxu0
        %v5422 = vadd.f32 %v4464, %v5421
        %5423 = vmatmul.f32.gmra.mxu0 %v4183
        %v5424 = vpop.f32.mrf.mxu0
        %v5425 = vadd.f32 %v4464, %v5424
        %5426 = vmatmul.f32.gmra.mxu0 %v4185
        %v5427 = vpop.f32.mrf.mxu0
        %v5428 = vadd.f32 %v4464, %v5427
        %5429 = vmatmul.f32.gmra.mxu0 %v4187
        %v5430 = vpop.f32.mrf.mxu0
        %v5431 = vadd.f32 %v4464, %v5430
        %5432 = vmatmul.f32.gmra.mxu0 %v4189
        %v5433 = vpop.f32.mrf.mxu0
        %v5434 = vadd.f32 %v4464, %v5433
        %5435 = vmatmul.f32.gmra.mxu0 %v4191
        %v5436 = vpop.f32.mrf.mxu0
        %v5437 = vadd.f32 %v4464, %v5436
        %5438 = vmatmul.f32.gmra.mxu0 %v4193
        %v5439 = vpop.f32.mrf.mxu0
        %v5440 = vadd.f32 %v4464, %v5439
        %5441 = vmatmul.f32.gmra.mxu0 %v4195
        %v5442 = vpop.f32.mrf.mxu0
        %v5443 = vadd.f32 %v4464, %v5442
        %5444 = vmatmul.f32.gmra.mxu0 %v4197
        %v5445 = vpop.f32.mrf.mxu0
        %v5446 = vadd.f32 %v4464, %v5445
        %5447 = vdwg.mxu0
        %5448 = vmatpush.msra.mxu0 %v4454
        %5449 = vmatpush.msra.mxu0 %v4446
        %5450 = vmatpush.msra.mxu0 %v4438
        %5451 = vmatpush.msra.mxu0 %v4430
        %5452 = vmatpush.msra.mxu0 %v4422
        %5453 = vmatpush.msra.mxu0 %v4414
        %5454 = vmatpush.msra.mxu0 %v4406
        %5455 = vmatpush.msra.mxu0 %v4398
        %5456 = vmatpush.msra.mxu0 %v4390
        %5457 = vmatpush.msra.mxu0 %v4382
        %5458 = vmatpush.msra.mxu0 %v4374
        %5459 = vmatpush.msra.mxu0 %v4366
        %5460 = vmatpush.msra.mxu0 %v4358
        %5461 = vmatpush.msra.mxu0 %v4350
        %5462 = vmatpush.msra.mxu0 %v4342
        %5463 = vmatpush.msra.mxu0 %v4334
        %5464 = vmatmul.f32.gmra.mxu0 %v4168
        %v5465 = vpop.f32.mrf.mxu0
        %v5466 = vadd.f32 %v5401, %v5465
        %5467 = vmatmul.f32.gmra.mxu0 %v4170
        %v5468 = vpop.f32.mrf.mxu0
        %v5469 = vadd.f32 %v5404, %v5468
        %5470 = vmatmul.f32.gmra.mxu0 %v4172
        %v5471 = vpop.f32.mrf.mxu0
        %v5472 = vadd.f32 %v5407, %v5471
        %5473 = vmatmul.f32.gmra.mxu0 %v4174
        %v5474 = vpop.f32.mrf.mxu0
        %v5475 = vadd.f32 %v5410, %v5474
        %5476 = vmatmul.f32.gmra.mxu0 %v4176
        %v5477 = vpop.f32.mrf.mxu0
        %v5478 = vadd.f32 %v5413, %v5477
        %5479 = vmatmul.f32.gmra.mxu0 %v4178
        %v5480 = vpop.f32.mrf.mxu0
        %v5481 = vadd.f32 %v5416, %v5480
        %5482 = vmatmul.f32.gmra.mxu0 %v4180
        %v5483 = vpop.f32.mrf.mxu0
        %v5484 = vadd.f32 %v5419, %v5483
        %5485 = vmatmul.f32.gmra.mxu0 %v4182
        %v5486 = vpop.f32.mrf.mxu0
        %v5487 = vadd.f32 %v5422, %v5486
        %5488 = vmatmul.f32.gmra.mxu0 %v4184
        %v5489 = vpop.f32.mrf.mxu0
        %v5490 = vadd.f32 %v5425, %v5489
        %5491 = vmatmul.f32.gmra.mxu0 %v4186
        %v5492 = vpop.f32.mrf.mxu0
        %v5493 = vadd.f32 %v5428, %v5492
        %5494 = vmatmul.f32.gmra.mxu0 %v4188
        %v5495 = vpop.f32.mrf.mxu0
        %v5496 = vadd.f32 %v5431, %v5495
        %5497 = vmatmul.f32.gmra.mxu0 %v4190
        %v5498 = vpop.f32.mrf.mxu0
        %v5499 = vadd.f32 %v5434, %v5498
        %5500 = vmatmul.f32.gmra.mxu0 %v4192
        %v5501 = vpop.f32.mrf.mxu0
        %v5502 = vadd.f32 %v5437, %v5501
        %5503 = vmatmul.f32.gmra.mxu0 %v4194
        %v5504 = vpop.f32.mrf.mxu0
        %v5505 = vadd.f32 %v5440, %v5504
        %5506 = vmatmul.f32.gmra.mxu0 %v4196
        %v5507 = vpop.f32.mrf.mxu0
        %v5508 = vadd.f32 %v5443, %v5507
        %5509 = vmatmul.f32.gmra.mxu0 %v4198
        %v5510 = vpop.f32.mrf.mxu0
        %v5511 = vadd.f32 %v5446, %v5510
        %5512 = vdwg.mxu0
        %v5513 = vmul.f32 %v4556, 0.5
        %v5514 = vmul.f32 %v4686, 0.5
        %v5515 = vmul.f32 %v4816, 0.5
        %v5516 = vmul.f32 %v4946, 0.5
        %v5517 = vmul.f32 %v5076, 0.5
        %v5518 = vmul.f32 %v5206, 0.5
        %v5519 = vmul.f32 %v5336, 0.5
        %v5520 = vmul.f32 %v5466, 0.5
        %v5521 = vmul.f32 %v4559, 0.5
        %v5522 = vmul.f32 %v4689, 0.5
        %v5523 = vmul.f32 %v4819, 0.5
        %v5524 = vmul.f32 %v4949, 0.5
        %v5525 = vmul.f32 %v5079, 0.5
        %v5526 = vmul.f32 %v5209, 0.5
        %v5527 = vmul.f32 %v5339, 0.5
        %v5528 = vmul.f32 %v5469, 0.5
        %v5529 = vmul.f32 %v4562, 0.5
        %v5530 = vmul.f32 %v4692, 0.5
        %v5531 = vmul.f32 %v4822, 0.5
        %v5532 = vmul.f32 %v4952, 0.5
        %v5533 = vmul.f32 %v5082, 0.5
        %v5534 = vmul.f32 %v5212, 0.5
        %v5535 = vmul.f32 %v5342, 0.5
        %v5536 = vmul.f32 %v5472, 0.5
        %v5537 = vmul.f32 %v4565, 0.5
        %v5538 = vmul.f32 %v4695, 0.5
        %v5539 = vmul.f32 %v4825, 0.5
        %v5540 = vmul.f32 %v4955, 0.5
        %v5541 = vmul.f32 %v5085, 0.5
        %v5542 = vmul.f32 %v5215, 0.5
        %v5543 = vmul.f32 %v5345, 0.5
        %v5544 = vmul.f32 %v5475, 0.5
        %v5545 = vmul.f32 %v4568, 0.5
        %v5546 = vmul.f32 %v4698, 0.5
        %v5547 = vmul.f32 %v4828, 0.5
        %v5548 = vmul.f32 %v4958, 0.5
        %v5549 = vmul.f32 %v5088, 0.5
        %v5550 = vmul.f32 %v5218, 0.5
        %v5551 = vmul.f32 %v5348, 0.5
        %v5552 = vmul.f32 %v5478, 0.5
        %v5553 = vmul.f32 %v4571, 0.5
        %v5554 = vmul.f32 %v4701, 0.5
        %v5555 = vmul.f32 %v4831, 0.5
        %v5556 = vmul.f32 %v4961, 0.5
        %v5557 = vmul.f32 %v5091, 0.5
        %v5558 = vmul.f32 %v5221, 0.5
        %v5559 = vmul.f32 %v5351, 0.5
        %v5560 = vmul.f32 %v5481, 0.5
        %v5561 = vmul.f32 %v4574, 0.5
        %v5562 = vmul.f32 %v4704, 0.5
        %v5563 = vmul.f32 %v4834, 0.5
        %v5564 = vmul.f32 %v4964, 0.5
        %v5565 = vmul.f32 %v5094, 0.5
        %v5566 = vmul.f32 %v5224, 0.5
        %v5567 = vmul.f32 %v5354, 0.5
        %v5568 = vmul.f32 %v5484, 0.5
        %v5569 = vmul.f32 %v4577, 0.5
        %v5570 = vmul.f32 %v4707, 0.5
        %v5571 = vmul.f32 %v4837, 0.5
        %v5572 = vmul.f32 %v4967, 0.5
        %v5573 = vmul.f32 %v5097, 0.5
        %v5574 = vmul.f32 %v5227, 0.5
        %v5575 = vmul.f32 %v5357, 0.5
        %v5576 = vmul.f32 %v5487, 0.5
        %v5577 = vmul.f32 %v4580, 0.5
        %v5578 = vmul.f32 %v4710, 0.5
        %v5579 = vmul.f32 %v4840, 0.5
        %v5580 = vmul.f32 %v4970, 0.5
        %v5581 = vmul.f32 %v5100, 0.5
        %v5582 = vmul.f32 %v5230, 0.5
        %v5583 = vmul.f32 %v5360, 0.5
        %v5584 = vmul.f32 %v5490, 0.5
        %v5585 = vmul.f32 %v4583, 0.5
        %v5586 = vmul.f32 %v4713, 0.5
        %v5587 = vmul.f32 %v4843, 0.5
        %v5588 = vmul.f32 %v4973, 0.5
        %v5589 = vmul.f32 %v5103, 0.5
        %v5590 = vmul.f32 %v5233, 0.5
        %v5591 = vmul.f32 %v5363, 0.5
        %v5592 = vmul.f32 %v5493, 0.5
        %v5593 = vmul.f32 %v4586, 0.5
        %v5594 = vmul.f32 %v4716, 0.5
        %v5595 = vmul.f32 %v4846, 0.5
        %v5596 = vmul.f32 %v4976, 0.5
        %v5597 = vmul.f32 %v5106, 0.5
        %v5598 = vmul.f32 %v5236, 0.5
        %v5599 = vmul.f32 %v5366, 0.5
        %v5600 = vmul.f32 %v5496, 0.5
        %v5601 = vmul.f32 %v4589, 0.5
        %v5602 = vmul.f32 %v4719, 0.5
        %v5603 = vmul.f32 %v4849, 0.5
        %v5604 = vmul.f32 %v4979, 0.5
        %v5605 = vmul.f32 %v5109, 0.5
        %v5606 = vmul.f32 %v5239, 0.5
        %v5607 = vmul.f32 %v5369, 0.5
        %v5608 = vmul.f32 %v5499, 0.5
        %v5609 = vmul.f32 %v4592, 0.5
        %v5610 = vmul.f32 %v4722, 0.5
        %v5611 = vmul.f32 %v4852, 0.5
        %v5612 = vmul.f32 %v4982, 0.5
        %v5613 = vmul.f32 %v5112, 0.5
        %v5614 = vmul.f32 %v5242, 0.5
        %v5615 = vmul.f32 %v5372, 0.5
        %v5616 = vmul.f32 %v5502, 0.5
        %v5617 = vmul.f32 %v4595, 0.5
        %v5618 = vmul.f32 %v4725, 0.5
        %v5619 = vmul.f32 %v4855, 0.5
        %v5620 = vmul.f32 %v4985, 0.5
        %v5621 = vmul.f32 %v5115, 0.5
        %v5622 = vmul.f32 %v5245, 0.5
        %v5623 = vmul.f32 %v5375, 0.5
        %v5624 = vmul.f32 %v5505, 0.5
        %v5625 = vmul.f32 %v4598, 0.5
        %v5626 = vmul.f32 %v4728, 0.5
        %v5627 = vmul.f32 %v4858, 0.5
        %v5628 = vmul.f32 %v4988, 0.5
        %v5629 = vmul.f32 %v5118, 0.5
        %v5630 = vmul.f32 %v5248, 0.5
        %v5631 = vmul.f32 %v5378, 0.5
        %v5632 = vmul.f32 %v5508, 0.5
        %v5633 = vmul.f32 %v4601, 0.5
        %v5634 = vmul.f32 %v4731, 0.5
        %v5635 = vmul.f32 %v4861, 0.5
        %v5636 = vmul.f32 %v4991, 0.5
        %v5637 = vmul.f32 %v5121, 0.5
        %v5638 = vmul.f32 %v5251, 0.5
        %v5639 = vmul.f32 %v5381, 0.5
        %v5640 = vmul.f32 %v5511, 0.5
        %v5641 = vmul.f32 %v4556, 0.044715
        %v5642 = vmul.f32 %v4686, 0.044715
        %v5643 = vmul.f32 %v4816, 0.044715
        %v5644 = vmul.f32 %v4946, 0.044715
        %v5645 = vmul.f32 %v5076, 0.044715
        %v5646 = vmul.f32 %v5206, 0.044715
        %v5647 = vmul.f32 %v5336, 0.044715
        %v5648 = vmul.f32 %v5466, 0.044715
        %v5649 = vmul.f32 %v4559, 0.044715
        %v5650 = vmul.f32 %v4689, 0.044715
        %v5651 = vmul.f32 %v4819, 0.044715
        %v5652 = vmul.f32 %v4949, 0.044715
        %v5653 = vmul.f32 %v5079, 0.044715
        %v5654 = vmul.f32 %v5209, 0.044715
        %v5655 = vmul.f32 %v5339, 0.044715
        %v5656 = vmul.f32 %v5469, 0.044715
        %v5657 = vmul.f32 %v4562, 0.044715
        %v5658 = vmul.f32 %v4692, 0.044715
        %v5659 = vmul.f32 %v4822, 0.044715
        %v5660 = vmul.f32 %v4952, 0.044715
        %v5661 = vmul.f32 %v5082, 0.044715
        %v5662 = vmul.f32 %v5212, 0.044715
        %v5663 = vmul.f32 %v5342, 0.044715
        %v5664 = vmul.f32 %v5472, 0.044715
        %v5665 = vmul.f32 %v4565, 0.044715
        %v5666 = vmul.f32 %v4695, 0.044715
        %v5667 = vmul.f32 %v4825, 0.044715
        %v5668 = vmul.f32 %v4955, 0.044715
        %v5669 = vmul.f32 %v5085, 0.044715
        %v5670 = vmul.f32 %v5215, 0.044715
        %v5671 = vmul.f32 %v5345, 0.044715
        %v5672 = vmul.f32 %v5475, 0.044715
        %v5673 = vmul.f32 %v4568, 0.044715
        %v5674 = vmul.f32 %v4698, 0.044715
        %v5675 = vmul.f32 %v4828, 0.044715
        %v5676 = vmul.f32 %v4958, 0.044715
        %v5677 = vmul.f32 %v5088, 0.044715
        %v5678 = vmul.f32 %v5218, 0.044715
        %v5679 = vmul.f32 %v5348, 0.044715
        %v5680 = vmul.f32 %v5478, 0.044715
        %v5681 = vmul.f32 %v4571, 0.044715
        %v5682 = vmul.f32 %v4701, 0.044715
        %v5683 = vmul.f32 %v4831, 0.044715
        %v5684 = vmul.f32 %v4961, 0.044715
        %v5685 = vmul.f32 %v5091, 0.044715
        %v5686 = vmul.f32 %v5221, 0.044715
        %v5687 = vmul.f32 %v5351, 0.044715
        %v5688 = vmul.f32 %v5481, 0.044715
        %v5689 = vmul.f32 %v4574, 0.044715
        %v5690 = vmul.f32 %v4704, 0.044715
        %v5691 = vmul.f32 %v4834, 0.044715
        %v5692 = vmul.f32 %v4964, 0.044715
        %v5693 = vmul.f32 %v5094, 0.044715
        %v5694 = vmul.f32 %v5224, 0.044715
        %v5695 = vmul.f32 %v5354, 0.044715
        %v5696 = vmul.f32 %v5484, 0.044715
        %v5697 = vmul.f32 %v4577, 0.044715
        %v5698 = vmul.f32 %v4707, 0.044715
        %v5699 = vmul.f32 %v4837, 0.044715
        %v5700 = vmul.f32 %v4967, 0.044715
        %v5701 = vmul.f32 %v5097, 0.044715
        %v5702 = vmul.f32 %v5227, 0.044715
        %v5703 = vmul.f32 %v5357, 0.044715
        %v5704 = vmul.f32 %v5487, 0.044715
        %v5705 = vmul.f32 %v4580, 0.044715
        %v5706 = vmul.f32 %v4710, 0.044715
        %v5707 = vmul.f32 %v4840, 0.044715
        %v5708 = vmul.f32 %v4970, 0.044715
        %v5709 = vmul.f32 %v5100, 0.044715
        %v5710 = vmul.f32 %v5230, 0.044715
        %v5711 = vmul.f32 %v5360, 0.044715
        %v5712 = vmul.f32 %v5490, 0.044715
        %v5713 = vmul.f32 %v4583, 0.044715
        %v5714 = vmul.f32 %v4713, 0.044715
        %v5715 = vmul.f32 %v4843, 0.044715
        %v5716 = vmul.f32 %v4973, 0.044715
        %v5717 = vmul.f32 %v5103, 0.044715
        %v5718 = vmul.f32 %v5233, 0.044715
        %v5719 = vmul.f32 %v5363, 0.044715
        %v5720 = vmul.f32 %v5493, 0.044715
        %v5721 = vmul.f32 %v4586, 0.044715
        %v5722 = vmul.f32 %v4716, 0.044715
        %v5723 = vmul.f32 %v4846, 0.044715
        %v5724 = vmul.f32 %v4976, 0.044715
        %v5725 = vmul.f32 %v5106, 0.044715
        %v5726 = vmul.f32 %v5236, 0.044715
        %v5727 = vmul.f32 %v5366, 0.044715
        %v5728 = vmul.f32 %v5496, 0.044715
        %v5729 = vmul.f32 %v4589, 0.044715
        %v5730 = vmul.f32 %v4719, 0.044715
        %v5731 = vmul.f32 %v4849, 0.044715
        %v5732 = vmul.f32 %v4979, 0.044715
        %v5733 = vmul.f32 %v5109, 0.044715
        %v5734 = vmul.f32 %v5239, 0.044715
        %v5735 = vmul.f32 %v5369, 0.044715
        %v5736 = vmul.f32 %v5499, 0.044715
        %v5737 = vmul.f32 %v4592, 0.044715
        %v5738 = vmul.f32 %v4722, 0.044715
        %v5739 = vmul.f32 %v4852, 0.044715
        %v5740 = vmul.f32 %v4982, 0.044715
        %v5741 = vmul.f32 %v5112, 0.044715
        %v5742 = vmul.f32 %v5242, 0.044715
        %v5743 = vmul.f32 %v5372, 0.044715
        %v5744 = vmul.f32 %v5502, 0.044715
        %v5745 = vmul.f32 %v4595, 0.044715
        %v5746 = vmul.f32 %v4725, 0.044715
        %v5747 = vmul.f32 %v4855, 0.044715
        %v5748 = vmul.f32 %v4985, 0.044715
        %v5749 = vmul.f32 %v5115, 0.044715
        %v5750 = vmul.f32 %v5245, 0.044715
        %v5751 = vmul.f32 %v5375, 0.044715
        %v5752 = vmul.f32 %v5505, 0.044715
        %v5753 = vmul.f32 %v4598, 0.044715
        %v5754 = vmul.f32 %v4728, 0.044715
        %v5755 = vmul.f32 %v4858, 0.044715
        %v5756 = vmul.f32 %v4988, 0.044715
        %v5757 = vmul.f32 %v5118, 0.044715
        %v5758 = vmul.f32 %v5248, 0.044715
        %v5759 = vmul.f32 %v5378, 0.044715
        %v5760 = vmul.f32 %v5508, 0.044715
        %v5761 = vmul.f32 %v4601, 0.044715
        %v5762 = vmul.f32 %v4731, 0.044715
        %v5763 = vmul.f32 %v4861, 0.044715
        %v5764 = vmul.f32 %v4991, 0.044715
        %v5765 = vmul.f32 %v5121, 0.044715
        %v5766 = vmul.f32 %v5251, 0.044715
        %v5767 = vmul.f32 %v5381, 0.044715
        %v5768 = vmul.f32 %v5511, 0.044715
        %v5769 = vmul.f32 %v5641, %v4556
        %v5770 = vmul.f32 %v5642, %v4686
        %v5771 = vmul.f32 %v5643, %v4816
        %v5772 = vmul.f32 %v5644, %v4946
        %v5773 = vmul.f32 %v5645, %v5076
        %v5774 = vmul.f32 %v5646, %v5206
        %v5775 = vmul.f32 %v5647, %v5336
        %v5776 = vmul.f32 %v5648, %v5466
        %v5777 = vmul.f32 %v5649, %v4559
        %v5778 = vmul.f32 %v5650, %v4689
        %v5779 = vmul.f32 %v5651, %v4819
        %v5780 = vmul.f32 %v5652, %v4949
        %v5781 = vmul.f32 %v5653, %v5079
        %v5782 = vmul.f32 %v5654, %v5209
        %v5783 = vmul.f32 %v5655, %v5339
        %v5784 = vmul.f32 %v5656, %v5469
        %v5785 = vmul.f32 %v5657, %v4562
        %v5786 = vmul.f32 %v5658, %v4692
        %v5787 = vmul.f32 %v5659, %v4822
        %v5788 = vmul.f32 %v5660, %v4952
        %v5789 = vmul.f32 %v5661, %v5082
        %v5790 = vmul.f32 %v5662, %v5212
        %v5791 = vmul.f32 %v5663, %v5342
        %v5792 = vmul.f32 %v5664, %v5472
        %v5793 = vmul.f32 %v5665, %v4565
        %v5794 = vmul.f32 %v5666, %v4695
        %v5795 = vmul.f32 %v5667, %v4825
        %v5796 = vmul.f32 %v5668, %v4955
        %v5797 = vmul.f32 %v5669, %v5085
        %v5798 = vmul.f32 %v5670, %v5215
        %v5799 = vmul.f32 %v5671, %v5345
        %v5800 = vmul.f32 %v5672, %v5475
        %v5801 = vmul.f32 %v5673, %v4568
        %v5802 = vmul.f32 %v5674, %v4698
        %v5803 = vmul.f32 %v5675, %v4828
        %v5804 = vmul.f32 %v5676, %v4958
        %v5805 = vmul.f32 %v5677, %v5088
        %v5806 = vmul.f32 %v5678, %v5218
        %v5807 = vmul.f32 %v5679, %v5348
        %v5808 = vmul.f32 %v5680, %v5478
        %v5809 = vmul.f32 %v5681, %v4571
        %v5810 = vmul.f32 %v5682, %v4701
        %v5811 = vmul.f32 %v5683, %v4831
        %v5812 = vmul.f32 %v5684, %v4961
        %v5813 = vmul.f32 %v5685, %v5091
        %v5814 = vmul.f32 %v5686, %v5221
        %v5815 = vmul.f32 %v5687, %v5351
        %v5816 = vmul.f32 %v5688, %v5481
        %v5817 = vmul.f32 %v5689, %v4574
        %v5818 = vmul.f32 %v5690, %v4704
        %v5819 = vmul.f32 %v5691, %v4834
        %v5820 = vmul.f32 %v5692, %v4964
        %v5821 = vmul.f32 %v5693, %v5094
        %v5822 = vmul.f32 %v5694, %v5224
        %v5823 = vmul.f32 %v5695, %v5354
        %v5824 = vmul.f32 %v5696, %v5484
        %v5825 = vmul.f32 %v5697, %v4577
        %v5826 = vmul.f32 %v5698, %v4707
        %v5827 = vmul.f32 %v5699, %v4837
        %v5828 = vmul.f32 %v5700, %v4967
        %v5829 = vmul.f32 %v5701, %v5097
        %v5830 = vmul.f32 %v5702, %v5227
        %v5831 = vmul.f32 %v5703, %v5357
        %v5832 = vmul.f32 %v5704, %v5487
        %v5833 = vmul.f32 %v5705, %v4580
        %v5834 = vmul.f32 %v5706, %v4710
        %v5835 = vmul.f32 %v5707, %v4840
        %v5836 = vmul.f32 %v5708, %v4970
        %v5837 = vmul.f32 %v5709, %v5100
        %v5838 = vmul.f32 %v5710, %v5230
        %v5839 = vmul.f32 %v5711, %v5360
        %v5840 = vmul.f32 %v5712, %v5490
        %v5841 = vmul.f32 %v5713, %v4583
        %v5842 = vmul.f32 %v5714, %v4713
        %v5843 = vmul.f32 %v5715, %v4843
        %v5844 = vmul.f32 %v5716, %v4973
        %v5845 = vmul.f32 %v5717, %v5103
        %v5846 = vmul.f32 %v5718, %v5233
        %v5847 = vmul.f32 %v5719, %v5363
        %v5848 = vmul.f32 %v5720, %v5493
        %v5849 = vmul.f32 %v5721, %v4586
        %v5850 = vmul.f32 %v5722, %v4716
        %v5851 = vmul.f32 %v5723, %v4846
        %v5852 = vmul.f32 %v5724, %v4976
        %v5853 = vmul.f32 %v5725, %v5106
        %v5854 = vmul.f32 %v5726, %v5236
        %v5855 = vmul.f32 %v5727, %v5366
        %v5856 = vmul.f32 %v5728, %v5496
        %v5857 = vmul.f32 %v5729, %v4589
        %v5858 = vmul.f32 %v5730, %v4719
        %v5859 = vmul.f32 %v5731, %v4849
        %v5860 = vmul.f32 %v5732, %v4979
        %v5861 = vmul.f32 %v5733, %v5109
        %v5862 = vmul.f32 %v5734, %v5239
        %v5863 = vmul.f32 %v5735, %v5369
        %v5864 = vmul.f32 %v5736, %v5499
        %v5865 = vmul.f32 %v5737, %v4592
        %v5866 = vmul.f32 %v5738, %v4722
        %v5867 = vmul.f32 %v5739, %v4852
        %v5868 = vmul.f32 %v5740, %v4982
        %v5869 = vmul.f32 %v5741, %v5112
        %v5870 = vmul.f32 %v5742, %v5242
        %v5871 = vmul.f32 %v5743, %v5372
        %v5872 = vmul.f32 %v5744, %v5502
        %v5873 = vmul.f32 %v5745, %v4595
        %v5874 = vmul.f32 %v5746, %v4725
        %v5875 = vmul.f32 %v5747, %v4855
        %v5876 = vmul.f32 %v5748, %v4985
        %v5877 = vmul.f32 %v5749, %v5115
        %v5878 = vmul.f32 %v5750, %v5245
        %v5879 = vmul.f32 %v5751, %v5375
        %v5880 = vmul.f32 %v5752, %v5505
        %v5881 = vmul.f32 %v5753, %v4598
        %v5882 = vmul.f32 %v5754, %v4728
        %v5883 = vmul.f32 %v5755, %v4858
        %v5884 = vmul.f32 %v5756, %v4988
        %v5885 = vmul.f32 %v5757, %v5118
        %v5886 = vmul.f32 %v5758, %v5248
        %v5887 = vmul.f32 %v5759, %v5378
        %v5888 = vmul.f32 %v5760, %v5508
        %v5889 = vmul.f32 %v5761, %v4601
        %v5890 = vmul.f32 %v5762, %v4731
        %v5891 = vmul.f32 %v5763, %v4861
        %v5892 = vmul.f32 %v5764, %v4991
        %v5893 = vmul.f32 %v5765, %v5121
        %v5894 = vmul.f32 %v5766, %v5251
        %v5895 = vmul.f32 %v5767, %v5381
        %v5896 = vmul.f32 %v5768, %v5511
        %v5897 = vmul.f32 %v5769, %v4556
        %v5898 = vmul.f32 %v5770, %v4686
        %v5899 = vmul.f32 %v5771, %v4816
        %v5900 = vmul.f32 %v5772, %v4946
        %v5901 = vmul.f32 %v5773, %v5076
        %v5902 = vmul.f32 %v5774, %v5206
        %v5903 = vmul.f32 %v5775, %v5336
        %v5904 = vmul.f32 %v5776, %v5466
        %v5905 = vmul.f32 %v5777, %v4559
        %v5906 = vmul.f32 %v5778, %v4689
        %v5907 = vmul.f32 %v5779, %v4819
        %v5908 = vmul.f32 %v5780, %v4949
        %v5909 = vmul.f32 %v5781, %v5079
        %v5910 = vmul.f32 %v5782, %v5209
        %v5911 = vmul.f32 %v5783, %v5339
        %v5912 = vmul.f32 %v5784, %v5469
        %v5913 = vmul.f32 %v5785, %v4562
        %v5914 = vmul.f32 %v5786, %v4692
        %v5915 = vmul.f32 %v5787, %v4822
        %v5916 = vmul.f32 %v5788, %v4952
        %v5917 = vmul.f32 %v5789, %v5082
        %v5918 = vmul.f32 %v5790, %v5212
        %v5919 = vmul.f32 %v5791, %v5342
        %v5920 = vmul.f32 %v5792, %v5472
        %v5921 = vmul.f32 %v5793, %v4565
        %v5922 = vmul.f32 %v5794, %v4695
        %v5923 = vmul.f32 %v5795, %v4825
        %v5924 = vmul.f32 %v5796, %v4955
        %v5925 = vmul.f32 %v5797, %v5085
        %v5926 = vmul.f32 %v5798, %v5215
        %v5927 = vmul.f32 %v5799, %v5345
        %v5928 = vmul.f32 %v5800, %v5475
        %v5929 = vmul.f32 %v5801, %v4568
        %v5930 = vmul.f32 %v5802, %v4698
        %v5931 = vmul.f32 %v5803, %v4828
        %v5932 = vmul.f32 %v5804, %v4958
        %v5933 = vmul.f32 %v5805, %v5088
        %v5934 = vmul.f32 %v5806, %v5218
        %v5935 = vmul.f32 %v5807, %v5348
        %v5936 = vmul.f32 %v5808, %v5478
        %v5937 = vmul.f32 %v5809, %v4571
        %v5938 = vmul.f32 %v5810, %v4701
        %v5939 = vmul.f32 %v5811, %v4831
        %v5940 = vmul.f32 %v5812, %v4961
        %v5941 = vmul.f32 %v5813, %v5091
        %v5942 = vmul.f32 %v5814, %v5221
        %v5943 = vmul.f32 %v5815, %v5351
        %v5944 = vmul.f32 %v5816, %v5481
        %v5945 = vmul.f32 %v5817, %v4574
        %v5946 = vmul.f32 %v5818, %v4704
        %v5947 = vmul.f32 %v5819, %v4834
        %v5948 = vmul.f32 %v5820, %v4964
        %v5949 = vmul.f32 %v5821, %v5094
        %v5950 = vmul.f32 %v5822, %v5224
        %v5951 = vmul.f32 %v5823, %v5354
        %v5952 = vmul.f32 %v5824, %v5484
        %v5953 = vmul.f32 %v5825, %v4577
        %v5954 = vmul.f32 %v5826, %v4707
        %v5955 = vmul.f32 %v5827, %v4837
        %v5956 = vmul.f32 %v5828, %v4967
        %v5957 = vmul.f32 %v5829, %v5097
        %v5958 = vmul.f32 %v5830, %v5227
        %v5959 = vmul.f32 %v5831, %v5357
        %v5960 = vmul.f32 %v5832, %v5487
        %v5961 = vmul.f32 %v5833, %v4580
        %v5962 = vmul.f32 %v5834, %v4710
        %v5963 = vmul.f32 %v5835, %v4840
        %v5964 = vmul.f32 %v5836, %v4970
        %v5965 = vmul.f32 %v5837, %v5100
        %v5966 = vmul.f32 %v5838, %v5230
        %v5967 = vmul.f32 %v5839, %v5360
        %v5968 = vmul.f32 %v5840, %v5490
        %v5969 = vmul.f32 %v5841, %v4583
        %v5970 = vmul.f32 %v5842, %v4713
        %v5971 = vmul.f32 %v5843, %v4843
        %v5972 = vmul.f32 %v5844, %v4973
        %v5973 = vmul.f32 %v5845, %v5103
        %v5974 = vmul.f32 %v5846, %v5233
        %v5975 = vmul.f32 %v5847, %v5363
        %v5976 = vmul.f32 %v5848, %v5493
        %v5977 = vmul.f32 %v5849, %v4586
        %v5978 = vmul.f32 %v5850, %v4716
        %v5979 = vmul.f32 %v5851, %v4846
        %v5980 = vmul.f32 %v5852, %v4976
        %v5981 = vmul.f32 %v5853, %v5106
        %v5982 = vmul.f32 %v5854, %v5236
        %v5983 = vmul.f32 %v5855, %v5366
        %v5984 = vmul.f32 %v5856, %v5496
        %v5985 = vmul.f32 %v5857, %v4589
        %v5986 = vmul.f32 %v5858, %v4719
        %v5987 = vmul.f32 %v5859, %v4849
        %v5988 = vmul.f32 %v5860, %v4979
        %v5989 = vmul.f32 %v5861, %v5109
        %v5990 = vmul.f32 %v5862, %v5239
        %v5991 = vmul.f32 %v5863, %v5369
        %v5992 = vmul.f32 %v5864, %v5499
        %v5993 = vmul.f32 %v5865, %v4592
        %v5994 = vmul.f32 %v5866, %v4722
        %v5995 = vmul.f32 %v5867, %v4852
        %v5996 = vmul.f32 %v5868, %v4982
        %v5997 = vmul.f32 %v5869, %v5112
        %v5998 = vmul.f32 %v5870, %v5242
        %v5999 = vmul.f32 %v5871, %v5372
        %v6000 = vmul.f32 %v5872, %v5502
        %v6001 = vmul.f32 %v5873, %v4595
        %v6002 = vmul.f32 %v5874, %v4725
        %v6003 = vmul.f32 %v5875, %v4855
        %v6004 = vmul.f32 %v5876, %v4985
        %v6005 = vmul.f32 %v5877, %v5115
        %v6006 = vmul.f32 %v5878, %v5245
        %v6007 = vmul.f32 %v5879, %v5375
        %v6008 = vmul.f32 %v5880, %v5505
        %v6009 = vmul.f32 %v5881, %v4598
        %v6010 = vmul.f32 %v5882, %v4728
        %v6011 = vmul.f32 %v5883, %v4858
        %v6012 = vmul.f32 %v5884, %v4988
        %v6013 = vmul.f32 %v5885, %v5118
        %v6014 = vmul.f32 %v5886, %v5248
        %v6015 = vmul.f32 %v5887, %v5378
        %v6016 = vmul.f32 %v5888, %v5508
        %v6017 = vmul.f32 %v5889, %v4601
        %v6018 = vmul.f32 %v5890, %v4731
        %v6019 = vmul.f32 %v5891, %v4861
        %v6020 = vmul.f32 %v5892, %v4991
        %v6021 = vmul.f32 %v5893, %v5121
        %v6022 = vmul.f32 %v5894, %v5251
        %v6023 = vmul.f32 %v5895, %v5381
        %v6024 = vmul.f32 %v5896, %v5511
        %v6025 = vadd.f32 %v4556, %v5897
        %v6026 = vadd.f32 %v4686, %v5898
        %v6027 = vadd.f32 %v4816, %v5899
        %v6028 = vadd.f32 %v4946, %v5900
        %v6029 = vadd.f32 %v5076, %v5901
        %v6030 = vadd.f32 %v5206, %v5902
        %v6031 = vadd.f32 %v5336, %v5903
        %v6032 = vadd.f32 %v5466, %v5904
        %v6033 = vadd.f32 %v4559, %v5905
        %v6034 = vadd.f32 %v4689, %v5906
        %v6035 = vadd.f32 %v4819, %v5907
        %v6036 = vadd.f32 %v4949, %v5908
        %v6037 = vadd.f32 %v5079, %v5909
        %v6038 = vadd.f32 %v5209, %v5910
        %v6039 = vadd.f32 %v5339, %v5911
        %v6040 = vadd.f32 %v5469, %v5912
        %v6041 = vadd.f32 %v4562, %v5913
        %v6042 = vadd.f32 %v4692, %v5914
        %v6043 = vadd.f32 %v4822, %v5915
        %v6044 = vadd.f32 %v4952, %v5916
        %v6045 = vadd.f32 %v5082, %v5917
        %v6046 = vadd.f32 %v5212, %v5918
        %v6047 = vadd.f32 %v5342, %v5919
        %v6048 = vadd.f32 %v5472, %v5920
        %v6049 = vadd.f32 %v4565, %v5921
        %v6050 = vadd.f32 %v4695, %v5922
        %v6051 = vadd.f32 %v4825, %v5923
        %v6052 = vadd.f32 %v4955, %v5924
        %v6053 = vadd.f32 %v5085, %v5925
        %v6054 = vadd.f32 %v5215, %v5926
        %v6055 = vadd.f32 %v5345, %v5927
        %v6056 = vadd.f32 %v5475, %v5928
        %v6057 = vadd.f32 %v4568, %v5929
        %v6058 = vadd.f32 %v4698, %v5930
        %v6059 = vadd.f32 %v4828, %v5931
        %v6060 = vadd.f32 %v4958, %v5932
        %v6061 = vadd.f32 %v5088, %v5933
        %v6062 = vadd.f32 %v5218, %v5934
        %v6063 = vadd.f32 %v5348, %v5935
        %v6064 = vadd.f32 %v5478, %v5936
        %v6065 = vadd.f32 %v4571, %v5937
        %v6066 = vadd.f32 %v4701, %v5938
        %v6067 = vadd.f32 %v4831, %v5939
        %v6068 = vadd.f32 %v4961, %v5940
        %v6069 = vadd.f32 %v5091, %v5941
        %v6070 = vadd.f32 %v5221, %v5942
        %v6071 = vadd.f32 %v5351, %v5943
        %v6072 = vadd.f32 %v5481, %v5944
        %v6073 = vadd.f32 %v4574, %v5945
        %v6074 = vadd.f32 %v4704, %v5946
        %v6075 = vadd.f32 %v4834, %v5947
        %v6076 = vadd.f32 %v4964, %v5948
        %v6077 = vadd.f32 %v5094, %v5949
        %v6078 = vadd.f32 %v5224, %v5950
        %v6079 = vadd.f32 %v5354, %v5951
        %v6080 = vadd.f32 %v5484, %v5952
        %v6081 = vadd.f32 %v4577, %v5953
        %v6082 = vadd.f32 %v4707, %v5954
        %v6083 = vadd.f32 %v4837, %v5955
        %v6084 = vadd.f32 %v4967, %v5956
        %v6085 = vadd.f32 %v5097, %v5957
        %v6086 = vadd.f32 %v5227, %v5958
        %v6087 = vadd.f32 %v5357, %v5959
        %v6088 = vadd.f32 %v5487, %v5960
        %v6089 = vadd.f32 %v4580, %v5961
        %v6090 = vadd.f32 %v4710, %v5962
        %v6091 = vadd.f32 %v4840, %v5963
        %v6092 = vadd.f32 %v4970, %v5964
        %v6093 = vadd.f32 %v5100, %v5965
        %v6094 = vadd.f32 %v5230, %v5966
        %v6095 = vadd.f32 %v5360, %v5967
        %v6096 = vadd.f32 %v5490, %v5968
        %v6097 = vadd.f32 %v4583, %v5969
        %v6098 = vadd.f32 %v4713, %v5970
        %v6099 = vadd.f32 %v4843, %v5971
        %v6100 = vadd.f32 %v4973, %v5972
        %v6101 = vadd.f32 %v5103, %v5973
        %v6102 = vadd.f32 %v5233, %v5974
        %v6103 = vadd.f32 %v5363, %v5975
        %v6104 = vadd.f32 %v5493, %v5976
        %v6105 = vadd.f32 %v4586, %v5977
        %v6106 = vadd.f32 %v4716, %v5978
        %v6107 = vadd.f32 %v4846, %v5979
        %v6108 = vadd.f32 %v4976, %v5980
        %v6109 = vadd.f32 %v5106, %v5981
        %v6110 = vadd.f32 %v5236, %v5982
        %v6111 = vadd.f32 %v5366, %v5983
        %v6112 = vadd.f32 %v5496, %v5984
        %v6113 = vadd.f32 %v4589, %v5985
        %v6114 = vadd.f32 %v4719, %v5986
        %v6115 = vadd.f32 %v4849, %v5987
        %v6116 = vadd.f32 %v4979, %v5988
        %v6117 = vadd.f32 %v5109, %v5989
        %v6118 = vadd.f32 %v5239, %v5990
        %v6119 = vadd.f32 %v5369, %v5991
        %v6120 = vadd.f32 %v5499, %v5992
        %v6121 = vadd.f32 %v4592, %v5993
        %v6122 = vadd.f32 %v4722, %v5994
        %v6123 = vadd.f32 %v4852, %v5995
        %v6124 = vadd.f32 %v4982, %v5996
        %v6125 = vadd.f32 %v5112, %v5997
        %v6126 = vadd.f32 %v5242, %v5998
        %v6127 = vadd.f32 %v5372, %v5999
        %v6128 = vadd.f32 %v5502, %v6000
        %v6129 = vadd.f32 %v4595, %v6001
        %v6130 = vadd.f32 %v4725, %v6002
        %v6131 = vadd.f32 %v4855, %v6003
        %v6132 = vadd.f32 %v4985, %v6004
        %v6133 = vadd.f32 %v5115, %v6005
        %v6134 = vadd.f32 %v5245, %v6006
        %v6135 = vadd.f32 %v5375, %v6007
        %v6136 = vadd.f32 %v5505, %v6008
        %v6137 = vadd.f32 %v4598, %v6009
        %v6138 = vadd.f32 %v4728, %v6010
        %v6139 = vadd.f32 %v4858, %v6011
        %v6140 = vadd.f32 %v4988, %v6012
        %v6141 = vadd.f32 %v5118, %v6013
        %v6142 = vadd.f32 %v5248, %v6014
        %v6143 = vadd.f32 %v5378, %v6015
        %v6144 = vadd.f32 %v5508, %v6016
        %v6145 = vadd.f32 %v4601, %v6017
        %v6146 = vadd.f32 %v4731, %v6018
        %v6147 = vadd.f32 %v4861, %v6019
        %v6148 = vadd.f32 %v4991, %v6020
        %v6149 = vadd.f32 %v5121, %v6021
        %v6150 = vadd.f32 %v5251, %v6022
        %v6151 = vadd.f32 %v5381, %v6023
        %v6152 = vadd.f32 %v5511, %v6024
        %v6153 = vmul.f32 %v6025, 0.66285247
        %v6154 = vmul.f32 %v6026, 0.66285247
        %v6155 = vmul.f32 %v6027, 0.66285247
        %v6156 = vmul.f32 %v6028, 0.66285247
        %v6157 = vmul.f32 %v6029, 0.66285247
        %v6158 = vmul.f32 %v6030, 0.66285247
        %v6159 = vmul.f32 %v6031, 0.66285247
        %v6160 = vmul.f32 %v6032, 0.66285247
        %v6161 = vmul.f32 %v6033, 0.66285247
        %v6162 = vmul.f32 %v6034, 0.66285247
        %v6163 = vmul.f32 %v6035, 0.66285247
        %v6164 = vmul.f32 %v6036, 0.66285247
        %v6165 = vmul.f32 %v6037, 0.66285247
        %v6166 = vmul.f32 %v6038, 0.66285247
        %v6167 = vmul.f32 %v6039, 0.66285247
        %v6168 = vmul.f32 %v6040, 0.66285247
        %v6169 = vmul.f32 %v6041, 0.66285247
        %v6170 = vmul.f32 %v6042, 0.66285247
        %v6171 = vmul.f32 %v6043, 0.66285247
        %v6172 = vmul.f32 %v6044, 0.66285247
        %v6173 = vmul.f32 %v6045, 0.66285247
        %v6174 = vmul.f32 %v6046, 0.66285247
        %v6175 = vmul.f32 %v6047, 0.66285247
        %v6176 = vmul.f32 %v6048, 0.66285247
        %v6177 = vmul.f32 %v6049, 0.66285247
        %v6178 = vmul.f32 %v6050, 0.66285247
        %v6179 = vmul.f32 %v6051, 0.66285247
        %v6180 = vmul.f32 %v6052, 0.66285247
        %v6181 = vmul.f32 %v6053, 0.66285247
        %v6182 = vmul.f32 %v6054, 0.66285247
        %v6183 = vmul.f32 %v6055, 0.66285247
        %v6184 = vmul.f32 %v6056, 0.66285247
        %v6185 = vmul.f32 %v6057, 0.66285247
        %v6186 = vmul.f32 %v6058, 0.66285247
        %v6187 = vmul.f32 %v6059, 0.66285247
        %v6188 = vmul.f32 %v6060, 0.66285247
        %v6189 = vmul.f32 %v6061, 0.66285247
        %v6190 = vmul.f32 %v6062, 0.66285247
        %v6191 = vmul.f32 %v6063, 0.66285247
        %v6192 = vmul.f32 %v6064, 0.66285247
        %v6193 = vmul.f32 %v6065, 0.66285247
        %v6194 = vmul.f32 %v6066, 0.66285247
        %v6195 = vmul.f32 %v6067, 0.66285247
        %v6196 = vmul.f32 %v6068, 0.66285247
        %v6197 = vmul.f32 %v6069, 0.66285247
        %v6198 = vmul.f32 %v6070, 0.66285247
        %v6199 = vmul.f32 %v6071, 0.66285247
        %v6200 = vmul.f32 %v6072, 0.66285247
        %v6201 = vmul.f32 %v6073, 0.66285247
        %v6202 = vmul.f32 %v6074, 0.66285247
        %v6203 = vmul.f32 %v6075, 0.66285247
        %v6204 = vmul.f32 %v6076, 0.66285247
        %v6205 = vmul.f32 %v6077, 0.66285247
        %v6206 = vmul.f32 %v6078, 0.66285247
        %v6207 = vmul.f32 %v6079, 0.66285247
        %v6208 = vmul.f32 %v6080, 0.66285247
        %v6209 = vmul.f32 %v6081, 0.66285247
        %v6210 = vmul.f32 %v6082, 0.66285247
        %v6211 = vmul.f32 %v6083, 0.66285247
        %v6212 = vmul.f32 %v6084, 0.66285247
        %v6213 = vmul.f32 %v6085, 0.66285247
        %v6214 = vmul.f32 %v6086, 0.66285247
        %v6215 = vmul.f32 %v6087, 0.66285247
        %v6216 = vmul.f32 %v6088, 0.66285247
        %v6217 = vmul.f32 %v6089, 0.66285247
        %v6218 = vmul.f32 %v6090, 0.66285247
        %v6219 = vmul.f32 %v6091, 0.66285247
        %v6220 = vmul.f32 %v6092, 0.66285247
        %v6221 = vmul.f32 %v6093, 0.66285247
        %v6222 = vmul.f32 %v6094, 0.66285247
        %v6223 = vmul.f32 %v6095, 0.66285247
        %v6224 = vmul.f32 %v6096, 0.66285247
        %v6225 = vmul.f32 %v6097, 0.66285247
        %v6226 = vmul.f32 %v6098, 0.66285247
        %v6227 = vmul.f32 %v6099, 0.66285247
        %v6228 = vmul.f32 %v6100, 0.66285247
        %v6229 = vmul.f32 %v6101, 0.66285247
        %v6230 = vmul.f32 %v6102, 0.66285247
        %v6231 = vmul.f32 %v6103, 0.66285247
        %v6232 = vmul.f32 %v6104, 0.66285247
        %v6233 = vmul.f32 %v6105, 0.66285247
        %v6234 = vmul.f32 %v6106, 0.66285247
        %v6235 = vmul.f32 %v6107, 0.66285247
        %v6236 = vmul.f32 %v6108, 0.66285247
        %v6237 = vmul.f32 %v6109, 0.66285247
        %v6238 = vmul.f32 %v6110, 0.66285247
        %v6239 = vmul.f32 %v6111, 0.66285247
        %v6240 = vmul.f32 %v6112, 0.66285247
        %v6241 = vmul.f32 %v6113, 0.66285247
        %v6242 = vmul.f32 %v6114, 0.66285247
        %v6243 = vmul.f32 %v6115, 0.66285247
        %v6244 = vmul.f32 %v6116, 0.66285247
        %v6245 = vmul.f32 %v6117, 0.66285247
        %v6246 = vmul.f32 %v6118, 0.66285247
        %v6247 = vmul.f32 %v6119, 0.66285247
        %v6248 = vmul.f32 %v6120, 0.66285247
        %v6249 = vmul.f32 %v6121, 0.66285247
        %v6250 = vmul.f32 %v6122, 0.66285247
        %v6251 = vmul.f32 %v6123, 0.66285247
        %v6252 = vmul.f32 %v6124, 0.66285247
        %v6253 = vmul.f32 %v6125, 0.66285247
        %v6254 = vmul.f32 %v6126, 0.66285247
        %v6255 = vmul.f32 %v6127, 0.66285247
        %v6256 = vmul.f32 %v6128, 0.66285247
        %v6257 = vmul.f32 %v6129, 0.66285247
        %v6258 = vmul.f32 %v6130, 0.66285247
        %v6259 = vmul.f32 %v6131, 0.66285247
        %v6260 = vmul.f32 %v6132, 0.66285247
        %v6261 = vmul.f32 %v6133, 0.66285247
        %v6262 = vmul.f32 %v6134, 0.66285247
        %v6263 = vmul.f32 %v6135, 0.66285247
        %v6264 = vmul.f32 %v6136, 0.66285247
        %v6265 = vmul.f32 %v6137, 0.66285247
        %v6266 = vmul.f32 %v6138, 0.66285247
        %v6267 = vmul.f32 %v6139, 0.66285247
        %v6268 = vmul.f32 %v6140, 0.66285247
        %v6269 = vmul.f32 %v6141, 0.66285247
        %v6270 = vmul.f32 %v6142, 0.66285247
        %v6271 = vmul.f32 %v6143, 0.66285247
        %v6272 = vmul.f32 %v6144, 0.66285247
        %v6273 = vmul.f32 %v6145, 0.66285247
        %v6274 = vmul.f32 %v6146, 0.66285247
        %v6275 = vmul.f32 %v6147, 0.66285247
        %v6276 = vmul.f32 %v6148, 0.66285247
        %v6277 = vmul.f32 %v6149, 0.66285247
        %v6278 = vmul.f32 %v6150, 0.66285247
        %v6279 = vmul.f32 %v6151, 0.66285247
        %v6280 = vmul.f32 %v6152, 0.66285247
        %v6281 = vadd.f32 %v6153, 1.0
        %v6282 = vadd.f32 %v6154, 1.0
        %v6283 = vadd.f32 %v6155, 1.0
        %v6284 = vadd.f32 %v6156, 1.0
        %v6285 = vadd.f32 %v6157, 1.0
        %v6286 = vadd.f32 %v6158, 1.0
        %v6287 = vadd.f32 %v6159, 1.0
        %v6288 = vadd.f32 %v6160, 1.0
        %v6289 = vadd.f32 %v6161, 1.0
        %v6290 = vadd.f32 %v6162, 1.0
        %v6291 = vadd.f32 %v6163, 1.0
        %v6292 = vadd.f32 %v6164, 1.0
        %v6293 = vadd.f32 %v6165, 1.0
        %v6294 = vadd.f32 %v6166, 1.0
        %v6295 = vadd.f32 %v6167, 1.0
        %v6296 = vadd.f32 %v6168, 1.0
        %v6297 = vadd.f32 %v6169, 1.0
        %v6298 = vadd.f32 %v6170, 1.0
        %v6299 = vadd.f32 %v6171, 1.0
        %v6300 = vadd.f32 %v6172, 1.0
        %v6301 = vadd.f32 %v6173, 1.0
        %v6302 = vadd.f32 %v6174, 1.0
        %v6303 = vadd.f32 %v6175, 1.0
        %v6304 = vadd.f32 %v6176, 1.0
        %v6305 = vadd.f32 %v6177, 1.0
        %v6306 = vadd.f32 %v6178, 1.0
        %v6307 = vadd.f32 %v6179, 1.0
        %v6308 = vadd.f32 %v6180, 1.0
        %v6309 = vadd.f32 %v6181, 1.0
        %v6310 = vadd.f32 %v6182, 1.0
        %v6311 = vadd.f32 %v6183, 1.0
        %v6312 = vadd.f32 %v6184, 1.0
        %v6313 = vadd.f32 %v6185, 1.0
        %v6314 = vadd.f32 %v6186, 1.0
        %v6315 = vadd.f32 %v6187, 1.0
        %v6316 = vadd.f32 %v6188, 1.0
        %v6317 = vadd.f32 %v6189, 1.0
        %v6318 = vadd.f32 %v6190, 1.0
        %v6319 = vadd.f32 %v6191, 1.0
        %v6320 = vadd.f32 %v6192, 1.0
        %v6321 = vadd.f32 %v6193, 1.0
        %v6322 = vadd.f32 %v6194, 1.0
        %v6323 = vadd.f32 %v6195, 1.0
        %v6324 = vadd.f32 %v6196, 1.0
        %v6325 = vadd.f32 %v6197, 1.0
        %v6326 = vadd.f32 %v6198, 1.0
        %v6327 = vadd.f32 %v6199, 1.0
        %v6328 = vadd.f32 %v6200, 1.0
        %v6329 = vadd.f32 %v6201, 1.0
        %v6330 = vadd.f32 %v6202, 1.0
        %v6331 = vadd.f32 %v6203, 1.0
        %v6332 = vadd.f32 %v6204, 1.0
        %v6333 = vadd.f32 %v6205, 1.0
        %v6334 = vadd.f32 %v6206, 1.0
        %v6335 = vadd.f32 %v6207, 1.0
        %v6336 = vadd.f32 %v6208, 1.0
        %v6337 = vadd.f32 %v6209, 1.0
        %v6338 = vadd.f32 %v6210, 1.0
        %v6339 = vadd.f32 %v6211, 1.0
        %v6340 = vadd.f32 %v6212, 1.0
        %v6341 = vadd.f32 %v6213, 1.0
        %v6342 = vadd.f32 %v6214, 1.0
        %v6343 = vadd.f32 %v6215, 1.0
        %v6344 = vadd.f32 %v6216, 1.0
        %v6345 = vadd.f32 %v6217, 1.0
        %v6346 = vadd.f32 %v6218, 1.0
        %v6347 = vadd.f32 %v6219, 1.0
        %v6348 = vadd.f32 %v6220, 1.0
        %v6349 = vadd.f32 %v6221, 1.0
        %v6350 = vadd.f32 %v6222, 1.0
        %v6351 = vadd.f32 %v6223, 1.0
        %v6352 = vadd.f32 %v6224, 1.0
        %v6353 = vadd.f32 %v6225, 1.0
        %v6354 = vadd.f32 %v6226, 1.0
        %v6355 = vadd.f32 %v6227, 1.0
        %v6356 = vadd.f32 %v6228, 1.0
        %v6357 = vadd.f32 %v6229, 1.0
        %v6358 = vadd.f32 %v6230, 1.0
        %v6359 = vadd.f32 %v6231, 1.0
        %v6360 = vadd.f32 %v6232, 1.0
        %v6361 = vadd.f32 %v6233, 1.0
        %v6362 = vadd.f32 %v6234, 1.0
        %v6363 = vadd.f32 %v6235, 1.0
        %v6364 = vadd.f32 %v6236, 1.0
        %v6365 = vadd.f32 %v6237, 1.0
        %v6366 = vadd.f32 %v6238, 1.0
        %v6367 = vadd.f32 %v6239, 1.0
        %v6368 = vadd.f32 %v6240, 1.0
        %v6369 = vadd.f32 %v6241, 1.0
        %v6370 = vadd.f32 %v6242, 1.0
        %v6371 = vadd.f32 %v6243, 1.0
        %v6372 = vadd.f32 %v6244, 1.0
        %v6373 = vadd.f32 %v6245, 1.0
        %v6374 = vadd.f32 %v6246, 1.0
        %v6375 = vadd.f32 %v6247, 1.0
        %v6376 = vadd.f32 %v6248, 1.0
        %v6377 = vadd.f32 %v6249, 1.0
        %v6378 = vadd.f32 %v6250, 1.0
        %v6379 = vadd.f32 %v6251, 1.0
        %v6380 = vadd.f32 %v6252, 1.0
        %v6381 = vadd.f32 %v6253, 1.0
        %v6382 = vadd.f32 %v6254, 1.0
        %v6383 = vadd.f32 %v6255, 1.0
        %v6384 = vadd.f32 %v6256, 1.0
        %v6385 = vadd.f32 %v6257, 1.0
        %v6386 = vadd.f32 %v6258, 1.0
        %v6387 = vadd.f32 %v6259, 1.0
        %v6388 = vadd.f32 %v6260, 1.0
        %v6389 = vadd.f32 %v6261, 1.0
        %v6390 = vadd.f32 %v6262, 1.0
        %v6391 = vadd.f32 %v6263, 1.0
        %v6392 = vadd.f32 %v6264, 1.0
        %v6393 = vadd.f32 %v6265, 1.0
        %v6394 = vadd.f32 %v6266, 1.0
        %v6395 = vadd.f32 %v6267, 1.0
        %v6396 = vadd.f32 %v6268, 1.0
        %v6397 = vadd.f32 %v6269, 1.0
        %v6398 = vadd.f32 %v6270, 1.0
        %v6399 = vadd.f32 %v6271, 1.0
        %v6400 = vadd.f32 %v6272, 1.0
        %v6401 = vadd.f32 %v6273, 1.0
        %v6402 = vadd.f32 %v6274, 1.0
        %v6403 = vadd.f32 %v6275, 1.0
        %v6404 = vadd.f32 %v6276, 1.0
        %v6405 = vadd.f32 %v6277, 1.0
        %v6406 = vadd.f32 %v6278, 1.0
        %v6407 = vadd.f32 %v6279, 1.0
        %v6408 = vadd.f32 %v6280, 1.0
        %v6409 = vmul.f32 %v5513, %v6281
        %v6410 = vmul.f32 %v5514, %v6282
        %v6411 = vmul.f32 %v5515, %v6283
        %v6412 = vmul.f32 %v5516, %v6284
        %v6413 = vmul.f32 %v5517, %v6285
        %v6414 = vmul.f32 %v5518, %v6286
        %v6415 = vmul.f32 %v5519, %v6287
        %v6416 = vmul.f32 %v5520, %v6288
        %v6417 = vmul.f32 %v5521, %v6289
        %v6418 = vmul.f32 %v5522, %v6290
        %v6419 = vmul.f32 %v5523, %v6291
        %v6420 = vmul.f32 %v5524, %v6292
        %v6421 = vmul.f32 %v5525, %v6293
        %v6422 = vmul.f32 %v5526, %v6294
        %v6423 = vmul.f32 %v5527, %v6295
        %v6424 = vmul.f32 %v5528, %v6296
        %v6425 = vmul.f32 %v5529, %v6297
        %v6426 = vmul.f32 %v5530, %v6298
        %v6427 = vmul.f32 %v5531, %v6299
        %v6428 = vmul.f32 %v5532, %v6300
        %v6429 = vmul.f32 %v5533, %v6301
        %v6430 = vmul.f32 %v5534, %v6302
        %v6431 = vmul.f32 %v5535, %v6303
        %v6432 = vmul.f32 %v5536, %v6304
        %v6433 = vmul.f32 %v5537, %v6305
        %v6434 = vmul.f32 %v5538, %v6306
        %v6435 = vmul.f32 %v5539, %v6307
        %v6436 = vmul.f32 %v5540, %v6308
        %v6437 = vmul.f32 %v5541, %v6309
        %v6438 = vmul.f32 %v5542, %v6310
        %v6439 = vmul.f32 %v5543, %v6311
        %v6440 = vmul.f32 %v5544, %v6312
        %v6441 = vmul.f32 %v5545, %v6313
        %v6442 = vmul.f32 %v5546, %v6314
        %v6443 = vmul.f32 %v5547, %v6315
        %v6444 = vmul.f32 %v5548, %v6316
        %v6445 = vmul.f32 %v5549, %v6317
        %v6446 = vmul.f32 %v5550, %v6318
        %v6447 = vmul.f32 %v5551, %v6319
        %v6448 = vmul.f32 %v5552, %v6320
        %v6449 = vmul.f32 %v5553, %v6321
        %v6450 = vmul.f32 %v5554, %v6322
        %v6451 = vmul.f32 %v5555, %v6323
        %v6452 = vmul.f32 %v5556, %v6324
        %v6453 = vmul.f32 %v5557, %v6325
        %v6454 = vmul.f32 %v5558, %v6326
        %v6455 = vmul.f32 %v5559, %v6327
        %v6456 = vmul.f32 %v5560, %v6328
        %v6457 = vmul.f32 %v5561, %v6329
        %v6458 = vmul.f32 %v5562, %v6330
        %v6459 = vmul.f32 %v5563, %v6331
        %v6460 = vmul.f32 %v5564, %v6332
        %v6461 = vmul.f32 %v5565, %v6333
        %v6462 = vmul.f32 %v5566, %v6334
        %v6463 = vmul.f32 %v5567, %v6335
        %v6464 = vmul.f32 %v5568, %v6336
        %v6465 = vmul.f32 %v5569, %v6337
        %v6466 = vmul.f32 %v5570, %v6338
        %v6467 = vmul.f32 %v5571, %v6339
        %v6468 = vmul.f32 %v5572, %v6340
        %v6469 = vmul.f32 %v5573, %v6341
        %v6470 = vmul.f32 %v5574, %v6342
        %v6471 = vmul.f32 %v5575, %v6343
        %v6472 = vmul.f32 %v5576, %v6344
        %v6473 = vmul.f32 %v5577, %v6345
        %v6474 = vmul.f32 %v5578, %v6346
        %v6475 = vmul.f32 %v5579, %v6347
        %v6476 = vmul.f32 %v5580, %v6348
        %v6477 = vmul.f32 %v5581, %v6349
        %v6478 = vmul.f32 %v5582, %v6350
        %v6479 = vmul.f32 %v5583, %v6351
        %v6480 = vmul.f32 %v5584, %v6352
        %v6481 = vmul.f32 %v5585, %v6353
        %v6482 = vmul.f32 %v5586, %v6354
        %v6483 = vmul.f32 %v5587, %v6355
        %v6484 = vmul.f32 %v5588, %v6356
        %v6485 = vmul.f32 %v5589, %v6357
        %v6486 = vmul.f32 %v5590, %v6358
        %v6487 = vmul.f32 %v5591, %v6359
        %v6488 = vmul.f32 %v5592, %v6360
        %v6489 = vmul.f32 %v5593, %v6361
        %v6490 = vmul.f32 %v5594, %v6362
        %v6491 = vmul.f32 %v5595, %v6363
        %v6492 = vmul.f32 %v5596, %v6364
        %v6493 = vmul.f32 %v5597, %v6365
        %v6494 = vmul.f32 %v5598, %v6366
        %v6495 = vmul.f32 %v5599, %v6367
        %v6496 = vmul.f32 %v5600, %v6368
        %v6497 = vmul.f32 %v5601, %v6369
        %v6498 = vmul.f32 %v5602, %v6370
        %v6499 = vmul.f32 %v5603, %v6371
        %v6500 = vmul.f32 %v5604, %v6372
        %v6501 = vmul.f32 %v5605, %v6373
        %v6502 = vmul.f32 %v5606, %v6374
        %v6503 = vmul.f32 %v5607, %v6375
        %v6504 = vmul.f32 %v5608, %v6376
        %v6505 = vmul.f32 %v5609, %v6377
        %v6506 = vmul.f32 %v5610, %v6378
        %v6507 = vmul.f32 %v5611, %v6379
        %v6508 = vmul.f32 %v5612, %v6380
        %v6509 = vmul.f32 %v5613, %v6381
        %v6510 = vmul.f32 %v5614, %v6382
        %v6511 = vmul.f32 %v5615, %v6383
        %v6512 = vmul.f32 %v5616, %v6384
        %v6513 = vmul.f32 %v5617, %v6385
        %v6514 = vmul.f32 %v5618, %v6386
        %v6515 = vmul.f32 %v5619, %v6387
        %v6516 = vmul.f32 %v5620, %v6388
        %v6517 = vmul.f32 %v5621, %v6389
        %v6518 = vmul.f32 %v5622, %v6390
        %v6519 = vmul.f32 %v5623, %v6391
        %v6520 = vmul.f32 %v5624, %v6392
        %v6521 = vmul.f32 %v5625, %v6393
        %v6522 = vmul.f32 %v5626, %v6394
        %v6523 = vmul.f32 %v5627, %v6395
        %v6524 = vmul.f32 %v5628, %v6396
        %v6525 = vmul.f32 %v5629, %v6397
        %v6526 = vmul.f32 %v5630, %v6398
        %v6527 = vmul.f32 %v5631, %v6399
        %v6528 = vmul.f32 %v5632, %v6400
        %v6529 = vmul.f32 %v5633, %v6401
        %v6530 = vmul.f32 %v5634, %v6402
        %v6531 = vmul.f32 %v5635, %v6403
        %v6532 = vmul.f32 %v5636, %v6404
        %v6533 = vmul.f32 %v5637, %v6405
        %v6534 = vmul.f32 %v5638, %v6406
        %v6535 = vmul.f32 %v5639, %v6407
        %v6536 = vmul.f32 %v5640, %v6408
        %v6537 = vld [vmem:[%s565] sm:$0xff]
        %v6538 = vld [vmem:[%s565 + $0x8] sm:$0xff]
        %v6539 = vld [vmem:[%s565 + $0x10] sm:$0xff]
        %v6540 = vld [vmem:[%s565 + $0x18] sm:$0xff]
        %v6541 = vld [vmem:[%s565 + $0x20] sm:$0xff]
        %v6542 = vld [vmem:[%s565 + $0x28] sm:$0xff]
        %v6543 = vld [vmem:[%s565 + $0x30] sm:$0xff]
        %v6544 = vld [vmem:[%s565 + $0x38] sm:$0xff]
        %v6545 = vld [vmem:[%s565 + $0x40] sm:$0xff]
        %v6546 = vld [vmem:[%s565 + $0x48] sm:$0xff]
        %v6547 = vld [vmem:[%s565 + $0x50] sm:$0xff]
        %v6548 = vld [vmem:[%s565 + $0x58] sm:$0xff]
        %v6549 = vld [vmem:[%s565 + $0x60] sm:$0xff]
        %v6550 = vld [vmem:[%s565 + $0x68] sm:$0xff]
        %v6551 = vld [vmem:[%s565 + $0x70] sm:$0xff]
        %v6552 = vld [vmem:[%s565 + $0x78] sm:$0xff]
        %v6553 = vld [vmem:[%s565 + $0x80] sm:$0xff]
        %v6554 = vld [vmem:[%s565 + $0x88] sm:$0xff]
        %v6555 = vld [vmem:[%s565 + $0x90] sm:$0xff]
        %v6556 = vld [vmem:[%s565 + $0x98] sm:$0xff]
        %v6557 = vld [vmem:[%s565 + $0xa0] sm:$0xff]
        %v6558 = vld [vmem:[%s565 + $0xa8] sm:$0xff]
        %v6559 = vld [vmem:[%s565 + $0xb0] sm:$0xff]
        %v6560 = vld [vmem:[%s565 + $0xb8] sm:$0xff]
        %v6561 = vld [vmem:[%s565 + $0xc0] sm:$0xff]
        %v6562 = vld [vmem:[%s565 + $0xc8] sm:$0xff]
        %v6563 = vld [vmem:[%s565 + $0xd0] sm:$0xff]
        %v6564 = vld [vmem:[%s565 + $0xd8] sm:$0xff]
        %v6565 = vld [vmem:[%s565 + $0xe0] sm:$0xff]
        %v6566 = vld [vmem:[%s565 + $0xe8] sm:$0xff]
        %v6567 = vld [vmem:[%s565 + $0xf0] sm:$0xff]
        %v6568 = vld [vmem:[%s565 + $0xf8] sm:$0xff]
        %v6569 = vld [vmem:[%s565 + $0x100] sm:$0xff]
        %v6570 = vld [vmem:[%s565 + $0x108] sm:$0xff]
        %v6571 = vld [vmem:[%s565 + $0x110] sm:$0xff]
        %v6572 = vld [vmem:[%s565 + $0x118] sm:$0xff]
        %v6573 = vld [vmem:[%s565 + $0x120] sm:$0xff]
        %v6574 = vld [vmem:[%s565 + $0x128] sm:$0xff]
        %v6575 = vld [vmem:[%s565 + $0x130] sm:$0xff]
        %v6576 = vld [vmem:[%s565 + $0x138] sm:$0xff]
        %v6577 = vld [vmem:[%s565 + $0x140] sm:$0xff]
        %v6578 = vld [vmem:[%s565 + $0x148] sm:$0xff]
        %v6579 = vld [vmem:[%s565 + $0x150] sm:$0xff]
        %v6580 = vld [vmem:[%s565 + $0x158] sm:$0xff]
        %v6581 = vld [vmem:[%s565 + $0x160] sm:$0xff]
        %v6582 = vld [vmem:[%s565 + $0x168] sm:$0xff]
        %v6583 = vld [vmem:[%s565 + $0x170] sm:$0xff]
        %v6584 = vld [vmem:[%s565 + $0x178] sm:$0xff]
        %v6585 = vld [vmem:[%s565 + $0x180] sm:$0xff]
        %v6586 = vld [vmem:[%s565 + $0x188] sm:$0xff]
        %v6587 = vld [vmem:[%s565 + $0x190] sm:$0xff]
        %v6588 = vld [vmem:[%s565 + $0x198] sm:$0xff]
        %v6589 = vld [vmem:[%s565 + $0x1a0] sm:$0xff]
        %v6590 = vld [vmem:[%s565 + $0x1a8] sm:$0xff]
        %v6591 = vld [vmem:[%s565 + $0x1b0] sm:$0xff]
        %v6592 = vld [vmem:[%s565 + $0x1b8] sm:$0xff]
        %v6593 = vld [vmem:[%s565 + $0x1c0] sm:$0xff]
        %v6594 = vld [vmem:[%s565 + $0x1c8] sm:$0xff]
        %v6595 = vld [vmem:[%s565 + $0x1d0] sm:$0xff]
        %v6596 = vld [vmem:[%s565 + $0x1d8] sm:$0xff]
        %v6597 = vld [vmem:[%s565 + $0x1e0] sm:$0xff]
        %v6598 = vld [vmem:[%s565 + $0x1e8] sm:$0xff]
        %v6599 = vld [vmem:[%s565 + $0x1f0] sm:$0xff]
        %v6600 = vld [vmem:[%s565 + $0x1f8] sm:$0xff]
        %v6601 = vld [vmem:[%s565 + $0x200] sm:$0xff]
        %v6602 = vld [vmem:[%s565 + $0x208] sm:$0xff]
        %v6603 = vld [vmem:[%s565 + $0x210] sm:$0xff]
        %v6604 = vld [vmem:[%s565 + $0x218] sm:$0xff]
        %v6605 = vld [vmem:[%s565 + $0x220] sm:$0xff]
        %v6606 = vld [vmem:[%s565 + $0x228] sm:$0xff]
        %v6607 = vld [vmem:[%s565 + $0x230] sm:$0xff]
        %v6608 = vld [vmem:[%s565 + $0x238] sm:$0xff]
        %v6609 = vld [vmem:[%s565 + $0x240] sm:$0xff]
        %v6610 = vld [vmem:[%s565 + $0x248] sm:$0xff]
        %v6611 = vld [vmem:[%s565 + $0x250] sm:$0xff]
        %v6612 = vld [vmem:[%s565 + $0x258] sm:$0xff]
        %v6613 = vld [vmem:[%s565 + $0x260] sm:$0xff]
        %v6614 = vld [vmem:[%s565 + $0x268] sm:$0xff]
        %v6615 = vld [vmem:[%s565 + $0x270] sm:$0xff]
        %v6616 = vld [vmem:[%s565 + $0x278] sm:$0xff]
        %v6617 = vld [vmem:[%s565 + $0x280] sm:$0xff]
        %v6618 = vld [vmem:[%s565 + $0x288] sm:$0xff]
        %v6619 = vld [vmem:[%s565 + $0x290] sm:$0xff]
        %v6620 = vld [vmem:[%s565 + $0x298] sm:$0xff]
        %v6621 = vld [vmem:[%s565 + $0x2a0] sm:$0xff]
        %v6622 = vld [vmem:[%s565 + $0x2a8] sm:$0xff]
        %v6623 = vld [vmem:[%s565 + $0x2b0] sm:$0xff]
        %v6624 = vld [vmem:[%s565 + $0x2b8] sm:$0xff]
        %v6625 = vld [vmem:[%s565 + $0x2c0] sm:$0xff]
        %v6626 = vld [vmem:[%s565 + $0x2c8] sm:$0xff]
        %v6627 = vld [vmem:[%s565 + $0x2d0] sm:$0xff]
        %v6628 = vld [vmem:[%s565 + $0x2d8] sm:$0xff]
        %v6629 = vld [vmem:[%s565 + $0x2e0] sm:$0xff]
        %v6630 = vld [vmem:[%s565 + $0x2e8] sm:$0xff]
        %v6631 = vld [vmem:[%s565 + $0x2f0] sm:$0xff]
        %v6632 = vld [vmem:[%s565 + $0x2f8] sm:$0xff]
        %v6633 = vld [vmem:[%s565 + $0x300] sm:$0xff]
        %v6634 = vld [vmem:[%s565 + $0x308] sm:$0xff]
        %v6635 = vld [vmem:[%s565 + $0x310] sm:$0xff]
        %v6636 = vld [vmem:[%s565 + $0x318] sm:$0xff]
        %v6637 = vld [vmem:[%s565 + $0x320] sm:$0xff]
        %v6638 = vld [vmem:[%s565 + $0x328] sm:$0xff]
        %v6639 = vld [vmem:[%s565 + $0x330] sm:$0xff]
        %v6640 = vld [vmem:[%s565 + $0x338] sm:$0xff]
        %v6641 = vld [vmem:[%s565 + $0x340] sm:$0xff]
        %v6642 = vld [vmem:[%s565 + $0x348] sm:$0xff]
        %v6643 = vld [vmem:[%s565 + $0x350] sm:$0xff]
        %v6644 = vld [vmem:[%s565 + $0x358] sm:$0xff]
        %v6645 = vld [vmem:[%s565 + $0x360] sm:$0xff]
        %v6646 = vld [vmem:[%s565 + $0x368] sm:$0xff]
        %v6647 = vld [vmem:[%s565 + $0x370] sm:$0xff]
        %v6648 = vld [vmem:[%s565 + $0x378] sm:$0xff]
        %v6649 = vld [vmem:[%s565 + $0x380] sm:$0xff]
        %v6650 = vld [vmem:[%s565 + $0x388] sm:$0xff]
        %v6651 = vld [vmem:[%s565 + $0x390] sm:$0xff]
        %v6652 = vld [vmem:[%s565 + $0x398] sm:$0xff]
        %v6653 = vld [vmem:[%s565 + $0x3a0] sm:$0xff]
        %v6654 = vld [vmem:[%s565 + $0x3a8] sm:$0xff]
        %v6655 = vld [vmem:[%s565 + $0x3b0] sm:$0xff]
        %v6656 = vld [vmem:[%s565 + $0x3b8] sm:$0xff]
        %v6657 = vld [vmem:[%s565 + $0x3c0] sm:$0xff]
        %v6658 = vld [vmem:[%s565 + $0x3c8] sm:$0xff]
        %v6659 = vld [vmem:[%s565 + $0x3d0] sm:$0xff]
        %v6660 = vld [vmem:[%s565 + $0x3d8] sm:$0xff]
        %v6661 = vld [vmem:[%s565 + $0x3e0] sm:$0xff]
        %v6662 = vld [vmem:[%s565 + $0x3e8] sm:$0xff]
        %v6663 = vld [vmem:[%s565 + $0x3f0] sm:$0xff]
        %v6664 = vld [vmem:[%s565 + $0x3f8] sm:$0xff]
        %v6665 = vld [vmem:[%s565 + $0x400] sm:$0xff]
        %v6666 = vld [vmem:[%s565 + $0x408] sm:$0xff]
        %v6667 = vld [vmem:[%s565 + $0x410] sm:$0xff]
        %v6668 = vld [vmem:[%s565 + $0x418] sm:$0xff]
        %v6669 = vld [vmem:[%s565 + $0x420] sm:$0xff]
        %v6670 = vld [vmem:[%s565 + $0x428] sm:$0xff]
        %v6671 = vld [vmem:[%s565 + $0x430] sm:$0xff]
        %v6672 = vld [vmem:[%s565 + $0x438] sm:$0xff]
        %v6673 = vld [vmem:[%s565 + $0x440] sm:$0xff]
        %v6674 = vld [vmem:[%s565 + $0x448] sm:$0xff]
        %v6675 = vld [vmem:[%s565 + $0x450] sm:$0xff]
        %v6676 = vld [vmem:[%s565 + $0x458] sm:$0xff]
        %v6677 = vld [vmem:[%s565 + $0x460] sm:$0xff]
        %v6678 = vld [vmem:[%s565 + $0x468] sm:$0xff]
        %v6679 = vld [vmem:[%s565 + $0x470] sm:$0xff]
        %v6680 = vld [vmem:[%s565 + $0x478] sm:$0xff]
        %v6681 = vld [vmem:[%s565 + $0x480] sm:$0xff]
        %v6682 = vld [vmem:[%s565 + $0x488] sm:$0xff]
        %v6683 = vld [vmem:[%s565 + $0x490] sm:$0xff]
        %v6684 = vld [vmem:[%s565 + $0x498] sm:$0xff]
        %v6685 = vld [vmem:[%s565 + $0x4a0] sm:$0xff]
        %v6686 = vld [vmem:[%s565 + $0x4a8] sm:$0xff]
        %v6687 = vld [vmem:[%s565 + $0x4b0] sm:$0xff]
        %v6688 = vld [vmem:[%s565 + $0x4b8] sm:$0xff]
        %v6689 = vld [vmem:[%s565 + $0x4c0] sm:$0xff]
        %v6690 = vld [vmem:[%s565 + $0x4c8] sm:$0xff]
        %v6691 = vld [vmem:[%s565 + $0x4d0] sm:$0xff]
        %v6692 = vld [vmem:[%s565 + $0x4d8] sm:$0xff]
        %v6693 = vld [vmem:[%s565 + $0x4e0] sm:$0xff]
        %v6694 = vld [vmem:[%s565 + $0x4e8] sm:$0xff]
        %v6695 = vld [vmem:[%s565 + $0x4f0] sm:$0xff]
        %v6696 = vld [vmem:[%s565 + $0x4f8] sm:$0xff]
        %v6697 = vld [vmem:[%s565 + $0x500] sm:$0xff]
        %v6698 = vld [vmem:[%s565 + $0x508] sm:$0xff]
        %v6699 = vld [vmem:[%s565 + $0x510] sm:$0xff]
        %v6700 = vld [vmem:[%s565 + $0x518] sm:$0xff]
        %v6701 = vld [vmem:[%s565 + $0x520] sm:$0xff]
        %v6702 = vld [vmem:[%s565 + $0x528] sm:$0xff]
        %v6703 = vld [vmem:[%s565 + $0x530] sm:$0xff]
        %v6704 = vld [vmem:[%s565 + $0x538] sm:$0xff]
        %v6705 = vld [vmem:[%s565 + $0x540] sm:$0xff]
        %v6706 = vld [vmem:[%s565 + $0x548] sm:$0xff]
        %v6707 = vld [vmem:[%s565 + $0x550] sm:$0xff]
        %v6708 = vld [vmem:[%s565 + $0x558] sm:$0xff]
        %v6709 = vld [vmem:[%s565 + $0x560] sm:$0xff]
        %v6710 = vld [vmem:[%s565 + $0x568] sm:$0xff]
        %v6711 = vld [vmem:[%s565 + $0x570] sm:$0xff]
        %v6712 = vld [vmem:[%s565 + $0x578] sm:$0xff]
        %v6713 = vld [vmem:[%s565 + $0x580] sm:$0xff]
        %v6714 = vld [vmem:[%s565 + $0x588] sm:$0xff]
        %v6715 = vld [vmem:[%s565 + $0x590] sm:$0xff]
        %v6716 = vld [vmem:[%s565 + $0x598] sm:$0xff]
        %v6717 = vld [vmem:[%s565 + $0x5a0] sm:$0xff]
        %v6718 = vld [vmem:[%s565 + $0x5a8] sm:$0xff]
        %v6719 = vld [vmem:[%s565 + $0x5b0] sm:$0xff]
        %v6720 = vld [vmem:[%s565 + $0x5b8] sm:$0xff]
        %v6721 = vld [vmem:[%s565 + $0x5c0] sm:$0xff]
        %v6722 = vld [vmem:[%s565 + $0x5c8] sm:$0xff]
        %v6723 = vld [vmem:[%s565 + $0x5d0] sm:$0xff]
        %v6724 = vld [vmem:[%s565 + $0x5d8] sm:$0xff]
        %v6725 = vld [vmem:[%s565 + $0x5e0] sm:$0xff]
        %v6726 = vld [vmem:[%s565 + $0x5e8] sm:$0xff]
        %v6727 = vld [vmem:[%s565 + $0x5f0] sm:$0xff]
        %v6728 = vld [vmem:[%s565 + $0x5f8] sm:$0xff]
        %v6729 = vld [vmem:[%s565 + $0x600] sm:$0xff]
        %v6730 = vld [vmem:[%s565 + $0x608] sm:$0xff]
        %v6731 = vld [vmem:[%s565 + $0x610] sm:$0xff]
        %v6732 = vld [vmem:[%s565 + $0x618] sm:$0xff]
        %v6733 = vld [vmem:[%s565 + $0x620] sm:$0xff]
        %v6734 = vld [vmem:[%s565 + $0x628] sm:$0xff]
        %v6735 = vld [vmem:[%s565 + $0x630] sm:$0xff]
        %v6736 = vld [vmem:[%s565 + $0x638] sm:$0xff]
        %v6737 = vld [vmem:[%s565 + $0x640] sm:$0xff]
        %v6738 = vld [vmem:[%s565 + $0x648] sm:$0xff]
        %v6739 = vld [vmem:[%s565 + $0x650] sm:$0xff]
        %v6740 = vld [vmem:[%s565 + $0x658] sm:$0xff]
        %v6741 = vld [vmem:[%s565 + $0x660] sm:$0xff]
        %v6742 = vld [vmem:[%s565 + $0x668] sm:$0xff]
        %v6743 = vld [vmem:[%s565 + $0x670] sm:$0xff]
        %v6744 = vld [vmem:[%s565 + $0x678] sm:$0xff]
        %v6745 = vld [vmem:[%s565 + $0x680] sm:$0xff]
        %v6746 = vld [vmem:[%s565 + $0x688] sm:$0xff]
        %v6747 = vld [vmem:[%s565 + $0x690] sm:$0xff]
        %v6748 = vld [vmem:[%s565 + $0x698] sm:$0xff]
        %v6749 = vld [vmem:[%s565 + $0x6a0] sm:$0xff]
        %v6750 = vld [vmem:[%s565 + $0x6a8] sm:$0xff]
        %v6751 = vld [vmem:[%s565 + $0x6b0] sm:$0xff]
        %v6752 = vld [vmem:[%s565 + $0x6b8] sm:$0xff]
        %v6753 = vld [vmem:[%s565 + $0x6c0] sm:$0xff]
        %v6754 = vld [vmem:[%s565 + $0x6c8] sm:$0xff]
        %v6755 = vld [vmem:[%s565 + $0x6d0] sm:$0xff]
        %v6756 = vld [vmem:[%s565 + $0x6d8] sm:$0xff]
        %v6757 = vld [vmem:[%s565 + $0x6e0] sm:$0xff]
        %v6758 = vld [vmem:[%s565 + $0x6e8] sm:$0xff]
        %v6759 = vld [vmem:[%s565 + $0x6f0] sm:$0xff]
        %v6760 = vld [vmem:[%s565 + $0x6f8] sm:$0xff]
        %v6761 = vld [vmem:[%s565 + $0x700] sm:$0xff]
        %v6762 = vld [vmem:[%s565 + $0x708] sm:$0xff]
        %v6763 = vld [vmem:[%s565 + $0x710] sm:$0xff]
        %v6764 = vld [vmem:[%s565 + $0x718] sm:$0xff]
        %v6765 = vld [vmem:[%s565 + $0x720] sm:$0xff]
        %v6766 = vld [vmem:[%s565 + $0x728] sm:$0xff]
        %v6767 = vld [vmem:[%s565 + $0x730] sm:$0xff]
        %v6768 = vld [vmem:[%s565 + $0x738] sm:$0xff]
        %v6769 = vld [vmem:[%s565 + $0x740] sm:$0xff]
        %v6770 = vld [vmem:[%s565 + $0x748] sm:$0xff]
        %v6771 = vld [vmem:[%s565 + $0x750] sm:$0xff]
        %v6772 = vld [vmem:[%s565 + $0x758] sm:$0xff]
        %v6773 = vld [vmem:[%s565 + $0x760] sm:$0xff]
        %v6774 = vld [vmem:[%s565 + $0x768] sm:$0xff]
        %v6775 = vld [vmem:[%s565 + $0x770] sm:$0xff]
        %v6776 = vld [vmem:[%s565 + $0x778] sm:$0xff]
        %v6777 = vld [vmem:[%s565 + $0x780] sm:$0xff]
        %v6778 = vld [vmem:[%s565 + $0x788] sm:$0xff]
        %v6779 = vld [vmem:[%s565 + $0x790] sm:$0xff]
        %v6780 = vld [vmem:[%s565 + $0x798] sm:$0xff]
        %v6781 = vld [vmem:[%s565 + $0x7a0] sm:$0xff]
        %v6782 = vld [vmem:[%s565 + $0x7a8] sm:$0xff]
        %v6783 = vld [vmem:[%s565 + $0x7b0] sm:$0xff]
        %v6784 = vld [vmem:[%s565 + $0x7b8] sm:$0xff]
        %v6785 = vld [vmem:[%s565 + $0x7c0] sm:$0xff]
        %v6786 = vld [vmem:[%s565 + $0x7c8] sm:$0xff]
        %v6787 = vld [vmem:[%s565 + $0x7d0] sm:$0xff]
        %v6788 = vld [vmem:[%s565 + $0x7d8] sm:$0xff]
        %v6789 = vld [vmem:[%s565 + $0x7e0] sm:$0xff]
        %v6790 = vld [vmem:[%s565 + $0x7e8] sm:$0xff]
        %v6791 = vld [vmem:[%s565 + $0x7f0] sm:$0xff]
        %v6792 = vld [vmem:[%s565 + $0x7f8] sm:$0xff]
        %v6793 = vld [vmem:[%s707] sm:$0x3]
        %v6795 = vperm.slane %v6793, 0
        %v6796 = vperm.slane %v6793, 1
        %6799 = vmatpush.msra.mxu0 %v6567
        %6800 = vmatpush.msra.mxu0 %v6565
        %6801 = vmatpush.msra.mxu0 %v6563
        %6802 = vmatpush.msra.mxu0 %v6561
        %6803 = vmatpush.msra.mxu0 %v6559
        %6804 = vmatpush.msra.mxu0 %v6557
        %6805 = vmatpush.msra.mxu0 %v6555
        %6806 = vmatpush.msra.mxu0 %v6553
        %6807 = vmatpush.msra.mxu0 %v6551
        %6808 = vmatpush.msra.mxu0 %v6549
        %6809 = vmatpush.msra.mxu0 %v6547
        %6810 = vmatpush.msra.mxu0 %v6545
        %6811 = vmatpush.msra.mxu0 %v6543
        %6812 = vmatpush.msra.mxu0 %v6541
        %6813 = vmatpush.msra.mxu0 %v6539
        %6814 = vmatpush.msra.mxu0 %v6537
        %6815 = vmatmul.f32.gmra.mxu0 %v6409
        %v6816 = vpop.f32.mrf.mxu0
        %v6817 = vadd.f32 %v6795, %v6816
        %6818 = vmatmul.f32.gmra.mxu0 %v6417
        %v6819 = vpop.f32.mrf.mxu0
        %v6820 = vadd.f32 %v6795, %v6819
        %6821 = vmatmul.f32.gmra.mxu0 %v6425
        %v6822 = vpop.f32.mrf.mxu0
        %v6823 = vadd.f32 %v6795, %v6822
        %6824 = vmatmul.f32.gmra.mxu0 %v6433
        %v6825 = vpop.f32.mrf.mxu0
        %v6826 = vadd.f32 %v6795, %v6825
        %6827 = vmatmul.f32.gmra.mxu0 %v6441
        %v6828 = vpop.f32.mrf.mxu0
        %v6829 = vadd.f32 %v6795, %v6828
        %6830 = vmatmul.f32.gmra.mxu0 %v6449
        %v6831 = vpop.f32.mrf.mxu0
        %v6832 = vadd.f32 %v6795, %v6831
        %6833 = vmatmul.f32.gmra.mxu0 %v6457
        %v6834 = vpop.f32.mrf.mxu0
        %v6835 = vadd.f32 %v6795, %v6834
        %6836 = vmatmul.f32.gmra.mxu0 %v6465
        %v6837 = vpop.f32.mrf.mxu0
        %v6838 = vadd.f32 %v6795, %v6837
        %6839 = vmatmul.f32.gmra.mxu0 %v6473
        %v6840 = vpop.f32.mrf.mxu0
        %v6841 = vadd.f32 %v6795, %v6840
        %6842 = vmatmul.f32.gmra.mxu0 %v6481
        %v6843 = vpop.f32.mrf.mxu0
        %v6844 = vadd.f32 %v6795, %v6843
        %6845 = vmatmul.f32.gmra.mxu0 %v6489
        %v6846 = vpop.f32.mrf.mxu0
        %v6847 = vadd.f32 %v6795, %v6846
        %6848 = vmatmul.f32.gmra.mxu0 %v6497
        %v6849 = vpop.f32.mrf.mxu0
        %v6850 = vadd.f32 %v6795, %v6849
        %6851 = vmatmul.f32.gmra.mxu0 %v6505
        %v6852 = vpop.f32.mrf.mxu0
        %v6853 = vadd.f32 %v6795, %v6852
        %6854 = vmatmul.f32.gmra.mxu0 %v6513
        %v6855 = vpop.f32.mrf.mxu0
        %v6856 = vadd.f32 %v6795, %v6855
        %6857 = vmatmul.f32.gmra.mxu0 %v6521
        %v6858 = vpop.f32.mrf.mxu0
        %v6859 = vadd.f32 %v6795, %v6858
        %6860 = vmatmul.f32.gmra.mxu0 %v6529
        %v6861 = vpop.f32.mrf.mxu0
        %v6862 = vadd.f32 %v6795, %v6861
        %6863 = vdwg.mxu0
        %6864 = vmatpush.msra.mxu0 %v6599
        %6865 = vmatpush.msra.mxu0 %v6597
        %6866 = vmatpush.msra.mxu0 %v6595
        %6867 = vmatpush.msra.mxu0 %v6593
        %6868 = vmatpush.msra.mxu0 %v6591
        %6869 = vmatpush.msra.mxu0 %v6589
        %6870 = vmatpush.msra.mxu0 %v6587
        %6871 = vmatpush.msra.mxu0 %v6585
        %6872 = vmatpush.msra.mxu0 %v6583
        %6873 = vmatpush.msra.mxu0 %v6581
        %6874 = vmatpush.msra.mxu0 %v6579
        %6875 = vmatpush.msra.mxu0 %v6577
        %6876 = vmatpush.msra.mxu0 %v6575
        %6877 = vmatpush.msra.mxu0 %v6573
        %6878 = vmatpush.msra.mxu0 %v6571
        %6879 = vmatpush.msra.mxu0 %v6569
        %6880 = vmatmul.f32.gmra.mxu0 %v6410
        %v6881 = vpop.f32.mrf.mxu0
        %v6882 = vadd.f32 %v6817, %v6881
        %6883 = vmatmul.f32.gmra.mxu0 %v6418
        %v6884 = vpop.f32.mrf.mxu0
        %v6885 = vadd.f32 %v6820, %v6884
        %6886 = vmatmul.f32.gmra.mxu0 %v6426
        %v6887 = vpop.f32.mrf.mxu0
        %v6888 = vadd.f32 %v6823, %v6887
        %6889 = vmatmul.f32.gmra.mxu0 %v6434
        %v6890 = vpop.f32.mrf.mxu0
        %v6891 = vadd.f32 %v6826, %v6890
        %6892 = vmatmul.f32.gmra.mxu0 %v6442
        %v6893 = vpop.f32.mrf.mxu0
        %v6894 = vadd.f32 %v6829, %v6893
        %6895 = vmatmul.f32.gmra.mxu0 %v6450
        %v6896 = vpop.f32.mrf.mxu0
        %v6897 = vadd.f32 %v6832, %v6896
        %6898 = vmatmul.f32.gmra.mxu0 %v6458
        %v6899 = vpop.f32.mrf.mxu0
        %v6900 = vadd.f32 %v6835, %v6899
        %6901 = vmatmul.f32.gmra.mxu0 %v6466
        %v6902 = vpop.f32.mrf.mxu0
        %v6903 = vadd.f32 %v6838, %v6902
        %6904 = vmatmul.f32.gmra.mxu0 %v6474
        %v6905 = vpop.f32.mrf.mxu0
        %v6906 = vadd.f32 %v6841, %v6905
        %6907 = vmatmul.f32.gmra.mxu0 %v6482
        %v6908 = vpop.f32.mrf.mxu0
        %v6909 = vadd.f32 %v6844, %v6908
        %6910 = vmatmul.f32.gmra.mxu0 %v6490
        %v6911 = vpop.f32.mrf.mxu0
        %v6912 = vadd.f32 %v6847, %v6911
        %6913 = vmatmul.f32.gmra.mxu0 %v6498
        %v6914 = vpop.f32.mrf.mxu0
        %v6915 = vadd.f32 %v6850, %v6914
        %6916 = vmatmul.f32.gmra.mxu0 %v6506
        %v6917 = vpop.f32.mrf.mxu0
        %v6918 = vadd.f32 %v6853, %v6917
        %6919 = vmatmul.f32.gmra.mxu0 %v6514
        %v6920 = vpop.f32.mrf.mxu0
        %v6921 = vadd.f32 %v6856, %v6920
        %6922 = vmatmul.f32.gmra.mxu0 %v6522
        %v6923 = vpop.f32.mrf.mxu0
        %v6924 = vadd.f32 %v6859, %v6923
        %6925 = vmatmul.f32.gmra.mxu0 %v6530
        %v6926 = vpop.f32.mrf.mxu0
        %v6927 = vadd.f32 %v6862, %v6926
        %6928 = vdwg.mxu0
        %6929 = vmatpush.msra.mxu0 %v6631
        %6930 = vmatpush.msra.mxu0 %v6629
        %6931 = vmatpush.msra.mxu0 %v6627
        %6932 = vmatpush.msra.mxu0 %v6625
        %6933 = vmatpush.msra.mxu0 %v6623
        %6934 = vmatpush.msra.mxu0 %v6621
        %6935 = vmatpush.msra.mxu0 %v6619
        %6936 = vmatpush.msra.mxu0 %v6617
        %6937 = vmatpush.msra.mxu0 %v6615
        %6938 = vmatpush.msra.mxu0 %v6613
        %6939 = vmatpush.msra.mxu0 %v6611
        %6940 = vmatpush.msra.mxu0 %v6609
        %6941 = vmatpush.msra.mxu0 %v6607
        %6942 = vmatpush.msra.mxu0 %v6605
        %6943 = vmatpush.msra.mxu0 %v6603
        %6944 = vmatpush.msra.mxu0 %v6601
        %6945 = vmatmul.f32.gmra.mxu0 %v6411
        %v6946 = vpop.f32.mrf.mxu0
        %v6947 = vadd.f32 %v6882, %v6946
        %6948 = vmatmul.f32.gmra.mxu0 %v6419
        %v6949 = vpop.f32.mrf.mxu0
        %v6950 = vadd.f32 %v6885, %v6949
        %6951 = vmatmul.f32.gmra.mxu0 %v6427
        %v6952 = vpop.f32.mrf.mxu0
        %v6953 = vadd.f32 %v6888, %v6952
        %6954 = vmatmul.f32.gmra.mxu0 %v6435
        %v6955 = vpop.f32.mrf.mxu0
        %v6956 = vadd.f32 %v6891, %v6955
        %6957 = vmatmul.f32.gmra.mxu0 %v6443
        %v6958 = vpop.f32.mrf.mxu0
        %v6959 = vadd.f32 %v6894, %v6958
        %6960 = vmatmul.f32.gmra.mxu0 %v6451
        %v6961 = vpop.f32.mrf.mxu0
        %v6962 = vadd.f32 %v6897, %v6961
        %6963 = vmatmul.f32.gmra.mxu0 %v6459
        %v6964 = vpop.f32.mrf.mxu0
        %v6965 = vadd.f32 %v6900, %v6964
        %6966 = vmatmul.f32.gmra.mxu0 %v6467
        %v6967 = vpop.f32.mrf.mxu0
        %v6968 = vadd.f32 %v6903, %v6967
        %6969 = vmatmul.f32.gmra.mxu0 %v6475
        %v6970 = vpop.f32.mrf.mxu0
        %v6971 = vadd.f32 %v6906, %v6970
        %6972 = vmatmul.f32.gmra.mxu0 %v6483
        %v6973 = vpop.f32.mrf.mxu0
        %v6974 = vadd.f32 %v6909, %v6973
        %6975 = vmatmul.f32.gmra.mxu0 %v6491
        %v6976 = vpop.f32.mrf.mxu0
        %v6977 = vadd.f32 %v6912, %v6976
        %6978 = vmatmul.f32.gmra.mxu0 %v6499
        %v6979 = vpop.f32.mrf.mxu0
        %v6980 = vadd.f32 %v6915, %v6979
        %6981 = vmatmul.f32.gmra.mxu0 %v6507
        %v6982 = vpop.f32.mrf.mxu0
        %v6983 = vadd.f32 %v6918, %v6982
        %6984 = vmatmul.f32.gmra.mxu0 %v6515
        %v6985 = vpop.f32.mrf.mxu0
        %v6986 = vadd.f32 %v6921, %v6985
        %6987 = vmatmul.f32.gmra.mxu0 %v6523
        %v6988 = vpop.f32.mrf.mxu0
        %v6989 = vadd.f32 %v6924, %v6988
        %6990 = vmatmul.f32.gmra.mxu0 %v6531
        %v6991 = vpop.f32.mrf.mxu0
        %v6992 = vadd.f32 %v6927, %v6991
        %6993 = vdwg.mxu0
        %6994 = vmatpush.msra.mxu0 %v6663
        %6995 = vmatpush.msra.mxu0 %v6661
        %6996 = vmatpush.msra.mxu0 %v6659
        %6997 = vmatpush.msra.mxu0 %v6657
        %6998 = vmatpush.msra.mxu0 %v6655
        %6999 = vmatpush.msra.mxu0 %v6653
        %7000 = vmatpush.msra.mxu0 %v6651
        %7001 = vmatpush.msra.mxu0 %v6649
        %7002 = vmatpush.msra.mxu0 %v6647
        %7003 = vmatpush.msra.mxu0 %v6645
        %7004 = vmatpush.msra.mxu0 %v6643
        %7005 = vmatpush.msra.mxu0 %v6641
        %7006 = vmatpush.msra.mxu0 %v6639
        %7007 = vmatpush.msra.mxu0 %v6637
        %7008 = vmatpush.msra.mxu0 %v6635
        %7009 = vmatpush.msra.mxu0 %v6633
        %7010 = vmatmul.f32.gmra.mxu0 %v6412
        %v7011 = vpop.f32.mrf.mxu0
        %v7012 = vadd.f32 %v6947, %v7011
        %7013 = vmatmul.f32.gmra.mxu0 %v6420
        %v7014 = vpop.f32.mrf.mxu0
        %v7015 = vadd.f32 %v6950, %v7014
        %7016 = vmatmul.f32.gmra.mxu0 %v6428
        %v7017 = vpop.f32.mrf.mxu0
        %v7018 = vadd.f32 %v6953, %v7017
        %7019 = vmatmul.f32.gmra.mxu0 %v6436
        %v7020 = vpop.f32.mrf.mxu0
        %v7021 = vadd.f32 %v6956, %v7020
        %7022 = vmatmul.f32.gmra.mxu0 %v6444
        %v7023 = vpop.f32.mrf.mxu0
        %v7024 = vadd.f32 %v6959, %v7023
        %7025 = vmatmul.f32.gmra.mxu0 %v6452
        %v7026 = vpop.f32.mrf.mxu0
        %v7027 = vadd.f32 %v6962, %v7026
        %7028 = vmatmul.f32.gmra.mxu0 %v6460
        %v7029 = vpop.f32.mrf.mxu0
        %v7030 = vadd.f32 %v6965, %v7029
        %7031 = vmatmul.f32.gmra.mxu0 %v6468
        %v7032 = vpop.f32.mrf.mxu0
        %v7033 = vadd.f32 %v6968, %v7032
        %7034 = vmatmul.f32.gmra.mxu0 %v6476
        %v7035 = vpop.f32.mrf.mxu0
        %v7036 = vadd.f32 %v6971, %v7035
        %7037 = vmatmul.f32.gmra.mxu0 %v6484
        %v7038 = vpop.f32.mrf.mxu0
        %v7039 = vadd.f32 %v6974, %v7038
        %7040 = vmatmul.f32.gmra.mxu0 %v6492
        %v7041 = vpop.f32.mrf.mxu0
        %v7042 = vadd.f32 %v6977, %v7041
        %7043 = vmatmul.f32.gmra.mxu0 %v6500
        %v7044 = vpop.f32.mrf.mxu0
        %v7045 = vadd.f32 %v6980, %v7044
        %7046 = vmatmul.f32.gmra.mxu0 %v6508
        %v7047 = vpop.f32.mrf.mxu0
        %v7048 = vadd.f32 %v6983, %v7047
        %7049 = vmatmul.f32.gmra.mxu0 %v6516
        %v7050 = vpop.f32.mrf.mxu0
        %v7051 = vadd.f32 %v6986, %v7050
        %7052 = vmatmul.f32.gmra.mxu0 %v6524
        %v7053 = vpop.f32.mrf.mxu0
        %v7054 = vadd.f32 %v6989, %v7053
        %7055 = vmatmul.f32.gmra.mxu0 %v6532
        %v7056 = vpop.f32.mrf.mxu0
        %v7057 = vadd.f32 %v6992, %v7056
        %7058 = vdwg.mxu0
        %7059 = vmatpush.msra.mxu0 %v6695
        %7060 = vmatpush.msra.mxu0 %v6693
        %7061 = vmatpush.msra.mxu0 %v6691
        %7062 = vmatpush.msra.mxu0 %v6689
        %7063 = vmatpush.msra.mxu0 %v6687
        %7064 = vmatpush.msra.mxu0 %v6685
        %7065 = vmatpush.msra.mxu0 %v6683
        %7066 = vmatpush.msra.mxu0 %v6681
        %7067 = vmatpush.msra.mxu0 %v6679
        %7068 = vmatpush.msra.mxu0 %v6677
        %7069 = vmatpush.msra.mxu0 %v6675
        %7070 = vmatpush.msra.mxu0 %v6673
        %7071 = vmatpush.msra.mxu0 %v6671
        %7072 = vmatpush.msra.mxu0 %v6669
        %7073 = vmatpush.msra.mxu0 %v6667
        %7074 = vmatpush.msra.mxu0 %v6665
        %7075 = vmatmul.f32.gmra.mxu0 %v6413
        %v7076 = vpop.f32.mrf.mxu0
        %v7077 = vadd.f32 %v7012, %v7076
        %7078 = vmatmul.f32.gmra.mxu0 %v6421
        %v7079 = vpop.f32.mrf.mxu0
        %v7080 = vadd.f32 %v7015, %v7079
        %7081 = vmatmul.f32.gmra.mxu0 %v6429
        %v7082 = vpop.f32.mrf.mxu0
        %v7083 = vadd.f32 %v7018, %v7082
        %7084 = vmatmul.f32.gmra.mxu0 %v6437
        %v7085 = vpop.f32.mrf.mxu0
        %v7086 = vadd.f32 %v7021, %v7085
        %7087 = vmatmul.f32.gmra.mxu0 %v6445
        %v7088 = vpop.f32.mrf.mxu0
        %v7089 = vadd.f32 %v7024, %v7088
        %7090 = vmatmul.f32.gmra.mxu0 %v6453
        %v7091 = vpop.f32.mrf.mxu0
        %v7092 = vadd.f32 %v7027, %v7091
        %7093 = vmatmul.f32.gmra.mxu0 %v6461
        %v7094 = vpop.f32.mrf.mxu0
        %v7095 = vadd.f32 %v7030, %v7094
        %7096 = vmatmul.f32.gmra.mxu0 %v6469
        %v7097 = vpop.f32.mrf.mxu0
        %v7098 = vadd.f32 %v7033, %v7097
        %7099 = vmatmul.f32.gmra.mxu0 %v6477
        %v7100 = vpop.f32.mrf.mxu0
        %v7101 = vadd.f32 %v7036, %v7100
        %7102 = vmatmul.f32.gmra.mxu0 %v6485
        %v7103 = vpop.f32.mrf.mxu0
        %v7104 = vadd.f32 %v7039, %v7103
        %7105 = vmatmul.f32.gmra.mxu0 %v6493
        %v7106 = vpop.f32.mrf.mxu0
        %v7107 = vadd.f32 %v7042, %v7106
        %7108 = vmatmul.f32.gmra.mxu0 %v6501
        %v7109 = vpop.f32.mrf.mxu0
        %v7110 = vadd.f32 %v7045, %v7109
        %7111 = vmatmul.f32.gmra.mxu0 %v6509
        %v7112 = vpop.f32.mrf.mxu0
        %v7113 = vadd.f32 %v7048, %v7112
        %7114 = vmatmul.f32.gmra.mxu0 %v6517
        %v7115 = vpop.f32.mrf.mxu0
        %v7116 = vadd.f32 %v7051, %v7115
        %7117 = vmatmul.f32.gmra.mxu0 %v6525
        %v7118 = vpop.f32.mrf.mxu0
        %v7119 = vadd.f32 %v7054, %v7118
        %7120 = vmatmul.f32.gmra.mxu0 %v6533
        %v7121 = vpop.f32.mrf.mxu0
        %v7122 = vadd.f32 %v7057, %v7121
        %7123 = vdwg.mxu0
        %7124 = vmatpush.msra.mxu0 %v6727
        %7125 = vmatpush.msra.mxu0 %v6725
        %7126 = vmatpush.msra.mxu0 %v6723
        %7127 = vmatpush.msra.mxu0 %v6721
        %7128 = vmatpush.msra.mxu0 %v6719
        %7129 = vmatpush.msra.mxu0 %v6717
        %7130 = vmatpush.msra.mxu0 %v6715
        %7131 = vmatpush.msra.mxu0 %v6713
        %7132 = vmatpush.msra.mxu0 %v6711
        %7133 = vmatpush.msra.mxu0 %v6709
        %7134 = vmatpush.msra.mxu0 %v6707
        %7135 = vmatpush.msra.mxu0 %v6705
        %7136 = vmatpush.msra.mxu0 %v6703
        %7137 = vmatpush.msra.mxu0 %v6701
        %7138 = vmatpush.msra.mxu0 %v6699
        %7139 = vmatpush.msra.mxu0 %v6697
        %7140 = vmatmul.f32.gmra.mxu0 %v6414
        %v7141 = vpop.f32.mrf.mxu0
        %v7142 = vadd.f32 %v7077, %v7141
        %7143 = vmatmul.f32.gmra.mxu0 %v6422
        %v7144 = vpop.f32.mrf.mxu0
        %v7145 = vadd.f32 %v7080, %v7144
        %7146 = vmatmul.f32.gmra.mxu0 %v6430
        %v7147 = vpop.f32.mrf.mxu0
        %v7148 = vadd.f32 %v7083, %v7147
        %7149 = vmatmul.f32.gmra.mxu0 %v6438
        %v7150 = vpop.f32.mrf.mxu0
        %v7151 = vadd.f32 %v7086, %v7150
        %7152 = vmatmul.f32.gmra.mxu0 %v6446
        %v7153 = vpop.f32.mrf.mxu0
        %v7154 = vadd.f32 %v7089, %v7153
        %7155 = vmatmul.f32.gmra.mxu0 %v6454
        %v7156 = vpop.f32.mrf.mxu0
        %v7157 = vadd.f32 %v7092, %v7156
        %7158 = vmatmul.f32.gmra.mxu0 %v6462
        %v7159 = vpop.f32.mrf.mxu0
        %v7160 = vadd.f32 %v7095, %v7159
        %7161 = vmatmul.f32.gmra.mxu0 %v6470
        %v7162 = vpop.f32.mrf.mxu0
        %v7163 = vadd.f32 %v7098, %v7162
        %7164 = vmatmul.f32.gmra.mxu0 %v6478
        %v7165 = vpop.f32.mrf.mxu0
        %v7166 = vadd.f32 %v7101, %v7165
        %7167 = vmatmul.f32.gmra.mxu0 %v6486
        %v7168 = vpop.f32.mrf.mxu0
        %v7169 = vadd.f32 %v7104, %v7168
        %7170 = vmatmul.f32.gmra.mxu0 %v6494
        %v7171 = vpop.f32.mrf.mxu0
        %v7172 = vadd.f32 %v7107, %v7171
        %7173 = vmatmul.f32.gmra.mxu0 %v6502
        %v7174 = vpop.f32.mrf.mxu0
        %v7175 = vadd.f32 %v7110, %v7174
        %7176 = vmatmul.f32.gmra.mxu0 %v6510
        %v7177 = vpop.f32.mrf.mxu0
        %v7178 = vadd.f32 %v7113, %v7177
        %7179 = vmatmul.f32.gmra.mxu0 %v6518
        %v7180 = vpop.f32.mrf.mxu0
        %v7181 = vadd.f32 %v7116, %v7180
        %7182 = vmatmul.f32.gmra.mxu0 %v6526
        %v7183 = vpop.f32.mrf.mxu0
        %v7184 = vadd.f32 %v7119, %v7183
        %7185 = vmatmul.f32.gmra.mxu0 %v6534
        %v7186 = vpop.f32.mrf.mxu0
        %v7187 = vadd.f32 %v7122, %v7186
        %7188 = vdwg.mxu0
        %7189 = vmatpush.msra.mxu0 %v6759
        %7190 = vmatpush.msra.mxu0 %v6757
        %7191 = vmatpush.msra.mxu0 %v6755
        %7192 = vmatpush.msra.mxu0 %v6753
        %7193 = vmatpush.msra.mxu0 %v6751
        %7194 = vmatpush.msra.mxu0 %v6749
        %7195 = vmatpush.msra.mxu0 %v6747
        %7196 = vmatpush.msra.mxu0 %v6745
        %7197 = vmatpush.msra.mxu0 %v6743
        %7198 = vmatpush.msra.mxu0 %v6741
        %7199 = vmatpush.msra.mxu0 %v6739
        %7200 = vmatpush.msra.mxu0 %v6737
        %7201 = vmatpush.msra.mxu0 %v6735
        %7202 = vmatpush.msra.mxu0 %v6733
        %7203 = vmatpush.msra.mxu0 %v6731
        %7204 = vmatpush.msra.mxu0 %v6729
        %7205 = vmatmul.f32.gmra.mxu0 %v6415
        %v7206 = vpop.f32.mrf.mxu0
        %v7207 = vadd.f32 %v7142, %v7206
        %7208 = vmatmul.f32.gmra.mxu0 %v6423
        %v7209 = vpop.f32.mrf.mxu0
        %v7210 = vadd.f32 %v7145, %v7209
        %7211 = vmatmul.f32.gmra.mxu0 %v6431
        %v7212 = vpop.f32.mrf.mxu0
        %v7213 = vadd.f32 %v7148, %v7212
        %7214 = vmatmul.f32.gmra.mxu0 %v6439
        %v7215 = vpop.f32.mrf.mxu0
        %v7216 = vadd.f32 %v7151, %v7215
        %7217 = vmatmul.f32.gmra.mxu0 %v6447
        %v7218 = vpop.f32.mrf.mxu0
        %v7219 = vadd.f32 %v7154, %v7218
        %7220 = vmatmul.f32.gmra.mxu0 %v6455
        %v7221 = vpop.f32.mrf.mxu0
        %v7222 = vadd.f32 %v7157, %v7221
        %7223 = vmatmul.f32.gmra.mxu0 %v6463
        %v7224 = vpop.f32.mrf.mxu0
        %v7225 = vadd.f32 %v7160, %v7224
        %7226 = vmatmul.f32.gmra.mxu0 %v6471
        %v7227 = vpop.f32.mrf.mxu0
        %v7228 = vadd.f32 %v7163, %v7227
        %7229 = vmatmul.f32.gmra.mxu0 %v6479
        %v7230 = vpop.f32.mrf.mxu0
        %v7231 = vadd.f32 %v7166, %v7230
        %7232 = vmatmul.f32.gmra.mxu0 %v6487
        %v7233 = vpop.f32.mrf.mxu0
        %v7234 = vadd.f32 %v7169, %v7233
        %7235 = vmatmul.f32.gmra.mxu0 %v6495
        %v7236 = vpop.f32.mrf.mxu0
        %v7237 = vadd.f32 %v7172, %v7236
        %7238 = vmatmul.f32.gmra.mxu0 %v6503
        %v7239 = vpop.f32.mrf.mxu0
        %v7240 = vadd.f32 %v7175, %v7239
        %7241 = vmatmul.f32.gmra.mxu0 %v6511
        %v7242 = vpop.f32.mrf.mxu0
        %v7243 = vadd.f32 %v7178, %v7242
        %7244 = vmatmul.f32.gmra.mxu0 %v6519
        %v7245 = vpop.f32.mrf.mxu0
        %v7246 = vadd.f32 %v7181, %v7245
        %7247 = vmatmul.f32.gmra.mxu0 %v6527
        %v7248 = vpop.f32.mrf.mxu0
        %v7249 = vadd.f32 %v7184, %v7248
        %7250 = vmatmul.f32.gmra.mxu0 %v6535
        %v7251 = vpop.f32.mrf.mxu0
        %v7252 = vadd.f32 %v7187, %v7251
        %7253 = vdwg.mxu0
        %7254 = vmatpush.msra.mxu0 %v6791
        %7255 = vmatpush.msra.mxu0 %v6789
        %7256 = vmatpush.msra.mxu0 %v6787
        %7257 = vmatpush.msra.mxu0 %v6785
        %7258 = vmatpush.msra.mxu0 %v6783
        %7259 = vmatpush.msra.mxu0 %v6781
        %7260 = vmatpush.msra.mxu0 %v6779
        %7261 = vmatpush.msra.mxu0 %v6777
        %7262 = vmatpush.msra.mxu0 %v6775
        %7263 = vmatpush.msra.mxu0 %v6773
        %7264 = vmatpush.msra.mxu0 %v6771
        %7265 = vmatpush.msra.mxu0 %v6769
        %7266 = vmatpush.msra.mxu0 %v6767
        %7267 = vmatpush.msra.mxu0 %v6765
        %7268 = vmatpush.msra.mxu0 %v6763
        %7269 = vmatpush.msra.mxu0 %v6761
        %7270 = vmatmul.f32.gmra.mxu0 %v6416
        %v7271 = vpop.f32.mrf.mxu0
        %v7272 = vadd.f32 %v7207, %v7271
        %7273 = vmatmul.f32.gmra.mxu0 %v6424
        %v7274 = vpop.f32.mrf.mxu0
        %v7275 = vadd.f32 %v7210, %v7274
        %7276 = vmatmul.f32.gmra.mxu0 %v6432
        %v7277 = vpop.f32.mrf.mxu0
        %v7278 = vadd.f32 %v7213, %v7277
        %7279 = vmatmul.f32.gmra.mxu0 %v6440
        %v7280 = vpop.f32.mrf.mxu0
        %v7281 = vadd.f32 %v7216, %v7280
        %7282 = vmatmul.f32.gmra.mxu0 %v6448
        %v7283 = vpop.f32.mrf.mxu0
        %v7284 = vadd.f32 %v7219, %v7283
        %7285 = vmatmul.f32.gmra.mxu0 %v6456
        %v7286 = vpop.f32.mrf.mxu0
        %v7287 = vadd.f32 %v7222, %v7286
        %7288 = vmatmul.f32.gmra.mxu0 %v6464
        %v7289 = vpop.f32.mrf.mxu0
        %v7290 = vadd.f32 %v7225, %v7289
        %7291 = vmatmul.f32.gmra.mxu0 %v6472
        %v7292 = vpop.f32.mrf.mxu0
        %v7293 = vadd.f32 %v7228, %v7292
        %7294 = vmatmul.f32.gmra.mxu0 %v6480
        %v7295 = vpop.f32.mrf.mxu0
        %v7296 = vadd.f32 %v7231, %v7295
        %7297 = vmatmul.f32.gmra.mxu0 %v6488
        %v7298 = vpop.f32.mrf.mxu0
        %v7299 = vadd.f32 %v7234, %v7298
        %7300 = vmatmul.f32.gmra.mxu0 %v6496
        %v7301 = vpop.f32.mrf.mxu0
        %v7302 = vadd.f32 %v7237, %v7301
        %7303 = vmatmul.f32.gmra.mxu0 %v6504
        %v7304 = vpop.f32.mrf.mxu0
        %v7305 = vadd.f32 %v7240, %v7304
        %7306 = vmatmul.f32.gmra.mxu0 %v6512
        %v7307 = vpop.f32.mrf.mxu0
        %v7308 = vadd.f32 %v7243, %v7307
        %7309 = vmatmul.f32.gmra.mxu0 %v6520
        %v7310 = vpop.f32.mrf.mxu0
        %v7311 = vadd.f32 %v7246, %v7310
        %7312 = vmatmul.f32.gmra.mxu0 %v6528
        %v7313 = vpop.f32.mrf.mxu0
        %v7314 = vadd.f32 %v7249, %v7313
        %7315 = vmatmul.f32.gmra.mxu0 %v6536
        %v7316 = vpop.f32.mrf.mxu0
        %v7317 = vadd.f32 %v7252, %v7316
        %7318 = vdwg.mxu0
        %7319 = vmatpush.msra.mxu0 %v6568
        %7320 = vmatpush.msra.mxu0 %v6566
        %7321 = vmatpush.msra.mxu0 %v6564
        %7322 = vmatpush.msra.mxu0 %v6562
        %7323 = vmatpush.msra.mxu0 %v6560
        %7324 = vmatpush.msra.mxu0 %v6558
        %7325 = vmatpush.msra.mxu0 %v6556
        %7326 = vmatpush.msra.mxu0 %v6554
        %7327 = vmatpush.msra.mxu0 %v6552
        %7328 = vmatpush.msra.mxu0 %v6550
        %7329 = vmatpush.msra.mxu0 %v6548
        %7330 = vmatpush.msra.mxu0 %v6546
        %7331 = vmatpush.msra.mxu0 %v6544
        %7332 = vmatpush.msra.mxu0 %v6542
        %7333 = vmatpush.msra.mxu0 %v6540
        %7334 = vmatpush.msra.mxu0 %v6538
        %7335 = vmatmul.f32.gmra.mxu0 %v6409
        %v7336 = vpop.f32.mrf.mxu0
        %v7337 = vadd.f32 %v6796, %v7336
        %7338 = vmatmul.f32.gmra.mxu0 %v6417
        %v7339 = vpop.f32.mrf.mxu0
        %v7340 = vadd.f32 %v6796, %v7339
        %7341 = vmatmul.f32.gmra.mxu0 %v6425
        %v7342 = vpop.f32.mrf.mxu0
        %v7343 = vadd.f32 %v6796, %v7342
        %7344 = vmatmul.f32.gmra.mxu0 %v6433
        %v7345 = vpop.f32.mrf.mxu0
        %v7346 = vadd.f32 %v6796, %v7345
        %7347 = vmatmul.f32.gmra.mxu0 %v6441
        %v7348 = vpop.f32.mrf.mxu0
        %v7349 = vadd.f32 %v6796, %v7348
        %7350 = vmatmul.f32.gmra.mxu0 %v6449
        %v7351 = vpop.f32.mrf.mxu0
        %v7352 = vadd.f32 %v6796, %v7351
        %7353 = vmatmul.f32.gmra.mxu0 %v6457
        %v7354 = vpop.f32.mrf.mxu0
        %v7355 = vadd.f32 %v6796, %v7354
        %7356 = vmatmul.f32.gmra.mxu0 %v6465
        %v7357 = vpop.f32.mrf.mxu0
        %v7358 = vadd.f32 %v6796, %v7357
        %7359 = vmatmul.f32.gmra.mxu0 %v6473
        %v7360 = vpop.f32.mrf.mxu0
        %v7361 = vadd.f32 %v6796, %v7360
        %7362 = vmatmul.f32.gmra.mxu0 %v6481
        %v7363 = vpop.f32.mrf.mxu0
        %v7364 = vadd.f32 %v6796, %v7363
        %7365 = vmatmul.f32.gmra.mxu0 %v6489
        %v7366 = vpop.f32.mrf.mxu0
        %v7367 = vadd.f32 %v6796, %v7366
        %7368 = vmatmul.f32.gmra.mxu0 %v6497
        %v7369 = vpop.f32.mrf.mxu0
        %v7370 = vadd.f32 %v6796, %v7369
        %7371 = vmatmul.f32.gmra.mxu0 %v6505
        %v7372 = vpop.f32.mrf.mxu0
        %v7373 = vadd.f32 %v6796, %v7372
        %7374 = vmatmul.f32.gmra.mxu0 %v6513
        %v7375 = vpop.f32.mrf.mxu0
        %v7376 = vadd.f32 %v6796, %v7375
        %7377 = vmatmul.f32.gmra.mxu0 %v6521
        %v7378 = vpop.f32.mrf.mxu0
        %v7379 = vadd.f32 %v6796, %v7378
        %7380 = vmatmul.f32.gmra.mxu0 %v6529
        %v7381 = vpop.f32.mrf.mxu0
        %v7382 = vadd.f32 %v6796, %v7381
        %7383 = vdwg.mxu0
        %7384 = vmatpush.msra.mxu0 %v6600
        %7385 = vmatpush.msra.mxu0 %v6598
        %7386 = vmatpush.msra.mxu0 %v6596
        %7387 = vmatpush.msra.mxu0 %v6594
        %7388 = vmatpush.msra.mxu0 %v6592
        %7389 = vmatpush.msra.mxu0 %v6590
        %7390 = vmatpush.msra.mxu0 %v6588
        %7391 = vmatpush.msra.mxu0 %v6586
        %7392 = vmatpush.msra.mxu0 %v6584
        %7393 = vmatpush.msra.mxu0 %v6582
        %7394 = vmatpush.msra.mxu0 %v6580
        %7395 = vmatpush.msra.mxu0 %v6578
        %7396 = vmatpush.msra.mxu0 %v6576
        %7397 = vmatpush.msra.mxu0 %v6574
        %7398 = vmatpush.msra.mxu0 %v6572
        %7399 = vmatpush.msra.mxu0 %v6570
        %7400 = vmatmul.f32.gmra.mxu0 %v6410
        %v7401 = vpop.f32.mrf.mxu0
        %v7402 = vadd.f32 %v7337, %v7401
        %7403 = vmatmul.f32.gmra.mxu0 %v6418
        %v7404 = vpop.f32.mrf.mxu0
        %v7405 = vadd.f32 %v7340, %v7404
        %7406 = vmatmul.f32.gmra.mxu0 %v6426
        %v7407 = vpop.f32.mrf.mxu0
        %v7408 = vadd.f32 %v7343, %v7407
        %7409 = vmatmul.f32.gmra.mxu0 %v6434
        %v7410 = vpop.f32.mrf.mxu0
        %v7411 = vadd.f32 %v7346, %v7410
        %7412 = vmatmul.f32.gmra.mxu0 %v6442
        %v7413 = vpop.f32.mrf.mxu0
        %v7414 = vadd.f32 %v7349, %v7413
        %7415 = vmatmul.f32.gmra.mxu0 %v6450
        %v7416 = vpop.f32.mrf.mxu0
        %v7417 = vadd.f32 %v7352, %v7416
        %7418 = vmatmul.f32.gmra.mxu0 %v6458
        %v7419 = vpop.f32.mrf.mxu0
        %v7420 = vadd.f32 %v7355, %v7419
        %7421 = vmatmul.f32.gmra.mxu0 %v6466
        %v7422 = vpop.f32.mrf.mxu0
        %v7423 = vadd.f32 %v7358, %v7422
        %7424 = vmatmul.f32.gmra.mxu0 %v6474
        %v7425 = vpop.f32.mrf.mxu0
        %v7426 = vadd.f32 %v7361, %v7425
        %7427 = vmatmul.f32.gmra.mxu0 %v6482
        %v7428 = vpop.f32.mrf.mxu0
        %v7429 = vadd.f32 %v7364, %v7428
        %7430 = vmatmul.f32.gmra.mxu0 %v6490
        %v7431 = vpop.f32.mrf.mxu0
        %v7432 = vadd.f32 %v7367, %v7431
        %7433 = vmatmul.f32.gmra.mxu0 %v6498
        %v7434 = vpop.f32.mrf.mxu0
        %v7435 = vadd.f32 %v7370, %v7434
        %7436 = vmatmul.f32.gmra.mxu0 %v6506
        %v7437 = vpop.f32.mrf.mxu0
        %v7438 = vadd.f32 %v7373, %v7437
        %7439 = vmatmul.f32.gmra.mxu0 %v6514
        %v7440 = vpop.f32.mrf.mxu0
        %v7441 = vadd.f32 %v7376, %v7440
        %7442 = vmatmul.f32.gmra.mxu0 %v6522
        %v7443 = vpop.f32.mrf.mxu0
        %v7444 = vadd.f32 %v7379, %v7443
        %7445 = vmatmul.f32.gmra.mxu0 %v6530
        %v7446 = vpop.f32.mrf.mxu0
        %v7447 = vadd.f32 %v7382, %v7446
        %7448 = vdwg.mxu0
        %7449 = vmatpush.msra.mxu0 %v6632
        %7450 = vmatpush.msra.mxu0 %v6630
        %7451 = vmatpush.msra.mxu0 %v6628
        %7452 = vmatpush.msra.mxu0 %v6626
        %7453 = vmatpush.msra.mxu0 %v6624
        %7454 = vmatpush.msra.mxu0 %v6622
        %7455 = vmatpush.msra.mxu0 %v6620
        %7456 = vmatpush.msra.mxu0 %v6618
        %7457 = vmatpush.msra.mxu0 %v6616
        %7458 = vmatpush.msra.mxu0 %v6614
        %7459 = vmatpush.msra.mxu0 %v6612
        %7460 = vmatpush.msra.mxu0 %v6610
        %7461 = vmatpush.msra.mxu0 %v6608
        %7462 = vmatpush.msra.mxu0 %v6606
        %7463 = vmatpush.msra.mxu0 %v6604
        %7464 = vmatpush.msra.mxu0 %v6602
        %7465 = vmatmul.f32.gmra.mxu0 %v6411
        %v7466 = vpop.f32.mrf.mxu0
        %v7467 = vadd.f32 %v7402, %v7466
        %7468 = vmatmul.f32.gmra.mxu0 %v6419
        %v7469 = vpop.f32.mrf.mxu0
        %v7470 = vadd.f32 %v7405, %v7469
        %7471 = vmatmul.f32.gmra.mxu0 %v6427
        %v7472 = vpop.f32.mrf.mxu0
        %v7473 = vadd.f32 %v7408, %v7472
        %7474 = vmatmul.f32.gmra.mxu0 %v6435
        %v7475 = vpop.f32.mrf.mxu0
        %v7476 = vadd.f32 %v7411, %v7475
        %7477 = vmatmul.f32.gmra.mxu0 %v6443
        %v7478 = vpop.f32.mrf.mxu0
        %v7479 = vadd.f32 %v7414, %v7478
        %7480 = vmatmul.f32.gmra.mxu0 %v6451
        %v7481 = vpop.f32.mrf.mxu0
        %v7482 = vadd.f32 %v7417, %v7481
        %7483 = vmatmul.f32.gmra.mxu0 %v6459
        %v7484 = vpop.f32.mrf.mxu0
        %v7485 = vadd.f32 %v7420, %v7484
        %7486 = vmatmul.f32.gmra.mxu0 %v6467
        %v7487 = vpop.f32.mrf.mxu0
        %v7488 = vadd.f32 %v7423, %v7487
        %7489 = vmatmul.f32.gmra.mxu0 %v6475
        %v7490 = vpop.f32.mrf.mxu0
        %v7491 = vadd.f32 %v7426, %v7490
        %7492 = vmatmul.f32.gmra.mxu0 %v6483
        %v7493 = vpop.f32.mrf.mxu0
        %v7494 = vadd.f32 %v7429, %v7493
        %7495 = vmatmul.f32.gmra.mxu0 %v6491
        %v7496 = vpop.f32.mrf.mxu0
        %v7497 = vadd.f32 %v7432, %v7496
        %7498 = vmatmul.f32.gmra.mxu0 %v6499
        %v7499 = vpop.f32.mrf.mxu0
        %v7500 = vadd.f32 %v7435, %v7499
        %7501 = vmatmul.f32.gmra.mxu0 %v6507
        %v7502 = vpop.f32.mrf.mxu0
        %v7503 = vadd.f32 %v7438, %v7502
        %7504 = vmatmul.f32.gmra.mxu0 %v6515
        %v7505 = vpop.f32.mrf.mxu0
        %v7506 = vadd.f32 %v7441, %v7505
        %7507 = vmatmul.f32.gmra.mxu0 %v6523
        %v7508 = vpop.f32.mrf.mxu0
        %v7509 = vadd.f32 %v7444, %v7508
        %7510 = vmatmul.f32.gmra.mxu0 %v6531
        %v7511 = vpop.f32.mrf.mxu0
        %v7512 = vadd.f32 %v7447, %v7511
        %7513 = vdwg.mxu0
        %7514 = vmatpush.msra.mxu0 %v6664
        %7515 = vmatpush.msra.mxu0 %v6662
        %7516 = vmatpush.msra.mxu0 %v6660
        %7517 = vmatpush.msra.mxu0 %v6658
        %7518 = vmatpush.msra.mxu0 %v6656
        %7519 = vmatpush.msra.mxu0 %v6654
        %7520 = vmatpush.msra.mxu0 %v6652
        %7521 = vmatpush.msra.mxu0 %v6650
        %7522 = vmatpush.msra.mxu0 %v6648
        %7523 = vmatpush.msra.mxu0 %v6646
        %7524 = vmatpush.msra.mxu0 %v6644
        %7525 = vmatpush.msra.mxu0 %v6642
        %7526 = vmatpush.msra.mxu0 %v6640
        %7527 = vmatpush.msra.mxu0 %v6638
        %7528 = vmatpush.msra.mxu0 %v6636
        %7529 = vmatpush.msra.mxu0 %v6634
        %7530 = vmatmul.f32.gmra.mxu0 %v6412
        %v7531 = vpop.f32.mrf.mxu0
        %v7532 = vadd.f32 %v7467, %v7531
        %7533 = vmatmul.f32.gmra.mxu0 %v6420
        %v7534 = vpop.f32.mrf.mxu0
        %v7535 = vadd.f32 %v7470, %v7534
        %7536 = vmatmul.f32.gmra.mxu0 %v6428
        %v7537 = vpop.f32.mrf.mxu0
        %v7538 = vadd.f32 %v7473, %v7537
        %7539 = vmatmul.f32.gmra.mxu0 %v6436
        %v7540 = vpop.f32.mrf.mxu0
        %v7541 = vadd.f32 %v7476, %v7540
        %7542 = vmatmul.f32.gmra.mxu0 %v6444
        %v7543 = vpop.f32.mrf.mxu0
        %v7544 = vadd.f32 %v7479, %v7543
        %7545 = vmatmul.f32.gmra.mxu0 %v6452
        %v7546 = vpop.f32.mrf.mxu0
        %v7547 = vadd.f32 %v7482, %v7546
        %7548 = vmatmul.f32.gmra.mxu0 %v6460
        %v7549 = vpop.f32.mrf.mxu0
        %v7550 = vadd.f32 %v7485, %v7549
        %7551 = vmatmul.f32.gmra.mxu0 %v6468
        %v7552 = vpop.f32.mrf.mxu0
        %v7553 = vadd.f32 %v7488, %v7552
        %7554 = vmatmul.f32.gmra.mxu0 %v6476
        %v7555 = vpop.f32.mrf.mxu0
        %v7556 = vadd.f32 %v7491, %v7555
        %7557 = vmatmul.f32.gmra.mxu0 %v6484
        %v7558 = vpop.f32.mrf.mxu0
        %v7559 = vadd.f32 %v7494, %v7558
        %7560 = vmatmul.f32.gmra.mxu0 %v6492
        %v7561 = vpop.f32.mrf.mxu0
        %v7562 = vadd.f32 %v7497, %v7561
        %7563 = vmatmul.f32.gmra.mxu0 %v6500
        %v7564 = vpop.f32.mrf.mxu0
        %v7565 = vadd.f32 %v7500, %v7564
        %7566 = vmatmul.f32.gmra.mxu0 %v6508
        %v7567 = vpop.f32.mrf.mxu0
        %v7568 = vadd.f32 %v7503, %v7567
        %7569 = vmatmul.f32.gmra.mxu0 %v6516
        %v7570 = vpop.f32.mrf.mxu0
        %v7571 = vadd.f32 %v7506, %v7570
        %7572 = vmatmul.f32.gmra.mxu0 %v6524
        %v7573 = vpop.f32.mrf.mxu0
        %v7574 = vadd.f32 %v7509, %v7573
        %7575 = vmatmul.f32.gmra.mxu0 %v6532
        %v7576 = vpop.f32.mrf.mxu0
        %v7577 = vadd.f32 %v7512, %v7576
        %7578 = vdwg.mxu0
        %7579 = vmatpush.msra.mxu0 %v6696
        %7580 = vmatpush.msra.mxu0 %v6694
        %7581 = vmatpush.msra.mxu0 %v6692
        %7582 = vmatpush.msra.mxu0 %v6690
        %7583 = vmatpush.msra.mxu0 %v6688
        %7584 = vmatpush.msra.mxu0 %v6686
        %7585 = vmatpush.msra.mxu0 %v6684
        %7586 = vmatpush.msra.mxu0 %v6682
        %7587 = vmatpush.msra.mxu0 %v6680
        %7588 = vmatpush.msra.mxu0 %v6678
        %7589 = vmatpush.msra.mxu0 %v6676
        %7590 = vmatpush.msra.mxu0 %v6674
        %7591 = vmatpush.msra.mxu0 %v6672
        %7592 = vmatpush.msra.mxu0 %v6670
        %7593 = vmatpush.msra.mxu0 %v6668
        %7594 = vmatpush.msra.mxu0 %v6666
        %7595 = vmatmul.f32.gmra.mxu0 %v6413
        %v7596 = vpop.f32.mrf.mxu0
        %v7597 = vadd.f32 %v7532, %v7596
        %7598 = vmatmul.f32.gmra.mxu0 %v6421
        %v7599 = vpop.f32.mrf.mxu0
        %v7600 = vadd.f32 %v7535, %v7599
        %7601 = vmatmul.f32.gmra.mxu0 %v6429
        %v7602 = vpop.f32.mrf.mxu0
        %v7603 = vadd.f32 %v7538, %v7602
        %7604 = vmatmul.f32.gmra.mxu0 %v6437
        %v7605 = vpop.f32.mrf.mxu0
        %v7606 = vadd.f32 %v7541, %v7605
        %7607 = vmatmul.f32.gmra.mxu0 %v6445
        %v7608 = vpop.f32.mrf.mxu0
        %v7609 = vadd.f32 %v7544, %v7608
        %7610 = vmatmul.f32.gmra.mxu0 %v6453
        %v7611 = vpop.f32.mrf.mxu0
        %v7612 = vadd.f32 %v7547, %v7611
        %7613 = vmatmul.f32.gmra.mxu0 %v6461
        %v7614 = vpop.f32.mrf.mxu0
        %v7615 = vadd.f32 %v7550, %v7614
        %7616 = vmatmul.f32.gmra.mxu0 %v6469
        %v7617 = vpop.f32.mrf.mxu0
        %v7618 = vadd.f32 %v7553, %v7617
        %7619 = vmatmul.f32.gmra.mxu0 %v6477
        %v7620 = vpop.f32.mrf.mxu0
        %v7621 = vadd.f32 %v7556, %v7620
        %7622 = vmatmul.f32.gmra.mxu0 %v6485
        %v7623 = vpop.f32.mrf.mxu0
        %v7624 = vadd.f32 %v7559, %v7623
        %7625 = vmatmul.f32.gmra.mxu0 %v6493
        %v7626 = vpop.f32.mrf.mxu0
        %v7627 = vadd.f32 %v7562, %v7626
        %7628 = vmatmul.f32.gmra.mxu0 %v6501
        %v7629 = vpop.f32.mrf.mxu0
        %v7630 = vadd.f32 %v7565, %v7629
        %7631 = vmatmul.f32.gmra.mxu0 %v6509
        %v7632 = vpop.f32.mrf.mxu0
        %v7633 = vadd.f32 %v7568, %v7632
        %7634 = vmatmul.f32.gmra.mxu0 %v6517
        %v7635 = vpop.f32.mrf.mxu0
        %v7636 = vadd.f32 %v7571, %v7635
        %7637 = vmatmul.f32.gmra.mxu0 %v6525
        %v7638 = vpop.f32.mrf.mxu0
        %v7639 = vadd.f32 %v7574, %v7638
        %7640 = vmatmul.f32.gmra.mxu0 %v6533
        %v7641 = vpop.f32.mrf.mxu0
        %v7642 = vadd.f32 %v7577, %v7641
        %7643 = vdwg.mxu0
        %7644 = vmatpush.msra.mxu0 %v6728
        %7645 = vmatpush.msra.mxu0 %v6726
        %7646 = vmatpush.msra.mxu0 %v6724
        %7647 = vmatpush.msra.mxu0 %v6722
        %7648 = vmatpush.msra.mxu0 %v6720
        %7649 = vmatpush.msra.mxu0 %v6718
        %7650 = vmatpush.msra.mxu0 %v6716
        %7651 = vmatpush.msra.mxu0 %v6714
        %7652 = vmatpush.msra.mxu0 %v6712
        %7653 = vmatpush.msra.mxu0 %v6710
        %7654 = vmatpush.msra.mxu0 %v6708
        %7655 = vmatpush.msra.mxu0 %v6706
        %7656 = vmatpush.msra.mxu0 %v6704
        %7657 = vmatpush.msra.mxu0 %v6702
        %7658 = vmatpush.msra.mxu0 %v6700
        %7659 = vmatpush.msra.mxu0 %v6698
        %7660 = vmatmul.f32.gmra.mxu0 %v6414
        %v7661 = vpop.f32.mrf.mxu0
        %v7662 = vadd.f32 %v7597, %v7661
        %7663 = vmatmul.f32.gmra.mxu0 %v6422
        %v7664 = vpop.f32.mrf.mxu0
        %v7665 = vadd.f32 %v7600, %v7664
        %7666 = vmatmul.f32.gmra.mxu0 %v6430
        %v7667 = vpop.f32.mrf.mxu0
        %v7668 = vadd.f32 %v7603, %v7667
        %7669 = vmatmul.f32.gmra.mxu0 %v6438
        %v7670 = vpop.f32.mrf.mxu0
        %v7671 = vadd.f32 %v7606, %v7670
        %7672 = vmatmul.f32.gmra.mxu0 %v6446
        %v7673 = vpop.f32.mrf.mxu0
        %v7674 = vadd.f32 %v7609, %v7673
        %7675 = vmatmul.f32.gmra.mxu0 %v6454
        %v7676 = vpop.f32.mrf.mxu0
        %v7677 = vadd.f32 %v7612, %v7676
        %7678 = vmatmul.f32.gmra.mxu0 %v6462
        %v7679 = vpop.f32.mrf.mxu0
        %v7680 = vadd.f32 %v7615, %v7679
        %7681 = vmatmul.f32.gmra.mxu0 %v6470
        %v7682 = vpop.f32.mrf.mxu0
        %v7683 = vadd.f32 %v7618, %v7682
        %7684 = vmatmul.f32.gmra.mxu0 %v6478
        %v7685 = vpop.f32.mrf.mxu0
        %v7686 = vadd.f32 %v7621, %v7685
        %7687 = vmatmul.f32.gmra.mxu0 %v6486
        %v7688 = vpop.f32.mrf.mxu0
        %v7689 = vadd.f32 %v7624, %v7688
        %7690 = vmatmul.f32.gmra.mxu0 %v6494
        %v7691 = vpop.f32.mrf.mxu0
        %v7692 = vadd.f32 %v7627, %v7691
        %7693 = vmatmul.f32.gmra.mxu0 %v6502
        %v7694 = vpop.f32.mrf.mxu0
        %v7695 = vadd.f32 %v7630, %v7694
        %7696 = vmatmul.f32.gmra.mxu0 %v6510
        %v7697 = vpop.f32.mrf.mxu0
        %v7698 = vadd.f32 %v7633, %v7697
        %7699 = vmatmul.f32.gmra.mxu0 %v6518
        %v7700 = vpop.f32.mrf.mxu0
        %v7701 = vadd.f32 %v7636, %v7700
        %7702 = vmatmul.f32.gmra.mxu0 %v6526
        %v7703 = vpop.f32.mrf.mxu0
        %v7704 = vadd.f32 %v7639, %v7703
        %7705 = vmatmul.f32.gmra.mxu0 %v6534
        %v7706 = vpop.f32.mrf.mxu0
        %v7707 = vadd.f32 %v7642, %v7706
        %7708 = vdwg.mxu0
        %7709 = vmatpush.msra.mxu0 %v6760
        %7710 = vmatpush.msra.mxu0 %v6758
        %7711 = vmatpush.msra.mxu0 %v6756
        %7712 = vmatpush.msra.mxu0 %v6754
        %7713 = vmatpush.msra.mxu0 %v6752
        %7714 = vmatpush.msra.mxu0 %v6750
        %7715 = vmatpush.msra.mxu0 %v6748
        %7716 = vmatpush.msra.mxu0 %v6746
        %7717 = vmatpush.msra.mxu0 %v6744
        %7718 = vmatpush.msra.mxu0 %v6742
        %7719 = vmatpush.msra.mxu0 %v6740
        %7720 = vmatpush.msra.mxu0 %v6738
        %7721 = vmatpush.msra.mxu0 %v6736
        %7722 = vmatpush.msra.mxu0 %v6734
        %7723 = vmatpush.msra.mxu0 %v6732
        %7724 = vmatpush.msra.mxu0 %v6730
        %7725 = vmatmul.f32.gmra.mxu0 %v6415
        %v7726 = vpop.f32.mrf.mxu0
        %v7727 = vadd.f32 %v7662, %v7726
        %7728 = vmatmul.f32.gmra.mxu0 %v6423
        %v7729 = vpop.f32.mrf.mxu0
        %v7730 = vadd.f32 %v7665, %v7729
        %7731 = vmatmul.f32.gmra.mxu0 %v6431
        %v7732 = vpop.f32.mrf.mxu0
        %v7733 = vadd.f32 %v7668, %v7732
        %7734 = vmatmul.f32.gmra.mxu0 %v6439
        %v7735 = vpop.f32.mrf.mxu0
        %v7736 = vadd.f32 %v7671, %v7735
        %7737 = vmatmul.f32.gmra.mxu0 %v6447
        %v7738 = vpop.f32.mrf.mxu0
        %v7739 = vadd.f32 %v7674, %v7738
        %7740 = vmatmul.f32.gmra.mxu0 %v6455
        %v7741 = vpop.f32.mrf.mxu0
        %v7742 = vadd.f32 %v7677, %v7741
        %7743 = vmatmul.f32.gmra.mxu0 %v6463
        %v7744 = vpop.f32.mrf.mxu0
        %v7745 = vadd.f32 %v7680, %v7744
        %7746 = vmatmul.f32.gmra.mxu0 %v6471
        %v7747 = vpop.f32.mrf.mxu0
        %v7748 = vadd.f32 %v7683, %v7747
        %7749 = vmatmul.f32.gmra.mxu0 %v6479
        %v7750 = vpop.f32.mrf.mxu0
        %v7751 = vadd.f32 %v7686, %v7750
        %7752 = vmatmul.f32.gmra.mxu0 %v6487
        %v7753 = vpop.f32.mrf.mxu0
        %v7754 = vadd.f32 %v7689, %v7753
        %7755 = vmatmul.f32.gmra.mxu0 %v6495
        %v7756 = vpop.f32.mrf.mxu0
        %v7757 = vadd.f32 %v7692, %v7756
        %7758 = vmatmul.f32.gmra.mxu0 %v6503
        %v7759 = vpop.f32.mrf.mxu0
        %v7760 = vadd.f32 %v7695, %v7759
        %7761 = vmatmul.f32.gmra.mxu0 %v6511
        %v7762 = vpop.f32.mrf.mxu0
        %v7763 = vadd.f32 %v7698, %v7762
        %7764 = vmatmul.f32.gmra.mxu0 %v6519
        %v7765 = vpop.f32.mrf.mxu0
        %v7766 = vadd.f32 %v7701, %v7765
        %7767 = vmatmul.f32.gmra.mxu0 %v6527
        %v7768 = vpop.f32.mrf.mxu0
        %v7769 = vadd.f32 %v7704, %v7768
        %7770 = vmatmul.f32.gmra.mxu0 %v6535
        %v7771 = vpop.f32.mrf.mxu0
        %v7772 = vadd.f32 %v7707, %v7771
        %7773 = vdwg.mxu0
        %7774 = vmatpush.msra.mxu0 %v6792
        %7775 = vmatpush.msra.mxu0 %v6790
        %7776 = vmatpush.msra.mxu0 %v6788
        %7777 = vmatpush.msra.mxu0 %v6786
        %7778 = vmatpush.msra.mxu0 %v6784
        %7779 = vmatpush.msra.mxu0 %v6782
        %7780 = vmatpush.msra.mxu0 %v6780
        %7781 = vmatpush.msra.mxu0 %v6778
        %7782 = vmatpush.msra.mxu0 %v6776
        %7783 = vmatpush.msra.mxu0 %v6774
        %7784 = vmatpush.msra.mxu0 %v6772
        %7785 = vmatpush.msra.mxu0 %v6770
        %7786 = vmatpush.msra.mxu0 %v6768
        %7787 = vmatpush.msra.mxu0 %v6766
        %7788 = vmatpush.msra.mxu0 %v6764
        %7789 = vmatpush.msra.mxu0 %v6762
        %7790 = vmatmul.f32.gmra.mxu0 %v6416
        %v7791 = vpop.f32.mrf.mxu0
        %v7792 = vadd.f32 %v7727, %v7791
        %7793 = vmatmul.f32.gmra.mxu0 %v6424
        %v7794 = vpop.f32.mrf.mxu0
        %v7795 = vadd.f32 %v7730, %v7794
        %7796 = vmatmul.f32.gmra.mxu0 %v6432
        %v7797 = vpop.f32.mrf.mxu0
        %v7798 = vadd.f32 %v7733, %v7797
        %7799 = vmatmul.f32.gmra.mxu0 %v6440
        %v7800 = vpop.f32.mrf.mxu0
        %v7801 = vadd.f32 %v7736, %v7800
        %7802 = vmatmul.f32.gmra.mxu0 %v6448
        %v7803 = vpop.f32.mrf.mxu0
        %v7804 = vadd.f32 %v7739, %v7803
        %7805 = vmatmul.f32.gmra.mxu0 %v6456
        %v7806 = vpop.f32.mrf.mxu0
        %v7807 = vadd.f32 %v7742, %v7806
        %7808 = vmatmul.f32.gmra.mxu0 %v6464
        %v7809 = vpop.f32.mrf.mxu0
        %v7810 = vadd.f32 %v7745, %v7809
        %7811 = vmatmul.f32.gmra.mxu0 %v6472
        %v7812 = vpop.f32.mrf.mxu0
        %v7813 = vadd.f32 %v7748, %v7812
        %7814 = vmatmul.f32.gmra.mxu0 %v6480
        %v7815 = vpop.f32.mrf.mxu0
        %v7816 = vadd.f32 %v7751, %v7815
        %7817 = vmatmul.f32.gmra.mxu0 %v6488
        %v7818 = vpop.f32.mrf.mxu0
        %v7819 = vadd.f32 %v7754, %v7818
        %7820 = vmatmul.f32.gmra.mxu0 %v6496
        %v7821 = vpop.f32.mrf.mxu0
        %v7822 = vadd.f32 %v7757, %v7821
        %7823 = vmatmul.f32.gmra.mxu0 %v6504
        %v7824 = vpop.f32.mrf.mxu0
        %v7825 = vadd.f32 %v7760, %v7824
        %7826 = vmatmul.f32.gmra.mxu0 %v6512
        %v7827 = vpop.f32.mrf.mxu0
        %v7828 = vadd.f32 %v7763, %v7827
        %7829 = vmatmul.f32.gmra.mxu0 %v6520
        %v7830 = vpop.f32.mrf.mxu0
        %v7831 = vadd.f32 %v7766, %v7830
        %7832 = vmatmul.f32.gmra.mxu0 %v6528
        %v7833 = vpop.f32.mrf.mxu0
        %v7834 = vadd.f32 %v7769, %v7833
        %7835 = vmatmul.f32.gmra.mxu0 %v6536
        %v7836 = vpop.f32.mrf.mxu0
        %v7837 = vadd.f32 %v7772, %v7836
        %7838 = vdwg.mxu0
        %v7839 = vadd.f32 %v4167, %v7272
        %v7840 = vadd.f32 %v4168, %v7792
        %v7841 = vadd.f32 %v4169, %v7275
        %v7842 = vadd.f32 %v4170, %v7795
        %v7843 = vadd.f32 %v4171, %v7278
        %v7844 = vadd.f32 %v4172, %v7798
        %v7845 = vadd.f32 %v4173, %v7281
        %v7846 = vadd.f32 %v4174, %v7801
        %v7847 = vadd.f32 %v4175, %v7284
        %v7848 = vadd.f32 %v4176, %v7804
        %v7849 = vadd.f32 %v4177, %v7287
        %v7850 = vadd.f32 %v4178, %v7807
        %v7851 = vadd.f32 %v4179, %v7290
        %v7852 = vadd.f32 %v4180, %v7810
        %v7853 = vadd.f32 %v4181, %v7293
        %v7854 = vadd.f32 %v4182, %v7813
        %v7855 = vadd.f32 %v4183, %v7296
        %v7856 = vadd.f32 %v4184, %v7816
        %v7857 = vadd.f32 %v4185, %v7299
        %v7858 = vadd.f32 %v4186, %v7819
        %v7859 = vadd.f32 %v4187, %v7302
        %v7860 = vadd.f32 %v4188, %v7822
        %v7861 = vadd.f32 %v4189, %v7305
        %v7862 = vadd.f32 %v4190, %v7825
        %v7863 = vadd.f32 %v4191, %v7308
        %v7864 = vadd.f32 %v4192, %v7828
        %v7865 = vadd.f32 %v4193, %v7311
        %v7866 = vadd.f32 %v4194, %v7831
        %v7867 = vadd.f32 %v4195, %v7314
        %v7868 = vadd.f32 %v4196, %v7834
        %v7869 = vadd.f32 %v4197, %v7317
        %v7870 = vadd.f32 %v4198, %v7837
        %7871 = vst [vmem:[%s712] sm:$0xff] %v7839
        %7872 = vst [vmem:[%s712 + $0x8] sm:$0xff] %v7840
        %7873 = vst [vmem:[%s712 + $0x10] sm:$0xff] %v7841
        %7874 = vst [vmem:[%s712 + $0x18] sm:$0xff] %v7842
        %7875 = vst [vmem:[%s712 + $0x20] sm:$0xff] %v7843
        %7876 = vst [vmem:[%s712 + $0x28] sm:$0xff] %v7844
        %7877 = vst [vmem:[%s712 + $0x30] sm:$0xff] %v7845
        %7878 = vst [vmem:[%s712 + $0x38] sm:$0xff] %v7846
        %7879 = vst [vmem:[%s712 + $0x40] sm:$0xff] %v7847
        %7880 = vst [vmem:[%s712 + $0x48] sm:$0xff] %v7848
        %7881 = vst [vmem:[%s712 + $0x50] sm:$0xff] %v7849
        %7882 = vst [vmem:[%s712 + $0x58] sm:$0xff] %v7850
        %7883 = vst [vmem:[%s712 + $0x60] sm:$0xff] %v7851
        %7884 = vst [vmem:[%s712 + $0x68] sm:$0xff] %v7852
        %7885 = vst [vmem:[%s712 + $0x70] sm:$0xff] %v7853
        %7886 = vst [vmem:[%s712 + $0x78] sm:$0xff] %v7854
        %7887 = vst [vmem:[%s712 + $0x80] sm:$0xff] %v7855
        %7888 = vst [vmem:[%s712 + $0x88] sm:$0xff] %v7856
        %7889 = vst [vmem:[%s712 + $0x90] sm:$0xff] %v7857
        %7890 = vst [vmem:[%s712 + $0x98] sm:$0xff] %v7858
        %7891 = vst [vmem:[%s712 + $0xa0] sm:$0xff] %v7859
        %7892 = vst [vmem:[%s712 + $0xa8] sm:$0xff] %v7860
        %7893 = vst [vmem:[%s712 + $0xb0] sm:$0xff] %v7861
        %7894 = vst [vmem:[%s712 + $0xb8] sm:$0xff] %v7862
        %7895 = vst [vmem:[%s712 + $0xc0] sm:$0xff] %v7863
        %7896 = vst [vmem:[%s712 + $0xc8] sm:$0xff] %v7864
        %7897 = vst [vmem:[%s712 + $0xd0] sm:$0xff] %v7865
        %7898 = vst [vmem:[%s712 + $0xd8] sm:$0xff] %v7866
        %7899 = vst [vmem:[%s712 + $0xe0] sm:$0xff] %v7867
        %7900 = vst [vmem:[%s712 + $0xe8] sm:$0xff] %v7868
        %7901 = vst [vmem:[%s712 + $0xf0] sm:$0xff] %v7869
        %7902 = vst [vmem:[%s712 + $0xf8] sm:$0xff] %v7870
        %p7903 = scmp.lt.s32.totalorder %s34, 1
        %s7904 = scalar_select %p7903, %s34, 1
        %s7905 = smul.addr %s7904, 32
        %s7906 = smul.addr %s7905, 8
        %s7907 = scalar_lea.vmem %s13, %s7906
        // Predicated region
        $region85: #{gpt_forward.2} parent=71 // pred_check
          %p7908 = pneg %p398
        $region86: #{gpt_forward.2} parent=71 // pred_check_branch
          %7910 = sbr.rel (%p7908) target = $region88
        $region87: #{gpt_forward.2} parent=71 // pred_region
          _
        $region88: #{gpt_forward.2} parent=71 // pred_fallthru
          _
      $region72: #{gpt_forward.2} parent=5 // pred_fallthru
        _
      %p7911 = scmp.le.s32.totalorder 2, %s25
      // Predicated region
      $region89: #{gpt_forward.2} parent=5 // pred_check
        %p7912 = pneg %p7911
      $region90: #{gpt_forward.2} parent=5 // pred_check_branch
        %7914 = sbr.rel (%p7912) target = $region92
      $region91: #{gpt_forward.2} parent=5 // pred_region
        %s7915 = ssub.s32 %s25, 2
        // Predicated region
        $region93: #{gpt_forward.2} parent=91 // pred_check
          %p7916 = pneg %p404
        $region94: #{gpt_forward.2} parent=91 // pred_check_branch
          %7918 = sbr.rel (%p7916) target = $region96
        $region95: #{gpt_forward.2} parent=91 // pred_region
          %p7919 = scmp.lt.s32.totalorder %s36, 1
          %s7920 = scalar_select %p7919, %s36, 1
          %s7921 = smul.addr %s7920, 32
          %s7922 = smul.addr %s7921, 8
          %s7923 = scalar_lea.vmem %s13, %s7922
        $region96: #{gpt_forward.2} parent=91 // pred_fallthru
          _
      $region92: #{gpt_forward.2} parent=5 // pred_fallthru
        _
    $region6: #{gpt_forward.2} parent=1 // loop_footer
      %s29 = sadd.s32 1, %s25
    $region7: #{gpt_forward.2} parent=1 // loop_footer_branch
      %24 = sbr.rel target = $region3
    $region8: #{gpt_forward.2} parent=1 // loop_exit
      _
    %7924 = vsyncpa [#allocation3], 1
    %s7925 = scalar_lea.sflag [#allocation3], 1
    %7926 = vsyncpa %s7925, 1
    %7927 = vsyncpa [#allocation5], 1
    %s7928 = scalar_lea.sflag [#allocation5], 1
    %7929 = vsyncpa %s7928, 1

</llo_original>
